<compile_context>
chip_gen: v6e
topology: v6e:2x2x1
jax: 0.10.0
libtpu: 0.0.40
codegen_flags: <defaults>
</compile_context>

<pallas_src>
import functools
import math

import jax
import jax.numpy as jnp
from jax.experimental import pallas as pl
from jax.experimental.pallas import tpu as pltpu


# ----------------------------- in-kernel helpers -----------------------------

def _gelu_tanh(x):
    # TODO(synk): ACT2FN["gelu"] is exact erf-GELU; the tanh form keeps the EUP busy
    # instead of a long VALU polynomial and differs by <1e-3 absolute.
    c = math.sqrt(2.0 / math.pi)
    return 0.5 * x * (1.0 + jnp.tanh(c * (x + 0.044715 * x * x * x)))


def _layernorm_t(x_t, g, b, eps=1e-5):
    # Feature-major layernorm: x_t is (E, Tq); g, b are (E, 1); normalize over axis 0.
    # Single statistics pass: var = E[x^2] - E[x]^2.
    n = x_t.shape[0]
    inv_n = 1.0 / n
    mu = jnp.sum(x_t, axis=0, keepdims=True) * inv_n
    ms = jnp.sum(x_t * x_t, axis=0, keepdims=True) * inv_n
    var = ms - mu * mu
    return (x_t - mu) * jax.lax.rsqrt(var + eps) * g + b


def _attn(q_t, k_bf, v_bf, wo, bo, num_heads, *, causal_offset, transpose_free):
    """Multi-head attention on feature-major activations.

    q_t: (E, Tq) f32 (scaling already folded into the q projection).
    k_bf / v_bf: (E, K) bf16 cached key/value projections.
    wo: (E, E) bf16, bo: (E, 1) f32.  Returns (E, Tq) f32.
    """
    e, tq = q_t.shape
    hd = e // num_heads
    klen = k_bf.shape[1]
    neg = jnp.finfo(jnp.float32).min

    qh = q_t.astype(jnp.bfloat16).reshape(num_heads, hd, tq)   # leading-dim reshape only
    kh = k_bf.reshape(num_heads, hd, klen)
    vh = v_bf.reshape(num_heads, hd, klen)

    if transpose_free:
        # scores in (H, K, Q): K^T.Q per head, no qh relayout; softmax over sublane axis.
        s = jnp.einsum("hdk,hdq->hkq", kh, qh, preferred_element_type=jnp.float32)
        if causal_offset is not None:
            kpos = jax.lax.broadcasted_iota(jnp.int32, (klen, tq), 0)
            qpos = jax.lax.broadcasted_iota(jnp.int32, (klen, tq), 1) + causal_offset
            mask = jnp.where(kpos <= qpos, 0.0, neg).astype(jnp.float32)
            s = s + mask[None]
        m = jnp.max(s, axis=1, keepdims=True)
        es = jnp.exp(s - m)
        p = es * pl.reciprocal(jnp.sum(es, axis=1, keepdims=True), approx=True)
        o = jnp.einsum("hdk,hkq->hdq", vh, p.astype(jnp.bfloat16),
                       preferred_element_type=jnp.float32)          # (H, hd, Tq)
    else:
        # Fallback: previously-proven formulation (explicit qh minor-dims swap).
        qh_t = jnp.transpose(qh, (0, 2, 1))                          # (H, Tq, hd)
        s = jnp.einsum("hqd,hdk->hqk", qh_t, kh, preferred_element_type=jnp.float32)
        if causal_offset is not None:
            qpos = jax.lax.broadcasted_iota(jnp.int32, (tq, klen), 0) + causal_offset
            kpos = jax.lax.broadcasted_iota(jnp.int32, (tq, klen), 1)
            mask = jnp.where(kpos <= qpos, 0.0, neg).astype(jnp.float32)
            s = s + mask[None]
        m = jnp.max(s, axis=-1, keepdims=True)
        es = jnp.exp(s - m)
        p = es * pl.reciprocal(jnp.sum(es, axis=-1, keepdims=True), approx=True)
        o = jnp.einsum("hdk,hqk->hdq", vh, p.astype(jnp.bfloat16),
                       preferred_element_type=jnp.float32)          # (H, hd, Tq)

    o_t = o.reshape(e, tq)                                           # merge heads
    return jnp.dot(wo, o_t.astype(jnp.bfloat16), preferred_element_type=jnp.float32) + bo


# --------------------------------- kernel ------------------------------------

def decoder_layer_kernel(
    xq_ref, xfull_ref, enc_ref,
    sa_wq, sa_bq, sa_wk, sa_bk, sa_wv, sa_bv, sa_wo, sa_bo,
    ln1_g, ln1_b,
    ca_wq, ca_bq, ca_wk, ca_bk, ca_wv, ca_bv, ca_wo, ca_bo,
    ln2_g, ln2_b,
    fc1_w, fc1_b, fc2_w, fc2_b,
    ln3_g, ln3_b,
    out_ref,
    sa_k_sc, sa_v_sc, ca_k_sc, ca_v_sc,
    *, num_heads, transpose_free):
    qi = pl.program_id(1)
    q_tile = xq_ref.shape[2]

    # K/V caches recomputed once per batch element (first query tile), stored bf16.
    @pl.when(qi == 0)
    def _():
        xf = xfull_ref[0].astype(jnp.bfloat16)                       # (E, T)
        sa_k_sc[...] = (jnp.dot(sa_wk[...], xf, preferred_element_type=jnp.float32)
                        + sa_bk[...]).astype(jnp.bfloat16)
        sa_v_sc[...] = (jnp.dot(sa_wv[...], xf, preferred_element_type=jnp.float32)
                        + sa_bv[...]).astype(jnp.bfloat16)
        ef = enc_ref[0].astype(jnp.bfloat16)                         # (E_enc, S)
        ca_k_sc[...] = (jnp.dot(ca_wk[...], ef, preferred_element_type=jnp.float32)
                        + ca_bk[...]).astype(jnp.bfloat16)
        ca_v_sc[...] = (jnp.dot(ca_wv[...], ef, preferred_element_type=jnp.float32)
                        + ca_bv[...]).astype(jnp.bfloat16)

    x_t = xq_ref[0]                                                  # (E, Tq) f32

    # --- self-attention (attention/activation dropout are eval no-ops) ---
    q_t = jnp.dot(sa_wq[...], x_t.astype(jnp.bfloat16),
                  preferred_element_type=jnp.float32) + sa_bq[...]   # scaling folded in
    sa = _attn(q_t, sa_k_sc[...], sa_v_sc[...], sa_wo[...], sa_bo[...], num_heads,
               causal_offset=qi * q_tile, transpose_free=transpose_free)
    h = _layernorm_t(x_t + sa, ln1_g[...], ln1_b[...])

    # --- cross-attention against cached encoder K/V (no encoder mask) ---
    q2 = jnp.dot(ca_wq[...], h.astype(jnp.bfloat16),
                 preferred_element_type=jnp.float32) + ca_bq[...]
    ca = _attn(q2, ca_k_sc[...], ca_v_sc[...], ca_wo[...], ca_bo[...], num_heads,
               causal_offset=None, transpose_free=transpose_free)
    h = _layernorm_t(h + ca, ln2_g[...], ln2_b[...])

    # --- feed-forward ---
    # TODO(synk): tile F in 512-1024 chunks with streamed fc1/fc2 weight tiles for v7x.
    f = jnp.dot(fc1_w[...], h.astype(jnp.bfloat16),
                preferred_element_type=jnp.float32) + fc1_b[...]
    f = _gelu_tanh(f)
    f = jnp.dot(fc2_w[...], f.astype(jnp.bfloat16),
                preferred_element_type=jnp.float32) + fc2_b[...]
    h = _layernorm_t(h + f, ln3_g[...], ln3_b[...])

    # Output stays feature-major (E, Tq); the wrapper (or the next stacked layer)
    # handles the final orientation.
    out_ref[0] = h.astype(out_ref.dtype)


# --------------------------------- wrapper -----------------------------------

_PARAM_ORDER = [
    "sa_wq", "sa_bq", "sa_wk", "sa_bk", "sa_wv", "sa_bv", "sa_wo", "sa_bo",
    "ln1_g", "ln1_b",
    "ca_wq", "ca_bq", "ca_wk", "ca_bk", "ca_wv", "ca_bv", "ca_wo", "ca_bo",
    "ln2_g", "ln2_b",
    "fc1_w", "fc1_b", "fc2_w", "fc2_b",
    "ln3_g", "ln3_b",
]

_MATRIX_KEYS = {"sa_wq", "sa_wk", "sa_wv", "sa_wo",
                "ca_wq", "ca_wk", "ca_wv", "ca_wo",
                "fc1_w", "fc2_w"}


def _vmem_capacity_bytes():
    try:
        return int(pltpu.get_tpu_info().vmem_capacity_bytes)
    except Exception:
        return 64 * 1024 * 1024


def _build(weights, *, B, T, S, E, E_enc, F, num_heads, q_tile, vmem_limit, optimized):
    n_q = T // q_tile
    # Grid-invariant weights: single-buffered in the optimized build.
    w_kwargs = {"pipeline_mode": pl.Buffered(1)} if optimized else {}

    in_specs = [
        pl.BlockSpec((1, E, q_tile), lambda b, q: (b, 0, q)),     # query tile of x
        pl.BlockSpec((1, E, T), lambda b, q: (b, 0, 0)),          # full x (self-attn K/V)
        pl.BlockSpec((1, E_enc, S), lambda b, q: (b, 0, 0)),      # encoder hidden states
    ]
    for w in weights:
        in_specs.append(pl.BlockSpec(w.shape, lambda b, q: (0, 0), **w_kwargs))

    kernel = functools.partial(decoder_layer_kernel,
                               num_heads=num_heads, transpose_free=optimized)
    return pl.pallas_call(
        kernel,
        out_shape=jax.ShapeDtypeStruct((B, E, T), jnp.float32),
        grid_spec=pltpu.PrefetchScalarGridSpec(
            num_scalar_prefetch=0,
            grid=(B, n_q),
            in_specs=in_specs,
            out_specs=pl.BlockSpec((1, E, q_tile), lambda b, q: (b, 0, q)),
            scratch_shapes=[
                pltpu.VMEM((E, T), jnp.bfloat16),   # self-attn K cache
                pltpu.VMEM((E, T), jnp.bfloat16),   # self-attn V cache
                pltpu.VMEM((E, S), jnp.bfloat16),   # cross-attn K cache
                pltpu.VMEM((E, S), jnp.bfloat16),   # cross-attn V cache
            ],
        ),
        compiler_params=pltpu.CompilerParams(
            # batch axis split across cores; query-tile axis is sequential because the
            # K/V caches are filled on the first tile of each batch element.
            dimension_semantics=("parallel", "arbitrary"),
            vmem_limit_bytes=int(vmem_limit),
        ),
    )


def trocr_decoder_layer(x, enc, params, num_heads, *, q_tile=None,
                        weight_dtype=jnp.bfloat16):
    B, T, E = x.shape
    S, E_enc = enc.shape[1], enc.shape[2]
    F = params["fc1_w"].shape[1]
    scaling = (E // num_heads) ** -0.5

    if q_tile is None:
        q_tile = T if T <= 128 else 128
    assert T % q_tile == 0, "T must be divisible by q_tile"

    # Fold the 1/sqrt(head_dim) scaling into the q projections (one-time transform).
    p = dict(params)
    for k in ("sa_wq", "sa_bq", "ca_wq", "ca_bq"):
        p[k] = p[k] * scaling

    # Weights go in as (out, in) (torch Linear layout) so the kernel works feature-major;
    # big matrices are stored bf16, biases / LN params stay f32.
    weights = []
    for name in _PARAM_ORDER:
        w = jnp.transpose(p[name])                        # (out, in) / (out, 1)
        if name in _MATRIX_KEYS:
            w = w.astype(weight_dtype)
        weights.append(w)

    # Feature-major activations prepared once by XLA (no in-kernel XLU edge transposes;
    # for a stacked decoder, keep everything in (B, E, T) and skip the round-trips).
    x_t = jnp.transpose(x, (0, 2, 1)).astype(jnp.float32)         # (B, E, T)
    enc_t = jnp.transpose(enc, (0, 2, 1)).astype(jnp.float32)     # (B, E_enc, S)

    # VMEM budget: weights (x2 to also cover the double-buffered fallback), pipelined I/O
    # blocks, K/V scratch and the per-tile temporaries, clamped to the chip's capacity.
    weight_bytes = sum(int(w.size) * w.dtype.itemsize for w in weights)
    io_bytes = 2 * 4 * (2 * E * q_tile + E * T + E_enc * S)
    kv_scratch_bytes = 2 * (2 * E * T + 2 * E * S)
    tmp_bytes = 4 * (6 * E * q_tile
                     + 2 * num_heads * T * q_tile
                     + 2 * num_heads * S * q_tile
                     + 2 * F * q_tile)
    vmem_limit = min(_vmem_capacity_bytes(),
                     2 * weight_bytes + io_bytes + kv_scratch_bytes + tmp_bytes
                     + (8 << 20))

    common = dict(B=B, T=T, S=S, E=E, E_enc=E_enc, F=F, num_heads=num_heads,
                  q_tile=q_tile, vmem_limit=vmem_limit)
    try:
        out_t = _build(weights, optimized=True, **common)(x_t, x_t, enc_t, *weights)
        out_t = jax.block_until_ready(out_t)
    except Exception:
        # Fallback: double-buffered weights + the previously-proven attention forms.
        out_t = _build(weights, optimized=False, **common)(x_t, x_t, enc_t, *weights)

    return jnp.transpose(out_t, (0, 2, 1)).astype(x.dtype)


# ------------------------------ pure-JAX reference ---------------------------

def reference_decoder_layer(x, mask, enc, p, num_heads):
    E = x.shape[-1]
    hd = E // num_heads
    scaling = hd ** -0.5

    def mha(xq, xkv, wq, bq, wk, bk, wv, bv, wo, bo, m):
        B, T, _ = xq.shape
        q = (xq @ wq + bq) * scaling
        k = xkv @ wk + bk
        v = xkv @ wv + bv
        split = lambda t: t.reshape(t.shape[0], t.shape[1], num_heads, hd).transpose(0, 2, 1, 3)
        qh, kh, vh = split(q), split(k), split(v)
        s = jnp.einsum("bhtd,bhsd->bhts", qh, kh)
        if m is not None:
            s = s + m[:, None, :, :]
        pw = jax.nn.softmax(s, axis=-1)
        o = jnp.einsum("bhts,bhsd->bhtd", pw, vh).transpose(0, 2, 1, 3).reshape(B, T, E)
        return o @ wo + bo

    def ln(x_, g, b):
        mu = x_.mean(-1, keepdims=True)
        var = ((x_ - mu) ** 2).mean(-1, keepdims=True)
        return (x_ - mu) / jnp.sqrt(var + 1e-5) * g + b

    h = ln(x + mha(x, x, p["sa_wq"], p["sa_bq"], p["sa_wk"], p["sa_bk"],
                   p["sa_wv"], p["sa_bv"], p["sa_wo"], p["sa_bo"], mask),
           p["ln1_g"], p["ln1_b"])
    h = ln(h + mha(h, enc, p["ca_wq"], p["ca_bq"], p["ca_wk"], p["ca_bk"],
                   p["ca_wv"], p["ca_bv"], p["ca_wo"], p["ca_bo"], None),
           p["ln2_g"], p["ln2_b"])
    f = jax.nn.gelu(h @ p["fc1_w"] + p["fc1_b"], approximate=False)
    f = f @ p["fc2_w"] + p["fc2_b"]
    return ln(h + f, p["ln3_g"], p["ln3_b"])


# ---------------------------------- main --------------------------------------

if __name__ == "__main__":
    # Small config consistent with TrOCRDecoderLayer: d_model=32, heads=4, ffn=64.
    # NOTE: this is a correctness config only; performance must be evaluated at
    # production shapes (E=1024, F=4096, S~577, T up to 512).
    B, T, S, E, E_enc, H, F = 2, 8, 16, 32, 32, 4, 64

    key = jax.random.PRNGKey(0)
    keys = iter(jax.random.split(key, 64))
    nk = lambda: next(keys)
    w = lambda i, o: 0.02 * jax.random.normal(nk(), (i, o), jnp.float32)
    bias = lambda o: 0.02 * jax.random.normal(nk(), (1, o), jnp.float32)

    params = {
        # self-attention
        "sa_wq": w(E, E), "sa_bq": bias(E),
        "sa_wk": w(E, E), "sa_bk": bias(E),
        "sa_wv": w(E, E), "sa_bv": bias(E),
        "sa_wo": w(E, E), "sa_bo": bias(E),
        "ln1_g": jnp.ones((1, E), jnp.float32), "ln1_b": jnp.zeros((1, E), jnp.float32),
        # cross-attention (kdim = vdim = cross_attention_hidden_size = E_enc)
        "ca_wq": w(E, E), "ca_bq": bias(E),
        "ca_wk": w(E_enc, E), "ca_bk": bias(E),
        "ca_wv": w(E_enc, E), "ca_bv": bias(E),
        "ca_wo": w(E, E), "ca_bo": bias(E),
        "ln2_g": jnp.ones((1, E), jnp.float32), "ln2_b": jnp.zeros((1, E), jnp.float32),
        # feed-forward
        "fc1_w": w(E, F), "fc1_b": bias(F),
        "fc2_w": w(F, E), "fc2_b": bias(E),
        "ln3_g": jnp.ones((1, E), jnp.float32), "ln3_b": jnp.zeros((1, E), jnp.float32),
    }

    x = jax.random.normal(nk(), (B, T, E), jnp.float32)
    enc = jax.random.normal(nk(), (B, S, E_enc), jnp.float32)

    out = trocr_decoder_layer(x, enc, params, num_heads=H)
    out = jax.block_until_ready(out)

    # f32 reference (exact-erf GELU, additive causal mask in the torch convention).
    idx = jnp.arange(T)
    causal = jnp.where(idx[None, :] <= idx[:, None], 0.0, jnp.finfo(jnp.float32).min)
    attn_mask = jnp.broadcast_to(causal, (B, T, T)).astype(jnp.float32)
    ref = reference_decoder_layer(x, attn_mask, enc, params, num_heads=H)

    assert out.shape == (B, T, E)
    err = float(jnp.max(jnp.abs(out - ref)))
    # tolerance loosened vs the f32 reference: bf16 matmul inputs + tanh-approx GELU.
    assert err < 2e-2, err
    print("KERNEL_OK")
</pallas_src>

<mosaic_0001>
module attributes {stable_mosaic.version = 11 : i64} {
  func.func @decoder_layer_kernel(%arg0: i32, %arg1: i32, %arg2: memref<1x32x8xf32, #tpu.memory_space<vmem>>, %arg3: memref<1x32x8xf32, #tpu.memory_space<vmem>>, %arg4: memref<1x32x16xf32, #tpu.memory_space<vmem>>, %arg5: memref<32x32xbf16, #tpu.memory_space<vmem>>, %arg6: memref<32x1xf32, #tpu.memory_space<vmem>>, %arg7: memref<32x32xbf16, #tpu.memory_space<vmem>>, %arg8: memref<32x1xf32, #tpu.memory_space<vmem>>, %arg9: memref<32x32xbf16, #tpu.memory_space<vmem>>, %arg10: memref<32x1xf32, #tpu.memory_space<vmem>>, %arg11: memref<32x32xbf16, #tpu.memory_space<vmem>>, %arg12: memref<32x1xf32, #tpu.memory_space<vmem>>, %arg13: memref<32x1xf32, #tpu.memory_space<vmem>>, %arg14: memref<32x1xf32, #tpu.memory_space<vmem>>, %arg15: memref<32x32xbf16, #tpu.memory_space<vmem>>, %arg16: memref<32x1xf32, #tpu.memory_space<vmem>>, %arg17: memref<32x32xbf16, #tpu.memory_space<vmem>>, %arg18: memref<32x1xf32, #tpu.memory_space<vmem>>, %arg19: memref<32x32xbf16, #tpu.memory_space<vmem>>, %arg20: memref<32x1xf32, #tpu.memory_space<vmem>>, %arg21: memref<32x32xbf16, #tpu.memory_space<vmem>>, %arg22: memref<32x1xf32, #tpu.memory_space<vmem>>, %arg23: memref<32x1xf32, #tpu.memory_space<vmem>>, %arg24: memref<32x1xf32, #tpu.memory_space<vmem>>, %arg25: memref<64x32xbf16, #tpu.memory_space<vmem>>, %arg26: memref<64x1xf32, #tpu.memory_space<vmem>>, %arg27: memref<32x64xbf16, #tpu.memory_space<vmem>>, %arg28: memref<32x1xf32, #tpu.memory_space<vmem>>, %arg29: memref<32x1xf32, #tpu.memory_space<vmem>>, %arg30: memref<32x1xf32, #tpu.memory_space<vmem>>, %arg31: memref<1x32x8xf32, #tpu.memory_space<vmem>>, %arg32: memref<32x8xbf16, #tpu.memory_space<vmem>>, %arg33: memref<32x8xbf16, #tpu.memory_space<vmem>>, %arg34: memref<32x16xbf16, #tpu.memory_space<vmem>>, %arg35: memref<32x16xbf16, #tpu.memory_space<vmem>>) attributes {dimension_semantics = [#tpu.dimension_semantics<parallel>, #tpu.dimension_semantics<arbitrary>], iteration_bounds = array<i64: 2, 1>, scalar_prefetch = 0 : i64, scratch_operands = 4 : i64, tpu.core_type = #tpu.core_type<tc>, window_params = [{transform_indices = @transform_0, window_bounds = array<i64: 1, 32, 8>}, {transform_indices = @transform_1, window_bounds = array<i64: 1, 32, 8>}, {transform_indices = @transform_2, window_bounds = array<i64: 1, 32, 16>}, {pipeline_mode = #tpu.pipeline_mode<synchronous>, transform_indices = @transform_3, window_bounds = array<i64: 32, 32>}, {pipeline_mode = #tpu.pipeline_mode<synchronous>, transform_indices = @transform_4, window_bounds = array<i64: 32, 1>}, {pipeline_mode = #tpu.pipeline_mode<synchronous>, transform_indices = @transform_5, window_bounds = array<i64: 32, 32>}, {pipeline_mode = #tpu.pipeline_mode<synchronous>, transform_indices = @transform_6, window_bounds = array<i64: 32, 1>}, {pipeline_mode = #tpu.pipeline_mode<synchronous>, transform_indices = @transform_7, window_bounds = array<i64: 32, 32>}, {pipeline_mode = #tpu.pipeline_mode<synchronous>, transform_indices = @transform_8, window_bounds = array<i64: 32, 1>}, {pipeline_mode = #tpu.pipeline_mode<synchronous>, transform_indices = @transform_9, window_bounds = array<i64: 32, 32>}, {pipeline_mode = #tpu.pipeline_mode<synchronous>, transform_indices = @transform_10, window_bounds = array<i64: 32, 1>}, {pipeline_mode = #tpu.pipeline_mode<synchronous>, transform_indices = @transform_11, window_bounds = array<i64: 32, 1>}, {pipeline_mode = #tpu.pipeline_mode<synchronous>, transform_indices = @transform_12, window_bounds = array<i64: 32, 1>}, {pipeline_mode = #tpu.pipeline_mode<synchronous>, transform_indices = @transform_13, window_bounds = array<i64: 32, 32>}, {pipeline_mode = #tpu.pipeline_mode<synchronous>, transform_indices = @transform_14, window_bounds = array<i64: 32, 1>}, {pipeline_mode = #tpu.pipeline_mode<synchronous>, transform_indices = @transform_15, window_bounds = array<i64: 32, 32>}, {pipeline_mode = #tpu.pipeline_mode<synchronous>, transform_indices = @transform_16, window_bounds = array<i64: 32, 1>}, {pipeline_mode = #tpu.pipeline_mode<synchronous>, transform_indices = @transform_17, window_bounds = array<i64: 32, 32>}, {pipeline_mode = #tpu.pipeline_mode<synchronous>, transform_indices = @transform_18, window_bounds = array<i64: 32, 1>}, {pipeline_mode = #tpu.pipeline_mode<synchronous>, transform_indices = @transform_19, window_bounds = array<i64: 32, 32>}, {pipeline_mode = #tpu.pipeline_mode<synchronous>, transform_indices = @transform_20, window_bounds = array<i64: 32, 1>}, {pipeline_mode = #tpu.pipeline_mode<synchronous>, transform_indices = @transform_21, window_bounds = array<i64: 32, 1>}, {pipeline_mode = #tpu.pipeline_mode<synchronous>, transform_indices = @transform_22, window_bounds = array<i64: 32, 1>}, {pipeline_mode = #tpu.pipeline_mode<synchronous>, transform_indices = @transform_23, window_bounds = array<i64: 64, 32>}, {pipeline_mode = #tpu.pipeline_mode<synchronous>, transform_indices = @transform_24, window_bounds = array<i64: 64, 1>}, {pipeline_mode = #tpu.pipeline_mode<synchronous>, transform_indices = @transform_25, window_bounds = array<i64: 32, 64>}, {pipeline_mode = #tpu.pipeline_mode<synchronous>, transform_indices = @transform_26, window_bounds = array<i64: 32, 1>}, {pipeline_mode = #tpu.pipeline_mode<synchronous>, transform_indices = @transform_27, window_bounds = array<i64: 32, 1>}, {pipeline_mode = #tpu.pipeline_mode<synchronous>, transform_indices = @transform_28, window_bounds = array<i64: 32, 1>}, {transform_indices = @transform_29, window_bounds = array<i64: 1, 32, 8>}]} {
    %c0_i32 = arith.constant 0 : i32
    %0 = arith.cmpi eq, %arg1, %c0_i32 : i32
    %1 = arith.extui %0 : i1 to i32
    %c0_i32_0 = arith.constant 0 : i32
    %2 = arith.cmpi ne, %1, %c0_i32_0 : i32
    scf.if %2 {
      %c0_84 = arith.constant 0 : index
      %c0_85 = arith.constant 0 : index
      %c0_86 = arith.constant 0 : index
      %184 = vector.load %arg3[%c0_84, %c0_85, %c0_86] : memref<1x32x8xf32, #tpu.memory_space<vmem>>, vector<1x32x8xf32>
      %185 = vector.shape_cast %184 : vector<1x32x8xf32> to vector<32x8xf32>
      %186 = arith.truncf %185 : vector<32x8xf32> to vector<32x8xbf16>
      %c0_87 = arith.constant 0 : index
      %c0_88 = arith.constant 0 : index
      %187 = vector.load %arg7[%c0_87, %c0_88] : memref<32x32xbf16, #tpu.memory_space<vmem>>, vector<32x32xbf16>
      %cst_89 = arith.constant dense<0.000000e+00> : vector<32x8xf32>
      %188 = tpu.matmul %187, %186, %cst_89 {dimension_numbers = #tpu.dot_dimension_numbers<[1], [0], [0], [1], [0, 0, 1, 1], [], []>} : vector<32x32xbf16>, vector<32x8xbf16>, vector<32x8xf32> -> vector<32x8xf32>
      %c0_90 = arith.constant 0 : index
      %c0_91 = arith.constant 0 : index
      %189 = vector.load %arg8[%c0_90, %c0_91] : memref<32x1xf32, #tpu.memory_space<vmem>>, vector<32x1xf32>
      %190 = vector.broadcast %189 : vector<32x1xf32> to vector<32x8xf32>
      %191 = arith.addf %188, %190 : vector<32x8xf32>
      %192 = arith.truncf %191 : vector<32x8xf32> to vector<32x8xbf16>
      %c0_92 = arith.constant 0 : index
      %c0_93 = arith.constant 0 : index
      %193 = vector.load %arg32[%c0_92, %c0_93] : memref<32x8xbf16, #tpu.memory_space<vmem>>, vector<32x8xbf16>
      tpu.vector_store %arg32[%c0_92, %c0_93], %192 {strides = array<i32>} : memref<32x8xbf16, #tpu.memory_space<vmem>>, vector<32x8xbf16>,
      %c0_94 = arith.constant 0 : index
      %c0_95 = arith.constant 0 : index
      %194 = vector.load %arg9[%c0_94, %c0_95] : memref<32x32xbf16, #tpu.memory_space<vmem>>, vector<32x32xbf16>
      %cst_96 = arith.constant dense<0.000000e+00> : vector<32x8xf32>
      %195 = tpu.matmul %194, %186, %cst_96 {dimension_numbers = #tpu.dot_dimension_numbers<[1], [0], [0], [1], [0, 0, 1, 1], [], []>} : vector<32x32xbf16>, vector<32x8xbf16>, vector<32x8xf32> -> vector<32x8xf32>
      %c0_97 = arith.constant 0 : index
      %c0_98 = arith.constant 0 : index
      %196 = vector.load %arg10[%c0_97, %c0_98] : memref<32x1xf32, #tpu.memory_space<vmem>>, vector<32x1xf32>
      %197 = vector.broadcast %196 : vector<32x1xf32> to vector<32x8xf32>
      %198 = arith.addf %195, %197 : vector<32x8xf32>
      %199 = arith.truncf %198 : vector<32x8xf32> to vector<32x8xbf16>
      %c0_99 = arith.constant 0 : index
      %c0_100 = arith.constant 0 : index
      %200 = vector.load %arg33[%c0_99, %c0_100] : memref<32x8xbf16, #tpu.memory_space<vmem>>, vector<32x8xbf16>
      tpu.vector_store %arg33[%c0_99, %c0_100], %199 {strides = array<i32>} : memref<32x8xbf16, #tpu.memory_space<vmem>>, vector<32x8xbf16>,
      %c0_101 = arith.constant 0 : index
      %c0_102 = arith.constant 0 : index
      %c0_103 = arith.constant 0 : index
      %201 = vector.load %arg4[%c0_101, %c0_102, %c0_103] : memref<1x32x16xf32, #tpu.memory_space<vmem>>, vector<1x32x16xf32>
      %202 = vector.shape_cast %201 : vector<1x32x16xf32> to vector<32x16xf32>
      %203 = arith.truncf %202 : vector<32x16xf32> to vector<32x16xbf16>
      %c0_104 = arith.constant 0 : index
      %c0_105 = arith.constant 0 : index
      %204 = vector.load %arg17[%c0_104, %c0_105] : memref<32x32xbf16, #tpu.memory_space<vmem>>, vector<32x32xbf16>
      %cst_106 = arith.constant dense<0.000000e+00> : vector<32x16xf32>
      %205 = tpu.matmul %204, %203, %cst_106 {dimension_numbers = #tpu.dot_dimension_numbers<[1], [0], [0], [1], [0, 0, 1, 1], [], []>} : vector<32x32xbf16>, vector<32x16xbf16>, vector<32x16xf32> -> vector<32x16xf32>
      %c0_107 = arith.constant 0 : index
      %c0_108 = arith.constant 0 : index
      %206 = vector.load %arg18[%c0_107, %c0_108] : memref<32x1xf32, #tpu.memory_space<vmem>>, vector<32x1xf32>
      %207 = vector.broadcast %206 : vector<32x1xf32> to vector<32x16xf32>
      %208 = arith.addf %205, %207 : vector<32x16xf32>
      %209 = arith.truncf %208 : vector<32x16xf32> to vector<32x16xbf16>
      %c0_109 = arith.constant 0 : index
      %c0_110 = arith.constant 0 : index
      %210 = vector.load %arg34[%c0_109, %c0_110] : memref<32x16xbf16, #tpu.memory_space<vmem>>, vector<32x16xbf16>
      tpu.vector_store %arg34[%c0_109, %c0_110], %209 {strides = array<i32>} : memref<32x16xbf16, #tpu.memory_space<vmem>>, vector<32x16xbf16>,
      %c0_111 = arith.constant 0 : index
      %c0_112 = arith.constant 0 : index
      %211 = vector.load %arg19[%c0_111, %c0_112] : memref<32x32xbf16, #tpu.memory_space<vmem>>, vector<32x32xbf16>
      %cst_113 = arith.constant dense<0.000000e+00> : vector<32x16xf32>
      %212 = tpu.matmul %211, %203, %cst_113 {dimension_numbers = #tpu.dot_dimension_numbers<[1], [0], [0], [1], [0, 0, 1, 1], [], []>} : vector<32x32xbf16>, vector<32x16xbf16>, vector<32x16xf32> -> vector<32x16xf32>
      %c0_114 = arith.constant 0 : index
      %c0_115 = arith.constant 0 : index
      %213 = vector.load %arg20[%c0_114, %c0_115] : memref<32x1xf32, #tpu.memory_space<vmem>>, vector<32x1xf32>
      %214 = vector.broadcast %213 : vector<32x1xf32> to vector<32x16xf32>
      %215 = arith.addf %212, %214 : vector<32x16xf32>
      %216 = arith.truncf %215 : vector<32x16xf32> to vector<32x16xbf16>
      %c0_116 = arith.constant 0 : index
      %c0_117 = arith.constant 0 : index
      %217 = vector.load %arg35[%c0_116, %c0_117] : memref<32x16xbf16, #tpu.memory_space<vmem>>, vector<32x16xbf16>
      tpu.vector_store %arg35[%c0_116, %c0_117], %216 {strides = array<i32>} : memref<32x16xbf16, #tpu.memory_space<vmem>>, vector<32x16xbf16>,
    } else {
    }
    %c0 = arith.constant 0 : index
    %c0_1 = arith.constant 0 : index
    %c0_2 = arith.constant 0 : index
    %3 = vector.load %arg2[%c0, %c0_1, %c0_2] : memref<1x32x8xf32, #tpu.memory_space<vmem>>, vector<1x32x8xf32>
    %4 = vector.shape_cast %3 : vector<1x32x8xf32> to vector<32x8xf32>
    %c0_3 = arith.constant 0 : index
    %c0_4 = arith.constant 0 : index
    %5 = vector.load %arg5[%c0_3, %c0_4] : memref<32x32xbf16, #tpu.memory_space<vmem>>, vector<32x32xbf16>
    %6 = arith.truncf %4 : vector<32x8xf32> to vector<32x8xbf16>
    %cst = arith.constant dense<0.000000e+00> : vector<32x8xf32>
    %7 = tpu.matmul %5, %6, %cst {dimension_numbers = #tpu.dot_dimension_numbers<[1], [0], [0], [1], [0, 0, 1, 1], [], []>} : vector<32x32xbf16>, vector<32x8xbf16>, vector<32x8xf32> -> vector<32x8xf32>
    %c0_5 = arith.constant 0 : index
    %c0_6 = arith.constant 0 : index
    %8 = vector.load %arg6[%c0_5, %c0_6] : memref<32x1xf32, #tpu.memory_space<vmem>>, vector<32x1xf32>
    %9 = vector.broadcast %8 : vector<32x1xf32> to vector<32x8xf32>
    %10 = arith.addf %7, %9 : vector<32x8xf32>
    %c0_7 = arith.constant 0 : index
    %c0_8 = arith.constant 0 : index
    %11 = vector.load %arg32[%c0_7, %c0_8] : memref<32x8xbf16, #tpu.memory_space<vmem>>, vector<32x8xbf16>
    %c0_9 = arith.constant 0 : index
    %c0_10 = arith.constant 0 : index
    %12 = vector.load %arg33[%c0_9, %c0_10] : memref<32x8xbf16, #tpu.memory_space<vmem>>, vector<32x8xbf16>
    %c0_11 = arith.constant 0 : index
    %c0_12 = arith.constant 0 : index
    %13 = vector.load %arg11[%c0_11, %c0_12] : memref<32x32xbf16, #tpu.memory_space<vmem>>, vector<32x32xbf16>
    %c0_13 = arith.constant 0 : index
    %c0_14 = arith.constant 0 : index
    %14 = vector.load %arg12[%c0_13, %c0_14] : memref<32x1xf32, #tpu.memory_space<vmem>>, vector<32x1xf32>
    %c8_i32 = arith.constant 8 : i32
    %15 = arith.muli %arg1, %c8_i32 : i32
    %16 = arith.truncf %10 : vector<32x8xf32> to vector<32x8xbf16>
    %17 = vector.shape_cast %16 : vector<32x8xbf16> to vector<4x8x8xbf16>
    %18 = vector.shape_cast %11 : vector<32x8xbf16> to vector<4x8x8xbf16>
    %19 = vector.shape_cast %12 : vector<32x8xbf16> to vector<4x8x8xbf16>
    "tpu.trace_start"() <{level = 10 : i32, message = "hdk,hdq->hkq"}> : () -> ()
    %cst_15 = arith.constant dense<0.000000e+00> : vector<4x8x8xf32>
    %20 = tpu.matmul %18, %17, %cst_15 {dimension_numbers = #tpu.dot_dimension_numbers<[1], [1], [2], [2], [0, 0, 0, 2, 1, 2], [0], [0]>} : vector<4x8x8xbf16>, vector<4x8x8xbf16>, vector<4x8x8xf32> -> vector<4x8x8xf32>
    "tpu.trace_stop"() : () -> ()
    %21 = tpu.iota {dimensions = array<i32: 0>} : vector<8x8xi32>
    %22 = tpu.iota {dimensions = array<i32: 1>} : vector<8x8xi32>
    %23 = vector.broadcast %15 : i32 to vector<8x8xi32>
    %24 = arith.addi %22, %23 : vector<8x8xi32>
    %25 = arith.cmpi sle, %21, %24 : vector<8x8xi32>
    %cst_16 = arith.constant 0.000000e+00 : f32
    %cst_17 = arith.constant -3.40282347E+38 : f32
    %26 = vector.broadcast %cst_16 : f32 to vector<8x8xf32>
    %27 = vector.broadcast %cst_17 : f32 to vector<8x8xf32>
    %28 = arith.select %25, %26, %27 : vector<8x8xi1>, vector<8x8xf32>
    %29 = vector.shape_cast %28 : vector<8x8xf32> to vector<1x8x8xf32>
    %30 = vector.broadcast %29 : vector<1x8x8xf32> to vector<4x8x8xf32>
    %31 = arith.addf %20, %30 : vector<4x8x8xf32>
    %cst_18 = arith.constant dense<0xFF800000> : vector<4x8xf32>
    %32 = vector.multi_reduction <maximumf>, %31, %cst_18 [1] : vector<4x8x8xf32> to vector<4x8xf32>
    %33 = vector.shape_cast %32 : vector<4x8xf32> to vector<4x1x8xf32>
    %34 = vector.broadcast %33 : vector<4x1x8xf32> to vector<4x8x8xf32>
    %35 = arith.subf %31, %34 : vector<4x8x8xf32>
    %36 = math.exp %35 : vector<4x8x8xf32>
    %cst_19 = arith.constant dense<0.000000e+00> : vector<4x8xf32>
    %37 = vector.multi_reduction <add>, %36, %cst_19 [1] : vector<4x8x8xf32> to vector<4x8xf32>
    %38 = vector.shape_cast %37 : vector<4x8xf32> to vector<4x1x8xf32>
    %39 = tpu.reciprocal %38 {approx = true} : vector<4x1x8xf32> -> vector<4x1x8xf32>
    %40 = vector.broadcast %39 : vector<4x1x8xf32> to vector<4x8x8xf32>
    %41 = arith.mulf %36, %40 : vector<4x8x8xf32>
    %42 = arith.truncf %41 : vector<4x8x8xf32> to vector<4x8x8xbf16>
    "tpu.trace_start"() <{level = 10 : i32, message = "hdk,hkq->hdq"}> : () -> ()
    %cst_20 = arith.constant dense<0.000000e+00> : vector<4x8x8xf32>
    %43 = tpu.matmul %19, %42, %cst_20 {dimension_numbers = #tpu.dot_dimension_numbers<[2], [1], [1], [2], [0, 0, 0, 1, 1, 2], [0], [0]>} : vector<4x8x8xbf16>, vector<4x8x8xbf16>, vector<4x8x8xf32> -> vector<4x8x8xf32>
    "tpu.trace_stop"() : () -> ()
    %44 = vector.shape_cast %43 : vector<4x8x8xf32> to vector<32x8xf32>
    %45 = arith.truncf %44 : vector<32x8xf32> to vector<32x8xbf16>
    %cst_21 = arith.constant dense<0.000000e+00> : vector<32x8xf32>
    %46 = tpu.matmul %13, %45, %cst_21 {dimension_numbers = #tpu.dot_dimension_numbers<[1], [0], [0], [1], [0, 0, 1, 1], [], []>} : vector<32x32xbf16>, vector<32x8xbf16>, vector<32x8xf32> -> vector<32x8xf32>
    %47 = vector.broadcast %14 : vector<32x1xf32> to vector<32x8xf32>
    %48 = arith.addf %46, %47 : vector<32x8xf32>
    %49 = arith.addf %4, %48 : vector<32x8xf32>
    %c0_22 = arith.constant 0 : index
    %c0_23 = arith.constant 0 : index
    %50 = vector.load %arg13[%c0_22, %c0_23] : memref<32x1xf32, #tpu.memory_space<vmem>>, vector<32x1xf32>
    %c0_24 = arith.constant 0 : index
    %c0_25 = arith.constant 0 : index
    %51 = vector.load %arg14[%c0_24, %c0_25] : memref<32x1xf32, #tpu.memory_space<vmem>>, vector<32x1xf32>
    %cst_26 = arith.constant dense<0.000000e+00> : vector<8xf32>
    %52 = vector.multi_reduction <add>, %49, %cst_26 [0] : vector<32x8xf32> to vector<8xf32>
    %53 = vector.shape_cast %52 : vector<8xf32> to vector<1x8xf32>
    %cst_27 = arith.constant 3.125000e-02 : f32
    %54 = vector.broadcast %cst_27 : f32 to vector<1x8xf32>
    %55 = arith.mulf %53, %54 : vector<1x8xf32>
    %56 = arith.mulf %49, %49 : vector<32x8xf32>
    %cst_28 = arith.constant dense<0.000000e+00> : vector<8xf32>
    %57 = vector.multi_reduction <add>, %56, %cst_28 [0] : vector<32x8xf32> to vector<8xf32>
    %58 = vector.shape_cast %57 : vector<8xf32> to vector<1x8xf32>
    %cst_29 = arith.constant 3.125000e-02 : f32
    %59 = vector.broadcast %cst_29 : f32 to vector<1x8xf32>
    %60 = arith.mulf %58, %59 : vector<1x8xf32>
    %61 = arith.mulf %55, %55 : vector<1x8xf32>
    %62 = arith.subf %60, %61 : vector<1x8xf32>
    %63 = vector.broadcast %55 : vector<1x8xf32> to vector<32x8xf32>
    %64 = arith.subf %49, %63 : vector<32x8xf32>
    %cst_30 = arith.constant 9.99999974E-6 : f32
    %65 = vector.broadcast %cst_30 : f32 to vector<1x8xf32>
    %66 = arith.addf %62, %65 : vector<1x8xf32>
    %67 = math.rsqrt %66 : vector<1x8xf32>
    %68 = vector.broadcast %67 : vector<1x8xf32> to vector<32x8xf32>
    %69 = arith.mulf %64, %68 : vector<32x8xf32>
    %70 = vector.broadcast %50 : vector<32x1xf32> to vector<32x8xf32>
    %71 = arith.mulf %69, %70 : vector<32x8xf32>
    %72 = vector.broadcast %51 : vector<32x1xf32> to vector<32x8xf32>
    %73 = arith.addf %71, %72 : vector<32x8xf32>
    %c0_31 = arith.constant 0 : index
    %c0_32 = arith.constant 0 : index
    %74 = vector.load %arg15[%c0_31, %c0_32] : memref<32x32xbf16, #tpu.memory_space<vmem>>, vector<32x32xbf16>
    %75 = arith.truncf %73 : vector<32x8xf32> to vector<32x8xbf16>
    %cst_33 = arith.constant dense<0.000000e+00> : vector<32x8xf32>
    %76 = tpu.matmul %74, %75, %cst_33 {dimension_numbers = #tpu.dot_dimension_numbers<[1], [0], [0], [1], [0, 0, 1, 1], [], []>} : vector<32x32xbf16>, vector<32x8xbf16>, vector<32x8xf32> -> vector<32x8xf32>
    %c0_34 = arith.constant 0 : index
    %c0_35 = arith.constant 0 : index
    %77 = vector.load %arg16[%c0_34, %c0_35] : memref<32x1xf32, #tpu.memory_space<vmem>>, vector<32x1xf32>
    %78 = vector.broadcast %77 : vector<32x1xf32> to vector<32x8xf32>
    %79 = arith.addf %76, %78 : vector<32x8xf32>
    %c0_36 = arith.constant 0 : index
    %c0_37 = arith.constant 0 : index
    %80 = vector.load %arg34[%c0_36, %c0_37] : memref<32x16xbf16, #tpu.memory_space<vmem>>, vector<32x16xbf16>
    %c0_38 = arith.constant 0 : index
    %c0_39 = arith.constant 0 : index
    %81 = vector.load %arg35[%c0_38, %c0_39] : memref<32x16xbf16, #tpu.memory_space<vmem>>, vector<32x16xbf16>
    %c0_40 = arith.constant 0 : index
    %c0_41 = arith.constant 0 : index
    %82 = vector.load %arg21[%c0_40, %c0_41] : memref<32x32xbf16, #tpu.memory_space<vmem>>, vector<32x32xbf16>
    %c0_42 = arith.constant 0 : index
    %c0_43 = arith.constant 0 : index
    %83 = vector.load %arg22[%c0_42, %c0_43] : memref<32x1xf32, #tpu.memory_space<vmem>>, vector<32x1xf32>
    %84 = arith.truncf %79 : vector<32x8xf32> to vector<32x8xbf16>
    %85 = vector.shape_cast %84 : vector<32x8xbf16> to vector<4x8x8xbf16>
    %86 = vector.shape_cast %80 : vector<32x16xbf16> to vector<4x8x16xbf16>
    %87 = vector.shape_cast %81 : vector<32x16xbf16> to vector<4x8x16xbf16>
    "tpu.trace_start"() <{level = 10 : i32, message = "hdk,hdq->hkq"}> : () -> ()
    %cst_44 = arith.constant dense<0.000000e+00> : vector<4x16x8xf32>
    %88 = tpu.matmul %86, %85, %cst_44 {dimension_numbers = #tpu.dot_dimension_numbers<[1], [1], [2], [2], [0, 0, 0, 2, 1, 2], [0], [0]>} : vector<4x8x16xbf16>, vector<4x8x8xbf16>, vector<4x16x8xf32> -> vector<4x16x8xf32>
    "tpu.trace_stop"() : () -> ()
    %cst_45 = arith.constant dense<0xFF800000> : vector<4x8xf32>
    %89 = vector.multi_reduction <maximumf>, %88, %cst_45 [1] : vector<4x16x8xf32> to vector<4x8xf32>
    %90 = vector.shape_cast %89 : vector<4x8xf32> to vector<4x1x8xf32>
    %91 = vector.broadcast %90 : vector<4x1x8xf32> to vector<4x16x8xf32>
    %92 = arith.subf %88, %91 : vector<4x16x8xf32>
    %93 = math.exp %92 : vector<4x16x8xf32>
    %cst_46 = arith.constant dense<0.000000e+00> : vector<4x8xf32>
    %94 = vector.multi_reduction <add>, %93, %cst_46 [1] : vector<4x16x8xf32> to vector<4x8xf32>
    %95 = vector.shape_cast %94 : vector<4x8xf32> to vector<4x1x8xf32>
    %96 = tpu.reciprocal %95 {approx = true} : vector<4x1x8xf32> -> vector<4x1x8xf32>
    %97 = vector.broadcast %96 : vector<4x1x8xf32> to vector<4x16x8xf32>
    %98 = arith.mulf %93, %97 : vector<4x16x8xf32>
    %99 = arith.truncf %98 : vector<4x16x8xf32> to vector<4x16x8xbf16>
    "tpu.trace_start"() <{level = 10 : i32, message = "hdk,hkq->hdq"}> : () -> ()
    %cst_47 = arith.constant dense<0.000000e+00> : vector<4x8x8xf32>
    %100 = tpu.matmul %87, %99, %cst_47 {dimension_numbers = #tpu.dot_dimension_numbers<[2], [1], [1], [2], [0, 0, 0, 1, 1, 2], [0], [0]>} : vector<4x8x16xbf16>, vector<4x16x8xbf16>, vector<4x8x8xf32> -> vector<4x8x8xf32>
    "tpu.trace_stop"() : () -> ()
    %101 = vector.shape_cast %100 : vector<4x8x8xf32> to vector<32x8xf32>
    %102 = arith.truncf %101 : vector<32x8xf32> to vector<32x8xbf16>
    %cst_48 = arith.constant dense<0.000000e+00> : vector<32x8xf32>
    %103 = tpu.matmul %82, %102, %cst_48 {dimension_numbers = #tpu.dot_dimension_numbers<[1], [0], [0], [1], [0, 0, 1, 1], [], []>} : vector<32x32xbf16>, vector<32x8xbf16>, vector<32x8xf32> -> vector<32x8xf32>
    %104 = vector.broadcast %83 : vector<32x1xf32> to vector<32x8xf32>
    %105 = arith.addf %103, %104 : vector<32x8xf32>
    %106 = arith.addf %73, %105 : vector<32x8xf32>
    %c0_49 = arith.constant 0 : index
    %c0_50 = arith.constant 0 : index
    %107 = vector.load %arg23[%c0_49, %c0_50] : memref<32x1xf32, #tpu.memory_space<vmem>>, vector<32x1xf32>
    %c0_51 = arith.constant 0 : index
    %c0_52 = arith.constant 0 : index
    %108 = vector.load %arg24[%c0_51, %c0_52] : memref<32x1xf32, #tpu.memory_space<vmem>>, vector<32x1xf32>
    %cst_53 = arith.constant dense<0.000000e+00> : vector<8xf32>
    %109 = vector.multi_reduction <add>, %106, %cst_53 [0] : vector<32x8xf32> to vector<8xf32>
    %110 = vector.shape_cast %109 : vector<8xf32> to vector<1x8xf32>
    %cst_54 = arith.constant 3.125000e-02 : f32
    %111 = vector.broadcast %cst_54 : f32 to vector<1x8xf32>
    %112 = arith.mulf %110, %111 : vector<1x8xf32>
    %113 = arith.mulf %106, %106 : vector<32x8xf32>
    %cst_55 = arith.constant dense<0.000000e+00> : vector<8xf32>
    %114 = vector.multi_reduction <add>, %113, %cst_55 [0] : vector<32x8xf32> to vector<8xf32>
    %115 = vector.shape_cast %114 : vector<8xf32> to vector<1x8xf32>
    %cst_56 = arith.constant 3.125000e-02 : f32
    %116 = vector.broadcast %cst_56 : f32 to vector<1x8xf32>
    %117 = arith.mulf %115, %116 : vector<1x8xf32>
    %118 = arith.mulf %112, %112 : vector<1x8xf32>
    %119 = arith.subf %117, %118 : vector<1x8xf32>
    %120 = vector.broadcast %112 : vector<1x8xf32> to vector<32x8xf32>
    %121 = arith.subf %106, %120 : vector<32x8xf32>
    %cst_57 = arith.constant 9.99999974E-6 : f32
    %122 = vector.broadcast %cst_57 : f32 to vector<1x8xf32>
    %123 = arith.addf %119, %122 : vector<1x8xf32>
    %124 = math.rsqrt %123 : vector<1x8xf32>
    %125 = vector.broadcast %124 : vector<1x8xf32> to vector<32x8xf32>
    %126 = arith.mulf %121, %125 : vector<32x8xf32>
    %127 = vector.broadcast %107 : vector<32x1xf32> to vector<32x8xf32>
    %128 = arith.mulf %126, %127 : vector<32x8xf32>
    %129 = vector.broadcast %108 : vector<32x1xf32> to vector<32x8xf32>
    %130 = arith.addf %128, %129 : vector<32x8xf32>
    %c0_58 = arith.constant 0 : index
    %c0_59 = arith.constant 0 : index
    %131 = vector.load %arg25[%c0_58, %c0_59] : memref<64x32xbf16, #tpu.memory_space<vmem>>, vector<64x32xbf16>
    %132 = arith.truncf %130 : vector<32x8xf32> to vector<32x8xbf16>
    %cst_60 = arith.constant dense<0.000000e+00> : vector<64x8xf32>
    %133 = tpu.matmul %131, %132, %cst_60 {dimension_numbers = #tpu.dot_dimension_numbers<[1], [0], [0], [1], [0, 0, 1, 1], [], []>} : vector<64x32xbf16>, vector<32x8xbf16>, vector<64x8xf32> -> vector<64x8xf32>
    %c0_61 = arith.constant 0 : index
    %c0_62 = arith.constant 0 : index
    %134 = vector.load %arg26[%c0_61, %c0_62] : memref<64x1xf32, #tpu.memory_space<vmem>>, vector<64x1xf32>
    %135 = vector.broadcast %134 : vector<64x1xf32> to vector<64x8xf32>
    %136 = arith.addf %133, %135 : vector<64x8xf32>
    %cst_63 = arith.constant 5.000000e-01 : f32
    %137 = vector.broadcast %cst_63 : f32 to vector<64x8xf32>
    %138 = arith.mulf %137, %136 : vector<64x8xf32>
    %cst_64 = arith.constant 4.471500e-02 : f32
    %139 = vector.broadcast %cst_64 : f32 to vector<64x8xf32>
    %140 = arith.mulf %139, %136 : vector<64x8xf32>
    %141 = arith.mulf %140, %136 : vector<64x8xf32>
    %142 = arith.mulf %141, %136 : vector<64x8xf32>
    %143 = arith.addf %136, %142 : vector<64x8xf32>
    %cst_65 = arith.constant 0.797884583 : f32
    %144 = vector.broadcast %cst_65 : f32 to vector<64x8xf32>
    %145 = arith.mulf %144, %143 : vector<64x8xf32>
    %146 = math.tanh %145 : vector<64x8xf32>
    %cst_66 = arith.constant 1.000000e+00 : f32
    %147 = vector.broadcast %cst_66 : f32 to vector<64x8xf32>
    %148 = arith.addf %147, %146 : vector<64x8xf32>
    %149 = arith.mulf %138, %148 : vector<64x8xf32>
    %c0_67 = arith.constant 0 : index
    %c0_68 = arith.constant 0 : index
    %150 = vector.load %arg27[%c0_67, %c0_68] : memref<32x64xbf16, #tpu.memory_space<vmem>>, vector<32x64xbf16>
    %151 = arith.truncf %149 : vector<64x8xf32> to vector<64x8xbf16>
    %cst_69 = arith.constant dense<0.000000e+00> : vector<32x8xf32>
    %152 = tpu.matmul %150, %151, %cst_69 {dimension_numbers = #tpu.dot_dimension_numbers<[1], [0], [0], [1], [0, 0, 1, 1], [], []>} : vector<32x64xbf16>, vector<64x8xbf16>, vector<32x8xf32> -> vector<32x8xf32>
    %c0_70 = arith.constant 0 : index
    %c0_71 = arith.constant 0 : index
    %153 = vector.load %arg28[%c0_70, %c0_71] : memref<32x1xf32, #tpu.memory_space<vmem>>, vector<32x1xf32>
    %154 = vector.broadcast %153 : vector<32x1xf32> to vector<32x8xf32>
    %155 = arith.addf %152, %154 : vector<32x8xf32>
    %156 = arith.addf %130, %155 : vector<32x8xf32>
    %c0_72 = arith.constant 0 : index
    %c0_73 = arith.constant 0 : index
    %157 = vector.load %arg29[%c0_72, %c0_73] : memref<32x1xf32, #tpu.memory_space<vmem>>, vector<32x1xf32>
    %c0_74 = arith.constant 0 : index
    %c0_75 = arith.constant 0 : index
    %158 = vector.load %arg30[%c0_74, %c0_75] : memref<32x1xf32, #tpu.memory_space<vmem>>, vector<32x1xf32>
    %cst_76 = arith.constant dense<0.000000e+00> : vector<8xf32>
    %159 = vector.multi_reduction <add>, %156, %cst_76 [0] : vector<32x8xf32> to vector<8xf32>
    %160 = vector.shape_cast %159 : vector<8xf32> to vector<1x8xf32>
    %cst_77 = arith.constant 3.125000e-02 : f32
    %161 = vector.broadcast %cst_77 : f32 to vector<1x8xf32>
    %162 = arith.mulf %160, %161 : vector<1x8xf32>
    %163 = arith.mulf %156, %156 : vector<32x8xf32>
    %cst_78 = arith.constant dense<0.000000e+00> : vector<8xf32>
    %164 = vector.multi_reduction <add>, %163, %cst_78 [0] : vector<32x8xf32> to vector<8xf32>
    %165 = vector.shape_cast %164 : vector<8xf32> to vector<1x8xf32>
    %cst_79 = arith.constant 3.125000e-02 : f32
    %166 = vector.broadcast %cst_79 : f32 to vector<1x8xf32>
    %167 = arith.mulf %165, %166 : vector<1x8xf32>
    %168 = arith.mulf %162, %162 : vector<1x8xf32>
    %169 = arith.subf %167, %168 : vector<1x8xf32>
    %170 = vector.broadcast %162 : vector<1x8xf32> to vector<32x8xf32>
    %171 = arith.subf %156, %170 : vector<32x8xf32>
    %cst_80 = arith.constant 9.99999974E-6 : f32
    %172 = vector.broadcast %cst_80 : f32 to vector<1x8xf32>
    %173 = arith.addf %169, %172 : vector<1x8xf32>
    %174 = math.rsqrt %173 : vector<1x8xf32>
    %175 = vector.broadcast %174 : vector<1x8xf32> to vector<32x8xf32>
    %176 = arith.mulf %171, %175 : vector<32x8xf32>
    %177 = vector.broadcast %157 : vector<32x1xf32> to vector<32x8xf32>
    %178 = arith.mulf %176, %177 : vector<32x8xf32>
    %179 = vector.broadcast %158 : vector<32x1xf32> to vector<32x8xf32>
    %180 = arith.addf %178, %179 : vector<32x8xf32>
    %c0_81 = arith.constant 0 : index
    %c0_82 = arith.constant 0 : index
    %c0_83 = arith.constant 0 : index
    %181 = vector.load %arg31[%c0_81, %c0_82, %c0_83] : memref<1x32x8xf32, #tpu.memory_space<vmem>>, vector<1x32x8xf32>
    %182 = vector.shape_cast %181 : vector<1x32x8xf32> to vector<32x8xf32>
    %183 = vector.shape_cast %180 : vector<32x8xf32> to vector<1x32x8xf32>
    tpu.vector_store %arg31[%c0_81, %c0_82, %c0_83], %183 {strides = array<i32>} : memref<1x32x8xf32, #tpu.memory_space<vmem>>, vector<1x32x8xf32>,
    return
  }
  func.func @transform_0(%arg0: i32, %arg1: i32) -> (i32, i32, i32) {
    %c0_i32 = arith.constant 0 : i32
    %c0_i32_0 = arith.constant 0 : i32
    return %arg0, %c0_i32, %arg1 : i32, i32, i32
  }
  func.func @transform_1(%arg0: i32, %arg1: i32) -> (i32, i32, i32) {
    %c0_i32 = arith.constant 0 : i32
    %c0_i32_0 = arith.constant 0 : i32
    %c0_i32_1 = arith.constant 0 : i32
    return %arg0, %c0_i32, %c0_i32_0 : i32, i32, i32
  }
  func.func @transform_2(%arg0: i32, %arg1: i32) -> (i32, i32, i32) {
    %c0_i32 = arith.constant 0 : i32
    %c0_i32_0 = arith.constant 0 : i32
    %c0_i32_1 = arith.constant 0 : i32
    return %arg0, %c0_i32, %c0_i32_0 : i32, i32, i32
  }
  func.func @transform_3(%arg0: i32, %arg1: i32) -> (i32, i32) {
    %c0_i32 = arith.constant 0 : i32
    %c0_i32_0 = arith.constant 0 : i32
    %c0_i32_1 = arith.constant 0 : i32
    return %c0_i32, %c0_i32_0 : i32, i32
  }
  func.func @transform_4(%arg0: i32, %arg1: i32) -> (i32, i32) {
    %c0_i32 = arith.constant 0 : i32
    %c0_i32_0 = arith.constant 0 : i32
    %c0_i32_1 = arith.constant 0 : i32
    return %c0_i32, %c0_i32_0 : i32, i32
  }
  func.func @transform_5(%arg0: i32, %arg1: i32) -> (i32, i32) {
    %c0_i32 = arith.constant 0 : i32
    %c0_i32_0 = arith.constant 0 : i32
    %c0_i32_1 = arith.constant 0 : i32
    return %c0_i32, %c0_i32_0 : i32, i32
  }
  func.func @transform_6(%arg0: i32, %arg1: i32) -> (i32, i32) {
    %c0_i32 = arith.constant 0 : i32
    %c0_i32_0 = arith.constant 0 : i32
    %c0_i32_1 = arith.constant 0 : i32
    return %c0_i32, %c0_i32_0 : i32, i32
  }
  func.func @transform_7(%arg0: i32, %arg1: i32) -> (i32, i32) {
    %c0_i32 = arith.constant 0 : i32
    %c0_i32_0 = arith.constant 0 : i32
    %c0_i32_1 = arith.constant 0 : i32
    return %c0_i32, %c0_i32_0 : i32, i32
  }
  func.func @transform_8(%arg0: i32, %arg1: i32) -> (i32, i32) {
    %c0_i32 = arith.constant 0 : i32
    %c0_i32_0 = arith.constant 0 : i32
    %c0_i32_1 = arith.constant 0 : i32
    return %c0_i32, %c0_i32_0 : i32, i32
  }
  func.func @transform_9(%arg0: i32, %arg1: i32) -> (i32, i32) {
    %c0_i32 = arith.constant 0 : i32
    %c0_i32_0 = arith.constant 0 : i32
    %c0_i32_1 = arith.constant 0 : i32
    return %c0_i32, %c0_i32_0 : i32, i32
  }
  func.func @transform_10(%arg0: i32, %arg1: i32) -> (i32, i32) {
    %c0_i32 = arith.constant 0 : i32
    %c0_i32_0 = arith.constant 0 : i32
    %c0_i32_1 = arith.constant 0 : i32
    return %c0_i32, %c0_i32_0 : i32, i32
  }
  func.func @transform_11(%arg0: i32, %arg1: i32) -> (i32, i32) {
    %c0_i32 = arith.constant 0 : i32
    %c0_i32_0 = arith.constant 0 : i32
    %c0_i32_1 = arith.constant 0 : i32
    return %c0_i32, %c0_i32_0 : i32, i32
  }
  func.func @transform_12(%arg0: i32, %arg1: i32) -> (i32, i32) {
    %c0_i32 = arith.constant 0 : i32
    %c0_i32_0 = arith.constant 0 : i32
    %c0_i32_1 = arith.constant 0 : i32
    return %c0_i32, %c0_i32_0 : i32, i32
  }
  func.func @transform_13(%arg0: i32, %arg1: i32) -> (i32, i32) {
    %c0_i32 = arith.constant 0 : i32
    %c0_i32_0 = arith.constant 0 : i32
    %c0_i32_1 = arith.constant 0 : i32
    return %c0_i32, %c0_i32_0 : i32, i32
  }
  func.func @transform_14(%arg0: i32, %arg1: i32) -> (i32, i32) {
    %c0_i32 = arith.constant 0 : i32
    %c0_i32_0 = arith.constant 0 : i32
    %c0_i32_1 = arith.constant 0 : i32
    return %c0_i32, %c0_i32_0 : i32, i32
  }
  func.func @transform_15(%arg0: i32, %arg1: i32) -> (i32, i32) {
    %c0_i32 = arith.constant 0 : i32
    %c0_i32_0 = arith.constant 0 : i32
    %c0_i32_1 = arith.constant 0 : i32
    return %c0_i32, %c0_i32_0 : i32, i32
  }
  func.func @transform_16(%arg0: i32, %arg1: i32) -> (i32, i32) {
    %c0_i32 = arith.constant 0 : i32
    %c0_i32_0 = arith.constant 0 : i32
    %c0_i32_1 = arith.constant 0 : i32
    return %c0_i32, %c0_i32_0 : i32, i32
  }
  func.func @transform_17(%arg0: i32, %arg1: i32) -> (i32, i32) {
    %c0_i32 = arith.constant 0 : i32
    %c0_i32_0 = arith.constant 0 : i32
    %c0_i32_1 = arith.constant 0 : i32
    return %c0_i32, %c0_i32_0 : i32, i32
  }
  func.func @transform_18(%arg0: i32, %arg1: i32) -> (i32, i32) {
    %c0_i32 = arith.constant 0 : i32
    %c0_i32_0 = arith.constant 0 : i32
    %c0_i32_1 = arith.constant 0 : i32
    return %c0_i32, %c0_i32_0 : i32, i32
  }
  func.func @transform_19(%arg0: i32, %arg1: i32) -> (i32, i32) {
    %c0_i32 = arith.constant 0 : i32
    %c0_i32_0 = arith.constant 0 : i32
    %c0_i32_1 = arith.constant 0 : i32
    return %c0_i32, %c0_i32_0 : i32, i32
  }
  func.func @transform_20(%arg0: i32, %arg1: i32) -> (i32, i32) {
    %c0_i32 = arith.constant 0 : i32
    %c0_i32_0 = arith.constant 0 : i32
    %c0_i32_1 = arith.constant 0 : i32
    return %c0_i32, %c0_i32_0 : i32, i32
  }
  func.func @transform_21(%arg0: i32, %arg1: i32) -> (i32, i32) {
    %c0_i32 = arith.constant 0 : i32
    %c0_i32_0 = arith.constant 0 : i32
    %c0_i32_1 = arith.constant 0 : i32
    return %c0_i32, %c0_i32_0 : i32, i32
  }
  func.func @transform_22(%arg0: i32, %arg1: i32) -> (i32, i32) {
    %c0_i32 = arith.constant 0 : i32
    %c0_i32_0 = arith.constant 0 : i32
    %c0_i32_1 = arith.constant 0 : i32
    return %c0_i32, %c0_i32_0 : i32, i32
  }
  func.func @transform_23(%arg0: i32, %arg1: i32) -> (i32, i32) {
    %c0_i32 = arith.constant 0 : i32
    %c0_i32_0 = arith.constant 0 : i32
    %c0_i32_1 = arith.constant 0 : i32
    return %c0_i32, %c0_i32_0 : i32, i32
  }
  func.func @transform_24(%arg0: i32, %arg1: i32) -> (i32, i32) {
    %c0_i32 = arith.constant 0 : i32
    %c0_i32_0 = arith.constant 0 : i32
    %c0_i32_1 = arith.constant 0 : i32
    return %c0_i32, %c0_i32_0 : i32, i32
  }
  func.func @transform_25(%arg0: i32, %arg1: i32) -> (i32, i32) {
    %c0_i32 = arith.constant 0 : i32
    %c0_i32_0 = arith.constant 0 : i32
    %c0_i32_1 = arith.constant 0 : i32
    return %c0_i32, %c0_i32_0 : i32, i32
  }
  func.func @transform_26(%arg0: i32, %arg1: i32) -> (i32, i32) {
    %c0_i32 = arith.constant 0 : i32
    %c0_i32_0 = arith.constant 0 : i32
    %c0_i32_1 = arith.constant 0 : i32
    return %c0_i32, %c0_i32_0 : i32, i32
  }
  func.func @transform_27(%arg0: i32, %arg1: i32) -> (i32, i32) {
    %c0_i32 = arith.constant 0 : i32
    %c0_i32_0 = arith.constant 0 : i32
    %c0_i32_1 = arith.constant 0 : i32
    return %c0_i32, %c0_i32_0 : i32, i32
  }
  func.func @transform_28(%arg0: i32, %arg1: i32) -> (i32, i32) {
    %c0_i32 = arith.constant 0 : i32
    %c0_i32_0 = arith.constant 0 : i32
    %c0_i32_1 = arith.constant 0 : i32
    return %c0_i32, %c0_i32_0 : i32, i32
  }
  func.func @transform_29(%arg0: i32, %arg1: i32) -> (i32, i32, i32) {
    %c0_i32 = arith.constant 0 : i32
    %c0_i32_0 = arith.constant 0 : i32
    return %arg0, %c0_i32, %arg1 : i32, i32, i32
  }
}

module attributes {stable_mosaic.version = 11 : i64} {
  func.func @decoder_layer_kernel(%arg0: i32, %arg1: i32, %arg2: memref<1x32x8xf32, #tpu.memory_space<vmem>>, %arg3: memref<1x32x8xf32, #tpu.memory_space<vmem>>, %arg4: memref<1x32x16xf32, #tpu.memory_space<vmem>>, %arg5: memref<32x32xbf16, #tpu.memory_space<vmem>>, %arg6: memref<32x1xf32, #tpu.memory_space<vmem>>, %arg7: memref<32x32xbf16, #tpu.memory_space<vmem>>, %arg8: memref<32x1xf32, #tpu.memory_space<vmem>>, %arg9: memref<32x32xbf16, #tpu.memory_space<vmem>>, %arg10: memref<32x1xf32, #tpu.memory_space<vmem>>, %arg11: memref<32x32xbf16, #tpu.memory_space<vmem>>, %arg12: memref<32x1xf32, #tpu.memory_space<vmem>>, %arg13: memref<32x1xf32, #tpu.memory_space<vmem>>, %arg14: memref<32x1xf32, #tpu.memory_space<vmem>>, %arg15: memref<32x32xbf16, #tpu.memory_space<vmem>>, %arg16: memref<32x1xf32, #tpu.memory_space<vmem>>, %arg17: memref<32x32xbf16, #tpu.memory_space<vmem>>, %arg18: memref<32x1xf32, #tpu.memory_space<vmem>>, %arg19: memref<32x32xbf16, #tpu.memory_space<vmem>>, %arg20: memref<32x1xf32, #tpu.memory_space<vmem>>, %arg21: memref<32x32xbf16, #tpu.memory_space<vmem>>, %arg22: memref<32x1xf32, #tpu.memory_space<vmem>>, %arg23: memref<32x1xf32, #tpu.memory_space<vmem>>, %arg24: memref<32x1xf32, #tpu.memory_space<vmem>>, %arg25: memref<64x32xbf16, #tpu.memory_space<vmem>>, %arg26: memref<64x1xf32, #tpu.memory_space<vmem>>, %arg27: memref<32x64xbf16, #tpu.memory_space<vmem>>, %arg28: memref<32x1xf32, #tpu.memory_space<vmem>>, %arg29: memref<32x1xf32, #tpu.memory_space<vmem>>, %arg30: memref<32x1xf32, #tpu.memory_space<vmem>>, %arg31: memref<1x32x8xf32, #tpu.memory_space<vmem>>, %arg32: memref<32x8xbf16, #tpu.memory_space<vmem>>, %arg33: memref<32x8xbf16, #tpu.memory_space<vmem>>, %arg34: memref<32x16xbf16, #tpu.memory_space<vmem>>, %arg35: memref<32x16xbf16, #tpu.memory_space<vmem>>) attributes {dimension_semantics = [#tpu.dimension_semantics<parallel>, #tpu.dimension_semantics<arbitrary>], iteration_bounds = array<i64: 2, 1>, scalar_prefetch = 0 : i64, scratch_operands = 4 : i64, tpu.core_type = #tpu.core_type<tc>, window_params = [{transform_indices = @transform_0, window_bounds = array<i64: 1, 32, 8>}, {transform_indices = @transform_1, window_bounds = array<i64: 1, 32, 8>}, {transform_indices = @transform_2, window_bounds = array<i64: 1, 32, 16>}, {pipeline_mode = #tpu.pipeline_mode<synchronous>, transform_indices = @transform_3, window_bounds = array<i64: 32, 32>}, {pipeline_mode = #tpu.pipeline_mode<synchronous>, transform_indices = @transform_4, window_bounds = array<i64: 32, 1>}, {pipeline_mode = #tpu.pipeline_mode<synchronous>, transform_indices = @transform_5, window_bounds = array<i64: 32, 32>}, {pipeline_mode = #tpu.pipeline_mode<synchronous>, transform_indices = @transform_6, window_bounds = array<i64: 32, 1>}, {pipeline_mode = #tpu.pipeline_mode<synchronous>, transform_indices = @transform_7, window_bounds = array<i64: 32, 32>}, {pipeline_mode = #tpu.pipeline_mode<synchronous>, transform_indices = @transform_8, window_bounds = array<i64: 32, 1>}, {pipeline_mode = #tpu.pipeline_mode<synchronous>, transform_indices = @transform_9, window_bounds = array<i64: 32, 32>}, {pipeline_mode = #tpu.pipeline_mode<synchronous>, transform_indices = @transform_10, window_bounds = array<i64: 32, 1>}, {pipeline_mode = #tpu.pipeline_mode<synchronous>, transform_indices = @transform_11, window_bounds = array<i64: 32, 1>}, {pipeline_mode = #tpu.pipeline_mode<synchronous>, transform_indices = @transform_12, window_bounds = array<i64: 32, 1>}, {pipeline_mode = #tpu.pipeline_mode<synchronous>, transform_indices = @transform_13, window_bounds = array<i64: 32, 32>}, {pipeline_mode = #tpu.pipeline_mode<synchronous>, transform_indices = @transform_14, window_bounds = array<i64: 32, 1>}, {pipeline_mode = #tpu.pipeline_mode<synchronous>, transform_indices = @transform_15, window_bounds = array<i64: 32, 32>}, {pipeline_mode = #tpu.pipeline_mode<synchronous>, transform_indices = @transform_16, window_bounds = array<i64: 32, 1>}, {pipeline_mode = #tpu.pipeline_mode<synchronous>, transform_indices = @transform_17, window_bounds = array<i64: 32, 32>}, {pipeline_mode = #tpu.pipeline_mode<synchronous>, transform_indices = @transform_18, window_bounds = array<i64: 32, 1>}, {pipeline_mode = #tpu.pipeline_mode<synchronous>, transform_indices = @transform_19, window_bounds = array<i64: 32, 32>}, {pipeline_mode = #tpu.pipeline_mode<synchronous>, transform_indices = @transform_20, window_bounds = array<i64: 32, 1>}, {pipeline_mode = #tpu.pipeline_mode<synchronous>, transform_indices = @transform_21, window_bounds = array<i64: 32, 1>}, {pipeline_mode = #tpu.pipeline_mode<synchronous>, transform_indices = @transform_22, window_bounds = array<i64: 32, 1>}, {pipeline_mode = #tpu.pipeline_mode<synchronous>, transform_indices = @transform_23, window_bounds = array<i64: 64, 32>}, {pipeline_mode = #tpu.pipeline_mode<synchronous>, transform_indices = @transform_24, window_bounds = array<i64: 64, 1>}, {pipeline_mode = #tpu.pipeline_mode<synchronous>, transform_indices = @transform_25, window_bounds = array<i64: 32, 64>}, {pipeline_mode = #tpu.pipeline_mode<synchronous>, transform_indices = @transform_26, window_bounds = array<i64: 32, 1>}, {pipeline_mode = #tpu.pipeline_mode<synchronous>, transform_indices = @transform_27, window_bounds = array<i64: 32, 1>}, {pipeline_mode = #tpu.pipeline_mode<synchronous>, transform_indices = @transform_28, window_bounds = array<i64: 32, 1>}, {transform_indices = @transform_29, window_bounds = array<i64: 1, 32, 8>}]} {
    %c0_i32 = arith.constant 0 : i32
    %0 = arith.cmpi eq, %arg1, %c0_i32 : i32
    %1 = arith.extui %0 : i1 to i32
    %c0_i32_0 = arith.constant 0 : i32
    %2 = arith.cmpi ne, %1, %c0_i32_0 : i32
    scf.if %2 {
      %c0_84 = arith.constant 0 : index
      %c0_85 = arith.constant 0 : index
      %c0_86 = arith.constant 0 : index
      %186 = vector.load %arg3[%c0_84, %c0_85, %c0_86] : memref<1x32x8xf32, #tpu.memory_space<vmem>>, vector<1x32x8xf32>
      %187 = vector.shape_cast %186 : vector<1x32x8xf32> to vector<32x8xf32>
      %188 = arith.truncf %187 : vector<32x8xf32> to vector<32x8xbf16>
      %c0_87 = arith.constant 0 : index
      %c0_88 = arith.constant 0 : index
      %189 = vector.load %arg7[%c0_87, %c0_88] : memref<32x32xbf16, #tpu.memory_space<vmem>>, vector<32x32xbf16>
      %cst_89 = arith.constant dense<0.000000e+00> : vector<32x8xf32>
      %190 = tpu.matmul %189, %188, %cst_89 {dimension_numbers = #tpu.dot_dimension_numbers<[1], [0], [0], [1], [0, 0, 1, 1], [], []>} : vector<32x32xbf16>, vector<32x8xbf16>, vector<32x8xf32> -> vector<32x8xf32>
      %c0_90 = arith.constant 0 : index
      %c0_91 = arith.constant 0 : index
      %191 = vector.load %arg8[%c0_90, %c0_91] : memref<32x1xf32, #tpu.memory_space<vmem>>, vector<32x1xf32>
      %192 = vector.broadcast %191 : vector<32x1xf32> to vector<32x8xf32>
      %193 = arith.addf %190, %192 : vector<32x8xf32>
      %194 = arith.truncf %193 : vector<32x8xf32> to vector<32x8xbf16>
      %c0_92 = arith.constant 0 : index
      %c0_93 = arith.constant 0 : index
      %195 = vector.load %arg32[%c0_92, %c0_93] : memref<32x8xbf16, #tpu.memory_space<vmem>>, vector<32x8xbf16>
      tpu.vector_store %arg32[%c0_92, %c0_93], %194 {strides = array<i32>} : memref<32x8xbf16, #tpu.memory_space<vmem>>, vector<32x8xbf16>,
      %c0_94 = arith.constant 0 : index
      %c0_95 = arith.constant 0 : index
      %196 = vector.load %arg9[%c0_94, %c0_95] : memref<32x32xbf16, #tpu.memory_space<vmem>>, vector<32x32xbf16>
      %cst_96 = arith.constant dense<0.000000e+00> : vector<32x8xf32>
      %197 = tpu.matmul %196, %188, %cst_96 {dimension_numbers = #tpu.dot_dimension_numbers<[1], [0], [0], [1], [0, 0, 1, 1], [], []>} : vector<32x32xbf16>, vector<32x8xbf16>, vector<32x8xf32> -> vector<32x8xf32>
      %c0_97 = arith.constant 0 : index
      %c0_98 = arith.constant 0 : index
      %198 = vector.load %arg10[%c0_97, %c0_98] : memref<32x1xf32, #tpu.memory_space<vmem>>, vector<32x1xf32>
      %199 = vector.broadcast %198 : vector<32x1xf32> to vector<32x8xf32>
      %200 = arith.addf %197, %199 : vector<32x8xf32>
      %201 = arith.truncf %200 : vector<32x8xf32> to vector<32x8xbf16>
      %c0_99 = arith.constant 0 : index
      %c0_100 = arith.constant 0 : index
      %202 = vector.load %arg33[%c0_99, %c0_100] : memref<32x8xbf16, #tpu.memory_space<vmem>>, vector<32x8xbf16>
      tpu.vector_store %arg33[%c0_99, %c0_100], %201 {strides = array<i32>} : memref<32x8xbf16, #tpu.memory_space<vmem>>, vector<32x8xbf16>,
      %c0_101 = arith.constant 0 : index
      %c0_102 = arith.constant 0 : index
      %c0_103 = arith.constant 0 : index
      %203 = vector.load %arg4[%c0_101, %c0_102, %c0_103] : memref<1x32x16xf32, #tpu.memory_space<vmem>>, vector<1x32x16xf32>
      %204 = vector.shape_cast %203 : vector<1x32x16xf32> to vector<32x16xf32>
      %205 = arith.truncf %204 : vector<32x16xf32> to vector<32x16xbf16>
      %c0_104 = arith.constant 0 : index
      %c0_105 = arith.constant 0 : index
      %206 = vector.load %arg17[%c0_104, %c0_105] : memref<32x32xbf16, #tpu.memory_space<vmem>>, vector<32x32xbf16>
      %cst_106 = arith.constant dense<0.000000e+00> : vector<32x16xf32>
      %207 = tpu.matmul %206, %205, %cst_106 {dimension_numbers = #tpu.dot_dimension_numbers<[1], [0], [0], [1], [0, 0, 1, 1], [], []>} : vector<32x32xbf16>, vector<32x16xbf16>, vector<32x16xf32> -> vector<32x16xf32>
      %c0_107 = arith.constant 0 : index
      %c0_108 = arith.constant 0 : index
      %208 = vector.load %arg18[%c0_107, %c0_108] : memref<32x1xf32, #tpu.memory_space<vmem>>, vector<32x1xf32>
      %209 = vector.broadcast %208 : vector<32x1xf32> to vector<32x16xf32>
      %210 = arith.addf %207, %209 : vector<32x16xf32>
      %211 = arith.truncf %210 : vector<32x16xf32> to vector<32x16xbf16>
      %c0_109 = arith.constant 0 : index
      %c0_110 = arith.constant 0 : index
      %212 = vector.load %arg34[%c0_109, %c0_110] : memref<32x16xbf16, #tpu.memory_space<vmem>>, vector<32x16xbf16>
      tpu.vector_store %arg34[%c0_109, %c0_110], %211 {strides = array<i32>} : memref<32x16xbf16, #tpu.memory_space<vmem>>, vector<32x16xbf16>,
      %c0_111 = arith.constant 0 : index
      %c0_112 = arith.constant 0 : index
      %213 = vector.load %arg19[%c0_111, %c0_112] : memref<32x32xbf16, #tpu.memory_space<vmem>>, vector<32x32xbf16>
      %cst_113 = arith.constant dense<0.000000e+00> : vector<32x16xf32>
      %214 = tpu.matmul %213, %205, %cst_113 {dimension_numbers = #tpu.dot_dimension_numbers<[1], [0], [0], [1], [0, 0, 1, 1], [], []>} : vector<32x32xbf16>, vector<32x16xbf16>, vector<32x16xf32> -> vector<32x16xf32>
      %c0_114 = arith.constant 0 : index
      %c0_115 = arith.constant 0 : index
      %215 = vector.load %arg20[%c0_114, %c0_115] : memref<32x1xf32, #tpu.memory_space<vmem>>, vector<32x1xf32>
      %216 = vector.broadcast %215 : vector<32x1xf32> to vector<32x16xf32>
      %217 = arith.addf %214, %216 : vector<32x16xf32>
      %218 = arith.truncf %217 : vector<32x16xf32> to vector<32x16xbf16>
      %c0_116 = arith.constant 0 : index
      %c0_117 = arith.constant 0 : index
      %219 = vector.load %arg35[%c0_116, %c0_117] : memref<32x16xbf16, #tpu.memory_space<vmem>>, vector<32x16xbf16>
      tpu.vector_store %arg35[%c0_116, %c0_117], %218 {strides = array<i32>} : memref<32x16xbf16, #tpu.memory_space<vmem>>, vector<32x16xbf16>,
    } else {
    }
    %c0 = arith.constant 0 : index
    %c0_1 = arith.constant 0 : index
    %c0_2 = arith.constant 0 : index
    %3 = vector.load %arg2[%c0, %c0_1, %c0_2] : memref<1x32x8xf32, #tpu.memory_space<vmem>>, vector<1x32x8xf32>
    %4 = vector.shape_cast %3 : vector<1x32x8xf32> to vector<32x8xf32>
    %c0_3 = arith.constant 0 : index
    %c0_4 = arith.constant 0 : index
    %5 = vector.load %arg5[%c0_3, %c0_4] : memref<32x32xbf16, #tpu.memory_space<vmem>>, vector<32x32xbf16>
    %6 = arith.truncf %4 : vector<32x8xf32> to vector<32x8xbf16>
    %cst = arith.constant dense<0.000000e+00> : vector<32x8xf32>
    %7 = tpu.matmul %5, %6, %cst {dimension_numbers = #tpu.dot_dimension_numbers<[1], [0], [0], [1], [0, 0, 1, 1], [], []>} : vector<32x32xbf16>, vector<32x8xbf16>, vector<32x8xf32> -> vector<32x8xf32>
    %c0_5 = arith.constant 0 : index
    %c0_6 = arith.constant 0 : index
    %8 = vector.load %arg6[%c0_5, %c0_6] : memref<32x1xf32, #tpu.memory_space<vmem>>, vector<32x1xf32>
    %9 = vector.broadcast %8 : vector<32x1xf32> to vector<32x8xf32>
    %10 = arith.addf %7, %9 : vector<32x8xf32>
    %c0_7 = arith.constant 0 : index
    %c0_8 = arith.constant 0 : index
    %11 = vector.load %arg32[%c0_7, %c0_8] : memref<32x8xbf16, #tpu.memory_space<vmem>>, vector<32x8xbf16>
    %c0_9 = arith.constant 0 : index
    %c0_10 = arith.constant 0 : index
    %12 = vector.load %arg33[%c0_9, %c0_10] : memref<32x8xbf16, #tpu.memory_space<vmem>>, vector<32x8xbf16>
    %c0_11 = arith.constant 0 : index
    %c0_12 = arith.constant 0 : index
    %13 = vector.load %arg11[%c0_11, %c0_12] : memref<32x32xbf16, #tpu.memory_space<vmem>>, vector<32x32xbf16>
    %c0_13 = arith.constant 0 : index
    %c0_14 = arith.constant 0 : index
    %14 = vector.load %arg12[%c0_13, %c0_14] : memref<32x1xf32, #tpu.memory_space<vmem>>, vector<32x1xf32>
    %c8_i32 = arith.constant 8 : i32
    %15 = arith.muli %arg1, %c8_i32 : i32
    %16 = arith.truncf %10 : vector<32x8xf32> to vector<32x8xbf16>
    %17 = vector.shape_cast %16 : vector<32x8xbf16> to vector<4x8x8xbf16>
    %18 = vector.shape_cast %11 : vector<32x8xbf16> to vector<4x8x8xbf16>
    %19 = vector.shape_cast %12 : vector<32x8xbf16> to vector<4x8x8xbf16>
    %20 = tpu.transpose %17, [0, 2, 1] : vector<4x8x8xbf16> -> vector<4x8x8xbf16>
    "tpu.trace_start"() <{level = 10 : i32, message = "hqd,hdk->hqk"}> : () -> ()
    %cst_15 = arith.constant dense<0.000000e+00> : vector<4x8x8xf32>
    %21 = tpu.matmul %20, %18, %cst_15 {dimension_numbers = #tpu.dot_dimension_numbers<[2], [1], [1], [2], [0, 0, 0, 1, 1, 2], [0], [0]>} : vector<4x8x8xbf16>, vector<4x8x8xbf16>, vector<4x8x8xf32> -> vector<4x8x8xf32>
    "tpu.trace_stop"() : () -> ()
    %22 = tpu.iota {dimensions = array<i32: 0>} : vector<8x8xi32>
    %23 = vector.broadcast %15 : i32 to vector<8x8xi32>
    %24 = arith.addi %22, %23 : vector<8x8xi32>
    %25 = tpu.iota {dimensions = array<i32: 1>} : vector<8x8xi32>
    %26 = arith.cmpi sle, %25, %24 : vector<8x8xi32>
    %cst_16 = arith.constant 0.000000e+00 : f32
    %cst_17 = arith.constant -3.40282347E+38 : f32
    %27 = vector.broadcast %cst_16 : f32 to vector<8x8xf32>
    %28 = vector.broadcast %cst_17 : f32 to vector<8x8xf32>
    %29 = arith.select %26, %27, %28 : vector<8x8xi1>, vector<8x8xf32>
    %30 = vector.shape_cast %29 : vector<8x8xf32> to vector<1x8x8xf32>
    %31 = vector.broadcast %30 : vector<1x8x8xf32> to vector<4x8x8xf32>
    %32 = arith.addf %21, %31 : vector<4x8x8xf32>
    %cst_18 = arith.constant dense<0xFF800000> : vector<4x8xf32>
    %33 = vector.multi_reduction <maximumf>, %32, %cst_18 [2] : vector<4x8x8xf32> to vector<4x8xf32>
    %34 = vector.shape_cast %33 : vector<4x8xf32> to vector<4x8x1xf32>
    %35 = vector.broadcast %34 : vector<4x8x1xf32> to vector<4x8x8xf32>
    %36 = arith.subf %32, %35 : vector<4x8x8xf32>
    %37 = math.exp %36 : vector<4x8x8xf32>
    %cst_19 = arith.constant dense<0.000000e+00> : vector<4x8xf32>
    %38 = vector.multi_reduction <add>, %37, %cst_19 [2] : vector<4x8x8xf32> to vector<4x8xf32>
    %39 = vector.shape_cast %38 : vector<4x8xf32> to vector<4x8x1xf32>
    %40 = tpu.reciprocal %39 {approx = true} : vector<4x8x1xf32> -> vector<4x8x1xf32>
    %41 = vector.broadcast %40 : vector<4x8x1xf32> to vector<4x8x8xf32>
    %42 = arith.mulf %37, %41 : vector<4x8x8xf32>
    %43 = arith.truncf %42 : vector<4x8x8xf32> to vector<4x8x8xbf16>
    "tpu.trace_start"() <{level = 10 : i32, message = "hdk,hqk->hdq"}> : () -> ()
    %cst_20 = arith.constant dense<0.000000e+00> : vector<4x8x8xf32>
    %44 = tpu.matmul %19, %43, %cst_20 {dimension_numbers = #tpu.dot_dimension_numbers<[2], [2], [1], [1], [0, 0, 0, 1, 1, 1], [0], [0]>} : vector<4x8x8xbf16>, vector<4x8x8xbf16>, vector<4x8x8xf32> -> vector<4x8x8xf32>
    "tpu.trace_stop"() : () -> ()
    %45 = vector.shape_cast %44 : vector<4x8x8xf32> to vector<32x8xf32>
    %46 = arith.truncf %45 : vector<32x8xf32> to vector<32x8xbf16>
    %cst_21 = arith.constant dense<0.000000e+00> : vector<32x8xf32>
    %47 = tpu.matmul %13, %46, %cst_21 {dimension_numbers = #tpu.dot_dimension_numbers<[1], [0], [0], [1], [0, 0, 1, 1], [], []>} : vector<32x32xbf16>, vector<32x8xbf16>, vector<32x8xf32> -> vector<32x8xf32>
    %48 = vector.broadcast %14 : vector<32x1xf32> to vector<32x8xf32>
    %49 = arith.addf %47, %48 : vector<32x8xf32>
    %50 = arith.addf %4, %49 : vector<32x8xf32>
    %c0_22 = arith.constant 0 : index
    %c0_23 = arith.constant 0 : index
    %51 = vector.load %arg13[%c0_22, %c0_23] : memref<32x1xf32, #tpu.memory_space<vmem>>, vector<32x1xf32>
    %c0_24 = arith.constant 0 : index
    %c0_25 = arith.constant 0 : index
    %52 = vector.load %arg14[%c0_24, %c0_25] : memref<32x1xf32, #tpu.memory_space<vmem>>, vector<32x1xf32>
    %cst_26 = arith.constant dense<0.000000e+00> : vector<8xf32>
    %53 = vector.multi_reduction <add>, %50, %cst_26 [0] : vector<32x8xf32> to vector<8xf32>
    %54 = vector.shape_cast %53 : vector<8xf32> to vector<1x8xf32>
    %cst_27 = arith.constant 3.125000e-02 : f32
    %55 = vector.broadcast %cst_27 : f32 to vector<1x8xf32>
    %56 = arith.mulf %54, %55 : vector<1x8xf32>
    %57 = arith.mulf %50, %50 : vector<32x8xf32>
    %cst_28 = arith.constant dense<0.000000e+00> : vector<8xf32>
    %58 = vector.multi_reduction <add>, %57, %cst_28 [0] : vector<32x8xf32> to vector<8xf32>
    %59 = vector.shape_cast %58 : vector<8xf32> to vector<1x8xf32>
    %cst_29 = arith.constant 3.125000e-02 : f32
    %60 = vector.broadcast %cst_29 : f32 to vector<1x8xf32>
    %61 = arith.mulf %59, %60 : vector<1x8xf32>
    %62 = arith.mulf %56, %56 : vector<1x8xf32>
    %63 = arith.subf %61, %62 : vector<1x8xf32>
    %64 = vector.broadcast %56 : vector<1x8xf32> to vector<32x8xf32>
    %65 = arith.subf %50, %64 : vector<32x8xf32>
    %cst_30 = arith.constant 9.99999974E-6 : f32
    %66 = vector.broadcast %cst_30 : f32 to vector<1x8xf32>
    %67 = arith.addf %63, %66 : vector<1x8xf32>
    %68 = math.rsqrt %67 : vector<1x8xf32>
    %69 = vector.broadcast %68 : vector<1x8xf32> to vector<32x8xf32>
    %70 = arith.mulf %65, %69 : vector<32x8xf32>
    %71 = vector.broadcast %51 : vector<32x1xf32> to vector<32x8xf32>
    %72 = arith.mulf %70, %71 : vector<32x8xf32>
    %73 = vector.broadcast %52 : vector<32x1xf32> to vector<32x8xf32>
    %74 = arith.addf %72, %73 : vector<32x8xf32>
    %c0_31 = arith.constant 0 : index
    %c0_32 = arith.constant 0 : index
    %75 = vector.load %arg15[%c0_31, %c0_32] : memref<32x32xbf16, #tpu.memory_space<vmem>>, vector<32x32xbf16>
    %76 = arith.truncf %74 : vector<32x8xf32> to vector<32x8xbf16>
    %cst_33 = arith.constant dense<0.000000e+00> : vector<32x8xf32>
    %77 = tpu.matmul %75, %76, %cst_33 {dimension_numbers = #tpu.dot_dimension_numbers<[1], [0], [0], [1], [0, 0, 1, 1], [], []>} : vector<32x32xbf16>, vector<32x8xbf16>, vector<32x8xf32> -> vector<32x8xf32>
    %c0_34 = arith.constant 0 : index
    %c0_35 = arith.constant 0 : index
    %78 = vector.load %arg16[%c0_34, %c0_35] : memref<32x1xf32, #tpu.memory_space<vmem>>, vector<32x1xf32>
    %79 = vector.broadcast %78 : vector<32x1xf32> to vector<32x8xf32>
    %80 = arith.addf %77, %79 : vector<32x8xf32>
    %c0_36 = arith.constant 0 : index
    %c0_37 = arith.constant 0 : index
    %81 = vector.load %arg34[%c0_36, %c0_37] : memref<32x16xbf16, #tpu.memory_space<vmem>>, vector<32x16xbf16>
    %c0_38 = arith.constant 0 : index
    %c0_39 = arith.constant 0 : index
    %82 = vector.load %arg35[%c0_38, %c0_39] : memref<32x16xbf16, #tpu.memory_space<vmem>>, vector<32x16xbf16>
    %c0_40 = arith.constant 0 : index
    %c0_41 = arith.constant 0 : index
    %83 = vector.load %arg21[%c0_40, %c0_41] : memref<32x32xbf16, #tpu.memory_space<vmem>>, vector<32x32xbf16>
    %c0_42 = arith.constant 0 : index
    %c0_43 = arith.constant 0 : index
    %84 = vector.load %arg22[%c0_42, %c0_43] : memref<32x1xf32, #tpu.memory_space<vmem>>, vector<32x1xf32>
    %85 = arith.truncf %80 : vector<32x8xf32> to vector<32x8xbf16>
    %86 = vector.shape_cast %85 : vector<32x8xbf16> to vector<4x8x8xbf16>
    %87 = vector.shape_cast %81 : vector<32x16xbf16> to vector<4x8x16xbf16>
    %88 = vector.shape_cast %82 : vector<32x16xbf16> to vector<4x8x16xbf16>
    %89 = tpu.transpose %86, [0, 2, 1] : vector<4x8x8xbf16> -> vector<4x8x8xbf16>
    "tpu.trace_start"() <{level = 10 : i32, message = "hqd,hdk->hqk"}> : () -> ()
    %cst_44 = arith.constant dense<0.000000e+00> : vector<4x8x16xf32>
    %90 = tpu.matmul %89, %87, %cst_44 {dimension_numbers = #tpu.dot_dimension_numbers<[2], [1], [1], [2], [0, 0, 0, 1, 1, 2], [0], [0]>} : vector<4x8x8xbf16>, vector<4x8x16xbf16>, vector<4x8x16xf32> -> vector<4x8x16xf32>
    "tpu.trace_stop"() : () -> ()
    %cst_45 = arith.constant dense<0xFF800000> : vector<4x8xf32>
    %91 = vector.multi_reduction <maximumf>, %90, %cst_45 [2] : vector<4x8x16xf32> to vector<4x8xf32>
    %92 = vector.shape_cast %91 : vector<4x8xf32> to vector<4x8x1xf32>
    %93 = vector.broadcast %92 : vector<4x8x1xf32> to vector<4x8x16xf32>
    %94 = arith.subf %90, %93 : vector<4x8x16xf32>
    %95 = math.exp %94 : vector<4x8x16xf32>
    %cst_46 = arith.constant dense<0.000000e+00> : vector<4x8xf32>
    %96 = vector.multi_reduction <add>, %95, %cst_46 [2] : vector<4x8x16xf32> to vector<4x8xf32>
    %97 = vector.shape_cast %96 : vector<4x8xf32> to vector<4x8x1xf32>
    %98 = tpu.reciprocal %97 {approx = true} : vector<4x8x1xf32> -> vector<4x8x1xf32>
    %99 = vector.broadcast %98 : vector<4x8x1xf32> to vector<4x8x16xf32>
    %100 = arith.mulf %95, %99 : vector<4x8x16xf32>
    %101 = arith.truncf %100 : vector<4x8x16xf32> to vector<4x8x16xbf16>
    "tpu.trace_start"() <{level = 10 : i32, message = "hdk,hqk->hdq"}> : () -> ()
    %cst_47 = arith.constant dense<0.000000e+00> : vector<4x8x8xf32>
    %102 = tpu.matmul %88, %101, %cst_47 {dimension_numbers = #tpu.dot_dimension_numbers<[2], [2], [1], [1], [0, 0, 0, 1, 1, 1], [0], [0]>} : vector<4x8x16xbf16>, vector<4x8x16xbf16>, vector<4x8x8xf32> -> vector<4x8x8xf32>
    "tpu.trace_stop"() : () -> ()
    %103 = vector.shape_cast %102 : vector<4x8x8xf32> to vector<32x8xf32>
    %104 = arith.truncf %103 : vector<32x8xf32> to vector<32x8xbf16>
    %cst_48 = arith.constant dense<0.000000e+00> : vector<32x8xf32>
    %105 = tpu.matmul %83, %104, %cst_48 {dimension_numbers = #tpu.dot_dimension_numbers<[1], [0], [0], [1], [0, 0, 1, 1], [], []>} : vector<32x32xbf16>, vector<32x8xbf16>, vector<32x8xf32> -> vector<32x8xf32>
    %106 = vector.broadcast %84 : vector<32x1xf32> to vector<32x8xf32>
    %107 = arith.addf %105, %106 : vector<32x8xf32>
    %108 = arith.addf %74, %107 : vector<32x8xf32>
    %c0_49 = arith.constant 0 : index
    %c0_50 = arith.constant 0 : index
    %109 = vector.load %arg23[%c0_49, %c0_50] : memref<32x1xf32, #tpu.memory_space<vmem>>, vector<32x1xf32>
    %c0_51 = arith.constant 0 : index
    %c0_52 = arith.constant 0 : index
    %110 = vector.load %arg24[%c0_51, %c0_52] : memref<32x1xf32, #tpu.memory_space<vmem>>, vector<32x1xf32>
    %cst_53 = arith.constant dense<0.000000e+00> : vector<8xf32>
    %111 = vector.multi_reduction <add>, %108, %cst_53 [0] : vector<32x8xf32> to vector<8xf32>
    %112 = vector.shape_cast %111 : vector<8xf32> to vector<1x8xf32>
    %cst_54 = arith.constant 3.125000e-02 : f32
    %113 = vector.broadcast %cst_54 : f32 to vector<1x8xf32>
    %114 = arith.mulf %112, %113 : vector<1x8xf32>
    %115 = arith.mulf %108, %108 : vector<32x8xf32>
    %cst_55 = arith.constant dense<0.000000e+00> : vector<8xf32>
    %116 = vector.multi_reduction <add>, %115, %cst_55 [0] : vector<32x8xf32> to vector<8xf32>
    %117 = vector.shape_cast %116 : vector<8xf32> to vector<1x8xf32>
    %cst_56 = arith.constant 3.125000e-02 : f32
    %118 = vector.broadcast %cst_56 : f32 to vector<1x8xf32>
    %119 = arith.mulf %117, %118 : vector<1x8xf32>
    %120 = arith.mulf %114, %114 : vector<1x8xf32>
    %121 = arith.subf %119, %120 : vector<1x8xf32>
    %122 = vector.broadcast %114 : vector<1x8xf32> to vector<32x8xf32>
    %123 = arith.subf %108, %122 : vector<32x8xf32>
    %cst_57 = arith.constant 9.99999974E-6 : f32
    %124 = vector.broadcast %cst_57 : f32 to vector<1x8xf32>
    %125 = arith.addf %121, %124 : vector<1x8xf32>
    %126 = math.rsqrt %125 : vector<1x8xf32>
    %127 = vector.broadcast %126 : vector<1x8xf32> to vector<32x8xf32>
    %128 = arith.mulf %123, %127 : vector<32x8xf32>
    %129 = vector.broadcast %109 : vector<32x1xf32> to vector<32x8xf32>
    %130 = arith.mulf %128, %129 : vector<32x8xf32>
    %131 = vector.broadcast %110 : vector<32x1xf32> to vector<32x8xf32>
    %132 = arith.addf %130, %131 : vector<32x8xf32>
    %c0_58 = arith.constant 0 : index
    %c0_59 = arith.constant 0 : index
    %133 = vector.load %arg25[%c0_58, %c0_59] : memref<64x32xbf16, #tpu.memory_space<vmem>>, vector<64x32xbf16>
    %134 = arith.truncf %132 : vector<32x8xf32> to vector<32x8xbf16>
    %cst_60 = arith.constant dense<0.000000e+00> : vector<64x8xf32>
    %135 = tpu.matmul %133, %134, %cst_60 {dimension_numbers = #tpu.dot_dimension_numbers<[1], [0], [0], [1], [0, 0, 1, 1], [], []>} : vector<64x32xbf16>, vector<32x8xbf16>, vector<64x8xf32> -> vector<64x8xf32>
    %c0_61 = arith.constant 0 : index
    %c0_62 = arith.constant 0 : index
    %136 = vector.load %arg26[%c0_61, %c0_62] : memref<64x1xf32, #tpu.memory_space<vmem>>, vector<64x1xf32>
    %137 = vector.broadcast %136 : vector<64x1xf32> to vector<64x8xf32>
    %138 = arith.addf %135, %137 : vector<64x8xf32>
    %cst_63 = arith.constant 5.000000e-01 : f32
    %139 = vector.broadcast %cst_63 : f32 to vector<64x8xf32>
    %140 = arith.mulf %139, %138 : vector<64x8xf32>
    %cst_64 = arith.constant 4.471500e-02 : f32
    %141 = vector.broadcast %cst_64 : f32 to vector<64x8xf32>
    %142 = arith.mulf %141, %138 : vector<64x8xf32>
    %143 = arith.mulf %142, %138 : vector<64x8xf32>
    %144 = arith.mulf %143, %138 : vector<64x8xf32>
    %145 = arith.addf %138, %144 : vector<64x8xf32>
    %cst_65 = arith.constant 0.797884583 : f32
    %146 = vector.broadcast %cst_65 : f32 to vector<64x8xf32>
    %147 = arith.mulf %146, %145 : vector<64x8xf32>
    %148 = math.tanh %147 : vector<64x8xf32>
    %cst_66 = arith.constant 1.000000e+00 : f32
    %149 = vector.broadcast %cst_66 : f32 to vector<64x8xf32>
    %150 = arith.addf %149, %148 : vector<64x8xf32>
    %151 = arith.mulf %140, %150 : vector<64x8xf32>
    %c0_67 = arith.constant 0 : index
    %c0_68 = arith.constant 0 : index
    %152 = vector.load %arg27[%c0_67, %c0_68] : memref<32x64xbf16, #tpu.memory_space<vmem>>, vector<32x64xbf16>
    %153 = arith.truncf %151 : vector<64x8xf32> to vector<64x8xbf16>
    %cst_69 = arith.constant dense<0.000000e+00> : vector<32x8xf32>
    %154 = tpu.matmul %152, %153, %cst_69 {dimension_numbers = #tpu.dot_dimension_numbers<[1], [0], [0], [1], [0, 0, 1, 1], [], []>} : vector<32x64xbf16>, vector<64x8xbf16>, vector<32x8xf32> -> vector<32x8xf32>
    %c0_70 = arith.constant 0 : index
    %c0_71 = arith.constant 0 : index
    %155 = vector.load %arg28[%c0_70, %c0_71] : memref<32x1xf32, #tpu.memory_space<vmem>>, vector<32x1xf32>
    %156 = vector.broadcast %155 : vector<32x1xf32> to vector<32x8xf32>
    %157 = arith.addf %154, %156 : vector<32x8xf32>
    %158 = arith.addf %132, %157 : vector<32x8xf32>
    %c0_72 = arith.constant 0 : index
    %c0_73 = arith.constant 0 : index
    %159 = vector.load %arg29[%c0_72, %c0_73] : memref<32x1xf32, #tpu.memory_space<vmem>>, vector<32x1xf32>
    %c0_74 = arith.constant 0 : index
    %c0_75 = arith.constant 0 : index
    %160 = vector.load %arg30[%c0_74, %c0_75] : memref<32x1xf32, #tpu.memory_space<vmem>>, vector<32x1xf32>
    %cst_76 = arith.constant dense<0.000000e+00> : vector<8xf32>
    %161 = vector.multi_reduction <add>, %158, %cst_76 [0] : vector<32x8xf32> to vector<8xf32>
    %162 = vector.shape_cast %161 : vector<8xf32> to vector<1x8xf32>
    %cst_77 = arith.constant 3.125000e-02 : f32
    %163 = vector.broadcast %cst_77 : f32 to vector<1x8xf32>
    %164 = arith.mulf %162, %163 : vector<1x8xf32>
    %165 = arith.mulf %158, %158 : vector<32x8xf32>
    %cst_78 = arith.constant dense<0.000000e+00> : vector<8xf32>
    %166 = vector.multi_reduction <add>, %165, %cst_78 [0] : vector<32x8xf32> to vector<8xf32>
    %167 = vector.shape_cast %166 : vector<8xf32> to vector<1x8xf32>
    %cst_79 = arith.constant 3.125000e-02 : f32
    %168 = vector.broadcast %cst_79 : f32 to vector<1x8xf32>
    %169 = arith.mulf %167, %168 : vector<1x8xf32>
    %170 = arith.mulf %164, %164 : vector<1x8xf32>
    %171 = arith.subf %169, %170 : vector<1x8xf32>
    %172 = vector.broadcast %164 : vector<1x8xf32> to vector<32x8xf32>
    %173 = arith.subf %158, %172 : vector<32x8xf32>
    %cst_80 = arith.constant 9.99999974E-6 : f32
    %174 = vector.broadcast %cst_80 : f32 to vector<1x8xf32>
    %175 = arith.addf %171, %174 : vector<1x8xf32>
    %176 = math.rsqrt %175 : vector<1x8xf32>
    %177 = vector.broadcast %176 : vector<1x8xf32> to vector<32x8xf32>
    %178 = arith.mulf %173, %177 : vector<32x8xf32>
    %179 = vector.broadcast %159 : vector<32x1xf32> to vector<32x8xf32>
    %180 = arith.mulf %178, %179 : vector<32x8xf32>
    %181 = vector.broadcast %160 : vector<32x1xf32> to vector<32x8xf32>
    %182 = arith.addf %180, %181 : vector<32x8xf32>
    %c0_81 = arith.constant 0 : index
    %c0_82 = arith.constant 0 : index
    %c0_83 = arith.constant 0 : index
    %183 = vector.load %arg31[%c0_81, %c0_82, %c0_83] : memref<1x32x8xf32, #tpu.memory_space<vmem>>, vector<1x32x8xf32>
    %184 = vector.shape_cast %183 : vector<1x32x8xf32> to vector<32x8xf32>
    %185 = vector.shape_cast %182 : vector<32x8xf32> to vector<1x32x8xf32>
    tpu.vector_store %arg31[%c0_81, %c0_82, %c0_83], %185 {strides = array<i32>} : memref<1x32x8xf32, #tpu.memory_space<vmem>>, vector<1x32x8xf32>,
    return
  }
  func.func @transform_0(%arg0: i32, %arg1: i32) -> (i32, i32, i32) {
    %c0_i32 = arith.constant 0 : i32
    %c0_i32_0 = arith.constant 0 : i32
    return %arg0, %c0_i32, %arg1 : i32, i32, i32
  }
  func.func @transform_1(%arg0: i32, %arg1: i32) -> (i32, i32, i32) {
    %c0_i32 = arith.constant 0 : i32
    %c0_i32_0 = arith.constant 0 : i32
    %c0_i32_1 = arith.constant 0 : i32
    return %arg0, %c0_i32, %c0_i32_0 : i32, i32, i32
  }
  func.func @transform_2(%arg0: i32, %arg1: i32) -> (i32, i32, i32) {
    %c0_i32 = arith.constant 0 : i32
    %c0_i32_0 = arith.constant 0 : i32
    %c0_i32_1 = arith.constant 0 : i32
    return %arg0, %c0_i32, %c0_i32_0 : i32, i32, i32
  }
  func.func @transform_3(%arg0: i32, %arg1: i32) -> (i32, i32) {
    %c0_i32 = arith.constant 0 : i32
    %c0_i32_0 = arith.constant 0 : i32
    %c0_i32_1 = arith.constant 0 : i32
    return %c0_i32, %c0_i32_0 : i32, i32
  }
  func.func @transform_4(%arg0: i32, %arg1: i32) -> (i32, i32) {
    %c0_i32 = arith.constant 0 : i32
    %c0_i32_0 = arith.constant 0 : i32
    %c0_i32_1 = arith.constant 0 : i32
    return %c0_i32, %c0_i32_0 : i32, i32
  }
  func.func @transform_5(%arg0: i32, %arg1: i32) -> (i32, i32) {
    %c0_i32 = arith.constant 0 : i32
    %c0_i32_0 = arith.constant 0 : i32
    %c0_i32_1 = arith.constant 0 : i32
    return %c0_i32, %c0_i32_0 : i32, i32
  }
  func.func @transform_6(%arg0: i32, %arg1: i32) -> (i32, i32) {
    %c0_i32 = arith.constant 0 : i32
    %c0_i32_0 = arith.constant 0 : i32
    %c0_i32_1 = arith.constant 0 : i32
    return %c0_i32, %c0_i32_0 : i32, i32
  }
  func.func @transform_7(%arg0: i32, %arg1: i32) -> (i32, i32) {
    %c0_i32 = arith.constant 0 : i32
    %c0_i32_0 = arith.constant 0 : i32
    %c0_i32_1 = arith.constant 0 : i32
    return %c0_i32, %c0_i32_0 : i32, i32
  }
  func.func @transform_8(%arg0: i32, %arg1: i32) -> (i32, i32) {
    %c0_i32 = arith.constant 0 : i32
    %c0_i32_0 = arith.constant 0 : i32
    %c0_i32_1 = arith.constant 0 : i32
    return %c0_i32, %c0_i32_0 : i32, i32
  }
  func.func @transform_9(%arg0: i32, %arg1: i32) -> (i32, i32) {
    %c0_i32 = arith.constant 0 : i32
    %c0_i32_0 = arith.constant 0 : i32
    %c0_i32_1 = arith.constant 0 : i32
    return %c0_i32, %c0_i32_0 : i32, i32
  }
  func.func @transform_10(%arg0: i32, %arg1: i32) -> (i32, i32) {
    %c0_i32 = arith.constant 0 : i32
    %c0_i32_0 = arith.constant 0 : i32
    %c0_i32_1 = arith.constant 0 : i32
    return %c0_i32, %c0_i32_0 : i32, i32
  }
  func.func @transform_11(%arg0: i32, %arg1: i32) -> (i32, i32) {
    %c0_i32 = arith.constant 0 : i32
    %c0_i32_0 = arith.constant 0 : i32
    %c0_i32_1 = arith.constant 0 : i32
    return %c0_i32, %c0_i32_0 : i32, i32
  }
  func.func @transform_12(%arg0: i32, %arg1: i32) -> (i32, i32) {
    %c0_i32 = arith.constant 0 : i32
    %c0_i32_0 = arith.constant 0 : i32
    %c0_i32_1 = arith.constant 0 : i32
    return %c0_i32, %c0_i32_0 : i32, i32
  }
  func.func @transform_13(%arg0: i32, %arg1: i32) -> (i32, i32) {
    %c0_i32 = arith.constant 0 : i32
    %c0_i32_0 = arith.constant 0 : i32
    %c0_i32_1 = arith.constant 0 : i32
    return %c0_i32, %c0_i32_0 : i32, i32
  }
  func.func @transform_14(%arg0: i32, %arg1: i32) -> (i32, i32) {
    %c0_i32 = arith.constant 0 : i32
    %c0_i32_0 = arith.constant 0 : i32
    %c0_i32_1 = arith.constant 0 : i32
    return %c0_i32, %c0_i32_0 : i32, i32
  }
  func.func @transform_15(%arg0: i32, %arg1: i32) -> (i32, i32) {
    %c0_i32 = arith.constant 0 : i32
    %c0_i32_0 = arith.constant 0 : i32
    %c0_i32_1 = arith.constant 0 : i32
    return %c0_i32, %c0_i32_0 : i32, i32
  }
  func.func @transform_16(%arg0: i32, %arg1: i32) -> (i32, i32) {
    %c0_i32 = arith.constant 0 : i32
    %c0_i32_0 = arith.constant 0 : i32
    %c0_i32_1 = arith.constant 0 : i32
    return %c0_i32, %c0_i32_0 : i32, i32
  }
  func.func @transform_17(%arg0: i32, %arg1: i32) -> (i32, i32) {
    %c0_i32 = arith.constant 0 : i32
    %c0_i32_0 = arith.constant 0 : i32
    %c0_i32_1 = arith.constant 0 : i32
    return %c0_i32, %c0_i32_0 : i32, i32
  }
  func.func @transform_18(%arg0: i32, %arg1: i32) -> (i32, i32) {
    %c0_i32 = arith.constant 0 : i32
    %c0_i32_0 = arith.constant 0 : i32
    %c0_i32_1 = arith.constant 0 : i32
    return %c0_i32, %c0_i32_0 : i32, i32
  }
  func.func @transform_19(%arg0: i32, %arg1: i32) -> (i32, i32) {
    %c0_i32 = arith.constant 0 : i32
    %c0_i32_0 = arith.constant 0 : i32
    %c0_i32_1 = arith.constant 0 : i32
    return %c0_i32, %c0_i32_0 : i32, i32
  }
  func.func @transform_20(%arg0: i32, %arg1: i32) -> (i32, i32) {
    %c0_i32 = arith.constant 0 : i32
    %c0_i32_0 = arith.constant 0 : i32
    %c0_i32_1 = arith.constant 0 : i32
    return %c0_i32, %c0_i32_0 : i32, i32
  }
  func.func @transform_21(%arg0: i32, %arg1: i32) -> (i32, i32) {
    %c0_i32 = arith.constant 0 : i32
    %c0_i32_0 = arith.constant 0 : i32
    %c0_i32_1 = arith.constant 0 : i32
    return %c0_i32, %c0_i32_0 : i32, i32
  }
  func.func @transform_22(%arg0: i32, %arg1: i32) -> (i32, i32) {
    %c0_i32 = arith.constant 0 : i32
    %c0_i32_0 = arith.constant 0 : i32
    %c0_i32_1 = arith.constant 0 : i32
    return %c0_i32, %c0_i32_0 : i32, i32
  }
  func.func @transform_23(%arg0: i32, %arg1: i32) -> (i32, i32) {
    %c0_i32 = arith.constant 0 : i32
    %c0_i32_0 = arith.constant 0 : i32
    %c0_i32_1 = arith.constant 0 : i32
    return %c0_i32, %c0_i32_0 : i32, i32
  }
  func.func @transform_24(%arg0: i32, %arg1: i32) -> (i32, i32) {
    %c0_i32 = arith.constant 0 : i32
    %c0_i32_0 = arith.constant 0 : i32
    %c0_i32_1 = arith.constant 0 : i32
    return %c0_i32, %c0_i32_0 : i32, i32
  }
  func.func @transform_25(%arg0: i32, %arg1: i32) -> (i32, i32) {
    %c0_i32 = arith.constant 0 : i32
    %c0_i32_0 = arith.constant 0 : i32
    %c0_i32_1 = arith.constant 0 : i32
    return %c0_i32, %c0_i32_0 : i32, i32
  }
  func.func @transform_26(%arg0: i32, %arg1: i32) -> (i32, i32) {
    %c0_i32 = arith.constant 0 : i32
    %c0_i32_0 = arith.constant 0 : i32
    %c0_i32_1 = arith.constant 0 : i32
    return %c0_i32, %c0_i32_0 : i32, i32
  }
  func.func @transform_27(%arg0: i32, %arg1: i32) -> (i32, i32) {
    %c0_i32 = arith.constant 0 : i32
    %c0_i32_0 = arith.constant 0 : i32
    %c0_i32_1 = arith.constant 0 : i32
    return %c0_i32, %c0_i32_0 : i32, i32
  }
  func.func @transform_28(%arg0: i32, %arg1: i32) -> (i32, i32) {
    %c0_i32 = arith.constant 0 : i32
    %c0_i32_0 = arith.constant 0 : i32
    %c0_i32_1 = arith.constant 0 : i32
    return %c0_i32, %c0_i32_0 : i32, i32
  }
  func.func @transform_29(%arg0: i32, %arg1: i32) -> (i32, i32, i32) {
    %c0_i32 = arith.constant 0 : i32
    %c0_i32_0 = arith.constant 0 : i32
    return %arg0, %c0_i32, %arg1 : i32, i32, i32
  }
}

</mosaic_0001>

<llo_original>
// kernel: tpu_custom_call.1
$region0: #{tpu_custom_call.1}
  #allocation0 [shape = 'u32[]', space=smem, size = 0x4, offset = 0x4, fixed_abs, tag = 'smem constant byte address 0x4 - core index']
  #allocation1 [shape = 'u32[144,128]{1,0:T(1,128)}', space=vmem, size = 0x12000, scoped, tag = 'internal scratch']
  #allocation2 [shape = 'bf16[32,8]{1,0:T(8,128)(2,1)}', space=vmem, size = 0x2000, scoped, tag = 'scratch operand']
  #allocation3 [shape = 'bf16[32,8]{1,0:T(8,128)(2,1)}', space=vmem, size = 0x2000, scoped, tag = 'scratch operand']
  #allocation4 [shape = 'bf16[32,16]{1,0:T(8,128)(2,1)}', space=vmem, size = 0x2000, scoped, tag = 'scratch operand']
  #allocation5 [shape = 'bf16[32,16]{1,0:T(8,128)(2,1)}', space=vmem, size = 0x2000, scoped, tag = 'scratch operand']
  %s0 = inlined_call_operand.smem [shape: u32[30], index: -1, kind: input, shape index: {}]
  %s1 = sld [smem:[%s0]]
  %s2 = scalar_lea.smem %s0, 1
  %s3 = sld [smem:[%s2]]
  %s4 = scalar_lea.smem %s0, 2
  %s5 = sld [smem:[%s4]]
  %s6 = scalar_lea.smem %s0, 3
  %s7 = sld [smem:[%s6]]
  %s8 = scalar_lea.smem %s0, 4
  %s9 = sld [smem:[%s8]]
  %s10 = scalar_lea.smem %s0, 5
  %s11 = sld [smem:[%s10]]
  %s12 = scalar_lea.smem %s0, 6
  %s13 = sld [smem:[%s12]]
  %s14 = scalar_lea.smem %s0, 7
  %s15 = sld [smem:[%s14]]
  %s16 = scalar_lea.smem %s0, 8
  %s17 = sld [smem:[%s16]]
  %s18 = scalar_lea.smem %s0, 9
  %s19 = sld [smem:[%s18]]
  %s20 = scalar_lea.smem %s0, 10
  %s21 = sld [smem:[%s20]]
  %s22 = scalar_lea.smem %s0, 11
  %s23 = sld [smem:[%s22]]
  %s24 = scalar_lea.smem %s0, 12
  %s25 = sld [smem:[%s24]]
  %s26 = scalar_lea.smem %s0, 13
  %s27 = sld [smem:[%s26]]
  %s28 = scalar_lea.smem %s0, 14
  %s29 = sld [smem:[%s28]]
  %s30 = scalar_lea.smem %s0, 15
  %s31 = sld [smem:[%s30]]
  %s32 = scalar_lea.smem %s0, 16
  %s33 = sld [smem:[%s32]]
  %s34 = scalar_lea.smem %s0, 17
  %s35 = sld [smem:[%s34]]
  %s36 = scalar_lea.smem %s0, 18
  %s37 = sld [smem:[%s36]]
  %s38 = scalar_lea.smem %s0, 19
  %s39 = sld [smem:[%s38]]
  %s40 = scalar_lea.smem %s0, 20
  %s41 = sld [smem:[%s40]]
  %s42 = scalar_lea.smem %s0, 21
  %s43 = sld [smem:[%s42]]
  %s44 = scalar_lea.smem %s0, 22
  %s45 = sld [smem:[%s44]]
  %s46 = scalar_lea.smem %s0, 23
  %s47 = sld [smem:[%s46]]
  %s48 = scalar_lea.smem %s0, 24
  %s49 = sld [smem:[%s48]]
  %s50 = scalar_lea.smem %s0, 25
  %s51 = sld [smem:[%s50]]
  %s52 = scalar_lea.smem %s0, 26
  %s53 = sld [smem:[%s52]]
  %s54 = scalar_lea.smem %s0, 27
  %s55 = sld [smem:[%s54]]
  %s56 = scalar_lea.smem %s0, 28
  %s57 = sld [smem:[%s56]]
  %s58 = scalar_lea.smem %s0, 29
  %s59 = sld [smem:[%s58]]
  %s60 = sld [smem:[#allocation0]]
  $region153: #{tpu_custom_call.1} parent=0
    _
  %s62 = ssub.s32 1, %s60
  %s63 = scalar_select 0, %s62, %s60
  loop: start=0, step=1, limit=4
  $region2: #{tpu_custom_call.1} parent=0 // loop_pre_header
    _
  $region3: #{tpu_custom_call.1} parent=0 // loop_header
    %s65 = sphi 0, %s69
    %p66 = scmp.ge.s32.totalorder %s65, 4
    %s72 = sphi 0, %s84
    %s73 = sphi 0, %s80
    %s74 = sphi 0, %s72
    %s75 = sphi 0, %s73
    %s76 = sphi 0, %s74
    %s77 = sphi 0, %s75
    %s89 = sphi 0, %s91
    %s92 = sphi 0, %s89
    %s93 = sphi 0, %s92
    %s109 = sphi 0, %s93
    %s115 = sphi 0, %s117
    %s118 = sphi 0, %s115
    %s119 = sphi 0, %s118
    %s135 = sphi 0, %s119
    %s141 = sphi 0, %s143
    %s144 = sphi 0, %s141
    %s145 = sphi 0, %s144
    %s161 = sphi 0, %s145
    %s165 = sphi 0, %s165
    %s167 = sphi 0, %s165
    %s168 = sphi 0, %s167
    %s182 = sphi 0, %s168
    %s186 = sphi 0, %s186
    %s188 = sphi 0, %s186
    %s189 = sphi 0, %s188
    %s203 = sphi 0, %s189
    %s207 = sphi 0, %s207
    %s209 = sphi 0, %s207
    %s210 = sphi 0, %s209
    %s224 = sphi 0, %s210
    %s228 = sphi 0, %s228
    %s230 = sphi 0, %s228
    %s231 = sphi 0, %s230
    %s245 = sphi 0, %s231
    %s249 = sphi 0, %s249
    %s251 = sphi 0, %s249
    %s252 = sphi 0, %s251
    %s266 = sphi 0, %s252
    %s270 = sphi 0, %s270
    %s272 = sphi 0, %s270
    %s273 = sphi 0, %s272
    %s287 = sphi 0, %s273
    %s291 = sphi 0, %s291
    %s293 = sphi 0, %s291
    %s294 = sphi 0, %s293
    %s308 = sphi 0, %s294
    %s312 = sphi 0, %s312
    %s314 = sphi 0, %s312
    %s315 = sphi 0, %s314
    %s329 = sphi 0, %s315
    %s333 = sphi 0, %s333
    %s335 = sphi 0, %s333
    %s336 = sphi 0, %s335
    %s350 = sphi 0, %s336
    %s354 = sphi 0, %s354
    %s356 = sphi 0, %s354
    %s357 = sphi 0, %s356
    %s371 = sphi 0, %s357
    %s375 = sphi 0, %s375
    %s377 = sphi 0, %s375
    %s378 = sphi 0, %s377
    %s392 = sphi 0, %s378
    %s396 = sphi 0, %s396
    %s398 = sphi 0, %s396
    %s399 = sphi 0, %s398
    %s413 = sphi 0, %s399
    %s417 = sphi 0, %s417
    %s419 = sphi 0, %s417
    %s420 = sphi 0, %s419
    %s434 = sphi 0, %s420
    %s438 = sphi 0, %s438
    %s440 = sphi 0, %s438
    %s441 = sphi 0, %s440
    %s455 = sphi 0, %s441
    %s459 = sphi 0, %s459
    %s461 = sphi 0, %s459
    %s462 = sphi 0, %s461
    %s476 = sphi 0, %s462
    %s480 = sphi 0, %s480
    %s482 = sphi 0, %s480
    %s483 = sphi 0, %s482
    %s497 = sphi 0, %s483
    %s501 = sphi 0, %s501
    %s503 = sphi 0, %s501
    %s504 = sphi 0, %s503
    %s518 = sphi 0, %s504
    %s522 = sphi 0, %s522
    %s524 = sphi 0, %s522
    %s525 = sphi 0, %s524
    %s539 = sphi 0, %s525
    %s543 = sphi 0, %s543
    %s545 = sphi 0, %s543
    %s546 = sphi 0, %s545
    %s560 = sphi 0, %s546
    %s564 = sphi 0, %s564
    %s566 = sphi 0, %s564
    %s567 = sphi 0, %s566
    %s581 = sphi 0, %s567
    %s585 = sphi 0, %s585
    %s587 = sphi 0, %s585
    %s588 = sphi 0, %s587
    %s602 = sphi 0, %s588
    %s606 = sphi 0, %s606
    %s608 = sphi 0, %s606
    %s609 = sphi 0, %s608
    %s623 = sphi 0, %s609
    %s627 = sphi 0, %s627
    %s629 = sphi 0, %s627
    %s630 = sphi 0, %s629
    %s644 = sphi 0, %s630
    %s648 = sphi 0, %s648
    %s650 = sphi 0, %s648
    %s651 = sphi 0, %s650
    %s665 = sphi 0, %s651
    %s669 = sphi 0, %s669
    %s671 = sphi 0, %s669
    %s672 = sphi 0, %s671
    %s686 = sphi 0, %s672
    %s690 = sphi 0, %s690
    %s692 = sphi 0, %s690
    %s693 = sphi 0, %s692
    %s707 = sphi 0, %s693
    %s715 = sphi 0, %s717
    %s718 = sphi 0, %s715
    %s719 = sphi 0, %s718
    %s735 = sphi 0, %s719
  $region4: #{tpu_custom_call.1} parent=0 // loop_header_branch
    %68 = sbr.rel (%p66) target = $region8
  $region5: #{tpu_custom_call.1} parent=0 // loop_body
    %s70 = ssub.s32 %s65, 1
    %s71 = ssub.s32 %s65, 2
    %s78 = sadd.s32 1, %s73
    %p79 = scmp.ge.s32.totalorder %s78, 1
    %s80 = scalar_select %p79, 0, %s78
    %s81 = sadd.s32 1, %s72
    %s82 = scalar_select %p79, %s81, %s72
    %p83 = scmp.ge.s32.totalorder %s82, 2
    %s84 = scalar_select %p83, 0, %s82
    %s85 = ssub.s32 %s72, %s84
    %s86 = ssub.s32 %s73, %s80
    %s87 = sor.u32 %s85, %s86
    %p88 = scmp.eq.s32.totalorder %s87, 0
    %s90 = sadd.s32 %s89, 1
    %s91 = scalar_select %p88, %s89, %s90
    %p94 = pneg %p88
    %p95 = scmp.eq.s32.totalorder %s65, 1
    %p96 = por %p94, %p95
    %p97 = scmp.ne.s32.totalorder %s89, %s92
    %p98 = scmp.eq.s32.totalorder %s65, 0
    %p99 = por %p97, %p98
    %p100 = scmp.ne.s32.totalorder %s89, %s92
    %p101 = scmp.eq.s32.totalorder %s70, 1
    %p102 = por %p100, %p101
    %p103 = scmp.ne.s32.totalorder %s92, %s93
    %p104 = scmp.eq.s32.totalorder %s70, 0
    %p105 = por %p103, %p104
    %p106 = scmp.ne.s32.totalorder %s92, %s93
    %p107 = scmp.eq.s32.totalorder %s71, 1
    %p108 = por %p106, %p107
    %p110 = scmp.ne.s32.totalorder %s93, %s109
    %p111 = scmp.eq.s32.totalorder %s71, 0
    %p112 = por %p110, %p111
    %s113 = ssub.s32 %s72, %s84
    %p114 = scmp.eq.s32.totalorder %s113, 0
    %s116 = sadd.s32 %s115, 1
    %s117 = scalar_select %p114, %s115, %s116
    %p120 = pneg %p114
    %p121 = scmp.eq.s32.totalorder %s65, 1
    %p122 = por %p120, %p121
    %p123 = scmp.ne.s32.totalorder %s115, %s118
    %p124 = scmp.eq.s32.totalorder %s65, 0
    %p125 = por %p123, %p124
    %p126 = scmp.ne.s32.totalorder %s115, %s118
    %p127 = scmp.eq.s32.totalorder %s70, 1
    %p128 = por %p126, %p127
    %p129 = scmp.ne.s32.totalorder %s118, %s119
    %p130 = scmp.eq.s32.totalorder %s70, 0
    %p131 = por %p129, %p130
    %p132 = scmp.ne.s32.totalorder %s118, %s119
    %p133 = scmp.eq.s32.totalorder %s71, 1
    %p134 = por %p132, %p133
    %p136 = scmp.ne.s32.totalorder %s119, %s135
    %p137 = scmp.eq.s32.totalorder %s71, 0
    %p138 = por %p136, %p137
    %s139 = ssub.s32 %s72, %s84
    %p140 = scmp.eq.s32.totalorder %s139, 0
    %s142 = sadd.s32 %s141, 1
    %s143 = scalar_select %p140, %s141, %s142
    %p146 = pneg %p140
    %p147 = scmp.eq.s32.totalorder %s65, 1
    %p148 = por %p146, %p147
    %p149 = scmp.ne.s32.totalorder %s141, %s144
    %p150 = scmp.eq.s32.totalorder %s65, 0
    %p151 = por %p149, %p150
    %p152 = scmp.ne.s32.totalorder %s141, %s144
    %p153 = scmp.eq.s32.totalorder %s70, 1
    %p154 = por %p152, %p153
    %p155 = scmp.ne.s32.totalorder %s144, %s145
    %p156 = scmp.eq.s32.totalorder %s70, 0
    %p157 = por %p155, %p156
    %p158 = scmp.ne.s32.totalorder %s144, %s145
    %p159 = scmp.eq.s32.totalorder %s71, 1
    %p160 = por %p158, %p159
    %p162 = scmp.ne.s32.totalorder %s145, %s161
    %p163 = scmp.eq.s32.totalorder %s71, 0
    %p164 = por %p162, %p163
    %s166 = sadd.s32 %s165, 1
    %p169 = scmp.eq.s32.totalorder %s65, 1
    %p170 = scmp.ne.s32.totalorder %s165, %s167
    %p171 = scmp.eq.s32.totalorder %s65, 0
    %p172 = por %p170, %p171
    %p173 = scmp.ne.s32.totalorder %s165, %s167
    %p174 = scmp.eq.s32.totalorder %s70, 1
    %p175 = por %p173, %p174
    %p176 = scmp.ne.s32.totalorder %s167, %s168
    %p177 = scmp.eq.s32.totalorder %s70, 0
    %p178 = por %p176, %p177
    %p179 = scmp.ne.s32.totalorder %s167, %s168
    %p180 = scmp.eq.s32.totalorder %s71, 1
    %p181 = por %p179, %p180
    %p183 = scmp.ne.s32.totalorder %s168, %s182
    %p184 = scmp.eq.s32.totalorder %s71, 0
    %p185 = por %p183, %p184
    %s187 = sadd.s32 %s186, 1
    %p190 = scmp.eq.s32.totalorder %s65, 1
    %p191 = scmp.ne.s32.totalorder %s186, %s188
    %p192 = scmp.eq.s32.totalorder %s65, 0
    %p193 = por %p191, %p192
    %p194 = scmp.ne.s32.totalorder %s186, %s188
    %p195 = scmp.eq.s32.totalorder %s70, 1
    %p196 = por %p194, %p195
    %p197 = scmp.ne.s32.totalorder %s188, %s189
    %p198 = scmp.eq.s32.totalorder %s70, 0
    %p199 = por %p197, %p198
    %p200 = scmp.ne.s32.totalorder %s188, %s189
    %p201 = scmp.eq.s32.totalorder %s71, 1
    %p202 = por %p200, %p201
    %p204 = scmp.ne.s32.totalorder %s189, %s203
    %p205 = scmp.eq.s32.totalorder %s71, 0
    %p206 = por %p204, %p205
    %s208 = sadd.s32 %s207, 1
    %p211 = scmp.eq.s32.totalorder %s65, 1
    %p212 = scmp.ne.s32.totalorder %s207, %s209
    %p213 = scmp.eq.s32.totalorder %s65, 0
    %p214 = por %p212, %p213
    %p215 = scmp.ne.s32.totalorder %s207, %s209
    %p216 = scmp.eq.s32.totalorder %s70, 1
    %p217 = por %p215, %p216
    %p218 = scmp.ne.s32.totalorder %s209, %s210
    %p219 = scmp.eq.s32.totalorder %s70, 0
    %p220 = por %p218, %p219
    %p221 = scmp.ne.s32.totalorder %s209, %s210
    %p222 = scmp.eq.s32.totalorder %s71, 1
    %p223 = por %p221, %p222
    %p225 = scmp.ne.s32.totalorder %s210, %s224
    %p226 = scmp.eq.s32.totalorder %s71, 0
    %p227 = por %p225, %p226
    %s229 = sadd.s32 %s228, 1
    %p232 = scmp.eq.s32.totalorder %s65, 1
    %p233 = scmp.ne.s32.totalorder %s228, %s230
    %p234 = scmp.eq.s32.totalorder %s65, 0
    %p235 = por %p233, %p234
    %p236 = scmp.ne.s32.totalorder %s228, %s230
    %p237 = scmp.eq.s32.totalorder %s70, 1
    %p238 = por %p236, %p237
    %p239 = scmp.ne.s32.totalorder %s230, %s231
    %p240 = scmp.eq.s32.totalorder %s70, 0
    %p241 = por %p239, %p240
    %p242 = scmp.ne.s32.totalorder %s230, %s231
    %p243 = scmp.eq.s32.totalorder %s71, 1
    %p244 = por %p242, %p243
    %p246 = scmp.ne.s32.totalorder %s231, %s245
    %p247 = scmp.eq.s32.totalorder %s71, 0
    %p248 = por %p246, %p247
    %s250 = sadd.s32 %s249, 1
    %p253 = scmp.eq.s32.totalorder %s65, 1
    %p254 = scmp.ne.s32.totalorder %s249, %s251
    %p255 = scmp.eq.s32.totalorder %s65, 0
    %p256 = por %p254, %p255
    %p257 = scmp.ne.s32.totalorder %s249, %s251
    %p258 = scmp.eq.s32.totalorder %s70, 1
    %p259 = por %p257, %p258
    %p260 = scmp.ne.s32.totalorder %s251, %s252
    %p261 = scmp.eq.s32.totalorder %s70, 0
    %p262 = por %p260, %p261
    %p263 = scmp.ne.s32.totalorder %s251, %s252
    %p264 = scmp.eq.s32.totalorder %s71, 1
    %p265 = por %p263, %p264
    %p267 = scmp.ne.s32.totalorder %s252, %s266
    %p268 = scmp.eq.s32.totalorder %s71, 0
    %p269 = por %p267, %p268
    %s271 = sadd.s32 %s270, 1
    %p274 = scmp.eq.s32.totalorder %s65, 1
    %p275 = scmp.ne.s32.totalorder %s270, %s272
    %p276 = scmp.eq.s32.totalorder %s65, 0
    %p277 = por %p275, %p276
    %p278 = scmp.ne.s32.totalorder %s270, %s272
    %p279 = scmp.eq.s32.totalorder %s70, 1
    %p280 = por %p278, %p279
    %p281 = scmp.ne.s32.totalorder %s272, %s273
    %p282 = scmp.eq.s32.totalorder %s70, 0
    %p283 = por %p281, %p282
    %p284 = scmp.ne.s32.totalorder %s272, %s273
    %p285 = scmp.eq.s32.totalorder %s71, 1
    %p286 = por %p284, %p285
    %p288 = scmp.ne.s32.totalorder %s273, %s287
    %p289 = scmp.eq.s32.totalorder %s71, 0
    %p290 = por %p288, %p289
    %s292 = sadd.s32 %s291, 1
    %p295 = scmp.eq.s32.totalorder %s65, 1
    %p296 = scmp.ne.s32.totalorder %s291, %s293
    %p297 = scmp.eq.s32.totalorder %s65, 0
    %p298 = por %p296, %p297
    %p299 = scmp.ne.s32.totalorder %s291, %s293
    %p300 = scmp.eq.s32.totalorder %s70, 1
    %p301 = por %p299, %p300
    %p302 = scmp.ne.s32.totalorder %s293, %s294
    %p303 = scmp.eq.s32.totalorder %s70, 0
    %p304 = por %p302, %p303
    %p305 = scmp.ne.s32.totalorder %s293, %s294
    %p306 = scmp.eq.s32.totalorder %s71, 1
    %p307 = por %p305, %p306
    %p309 = scmp.ne.s32.totalorder %s294, %s308
    %p310 = scmp.eq.s32.totalorder %s71, 0
    %p311 = por %p309, %p310
    %s313 = sadd.s32 %s312, 1
    %p316 = scmp.eq.s32.totalorder %s65, 1
    %p317 = scmp.ne.s32.totalorder %s312, %s314
    %p318 = scmp.eq.s32.totalorder %s65, 0
    %p319 = por %p317, %p318
    %p320 = scmp.ne.s32.totalorder %s312, %s314
    %p321 = scmp.eq.s32.totalorder %s70, 1
    %p322 = por %p320, %p321
    %p323 = scmp.ne.s32.totalorder %s314, %s315
    %p324 = scmp.eq.s32.totalorder %s70, 0
    %p325 = por %p323, %p324
    %p326 = scmp.ne.s32.totalorder %s314, %s315
    %p327 = scmp.eq.s32.totalorder %s71, 1
    %p328 = por %p326, %p327
    %p330 = scmp.ne.s32.totalorder %s315, %s329
    %p331 = scmp.eq.s32.totalorder %s71, 0
    %p332 = por %p330, %p331
    %s334 = sadd.s32 %s333, 1
    %p337 = scmp.eq.s32.totalorder %s65, 1
    %p338 = scmp.ne.s32.totalorder %s333, %s335
    %p339 = scmp.eq.s32.totalorder %s65, 0
    %p340 = por %p338, %p339
    %p341 = scmp.ne.s32.totalorder %s333, %s335
    %p342 = scmp.eq.s32.totalorder %s70, 1
    %p343 = por %p341, %p342
    %p344 = scmp.ne.s32.totalorder %s335, %s336
    %p345 = scmp.eq.s32.totalorder %s70, 0
    %p346 = por %p344, %p345
    %p347 = scmp.ne.s32.totalorder %s335, %s336
    %p348 = scmp.eq.s32.totalorder %s71, 1
    %p349 = por %p347, %p348
    %p351 = scmp.ne.s32.totalorder %s336, %s350
    %p352 = scmp.eq.s32.totalorder %s71, 0
    %p353 = por %p351, %p352
    %s355 = sadd.s32 %s354, 1
    %p358 = scmp.eq.s32.totalorder %s65, 1
    %p359 = scmp.ne.s32.totalorder %s354, %s356
    %p360 = scmp.eq.s32.totalorder %s65, 0
    %p361 = por %p359, %p360
    %p362 = scmp.ne.s32.totalorder %s354, %s356
    %p363 = scmp.eq.s32.totalorder %s70, 1
    %p364 = por %p362, %p363
    %p365 = scmp.ne.s32.totalorder %s356, %s357
    %p366 = scmp.eq.s32.totalorder %s70, 0
    %p367 = por %p365, %p366
    %p368 = scmp.ne.s32.totalorder %s356, %s357
    %p369 = scmp.eq.s32.totalorder %s71, 1
    %p370 = por %p368, %p369
    %p372 = scmp.ne.s32.totalorder %s357, %s371
    %p373 = scmp.eq.s32.totalorder %s71, 0
    %p374 = por %p372, %p373
    %s376 = sadd.s32 %s375, 1
    %p379 = scmp.eq.s32.totalorder %s65, 1
    %p380 = scmp.ne.s32.totalorder %s375, %s377
    %p381 = scmp.eq.s32.totalorder %s65, 0
    %p382 = por %p380, %p381
    %p383 = scmp.ne.s32.totalorder %s375, %s377
    %p384 = scmp.eq.s32.totalorder %s70, 1
    %p385 = por %p383, %p384
    %p386 = scmp.ne.s32.totalorder %s377, %s378
    %p387 = scmp.eq.s32.totalorder %s70, 0
    %p388 = por %p386, %p387
    %p389 = scmp.ne.s32.totalorder %s377, %s378
    %p390 = scmp.eq.s32.totalorder %s71, 1
    %p391 = por %p389, %p390
    %p393 = scmp.ne.s32.totalorder %s378, %s392
    %p394 = scmp.eq.s32.totalorder %s71, 0
    %p395 = por %p393, %p394
    %s397 = sadd.s32 %s396, 1
    %p400 = scmp.eq.s32.totalorder %s65, 1
    %p401 = scmp.ne.s32.totalorder %s396, %s398
    %p402 = scmp.eq.s32.totalorder %s65, 0
    %p403 = por %p401, %p402
    %p404 = scmp.ne.s32.totalorder %s396, %s398
    %p405 = scmp.eq.s32.totalorder %s70, 1
    %p406 = por %p404, %p405
    %p407 = scmp.ne.s32.totalorder %s398, %s399
    %p408 = scmp.eq.s32.totalorder %s70, 0
    %p409 = por %p407, %p408
    %p410 = scmp.ne.s32.totalorder %s398, %s399
    %p411 = scmp.eq.s32.totalorder %s71, 1
    %p412 = por %p410, %p411
    %p414 = scmp.ne.s32.totalorder %s399, %s413
    %p415 = scmp.eq.s32.totalorder %s71, 0
    %p416 = por %p414, %p415
    %s418 = sadd.s32 %s417, 1
    %p421 = scmp.eq.s32.totalorder %s65, 1
    %p422 = scmp.ne.s32.totalorder %s417, %s419
    %p423 = scmp.eq.s32.totalorder %s65, 0
    %p424 = por %p422, %p423
    %p425 = scmp.ne.s32.totalorder %s417, %s419
    %p426 = scmp.eq.s32.totalorder %s70, 1
    %p427 = por %p425, %p426
    %p428 = scmp.ne.s32.totalorder %s419, %s420
    %p429 = scmp.eq.s32.totalorder %s70, 0
    %p430 = por %p428, %p429
    %p431 = scmp.ne.s32.totalorder %s419, %s420
    %p432 = scmp.eq.s32.totalorder %s71, 1
    %p433 = por %p431, %p432
    %p435 = scmp.ne.s32.totalorder %s420, %s434
    %p436 = scmp.eq.s32.totalorder %s71, 0
    %p437 = por %p435, %p436
    %s439 = sadd.s32 %s438, 1
    %p442 = scmp.eq.s32.totalorder %s65, 1
    %p443 = scmp.ne.s32.totalorder %s438, %s440
    %p444 = scmp.eq.s32.totalorder %s65, 0
    %p445 = por %p443, %p444
    %p446 = scmp.ne.s32.totalorder %s438, %s440
    %p447 = scmp.eq.s32.totalorder %s70, 1
    %p448 = por %p446, %p447
    %p449 = scmp.ne.s32.totalorder %s440, %s441
    %p450 = scmp.eq.s32.totalorder %s70, 0
    %p451 = por %p449, %p450
    %p452 = scmp.ne.s32.totalorder %s440, %s441
    %p453 = scmp.eq.s32.totalorder %s71, 1
    %p454 = por %p452, %p453
    %p456 = scmp.ne.s32.totalorder %s441, %s455
    %p457 = scmp.eq.s32.totalorder %s71, 0
    %p458 = por %p456, %p457
    %s460 = sadd.s32 %s459, 1
    %p463 = scmp.eq.s32.totalorder %s65, 1
    %p464 = scmp.ne.s32.totalorder %s459, %s461
    %p465 = scmp.eq.s32.totalorder %s65, 0
    %p466 = por %p464, %p465
    %p467 = scmp.ne.s32.totalorder %s459, %s461
    %p468 = scmp.eq.s32.totalorder %s70, 1
    %p469 = por %p467, %p468
    %p470 = scmp.ne.s32.totalorder %s461, %s462
    %p471 = scmp.eq.s32.totalorder %s70, 0
    %p472 = por %p470, %p471
    %p473 = scmp.ne.s32.totalorder %s461, %s462
    %p474 = scmp.eq.s32.totalorder %s71, 1
    %p475 = por %p473, %p474
    %p477 = scmp.ne.s32.totalorder %s462, %s476
    %p478 = scmp.eq.s32.totalorder %s71, 0
    %p479 = por %p477, %p478
    %s481 = sadd.s32 %s480, 1
    %p484 = scmp.eq.s32.totalorder %s65, 1
    %p485 = scmp.ne.s32.totalorder %s480, %s482
    %p486 = scmp.eq.s32.totalorder %s65, 0
    %p487 = por %p485, %p486
    %p488 = scmp.ne.s32.totalorder %s480, %s482
    %p489 = scmp.eq.s32.totalorder %s70, 1
    %p490 = por %p488, %p489
    %p491 = scmp.ne.s32.totalorder %s482, %s483
    %p492 = scmp.eq.s32.totalorder %s70, 0
    %p493 = por %p491, %p492
    %p494 = scmp.ne.s32.totalorder %s482, %s483
    %p495 = scmp.eq.s32.totalorder %s71, 1
    %p496 = por %p494, %p495
    %p498 = scmp.ne.s32.totalorder %s483, %s497
    %p499 = scmp.eq.s32.totalorder %s71, 0
    %p500 = por %p498, %p499
    %s502 = sadd.s32 %s501, 1
    %p505 = scmp.eq.s32.totalorder %s65, 1
    %p506 = scmp.ne.s32.totalorder %s501, %s503
    %p507 = scmp.eq.s32.totalorder %s65, 0
    %p508 = por %p506, %p507
    %p509 = scmp.ne.s32.totalorder %s501, %s503
    %p510 = scmp.eq.s32.totalorder %s70, 1
    %p511 = por %p509, %p510
    %p512 = scmp.ne.s32.totalorder %s503, %s504
    %p513 = scmp.eq.s32.totalorder %s70, 0
    %p514 = por %p512, %p513
    %p515 = scmp.ne.s32.totalorder %s503, %s504
    %p516 = scmp.eq.s32.totalorder %s71, 1
    %p517 = por %p515, %p516
    %p519 = scmp.ne.s32.totalorder %s504, %s518
    %p520 = scmp.eq.s32.totalorder %s71, 0
    %p521 = por %p519, %p520
    %s523 = sadd.s32 %s522, 1
    %p526 = scmp.eq.s32.totalorder %s65, 1
    %p527 = scmp.ne.s32.totalorder %s522, %s524
    %p528 = scmp.eq.s32.totalorder %s65, 0
    %p529 = por %p527, %p528
    %p530 = scmp.ne.s32.totalorder %s522, %s524
    %p531 = scmp.eq.s32.totalorder %s70, 1
    %p532 = por %p530, %p531
    %p533 = scmp.ne.s32.totalorder %s524, %s525
    %p534 = scmp.eq.s32.totalorder %s70, 0
    %p535 = por %p533, %p534
    %p536 = scmp.ne.s32.totalorder %s524, %s525
    %p537 = scmp.eq.s32.totalorder %s71, 1
    %p538 = por %p536, %p537
    %p540 = scmp.ne.s32.totalorder %s525, %s539
    %p541 = scmp.eq.s32.totalorder %s71, 0
    %p542 = por %p540, %p541
    %s544 = sadd.s32 %s543, 1
    %p547 = scmp.eq.s32.totalorder %s65, 1
    %p548 = scmp.ne.s32.totalorder %s543, %s545
    %p549 = scmp.eq.s32.totalorder %s65, 0
    %p550 = por %p548, %p549
    %p551 = scmp.ne.s32.totalorder %s543, %s545
    %p552 = scmp.eq.s32.totalorder %s70, 1
    %p553 = por %p551, %p552
    %p554 = scmp.ne.s32.totalorder %s545, %s546
    %p555 = scmp.eq.s32.totalorder %s70, 0
    %p556 = por %p554, %p555
    %p557 = scmp.ne.s32.totalorder %s545, %s546
    %p558 = scmp.eq.s32.totalorder %s71, 1
    %p559 = por %p557, %p558
    %p561 = scmp.ne.s32.totalorder %s546, %s560
    %p562 = scmp.eq.s32.totalorder %s71, 0
    %p563 = por %p561, %p562
    %s565 = sadd.s32 %s564, 1
    %p568 = scmp.eq.s32.totalorder %s65, 1
    %p569 = scmp.ne.s32.totalorder %s564, %s566
    %p570 = scmp.eq.s32.totalorder %s65, 0
    %p571 = por %p569, %p570
    %p572 = scmp.ne.s32.totalorder %s564, %s566
    %p573 = scmp.eq.s32.totalorder %s70, 1
    %p574 = por %p572, %p573
    %p575 = scmp.ne.s32.totalorder %s566, %s567
    %p576 = scmp.eq.s32.totalorder %s70, 0
    %p577 = por %p575, %p576
    %p578 = scmp.ne.s32.totalorder %s566, %s567
    %p579 = scmp.eq.s32.totalorder %s71, 1
    %p580 = por %p578, %p579
    %p582 = scmp.ne.s32.totalorder %s567, %s581
    %p583 = scmp.eq.s32.totalorder %s71, 0
    %p584 = por %p582, %p583
    %s586 = sadd.s32 %s585, 1
    %p589 = scmp.eq.s32.totalorder %s65, 1
    %p590 = scmp.ne.s32.totalorder %s585, %s587
    %p591 = scmp.eq.s32.totalorder %s65, 0
    %p592 = por %p590, %p591
    %p593 = scmp.ne.s32.totalorder %s585, %s587
    %p594 = scmp.eq.s32.totalorder %s70, 1
    %p595 = por %p593, %p594
    %p596 = scmp.ne.s32.totalorder %s587, %s588
    %p597 = scmp.eq.s32.totalorder %s70, 0
    %p598 = por %p596, %p597
    %p599 = scmp.ne.s32.totalorder %s587, %s588
    %p600 = scmp.eq.s32.totalorder %s71, 1
    %p601 = por %p599, %p600
    %p603 = scmp.ne.s32.totalorder %s588, %s602
    %p604 = scmp.eq.s32.totalorder %s71, 0
    %p605 = por %p603, %p604
    %s607 = sadd.s32 %s606, 1
    %p610 = scmp.eq.s32.totalorder %s65, 1
    %p611 = scmp.ne.s32.totalorder %s606, %s608
    %p612 = scmp.eq.s32.totalorder %s65, 0
    %p613 = por %p611, %p612
    %p614 = scmp.ne.s32.totalorder %s606, %s608
    %p615 = scmp.eq.s32.totalorder %s70, 1
    %p616 = por %p614, %p615
    %p617 = scmp.ne.s32.totalorder %s608, %s609
    %p618 = scmp.eq.s32.totalorder %s70, 0
    %p619 = por %p617, %p618
    %p620 = scmp.ne.s32.totalorder %s608, %s609
    %p621 = scmp.eq.s32.totalorder %s71, 1
    %p622 = por %p620, %p621
    %p624 = scmp.ne.s32.totalorder %s609, %s623
    %p625 = scmp.eq.s32.totalorder %s71, 0
    %p626 = por %p624, %p625
    %s628 = sadd.s32 %s627, 1
    %p631 = scmp.eq.s32.totalorder %s65, 1
    %p632 = scmp.ne.s32.totalorder %s627, %s629
    %p633 = scmp.eq.s32.totalorder %s65, 0
    %p634 = por %p632, %p633
    %p635 = scmp.ne.s32.totalorder %s627, %s629
    %p636 = scmp.eq.s32.totalorder %s70, 1
    %p637 = por %p635, %p636
    %p638 = scmp.ne.s32.totalorder %s629, %s630
    %p639 = scmp.eq.s32.totalorder %s70, 0
    %p640 = por %p638, %p639
    %p641 = scmp.ne.s32.totalorder %s629, %s630
    %p642 = scmp.eq.s32.totalorder %s71, 1
    %p643 = por %p641, %p642
    %p645 = scmp.ne.s32.totalorder %s630, %s644
    %p646 = scmp.eq.s32.totalorder %s71, 0
    %p647 = por %p645, %p646
    %s649 = sadd.s32 %s648, 1
    %p652 = scmp.eq.s32.totalorder %s65, 1
    %p653 = scmp.ne.s32.totalorder %s648, %s650
    %p654 = scmp.eq.s32.totalorder %s65, 0
    %p655 = por %p653, %p654
    %p656 = scmp.ne.s32.totalorder %s648, %s650
    %p657 = scmp.eq.s32.totalorder %s70, 1
    %p658 = por %p656, %p657
    %p659 = scmp.ne.s32.totalorder %s650, %s651
    %p660 = scmp.eq.s32.totalorder %s70, 0
    %p661 = por %p659, %p660
    %p662 = scmp.ne.s32.totalorder %s650, %s651
    %p663 = scmp.eq.s32.totalorder %s71, 1
    %p664 = por %p662, %p663
    %p666 = scmp.ne.s32.totalorder %s651, %s665
    %p667 = scmp.eq.s32.totalorder %s71, 0
    %p668 = por %p666, %p667
    %s670 = sadd.s32 %s669, 1
    %p673 = scmp.eq.s32.totalorder %s65, 1
    %p674 = scmp.ne.s32.totalorder %s669, %s671
    %p675 = scmp.eq.s32.totalorder %s65, 0
    %p676 = por %p674, %p675
    %p677 = scmp.ne.s32.totalorder %s669, %s671
    %p678 = scmp.eq.s32.totalorder %s70, 1
    %p679 = por %p677, %p678
    %p680 = scmp.ne.s32.totalorder %s671, %s672
    %p681 = scmp.eq.s32.totalorder %s70, 0
    %p682 = por %p680, %p681
    %p683 = scmp.ne.s32.totalorder %s671, %s672
    %p684 = scmp.eq.s32.totalorder %s71, 1
    %p685 = por %p683, %p684
    %p687 = scmp.ne.s32.totalorder %s672, %s686
    %p688 = scmp.eq.s32.totalorder %s71, 0
    %p689 = por %p687, %p688
    %s691 = sadd.s32 %s690, 1
    %p694 = scmp.eq.s32.totalorder %s65, 1
    %p695 = scmp.ne.s32.totalorder %s690, %s692
    %p696 = scmp.eq.s32.totalorder %s65, 0
    %p697 = por %p695, %p696
    %p698 = scmp.ne.s32.totalorder %s690, %s692
    %p699 = scmp.eq.s32.totalorder %s70, 1
    %p700 = por %p698, %p699
    %p701 = scmp.ne.s32.totalorder %s692, %s693
    %p702 = scmp.eq.s32.totalorder %s70, 0
    %p703 = por %p701, %p702
    %p704 = scmp.ne.s32.totalorder %s692, %s693
    %p705 = scmp.eq.s32.totalorder %s71, 1
    %p706 = por %p704, %p705
    %p708 = scmp.ne.s32.totalorder %s693, %s707
    %p709 = scmp.eq.s32.totalorder %s71, 0
    %p710 = por %p708, %p709
    %s711 = ssub.s32 %s72, %s84
    %s712 = ssub.s32 %s73, %s80
    %s713 = sor.u32 %s711, %s712
    %p714 = scmp.eq.s32.totalorder %s713, 0
    %s716 = sadd.s32 %s715, 1
    %s717 = scalar_select %p714, %s715, %s716
    %p720 = pneg %p714
    %p721 = scmp.eq.s32.totalorder %s65, 1
    %p722 = por %p720, %p721
    %p723 = scmp.ne.s32.totalorder %s715, %s718
    %p724 = scmp.eq.s32.totalorder %s65, 0
    %p725 = por %p723, %p724
    %p726 = scmp.ne.s32.totalorder %s715, %s718
    %p727 = scmp.eq.s32.totalorder %s70, 1
    %p728 = por %p726, %p727
    %p729 = scmp.ne.s32.totalorder %s718, %s719
    %p730 = scmp.eq.s32.totalorder %s70, 0
    %p731 = por %p729, %p730
    %p732 = scmp.ne.s32.totalorder %s718, %s719
    %p733 = scmp.eq.s32.totalorder %s71, 1
    %p734 = por %p732, %p733
    %p736 = scmp.ne.s32.totalorder %s719, %s735
    %p737 = scmp.eq.s32.totalorder %s71, 0
    %p738 = por %p736, %p737
    %p739 = scmp.le.s32.totalorder 1, %s65
    %p740 = scmp.lt.s32.totalorder %s65, 3
    %p741 = pnand %p739, %p740
    %p742 = pneg %p741
    // Predicated region
    $region9: #{tpu_custom_call.1} parent=5 // pred_check
      _
    $region10: #{tpu_custom_call.1} parent=5 // pred_check_branch
      %744 = sbr.rel (%p741) target = $region12
    $region11: #{tpu_custom_call.1} parent=5 // pred_region
      %s745 = ssub.s32 %s65, 1
      // Predicated region
      $region13: #{tpu_custom_call.1} parent=11 // pred_check
        %p746 = pneg %p178
      $region14: #{tpu_custom_call.1} parent=11 // pred_check_branch
        %748 = sbr.rel (%p746) target = $region16
      $region15: #{tpu_custom_call.1} parent=11 // pred_region
        _
      $region16: #{tpu_custom_call.1} parent=11 // pred_fallthru
        _
      // Predicated region
      $region17: #{tpu_custom_call.1} parent=11 // pred_check
        %p749 = pneg %p199
      $region18: #{tpu_custom_call.1} parent=11 // pred_check_branch
        %751 = sbr.rel (%p749) target = $region20
      $region19: #{tpu_custom_call.1} parent=11 // pred_region
        _
      $region20: #{tpu_custom_call.1} parent=11 // pred_fallthru
        _
      // Predicated region
      $region21: #{tpu_custom_call.1} parent=11 // pred_check
        %p752 = pneg %p220
      $region22: #{tpu_custom_call.1} parent=11 // pred_check_branch
        %754 = sbr.rel (%p752) target = $region24
      $region23: #{tpu_custom_call.1} parent=11 // pred_region
        _
      $region24: #{tpu_custom_call.1} parent=11 // pred_fallthru
        _
      // Predicated region
      $region25: #{tpu_custom_call.1} parent=11 // pred_check
        %p755 = pneg %p241
      $region26: #{tpu_custom_call.1} parent=11 // pred_check_branch
        %757 = sbr.rel (%p755) target = $region28
      $region27: #{tpu_custom_call.1} parent=11 // pred_region
        _
      $region28: #{tpu_custom_call.1} parent=11 // pred_fallthru
        _
      // Predicated region
      $region29: #{tpu_custom_call.1} parent=11 // pred_check
        %p758 = pneg %p262
      $region30: #{tpu_custom_call.1} parent=11 // pred_check_branch
        %760 = sbr.rel (%p758) target = $region32
      $region31: #{tpu_custom_call.1} parent=11 // pred_region
        _
      $region32: #{tpu_custom_call.1} parent=11 // pred_fallthru
        _
      // Predicated region
      $region33: #{tpu_custom_call.1} parent=11 // pred_check
        %p761 = pneg %p283
      $region34: #{tpu_custom_call.1} parent=11 // pred_check_branch
        %763 = sbr.rel (%p761) target = $region36
      $region35: #{tpu_custom_call.1} parent=11 // pred_region
        _
      $region36: #{tpu_custom_call.1} parent=11 // pred_fallthru
        _
      // Predicated region
      $region37: #{tpu_custom_call.1} parent=11 // pred_check
        %p764 = pneg %p304
      $region38: #{tpu_custom_call.1} parent=11 // pred_check_branch
        %766 = sbr.rel (%p764) target = $region40
      $region39: #{tpu_custom_call.1} parent=11 // pred_region
        _
      $region40: #{tpu_custom_call.1} parent=11 // pred_fallthru
        _
      // Predicated region
      $region41: #{tpu_custom_call.1} parent=11 // pred_check
        %p767 = pneg %p325
      $region42: #{tpu_custom_call.1} parent=11 // pred_check_branch
        %769 = sbr.rel (%p767) target = $region44
      $region43: #{tpu_custom_call.1} parent=11 // pred_region
        _
      $region44: #{tpu_custom_call.1} parent=11 // pred_fallthru
        _
      // Predicated region
      $region45: #{tpu_custom_call.1} parent=11 // pred_check
        %p770 = pneg %p346
      $region46: #{tpu_custom_call.1} parent=11 // pred_check_branch
        %772 = sbr.rel (%p770) target = $region48
      $region47: #{tpu_custom_call.1} parent=11 // pred_region
        _
      $region48: #{tpu_custom_call.1} parent=11 // pred_fallthru
        _
      // Predicated region
      $region49: #{tpu_custom_call.1} parent=11 // pred_check
        %p773 = pneg %p367
      $region50: #{tpu_custom_call.1} parent=11 // pred_check_branch
        %775 = sbr.rel (%p773) target = $region52
      $region51: #{tpu_custom_call.1} parent=11 // pred_region
        _
      $region52: #{tpu_custom_call.1} parent=11 // pred_fallthru
        _
      // Predicated region
      $region53: #{tpu_custom_call.1} parent=11 // pred_check
        %p776 = pneg %p388
      $region54: #{tpu_custom_call.1} parent=11 // pred_check_branch
        %778 = sbr.rel (%p776) target = $region56
      $region55: #{tpu_custom_call.1} parent=11 // pred_region
        _
      $region56: #{tpu_custom_call.1} parent=11 // pred_fallthru
        _
      // Predicated region
      $region57: #{tpu_custom_call.1} parent=11 // pred_check
        %p779 = pneg %p409
      $region58: #{tpu_custom_call.1} parent=11 // pred_check_branch
        %781 = sbr.rel (%p779) target = $region60
      $region59: #{tpu_custom_call.1} parent=11 // pred_region
        _
      $region60: #{tpu_custom_call.1} parent=11 // pred_fallthru
        _
      // Predicated region
      $region61: #{tpu_custom_call.1} parent=11 // pred_check
        %p782 = pneg %p430
      $region62: #{tpu_custom_call.1} parent=11 // pred_check_branch
        %784 = sbr.rel (%p782) target = $region64
      $region63: #{tpu_custom_call.1} parent=11 // pred_region
        _
      $region64: #{tpu_custom_call.1} parent=11 // pred_fallthru
        _
      // Predicated region
      $region65: #{tpu_custom_call.1} parent=11 // pred_check
        %p785 = pneg %p451
      $region66: #{tpu_custom_call.1} parent=11 // pred_check_branch
        %787 = sbr.rel (%p785) target = $region68
      $region67: #{tpu_custom_call.1} parent=11 // pred_region
        _
      $region68: #{tpu_custom_call.1} parent=11 // pred_fallthru
        _
      // Predicated region
      $region69: #{tpu_custom_call.1} parent=11 // pred_check
        %p788 = pneg %p472
      $region70: #{tpu_custom_call.1} parent=11 // pred_check_branch
        %790 = sbr.rel (%p788) target = $region72
      $region71: #{tpu_custom_call.1} parent=11 // pred_region
        _
      $region72: #{tpu_custom_call.1} parent=11 // pred_fallthru
        _
      // Predicated region
      $region73: #{tpu_custom_call.1} parent=11 // pred_check
        %p791 = pneg %p493
      $region74: #{tpu_custom_call.1} parent=11 // pred_check_branch
        %793 = sbr.rel (%p791) target = $region76
      $region75: #{tpu_custom_call.1} parent=11 // pred_region
        _
      $region76: #{tpu_custom_call.1} parent=11 // pred_fallthru
        _
      // Predicated region
      $region77: #{tpu_custom_call.1} parent=11 // pred_check
        %p794 = pneg %p514
      $region78: #{tpu_custom_call.1} parent=11 // pred_check_branch
        %796 = sbr.rel (%p794) target = $region80
      $region79: #{tpu_custom_call.1} parent=11 // pred_region
        _
      $region80: #{tpu_custom_call.1} parent=11 // pred_fallthru
        _
      // Predicated region
      $region81: #{tpu_custom_call.1} parent=11 // pred_check
        %p797 = pneg %p535
      $region82: #{tpu_custom_call.1} parent=11 // pred_check_branch
        %799 = sbr.rel (%p797) target = $region84
      $region83: #{tpu_custom_call.1} parent=11 // pred_region
        _
      $region84: #{tpu_custom_call.1} parent=11 // pred_fallthru
        _
      // Predicated region
      $region85: #{tpu_custom_call.1} parent=11 // pred_check
        %p800 = pneg %p556
      $region86: #{tpu_custom_call.1} parent=11 // pred_check_branch
        %802 = sbr.rel (%p800) target = $region88
      $region87: #{tpu_custom_call.1} parent=11 // pred_region
        _
      $region88: #{tpu_custom_call.1} parent=11 // pred_fallthru
        _
      // Predicated region
      $region89: #{tpu_custom_call.1} parent=11 // pred_check
        %p803 = pneg %p577
      $region90: #{tpu_custom_call.1} parent=11 // pred_check_branch
        %805 = sbr.rel (%p803) target = $region92
      $region91: #{tpu_custom_call.1} parent=11 // pred_region
        _
      $region92: #{tpu_custom_call.1} parent=11 // pred_fallthru
        _
      // Predicated region
      $region93: #{tpu_custom_call.1} parent=11 // pred_check
        %p806 = pneg %p598
      $region94: #{tpu_custom_call.1} parent=11 // pred_check_branch
        %808 = sbr.rel (%p806) target = $region96
      $region95: #{tpu_custom_call.1} parent=11 // pred_region
        _
      $region96: #{tpu_custom_call.1} parent=11 // pred_fallthru
        _
      // Predicated region
      $region97: #{tpu_custom_call.1} parent=11 // pred_check
        %p809 = pneg %p619
      $region98: #{tpu_custom_call.1} parent=11 // pred_check_branch
        %811 = sbr.rel (%p809) target = $region100
      $region99: #{tpu_custom_call.1} parent=11 // pred_region
        _
      $region100: #{tpu_custom_call.1} parent=11 // pred_fallthru
        _
      // Predicated region
      $region101: #{tpu_custom_call.1} parent=11 // pred_check
        %p812 = pneg %p640
      $region102: #{tpu_custom_call.1} parent=11 // pred_check_branch
        %814 = sbr.rel (%p812) target = $region104
      $region103: #{tpu_custom_call.1} parent=11 // pred_region
        _
      $region104: #{tpu_custom_call.1} parent=11 // pred_fallthru
        _
      // Predicated region
      $region105: #{tpu_custom_call.1} parent=11 // pred_check
        %p815 = pneg %p661
      $region106: #{tpu_custom_call.1} parent=11 // pred_check_branch
        %817 = sbr.rel (%p815) target = $region108
      $region107: #{tpu_custom_call.1} parent=11 // pred_region
        _
      $region108: #{tpu_custom_call.1} parent=11 // pred_fallthru
        _
      // Predicated region
      $region109: #{tpu_custom_call.1} parent=11 // pred_check
        %p818 = pneg %p682
      $region110: #{tpu_custom_call.1} parent=11 // pred_check_branch
        %820 = sbr.rel (%p818) target = $region112
      $region111: #{tpu_custom_call.1} parent=11 // pred_region
        _
      $region112: #{tpu_custom_call.1} parent=11 // pred_fallthru
        _
      // Predicated region
      $region113: #{tpu_custom_call.1} parent=11 // pred_check
        %p821 = pneg %p703
      $region114: #{tpu_custom_call.1} parent=11 // pred_check_branch
        %823 = sbr.rel (%p821) target = $region116
      $region115: #{tpu_custom_call.1} parent=11 // pred_region
        _
      $region116: #{tpu_custom_call.1} parent=11 // pred_fallthru
        _
    $region12: #{tpu_custom_call.1} parent=5 // pred_fallthru
      _
    %p824 = scmp.lt.s32.totalorder %s65, 2
    // Predicated region
    $region117: #{tpu_custom_call.1} parent=5 // pred_check
      %p825 = pneg %p824
    $region118: #{tpu_custom_call.1} parent=5 // pred_check_branch
      %827 = sbr.rel (%p825) target = $region120
    $region119: #{tpu_custom_call.1} parent=5 // pred_region
      // Predicated region
      $region121: #{tpu_custom_call.1} parent=119 // pred_check
        %p828 = pneg %p99
      $region122: #{tpu_custom_call.1} parent=119 // pred_check_branch
        %830 = sbr.rel (%p828) target = $region124
      $region123: #{tpu_custom_call.1} parent=119 // pred_region
        %p831 = scmp.lt.s32.totalorder %s72, 1
        %s832 = scalar_select %p831, %s72, 1
        %p833 = scmp.lt.s32.totalorder %s73, 0
        %s834 = scalar_select %p833, %s73, 0
        %s835 = smul.addr %s832, 4
        %s836 = sadd.s32 %s834, %s835
        %s837 = smul.addr %s836, 8
        %s838 = scalar_lea.vmem %s1, %s837
      $region124: #{tpu_custom_call.1} parent=119 // pred_fallthru
        _
      // Predicated region
      $region125: #{tpu_custom_call.1} parent=119 // pred_check
        %p839 = pneg %p125
      $region126: #{tpu_custom_call.1} parent=119 // pred_check_branch
        %841 = sbr.rel (%p839) target = $region128
      $region127: #{tpu_custom_call.1} parent=119 // pred_region
        %p842 = scmp.lt.s32.totalorder %s72, 1
        %s843 = scalar_select %p842, %s72, 1
        %s844 = smul.addr %s843, 4
        %s845 = smul.addr %s844, 8
        %s846 = scalar_lea.vmem %s3, %s845
      $region128: #{tpu_custom_call.1} parent=119 // pred_fallthru
        _
      // Predicated region
      $region129: #{tpu_custom_call.1} parent=119 // pred_check
        %p847 = pneg %p151
      $region130: #{tpu_custom_call.1} parent=119 // pred_check_branch
        %849 = sbr.rel (%p847) target = $region132
      $region131: #{tpu_custom_call.1} parent=119 // pred_region
        %p850 = scmp.lt.s32.totalorder %s72, 1
        %s851 = scalar_select %p850, %s72, 1
        %s852 = smul.addr %s851, 4
        %s853 = smul.addr %s852, 8
        %s854 = scalar_lea.vmem %s5, %s853
      $region132: #{tpu_custom_call.1} parent=119 // pred_fallthru
        _
    $region120: #{tpu_custom_call.1} parent=5 // pred_fallthru
      _
    %p855 = scmp.le.s32.totalorder 1, %s65
    %p856 = scmp.lt.s32.totalorder %s65, 3
    %p857 = pnand %p855, %p856
    %p858 = pneg %p857
    // Predicated region
    $region133: #{tpu_custom_call.1} parent=5 // pred_check
      _
    $region134: #{tpu_custom_call.1} parent=5 // pred_check_branch
      %860 = sbr.rel (%p857) target = $region136
    $region135: #{tpu_custom_call.1} parent=5 // pred_region
      %s861 = ssub.s32 %s65, 1
      %p862 = scmp.lt.s32.totalorder %s74, 1
      %s863 = scalar_select %p862, %s74, 1
      %p864 = scmp.lt.s32.totalorder %s75, 0
      %s865 = scalar_select %p864, %s75, 0
      %s866 = smul.addr %s863, 4
      %s867 = sadd.s32 %s865, %s866
      %s868 = smul.addr %s867, 8
      %s869 = scalar_lea.vmem %s1, %s868
      %p870 = pneg %p105
      %p871 = pneg %p102
      %p872 = scmp.lt.s32.totalorder %s74, 1
      %s873 = scalar_select %p872, %s74, 1
      %s874 = smul.addr %s873, 4
      %s875 = smul.addr %s874, 8
      %s876 = scalar_lea.vmem %s3, %s875
      %p877 = pneg %p131
      %p878 = pneg %p128
      %p879 = scmp.lt.s32.totalorder %s74, 1
      %s880 = scalar_select %p879, %s74, 1
      %s881 = smul.addr %s880, 4
      %s882 = smul.addr %s881, 8
      %s883 = scalar_lea.vmem %s5, %s882
      %p884 = pneg %p157
      %p885 = pneg %p154
      %p886 = pneg %p178
      %p887 = pneg %p175
      %p888 = pneg %p199
      %p889 = pneg %p196
      %p890 = pneg %p220
      %p891 = pneg %p217
      %p892 = pneg %p241
      %p893 = pneg %p238
      %p894 = pneg %p262
      %p895 = pneg %p259
      %p896 = pneg %p283
      %p897 = pneg %p280
      %p898 = pneg %p304
      %p899 = pneg %p301
      %p900 = pneg %p325
      %p901 = pneg %p322
      %p902 = pneg %p346
      %p903 = pneg %p343
      %p904 = pneg %p367
      %p905 = pneg %p364
      %p906 = pneg %p388
      %p907 = pneg %p385
      %p908 = pneg %p409
      %p909 = pneg %p406
      %p910 = pneg %p430
      %p911 = pneg %p427
      %p912 = pneg %p451
      %p913 = pneg %p448
      %p914 = pneg %p472
      %p915 = pneg %p469
      %p916 = pneg %p493
      %p917 = pneg %p490
      %p918 = pneg %p514
      %p919 = pneg %p511
      %p920 = pneg %p535
      %p921 = pneg %p532
      %p922 = pneg %p556
      %p923 = pneg %p553
      %p924 = pneg %p577
      %p925 = pneg %p574
      %p926 = pneg %p598
      %p927 = pneg %p595
      %p928 = pneg %p619
      %p929 = pneg %p616
      %p930 = pneg %p640
      %p931 = pneg %p637
      %p932 = pneg %p661
      %p933 = pneg %p658
      %p934 = pneg %p682
      %p935 = pneg %p679
      %p936 = pneg %p703
      %p937 = pneg %p700
      %p938 = pneg %p731
      %p939 = pneg %p728
      %p940 = scmp.lt.s32.totalorder %s74, 1
      %s941 = scalar_select %p940, %s74, 1
      %p942 = scmp.lt.s32.totalorder %s75, 0
      %s943 = scalar_select %p942, %s75, 0
      %s944 = smul.addr %s941, 4
      %s945 = sadd.s32 %s943, %s944
      %s946 = smul.addr %s945, 8
      %s947 = scalar_lea.vmem %s59, %s946
      %p948 = scmp.lt.s32.totalorder %s74, 1
      %s949 = scalar_select %p948, %s74, 1
      %p950 = scmp.lt.s32.totalorder %s75, 0
      %s951 = scalar_select %p950, %s75, 0
      %s952 = smul.addr %s949, 4
      %s953 = sadd.s32 %s951, %s952
      %s954 = smul.addr %s953, 8
      %s955 = scalar_lea.vmem %s1, %s954
      %p956 = scmp.lt.s32.totalorder %s74, 1
      %s957 = scalar_select %p956, %s74, 1
      %s958 = smul.addr %s957, 4
      %s959 = smul.addr %s958, 8
      %s960 = scalar_lea.vmem %s3, %s959
      %p961 = scmp.lt.s32.totalorder %s74, 1
      %s962 = scalar_select %p961, %s74, 1
      %s963 = smul.addr %s962, 4
      %s964 = smul.addr %s963, 8
      %s965 = scalar_lea.vmem %s5, %s964
      %p966 = scmp.lt.s32.totalorder %s74, 1
      %s967 = scalar_select %p966, %s74, 1
      %p968 = scmp.lt.s32.totalorder %s75, 0
      %s969 = scalar_select %p968, %s75, 0
      %s970 = smul.addr %s967, 4
      %s971 = sadd.s32 %s969, %s970
      %s972 = smul.addr %s971, 8
      %s973 = scalar_lea.vmem %s59, %s972
      %p975 = scmp.eq.s32.totalorder %s75, 0
      // Predicated region
      $region137: #{tpu_custom_call.1} parent=135 // pred_check
        %p976 = pneg %p975
      $region138: #{tpu_custom_call.1} parent=135 // pred_check_branch
        %978 = sbr.rel (%p976) target = $region140
      $region139: #{tpu_custom_call.1} parent=135 // pred_region
        %v979 = vld [vmem:[%s960] sm:$0xff]
        %v980 = vld [vmem:[%s960 + $0x8] sm:$0xff]
        %v981 = vld [vmem:[%s960 + $0x10] sm:$0xff]
        %v982 = vld [vmem:[%s960 + $0x18] sm:$0xff]
        %v983 = vpack.c.bf16 %v980, %v979
        %v984 = vpack.c.bf16 %v982, %v981
        %v985 = vld [vmem:[%s11] sm:$0xf]
        %v986 = vld [vmem:[%s11 + $0x4] sm:$0xf]
        %v987 = vld [vmem:[%s11 + $0x8] sm:$0xf]
        %v988 = vld [vmem:[%s11 + $0xc] sm:$0xf]
        %v989 = vld [vmem:[%s13] sm:$0xff]
        %v990 = vld [vmem:[%s13 + $0x8] sm:$0xff]
        %v991 = vld [vmem:[%s13 + $0x10] sm:$0xff]
        %v992 = vld [vmem:[%s13 + $0x18] sm:$0xff]
        %994 = vset.pattern.permute.xlu0 0
        %995 = vperm.xlu0 %994, %v989
        %v996 = vpop.permute.xlu0 %995
        %999 = vset.pattern.permute.xlu0 0
        %1000 = vperm.xlu0 %999, %v990
        %v1001 = vpop.permute.xlu0 %1000
        %1004 = vset.pattern.permute.xlu0 0
        %1005 = vperm.xlu0 %1004, %v991
        %v1006 = vpop.permute.xlu0 %1005
        %1009 = vset.pattern.permute.xlu0 0
        %1010 = vperm.xlu0 %1009, %v992
        %v1011 = vpop.permute.xlu0 %1010
        %v1017 = vunpack.c.l.b16 %v985
        %v1018 = vunpack.c.l.b16 %v986
        %v1019 = vunpack.c.l.b16 %v987
        %v1020 = vunpack.c.l.b16 %v988
        %v1021 = vpack.c.b16 %v1018, %v1017
        %v1022 = vpack.c.b16 %v1020, %v1019
        %vm1023 = vcmask 261120
        %v1025 = vsel %vm1023, %v1021, 0
        %v1028 = vsel %vm1023, %v1022, 0
        %1030 = vmatprep.subr.bf16.mxu0 0
        %1031 = vmatpush1.bf16.msra.mxu0 0
        %1032 = vmatprep.subr.bf16.mxu0 0
        %1033 = vmatpush1.bf16.msra.mxu0 0
        %1034 = vmatprep.subr.bf16.mxu0 0
        %1035 = vmatpush1.bf16.msra.mxu0 0
        %1036 = vmatprep.subr.bf16.mxu0 0
        %1037 = vmatpush1.bf16.msra.mxu0 0
        %1038 = vmatprep.subr.bf16.mxu0 0
        %1039 = vmatpush1.bf16.msra.mxu0 0
        %1040 = vmatprep.subr.bf16.mxu0 0
        %1041 = vmatpush1.bf16.msra.mxu0 0
        %1042 = vmatprep.subr.bf16.mxu0 0
        %1043 = vmatpush1.bf16.msra.mxu0 %v984
        %1044 = vmatprep.subr.bf16.mxu0 0
        %1045 = vmatpush1.bf16.msra.mxu0 %v983
        %1046 = vmatprep.subr.bf16.mxu0 0
        %1047 = vmatpush2.bf16.msra.mxu0 0
        %1048 = vmatprep.subr.bf16.mxu0 0
        %1049 = vmatpush2.bf16.msra.mxu0 0
        %1050 = vmatprep.subr.bf16.mxu0 0
        %1051 = vmatpush2.bf16.msra.mxu0 0
        %1052 = vmatprep.subr.bf16.mxu0 0
        %1053 = vmatpush2.bf16.msra.mxu0 0
        %1054 = vmatprep.subr.bf16.mxu0 0
        %1055 = vmatpush2.bf16.msra.mxu0 0
        %1056 = vmatprep.subr.bf16.mxu0 0
        %1057 = vmatpush2.bf16.msra.mxu0 0
        %1058 = vmatprep.subr.bf16.mxu0 0
        %1059 = vmatpush2.bf16.msra.mxu0 0
        %1060 = vmatprep.subr.bf16.mxu0 0
        %1061 = vmatpush2.bf16.msra.mxu0 0
        %1062 = vmatprep.mubr.bf16.mxu0 0
        %1063 = vmatmul.mubr.bf16.gmra.mxu0 %v1025
        %v1064 = vpop.f32.mrf.mxu0
        %v1065 = vadd.f32 %v996, %v1064
        %v1066 = vpop.f32.mrf.mxu0
        %v1067 = vpop.f32.mrf.mxu0
        %v1068 = vadd.f32 %v1001, %v1067
        %v1069 = vpop.f32.mrf.mxu0
        %1070 = vmatprep.mubr.bf16.mxu0 0
        %1071 = vmatmul.mubr.bf16.gmra.mxu0 %v1028
        %v1072 = vpop.f32.mrf.mxu0
        %v1073 = vadd.f32 %v1006, %v1072
        %v1074 = vpop.f32.mrf.mxu0
        %v1075 = vpop.f32.mrf.mxu0
        %v1076 = vadd.f32 %v1011, %v1075
        %v1077 = vpop.f32.mrf.mxu0
        %1078 = vdwg.mxu0
        %v1079 = vpack.c.bf16 %v1068, %v1065
        %v1080 = vpack.c.bf16 %v1076, %v1073
        %v1083 = vunpack.c.l.b16 %v1079
        %v1084 = vunpack.c.h.b16 %v1079
        %v1085 = vunpack.c.l.b16 %v1080
        %v1086 = vunpack.c.h.b16 %v1080
        %v1087 = vpack.c.b16 %v1083, %v1083
        %v1088 = vpack.c.b16 %v1084, %v1084
        %v1089 = vpack.c.b16 %v1085, %v1085
        %v1090 = vpack.c.b16 %v1086, %v1086
        %vm1095 = vcmask 60416
        %1096 = vst.msk [vmem:[#allocation2] sm:$0xf] %vm1095, %v1087
        %1097 = vst.msk [vmem:[#allocation2 + $0x4] sm:$0xf] %vm1095, %v1088
        %1098 = vst.msk [vmem:[#allocation2 + $0x8] sm:$0xf] %vm1095, %v1089
        %1099 = vst.msk [vmem:[#allocation2 + $0xc] sm:$0xf] %vm1095, %v1090
        %v1100 = vld [vmem:[%s15] sm:$0xf]
        %v1101 = vld [vmem:[%s15 + $0x4] sm:$0xf]
        %v1102 = vld [vmem:[%s15 + $0x8] sm:$0xf]
        %v1103 = vld [vmem:[%s15 + $0xc] sm:$0xf]
        %v1104 = vld [vmem:[%s17] sm:$0xff]
        %v1105 = vld [vmem:[%s17 + $0x8] sm:$0xff]
        %v1106 = vld [vmem:[%s17 + $0x10] sm:$0xff]
        %v1107 = vld [vmem:[%s17 + $0x18] sm:$0xff]
        %1109 = vset.pattern.permute.xlu0 0
        %1110 = vperm.xlu0 %1109, %v1104
        %v1111 = vpop.permute.xlu0 %1110
        %1114 = vset.pattern.permute.xlu0 0
        %1115 = vperm.xlu0 %1114, %v1105
        %v1116 = vpop.permute.xlu0 %1115
        %1119 = vset.pattern.permute.xlu0 0
        %1120 = vperm.xlu0 %1119, %v1106
        %v1121 = vpop.permute.xlu0 %1120
        %1124 = vset.pattern.permute.xlu0 0
        %1125 = vperm.xlu0 %1124, %v1107
        %v1126 = vpop.permute.xlu0 %1125
        %v1132 = vunpack.c.l.b16 %v1100
        %v1133 = vunpack.c.l.b16 %v1101
        %v1134 = vunpack.c.l.b16 %v1102
        %v1135 = vunpack.c.l.b16 %v1103
        %v1136 = vpack.c.b16 %v1133, %v1132
        %v1137 = vpack.c.b16 %v1135, %v1134
        %v1139 = vsel %vm1023, %v1136, 0
        %v1142 = vsel %vm1023, %v1137, 0
        %1144 = vmatprep.subr.bf16.mxu0 0
        %1145 = vmatpush1.bf16.msra.mxu0 0
        %1146 = vmatprep.subr.bf16.mxu0 0
        %1147 = vmatpush1.bf16.msra.mxu0 0
        %1148 = vmatprep.subr.bf16.mxu0 0
        %1149 = vmatpush1.bf16.msra.mxu0 0
        %1150 = vmatprep.subr.bf16.mxu0 0
        %1151 = vmatpush1.bf16.msra.mxu0 0
        %1152 = vmatprep.subr.bf16.mxu0 0
        %1153 = vmatpush1.bf16.msra.mxu0 0
        %1154 = vmatprep.subr.bf16.mxu0 0
        %1155 = vmatpush1.bf16.msra.mxu0 0
        %1156 = vmatprep.subr.bf16.mxu0 0
        %1157 = vmatpush1.bf16.msra.mxu0 %v984
        %1158 = vmatprep.subr.bf16.mxu0 0
        %1159 = vmatpush1.bf16.msra.mxu0 %v983
        %1160 = vmatprep.subr.bf16.mxu0 0
        %1161 = vmatpush2.bf16.msra.mxu0 0
        %1162 = vmatprep.subr.bf16.mxu0 0
        %1163 = vmatpush2.bf16.msra.mxu0 0
        %1164 = vmatprep.subr.bf16.mxu0 0
        %1165 = vmatpush2.bf16.msra.mxu0 0
        %1166 = vmatprep.subr.bf16.mxu0 0
        %1167 = vmatpush2.bf16.msra.mxu0 0
        %1168 = vmatprep.subr.bf16.mxu0 0
        %1169 = vmatpush2.bf16.msra.mxu0 0
        %1170 = vmatprep.subr.bf16.mxu0 0
        %1171 = vmatpush2.bf16.msra.mxu0 0
        %1172 = vmatprep.subr.bf16.mxu0 0
        %1173 = vmatpush2.bf16.msra.mxu0 0
        %1174 = vmatprep.subr.bf16.mxu0 0
        %1175 = vmatpush2.bf16.msra.mxu0 0
        %1176 = vmatprep.mubr.bf16.mxu0 0
        %1177 = vmatmul.mubr.bf16.gmra.mxu0 %v1139
        %v1178 = vpop.f32.mrf.mxu0
        %v1179 = vadd.f32 %v1111, %v1178
        %v1180 = vpop.f32.mrf.mxu0
        %v1181 = vpop.f32.mrf.mxu0
        %v1182 = vadd.f32 %v1116, %v1181
        %v1183 = vpop.f32.mrf.mxu0
        %1184 = vmatprep.mubr.bf16.mxu0 0
        %1185 = vmatmul.mubr.bf16.gmra.mxu0 %v1142
        %v1186 = vpop.f32.mrf.mxu0
        %v1187 = vadd.f32 %v1121, %v1186
        %v1188 = vpop.f32.mrf.mxu0
        %v1189 = vpop.f32.mrf.mxu0
        %v1190 = vadd.f32 %v1126, %v1189
        %v1191 = vpop.f32.mrf.mxu0
        %1192 = vdwg.mxu0
        %v1193 = vpack.c.bf16 %v1182, %v1179
        %v1194 = vpack.c.bf16 %v1190, %v1187
        %v1197 = vunpack.c.l.b16 %v1193
        %v1198 = vunpack.c.h.b16 %v1193
        %v1199 = vunpack.c.l.b16 %v1194
        %v1200 = vunpack.c.h.b16 %v1194
        %v1201 = vpack.c.b16 %v1197, %v1197
        %v1202 = vpack.c.b16 %v1198, %v1198
        %v1203 = vpack.c.b16 %v1199, %v1199
        %v1204 = vpack.c.b16 %v1200, %v1200
        %1209 = vst.msk [vmem:[#allocation3] sm:$0xf] %vm1095, %v1201
        %1210 = vst.msk [vmem:[#allocation3 + $0x4] sm:$0xf] %vm1095, %v1202
        %1211 = vst.msk [vmem:[#allocation3 + $0x8] sm:$0xf] %vm1095, %v1203
        %1212 = vst.msk [vmem:[#allocation3 + $0xc] sm:$0xf] %vm1095, %v1204
        %v1213 = vld [vmem:[%s965] sm:$0xff]
        %v1214 = vld [vmem:[%s965 + $0x8] sm:$0xff]
        %v1215 = vld [vmem:[%s965 + $0x10] sm:$0xff]
        %v1216 = vld [vmem:[%s965 + $0x18] sm:$0xff]
        %v1217 = vpack.c.bf16 %v1214, %v1213
        %v1218 = vpack.c.bf16 %v1216, %v1215
        %v1219 = vld [vmem:[%s31] sm:$0xf]
        %v1220 = vld [vmem:[%s31 + $0x4] sm:$0xf]
        %v1221 = vld [vmem:[%s31 + $0x8] sm:$0xf]
        %v1222 = vld [vmem:[%s31 + $0xc] sm:$0xf]
        %v1223 = vld [vmem:[%s33] sm:$0xff]
        %v1224 = vld [vmem:[%s33 + $0x8] sm:$0xff]
        %v1225 = vld [vmem:[%s33 + $0x10] sm:$0xff]
        %v1226 = vld [vmem:[%s33 + $0x18] sm:$0xff]
        %1228 = vset.pattern.permute.xlu0 0
        %1229 = vperm.xlu0 %1228, %v1223
        %v1230 = vpop.permute.xlu0 %1229
        %1233 = vset.pattern.permute.xlu0 0
        %1234 = vperm.xlu0 %1233, %v1224
        %v1235 = vpop.permute.xlu0 %1234
        %1238 = vset.pattern.permute.xlu0 0
        %1239 = vperm.xlu0 %1238, %v1225
        %v1240 = vpop.permute.xlu0 %1239
        %1243 = vset.pattern.permute.xlu0 0
        %1244 = vperm.xlu0 %1243, %v1226
        %v1245 = vpop.permute.xlu0 %1244
        %v1251 = vunpack.c.l.b16 %v1219
        %v1252 = vunpack.c.l.b16 %v1220
        %v1253 = vunpack.c.l.b16 %v1221
        %v1254 = vunpack.c.l.b16 %v1222
        %v1255 = vpack.c.b16 %v1252, %v1251
        %v1256 = vpack.c.b16 %v1254, %v1253
        %v1258 = vsel %vm1023, %v1255, 0
        %v1261 = vsel %vm1023, %v1256, 0
        %1263 = vmatprep.subr.bf16.mxu0 0
        %1264 = vmatpush1.bf16.msra.mxu0 0
        %1265 = vmatprep.subr.bf16.mxu0 0
        %1266 = vmatpush1.bf16.msra.mxu0 0
        %1267 = vmatprep.subr.bf16.mxu0 0
        %1268 = vmatpush1.bf16.msra.mxu0 0
        %1269 = vmatprep.subr.bf16.mxu0 0
        %1270 = vmatpush1.bf16.msra.mxu0 0
        %1271 = vmatprep.subr.bf16.mxu0 0
        %1272 = vmatpush1.bf16.msra.mxu0 0
        %1273 = vmatprep.subr.bf16.mxu0 0
        %1274 = vmatpush1.bf16.msra.mxu0 0
        %1275 = vmatprep.subr.bf16.mxu0 0
        %1276 = vmatpush1.bf16.msra.mxu0 %v1218
        %1277 = vmatprep.subr.bf16.mxu0 0
        %1278 = vmatpush1.bf16.msra.mxu0 %v1217
        %1279 = vmatprep.subr.bf16.mxu0 0
        %1280 = vmatpush2.bf16.msra.mxu0 0
        %1281 = vmatprep.subr.bf16.mxu0 0
        %1282 = vmatpush2.bf16.msra.mxu0 0
        %1283 = vmatprep.subr.bf16.mxu0 0
        %1284 = vmatpush2.bf16.msra.mxu0 0
        %1285 = vmatprep.subr.bf16.mxu0 0
        %1286 = vmatpush2.bf16.msra.mxu0 0
        %1287 = vmatprep.subr.bf16.mxu0 0
        %1288 = vmatpush2.bf16.msra.mxu0 0
        %1289 = vmatprep.subr.bf16.mxu0 0
        %1290 = vmatpush2.bf16.msra.mxu0 0
        %1291 = vmatprep.subr.bf16.mxu0 0
        %1292 = vmatpush2.bf16.msra.mxu0 0
        %1293 = vmatprep.subr.bf16.mxu0 0
        %1294 = vmatpush2.bf16.msra.mxu0 0
        %1295 = vmatprep.mubr.bf16.mxu0 0
        %1296 = vmatmul.mubr.bf16.gmra.mxu0 %v1258
        %v1297 = vpop.f32.mrf.mxu0
        %v1298 = vadd.f32 %v1230, %v1297
        %v1299 = vpop.f32.mrf.mxu0
        %v1300 = vpop.f32.mrf.mxu0
        %v1301 = vadd.f32 %v1235, %v1300
        %v1302 = vpop.f32.mrf.mxu0
        %1303 = vmatprep.mubr.bf16.mxu0 0
        %1304 = vmatmul.mubr.bf16.gmra.mxu0 %v1261
        %v1305 = vpop.f32.mrf.mxu0
        %v1306 = vadd.f32 %v1240, %v1305
        %v1307 = vpop.f32.mrf.mxu0
        %v1308 = vpop.f32.mrf.mxu0
        %v1309 = vadd.f32 %v1245, %v1308
        %v1310 = vpop.f32.mrf.mxu0
        %1311 = vdwg.mxu0
        %v1312 = vpack.c.bf16 %v1301, %v1298
        %v1313 = vpack.c.bf16 %v1309, %v1306
        %v1316 = vunpack.c.l.b16 %v1312
        %v1317 = vunpack.c.h.b16 %v1312
        %v1318 = vunpack.c.l.b16 %v1313
        %v1319 = vunpack.c.h.b16 %v1313
        %v1320 = vpack.c.b16 %v1316, %v1316
        %v1321 = vpack.c.b16 %v1317, %v1317
        %v1322 = vpack.c.b16 %v1318, %v1318
        %v1323 = vpack.c.b16 %v1319, %v1319
        %vm1328 = vcmask 125952
        %1329 = vst.msk [vmem:[#allocation4] sm:$0xf] %vm1328, %v1320
        %1330 = vst.msk [vmem:[#allocation4 + $0x4] sm:$0xf] %vm1328, %v1321
        %1331 = vst.msk [vmem:[#allocation4 + $0x8] sm:$0xf] %vm1328, %v1322
        %1332 = vst.msk [vmem:[#allocation4 + $0xc] sm:$0xf] %vm1328, %v1323
        %v1333 = vld [vmem:[%s35] sm:$0xf]
        %v1334 = vld [vmem:[%s35 + $0x4] sm:$0xf]
        %v1335 = vld [vmem:[%s35 + $0x8] sm:$0xf]
        %v1336 = vld [vmem:[%s35 + $0xc] sm:$0xf]
        %v1337 = vld [vmem:[%s37] sm:$0xff]
        %v1338 = vld [vmem:[%s37 + $0x8] sm:$0xff]
        %v1339 = vld [vmem:[%s37 + $0x10] sm:$0xff]
        %v1340 = vld [vmem:[%s37 + $0x18] sm:$0xff]
        %1342 = vset.pattern.permute.xlu0 0
        %1343 = vperm.xlu0 %1342, %v1337
        %v1344 = vpop.permute.xlu0 %1343
        %1347 = vset.pattern.permute.xlu0 0
        %1348 = vperm.xlu0 %1347, %v1338
        %v1349 = vpop.permute.xlu0 %1348
        %1352 = vset.pattern.permute.xlu0 0
        %1353 = vperm.xlu0 %1352, %v1339
        %v1354 = vpop.permute.xlu0 %1353
        %1357 = vset.pattern.permute.xlu0 0
        %1358 = vperm.xlu0 %1357, %v1340
        %v1359 = vpop.permute.xlu0 %1358
        %v1365 = vunpack.c.l.b16 %v1333
        %v1366 = vunpack.c.l.b16 %v1334
        %v1367 = vunpack.c.l.b16 %v1335
        %v1368 = vunpack.c.l.b16 %v1336
        %v1369 = vpack.c.b16 %v1366, %v1365
        %v1370 = vpack.c.b16 %v1368, %v1367
        %v1372 = vsel %vm1023, %v1369, 0
        %v1375 = vsel %vm1023, %v1370, 0
        %1377 = vmatprep.subr.bf16.mxu0 0
        %1378 = vmatpush1.bf16.msra.mxu0 0
        %1379 = vmatprep.subr.bf16.mxu0 0
        %1380 = vmatpush1.bf16.msra.mxu0 0
        %1381 = vmatprep.subr.bf16.mxu0 0
        %1382 = vmatpush1.bf16.msra.mxu0 0
        %1383 = vmatprep.subr.bf16.mxu0 0
        %1384 = vmatpush1.bf16.msra.mxu0 0
        %1385 = vmatprep.subr.bf16.mxu0 0
        %1386 = vmatpush1.bf16.msra.mxu0 0
        %1387 = vmatprep.subr.bf16.mxu0 0
        %1388 = vmatpush1.bf16.msra.mxu0 0
        %1389 = vmatprep.subr.bf16.mxu0 0
        %1390 = vmatpush1.bf16.msra.mxu0 %v1218
        %1391 = vmatprep.subr.bf16.mxu0 0
        %1392 = vmatpush1.bf16.msra.mxu0 %v1217
        %1393 = vmatprep.subr.bf16.mxu0 0
        %1394 = vmatpush2.bf16.msra.mxu0 0
        %1395 = vmatprep.subr.bf16.mxu0 0
        %1396 = vmatpush2.bf16.msra.mxu0 0
        %1397 = vmatprep.subr.bf16.mxu0 0
        %1398 = vmatpush2.bf16.msra.mxu0 0
        %1399 = vmatprep.subr.bf16.mxu0 0
        %1400 = vmatpush2.bf16.msra.mxu0 0
        %1401 = vmatprep.subr.bf16.mxu0 0
        %1402 = vmatpush2.bf16.msra.mxu0 0
        %1403 = vmatprep.subr.bf16.mxu0 0
        %1404 = vmatpush2.bf16.msra.mxu0 0
        %1405 = vmatprep.subr.bf16.mxu0 0
        %1406 = vmatpush2.bf16.msra.mxu0 0
        %1407 = vmatprep.subr.bf16.mxu0 0
        %1408 = vmatpush2.bf16.msra.mxu0 0
        %1409 = vmatprep.mubr.bf16.mxu0 0
        %1410 = vmatmul.mubr.bf16.gmra.mxu0 %v1372
        %v1411 = vpop.f32.mrf.mxu0
        %v1412 = vadd.f32 %v1344, %v1411
        %v1413 = vpop.f32.mrf.mxu0
        %v1414 = vpop.f32.mrf.mxu0
        %v1415 = vadd.f32 %v1349, %v1414
        %v1416 = vpop.f32.mrf.mxu0
        %1417 = vmatprep.mubr.bf16.mxu0 0
        %1418 = vmatmul.mubr.bf16.gmra.mxu0 %v1375
        %v1419 = vpop.f32.mrf.mxu0
        %v1420 = vadd.f32 %v1354, %v1419
        %v1421 = vpop.f32.mrf.mxu0
        %v1422 = vpop.f32.mrf.mxu0
        %v1423 = vadd.f32 %v1359, %v1422
        %v1424 = vpop.f32.mrf.mxu0
        %1425 = vdwg.mxu0
        %v1426 = vpack.c.bf16 %v1415, %v1412
        %v1427 = vpack.c.bf16 %v1423, %v1420
        %v1430 = vunpack.c.l.b16 %v1426
        %v1431 = vunpack.c.h.b16 %v1426
        %v1432 = vunpack.c.l.b16 %v1427
        %v1433 = vunpack.c.h.b16 %v1427
        %v1434 = vpack.c.b16 %v1430, %v1430
        %v1435 = vpack.c.b16 %v1431, %v1431
        %v1436 = vpack.c.b16 %v1432, %v1432
        %v1437 = vpack.c.b16 %v1433, %v1433
        %1442 = vst.msk [vmem:[#allocation5] sm:$0xf] %vm1328, %v1434
        %1443 = vst.msk [vmem:[#allocation5 + $0x4] sm:$0xf] %vm1328, %v1435
        %1444 = vst.msk [vmem:[#allocation5 + $0x8] sm:$0xf] %vm1328, %v1436
        %1445 = vst.msk [vmem:[#allocation5 + $0xc] sm:$0xf] %vm1328, %v1437
      $region140: #{tpu_custom_call.1} parent=135 // pred_fallthru
        _
      %v1446 = vld [vmem:[%s955] sm:$0xff]
      %v1447 = vld [vmem:[%s955 + $0x8] sm:$0xff]
      %v1448 = vld [vmem:[%s955 + $0x10] sm:$0xff]
      %v1449 = vld [vmem:[%s955 + $0x18] sm:$0xff]
      %v1450 = vld [vmem:[%s7] sm:$0xf]
      %v1451 = vld [vmem:[%s7 + $0x4] sm:$0xf]
      %v1452 = vld [vmem:[%s7 + $0x8] sm:$0xf]
      %v1453 = vld [vmem:[%s7 + $0xc] sm:$0xf]
      %v1454 = vpack.c.bf16 %v1447, %v1446
      %v1455 = vpack.c.bf16 %v1449, %v1448
      %v1456 = vld [vmem:[%s9] sm:$0xff]
      %v1457 = vld [vmem:[%s9 + $0x8] sm:$0xff]
      %v1458 = vld [vmem:[%s9 + $0x10] sm:$0xff]
      %v1459 = vld [vmem:[%s9 + $0x18] sm:$0xff]
      %1461 = vset.pattern.permute.xlu0 0
      %1462 = vperm.xlu0 %1461, %v1456
      %v1463 = vpop.permute.xlu0 %1462
      %1466 = vset.pattern.permute.xlu0 0
      %1467 = vperm.xlu0 %1466, %v1457
      %v1468 = vpop.permute.xlu0 %1467
      %1471 = vset.pattern.permute.xlu0 0
      %1472 = vperm.xlu0 %1471, %v1458
      %v1473 = vpop.permute.xlu0 %1472
      %1476 = vset.pattern.permute.xlu0 0
      %1477 = vperm.xlu0 %1476, %v1459
      %v1478 = vpop.permute.xlu0 %1477
      %v1484 = vunpack.c.l.b16 %v1450
      %v1485 = vunpack.c.l.b16 %v1451
      %v1486 = vunpack.c.l.b16 %v1452
      %v1487 = vunpack.c.l.b16 %v1453
      %v1488 = vpack.c.b16 %v1485, %v1484
      %v1489 = vpack.c.b16 %v1487, %v1486
      %vm1490 = vcmask 261120
      %v1492 = vsel %vm1490, %v1488, 0
      %v1495 = vsel %vm1490, %v1489, 0
      %1497 = vmatprep.subr.bf16.mxu0 0
      %1498 = vmatpush1.bf16.msra.mxu0 0
      %1499 = vmatprep.subr.bf16.mxu0 0
      %1500 = vmatpush1.bf16.msra.mxu0 0
      %1501 = vmatprep.subr.bf16.mxu0 0
      %1502 = vmatpush1.bf16.msra.mxu0 0
      %1503 = vmatprep.subr.bf16.mxu0 0
      %1504 = vmatpush1.bf16.msra.mxu0 0
      %1505 = vmatprep.subr.bf16.mxu0 0
      %1506 = vmatpush1.bf16.msra.mxu0 0
      %1507 = vmatprep.subr.bf16.mxu0 0
      %1508 = vmatpush1.bf16.msra.mxu0 0
      %1509 = vmatprep.subr.bf16.mxu0 0
      %1510 = vmatpush1.bf16.msra.mxu0 %v1455
      %1511 = vmatprep.subr.bf16.mxu0 0
      %1512 = vmatpush1.bf16.msra.mxu0 %v1454
      %1513 = vmatprep.subr.bf16.mxu0 0
      %1514 = vmatpush2.bf16.msra.mxu0 0
      %1515 = vmatprep.subr.bf16.mxu0 0
      %1516 = vmatpush2.bf16.msra.mxu0 0
      %1517 = vmatprep.subr.bf16.mxu0 0
      %1518 = vmatpush2.bf16.msra.mxu0 0
      %1519 = vmatprep.subr.bf16.mxu0 0
      %1520 = vmatpush2.bf16.msra.mxu0 0
      %1521 = vmatprep.subr.bf16.mxu0 0
      %1522 = vmatpush2.bf16.msra.mxu0 0
      %1523 = vmatprep.subr.bf16.mxu0 0
      %1524 = vmatpush2.bf16.msra.mxu0 0
      %1525 = vmatprep.subr.bf16.mxu0 0
      %1526 = vmatpush2.bf16.msra.mxu0 0
      %1527 = vmatprep.subr.bf16.mxu0 0
      %1528 = vmatpush2.bf16.msra.mxu0 0
      %1529 = vmatprep.mubr.bf16.mxu0 0
      %1530 = vmatmul.mubr.bf16.gmra.mxu0 %v1492
      %v1531 = vpop.f32.mrf.mxu0
      %v1532 = vadd.f32 %v1463, %v1531
      %v1533 = vpop.f32.mrf.mxu0
      %v1534 = vpop.f32.mrf.mxu0
      %v1535 = vadd.f32 %v1468, %v1534
      %v1536 = vpop.f32.mrf.mxu0
      %1537 = vmatprep.mubr.bf16.mxu0 0
      %1538 = vmatmul.mubr.bf16.gmra.mxu0 %v1495
      %v1539 = vpop.f32.mrf.mxu0
      %v1540 = vadd.f32 %v1473, %v1539
      %v1541 = vpop.f32.mrf.mxu0
      %v1542 = vpop.f32.mrf.mxu0
      %v1543 = vadd.f32 %v1478, %v1542
      %v1544 = vpop.f32.mrf.mxu0
      %1545 = vdwg.mxu0
      %v1546 = vld [vmem:[#allocation2] sm:$0xf]
      %v1547 = vld [vmem:[#allocation2 + $0x4] sm:$0xf]
      %v1548 = vld [vmem:[#allocation2 + $0x8] sm:$0xf]
      %v1549 = vld [vmem:[#allocation2 + $0xc] sm:$0xf]
      %v1550 = vld [vmem:[#allocation3] sm:$0xf]
      %v1551 = vld [vmem:[#allocation3 + $0x4] sm:$0xf]
      %v1552 = vld [vmem:[#allocation3 + $0x8] sm:$0xf]
      %v1553 = vld [vmem:[#allocation3 + $0xc] sm:$0xf]
      %v1554 = vld [vmem:[%s19] sm:$0xf]
      %v1555 = vld [vmem:[%s19 + $0x4] sm:$0xf]
      %v1556 = vld [vmem:[%s19 + $0x8] sm:$0xf]
      %v1557 = vld [vmem:[%s19 + $0xc] sm:$0xf]
      %v1558 = vld [vmem:[%s21] sm:$0xff]
      %v1559 = vld [vmem:[%s21 + $0x8] sm:$0xff]
      %v1560 = vld [vmem:[%s21 + $0x10] sm:$0xff]
      %v1561 = vld [vmem:[%s21 + $0x18] sm:$0xff]
      %s1562 = smul.u32 %s75, 8
      %v1563 = vpack.c.bf16 %v1535, %v1532
      %v1564 = vpack.c.bf16 %v1543, %v1540
      %v1567 = vunpack.c.l.b16 %v1563
      %v1568 = vunpack.c.h.b16 %v1563
      %v1569 = vunpack.c.l.b16 %v1564
      %v1570 = vunpack.c.h.b16 %v1564
      %v1571 = vpack.c.b16 %v1567, %v1567
      %v1572 = vpack.c.b16 %v1568, %v1568
      %v1573 = vpack.c.b16 %v1569, %v1569
      %v1574 = vpack.c.b16 %v1570, %v1570
      %v1575 = vlaneseq
      %v1576 = vshrl.u32 %v1575, 7
      %v1577 = vlaneseq
      %v1578 = vand.u32 %v1577, 127
      %v1579 = vstv %s1562
      %v1580 = vadd.s32 %v1578, %v1579
      %vm1581 = vcmp.le.s32.totalorder %v1576, %v1580
      %v1582 = vsel %vm1581, 0.0, -3.4028235e+38
      %1583 = vxpose.xlu0.c.b16.start [1/8] %v1546, 128
      %1584 = vxpose.xlu0.c.b16.cont [2/8] 0, 128
      %1585 = vxpose.xlu0.c.b16.cont [3/8] 0, 128
      %1586 = vxpose.xlu0.c.b16.cont [4/8] 0, 128
      %1587 = vxpose.xlu0.c.b16.cont [5/8] 0, 128
      %1588 = vxpose.xlu0.c.b16.cont [6/8] 0, 128
      %1589 = vxpose.xlu0.c.b16.cont [7/8] 0, 128
      %1590 = vxpose.xlu0.c.b16.end [8/8] 0, 128
      %v1591 = vpop.trf.xlu0
      %v1592 = vpop.trf.xlu0
      %v1593 = vpop.trf.xlu0
      %v1594 = vpop.trf.xlu0
      %v1595 = vpop.trf.xlu0
      %v1596 = vpop.trf.xlu0
      %v1597 = vpop.trf.xlu0
      %v1598 = vpop.trf.xlu0
      %vm1599 = vcmask 64512
      %v1601 = vsel %vm1599, %v1591, 0
      %vm1603 = vcmask 1043456
      %v1605 = vsel %vm1603, %v1571, 0
      %1607 = vmatprep.subr.bf16.mxu0 0
      %1608 = vmatpush1.bf16.msra.mxu0 0
      %1609 = vmatprep.subr.bf16.mxu0 0
      %1610 = vmatpush1.bf16.msra.mxu0 0
      %1611 = vmatprep.subr.bf16.mxu0 0
      %1612 = vmatpush1.bf16.msra.mxu0 0
      %1613 = vmatprep.subr.bf16.mxu0 0
      %1614 = vmatpush1.bf16.msra.mxu0 0
      %1615 = vmatprep.subr.bf16.mxu0 0
      %1616 = vmatpush1.bf16.msra.mxu0 0
      %1617 = vmatprep.subr.bf16.mxu0 0
      %1618 = vmatpush1.bf16.msra.mxu0 0
      %1619 = vmatprep.subr.bf16.mxu0 0
      %1620 = vmatpush1.bf16.msra.mxu0 0
      %1621 = vmatprep.subr.bf16.mxu0 0
      %1622 = vmatpush1.bf16.msra.mxu0 %v1605
      %1623 = vmatprep.subr.bf16.mxu0 0
      %1624 = vmatpush2.bf16.msra.mxu0 0
      %1625 = vmatprep.subr.bf16.mxu0 0
      %1626 = vmatpush2.bf16.msra.mxu0 0
      %1627 = vmatprep.subr.bf16.mxu0 0
      %1628 = vmatpush2.bf16.msra.mxu0 0
      %1629 = vmatprep.subr.bf16.mxu0 0
      %1630 = vmatpush2.bf16.msra.mxu0 0
      %1631 = vmatprep.subr.bf16.mxu0 0
      %1632 = vmatpush2.bf16.msra.mxu0 0
      %1633 = vmatprep.subr.bf16.mxu0 0
      %1634 = vmatpush2.bf16.msra.mxu0 0
      %1635 = vmatprep.subr.bf16.mxu0 0
      %1636 = vmatpush2.bf16.msra.mxu0 0
      %1637 = vmatprep.subr.bf16.mxu0 0
      %1638 = vmatpush2.bf16.msra.mxu0 0
      %1639 = vmatprep.mubr.bf16.mxu0 0
      %1640 = vmatmul.mubr.bf16.gmra.mxu0 %v1601
      %v1641 = vpop.f32.mrf.mxu0
      %v1642 = vadd.f32 %v1582, %v1641
      %v1643 = vpop.f32.mrf.mxu0
      %v1644 = vpop.f32.mrf.mxu0
      %v1645 = vpop.f32.mrf.mxu0
      %1646 = vdwg.mxu0
      %1647 = vxpose.xlu0.c.b16.start [1/8] %v1547, 128
      %1648 = vxpose.xlu0.c.b16.cont [2/8] 0, 128
      %1649 = vxpose.xlu0.c.b16.cont [3/8] 0, 128
      %1650 = vxpose.xlu0.c.b16.cont [4/8] 0, 128
      %1651 = vxpose.xlu0.c.b16.cont [5/8] 0, 128
      %1652 = vxpose.xlu0.c.b16.cont [6/8] 0, 128
      %1653 = vxpose.xlu0.c.b16.cont [7/8] 0, 128
      %1654 = vxpose.xlu0.c.b16.end [8/8] 0, 128
      %v1655 = vpop.trf.xlu0
      %v1656 = vpop.trf.xlu0
      %v1657 = vpop.trf.xlu0
      %v1658 = vpop.trf.xlu0
      %v1659 = vpop.trf.xlu0
      %v1660 = vpop.trf.xlu0
      %v1661 = vpop.trf.xlu0
      %v1662 = vpop.trf.xlu0
      %v1664 = vsel %vm1599, %v1655, 0
      %v1667 = vsel %vm1603, %v1572, 0
      %1669 = vmatprep.subr.bf16.mxu0 0
      %1670 = vmatpush1.bf16.msra.mxu0 0
      %1671 = vmatprep.subr.bf16.mxu0 0
      %1672 = vmatpush1.bf16.msra.mxu0 0
      %1673 = vmatprep.subr.bf16.mxu0 0
      %1674 = vmatpush1.bf16.msra.mxu0 0
      %1675 = vmatprep.subr.bf16.mxu0 0
      %1676 = vmatpush1.bf16.msra.mxu0 0
      %1677 = vmatprep.subr.bf16.mxu0 0
      %1678 = vmatpush1.bf16.msra.mxu0 0
      %1679 = vmatprep.subr.bf16.mxu0 0
      %1680 = vmatpush1.bf16.msra.mxu0 0
      %1681 = vmatprep.subr.bf16.mxu0 0
      %1682 = vmatpush1.bf16.msra.mxu0 0
      %1683 = vmatprep.subr.bf16.mxu0 0
      %1684 = vmatpush1.bf16.msra.mxu0 %v1667
      %1685 = vmatprep.subr.bf16.mxu0 0
      %1686 = vmatpush2.bf16.msra.mxu0 0
      %1687 = vmatprep.subr.bf16.mxu0 0
      %1688 = vmatpush2.bf16.msra.mxu0 0
      %1689 = vmatprep.subr.bf16.mxu0 0
      %1690 = vmatpush2.bf16.msra.mxu0 0
      %1691 = vmatprep.subr.bf16.mxu0 0
      %1692 = vmatpush2.bf16.msra.mxu0 0
      %1693 = vmatprep.subr.bf16.mxu0 0
      %1694 = vmatpush2.bf16.msra.mxu0 0
      %1695 = vmatprep.subr.bf16.mxu0 0
      %1696 = vmatpush2.bf16.msra.mxu0 0
      %1697 = vmatprep.subr.bf16.mxu0 0
      %1698 = vmatpush2.bf16.msra.mxu0 0
      %1699 = vmatprep.subr.bf16.mxu0 0
      %1700 = vmatpush2.bf16.msra.mxu0 0
      %1701 = vmatprep.mubr.bf16.mxu0 0
      %1702 = vmatmul.mubr.bf16.gmra.mxu0 %v1664
      %v1703 = vpop.f32.mrf.mxu0
      %v1704 = vadd.f32 %v1582, %v1703
      %v1705 = vpop.f32.mrf.mxu0
      %v1706 = vpop.f32.mrf.mxu0
      %v1707 = vpop.f32.mrf.mxu0
      %1708 = vdwg.mxu0
      %1709 = vxpose.xlu0.c.b16.start [1/8] %v1548, 128
      %1710 = vxpose.xlu0.c.b16.cont [2/8] 0, 128
      %1711 = vxpose.xlu0.c.b16.cont [3/8] 0, 128
      %1712 = vxpose.xlu0.c.b16.cont [4/8] 0, 128
      %1713 = vxpose.xlu0.c.b16.cont [5/8] 0, 128
      %1714 = vxpose.xlu0.c.b16.cont [6/8] 0, 128
      %1715 = vxpose.xlu0.c.b16.cont [7/8] 0, 128
      %1716 = vxpose.xlu0.c.b16.end [8/8] 0, 128
      %v1717 = vpop.trf.xlu0
      %v1718 = vpop.trf.xlu0
      %v1719 = vpop.trf.xlu0
      %v1720 = vpop.trf.xlu0
      %v1721 = vpop.trf.xlu0
      %v1722 = vpop.trf.xlu0
      %v1723 = vpop.trf.xlu0
      %v1724 = vpop.trf.xlu0
      %v1726 = vsel %vm1599, %v1717, 0
      %v1729 = vsel %vm1603, %v1573, 0
      %1731 = vmatprep.subr.bf16.mxu0 0
      %1732 = vmatpush1.bf16.msra.mxu0 0
      %1733 = vmatprep.subr.bf16.mxu0 0
      %1734 = vmatpush1.bf16.msra.mxu0 0
      %1735 = vmatprep.subr.bf16.mxu0 0
      %1736 = vmatpush1.bf16.msra.mxu0 0
      %1737 = vmatprep.subr.bf16.mxu0 0
      %1738 = vmatpush1.bf16.msra.mxu0 0
      %1739 = vmatprep.subr.bf16.mxu0 0
      %1740 = vmatpush1.bf16.msra.mxu0 0
      %1741 = vmatprep.subr.bf16.mxu0 0
      %1742 = vmatpush1.bf16.msra.mxu0 0
      %1743 = vmatprep.subr.bf16.mxu0 0
      %1744 = vmatpush1.bf16.msra.mxu0 0
      %1745 = vmatprep.subr.bf16.mxu0 0
      %1746 = vmatpush1.bf16.msra.mxu0 %v1729
      %1747 = vmatprep.subr.bf16.mxu0 0
      %1748 = vmatpush2.bf16.msra.mxu0 0
      %1749 = vmatprep.subr.bf16.mxu0 0
      %1750 = vmatpush2.bf16.msra.mxu0 0
      %1751 = vmatprep.subr.bf16.mxu0 0
      %1752 = vmatpush2.bf16.msra.mxu0 0
      %1753 = vmatprep.subr.bf16.mxu0 0
      %1754 = vmatpush2.bf16.msra.mxu0 0
      %1755 = vmatprep.subr.bf16.mxu0 0
      %1756 = vmatpush2.bf16.msra.mxu0 0
      %1757 = vmatprep.subr.bf16.mxu0 0
      %1758 = vmatpush2.bf16.msra.mxu0 0
      %1759 = vmatprep.subr.bf16.mxu0 0
      %1760 = vmatpush2.bf16.msra.mxu0 0
      %1761 = vmatprep.subr.bf16.mxu0 0
      %1762 = vmatpush2.bf16.msra.mxu0 0
      %1763 = vmatprep.mubr.bf16.mxu0 0
      %1764 = vmatmul.mubr.bf16.gmra.mxu0 %v1726
      %v1765 = vpop.f32.mrf.mxu0
      %v1766 = vadd.f32 %v1582, %v1765
      %v1767 = vpop.f32.mrf.mxu0
      %v1768 = vpop.f32.mrf.mxu0
      %v1769 = vpop.f32.mrf.mxu0
      %1770 = vdwg.mxu0
      %1771 = vxpose.xlu0.c.b16.start [1/8] %v1549, 128
      %1772 = vxpose.xlu0.c.b16.cont [2/8] 0, 128
      %1773 = vxpose.xlu0.c.b16.cont [3/8] 0, 128
      %1774 = vxpose.xlu0.c.b16.cont [4/8] 0, 128
      %1775 = vxpose.xlu0.c.b16.cont [5/8] 0, 128
      %1776 = vxpose.xlu0.c.b16.cont [6/8] 0, 128
      %1777 = vxpose.xlu0.c.b16.cont [7/8] 0, 128
      %1778 = vxpose.xlu0.c.b16.end [8/8] 0, 128
      %v1779 = vpop.trf.xlu0
      %v1780 = vpop.trf.xlu0
      %v1781 = vpop.trf.xlu0
      %v1782 = vpop.trf.xlu0
      %v1783 = vpop.trf.xlu0
      %v1784 = vpop.trf.xlu0
      %v1785 = vpop.trf.xlu0
      %v1786 = vpop.trf.xlu0
      %v1788 = vsel %vm1599, %v1779, 0
      %v1791 = vsel %vm1603, %v1574, 0
      %1793 = vmatprep.subr.bf16.mxu0 0
      %1794 = vmatpush1.bf16.msra.mxu0 0
      %1795 = vmatprep.subr.bf16.mxu0 0
      %1796 = vmatpush1.bf16.msra.mxu0 0
      %1797 = vmatprep.subr.bf16.mxu0 0
      %1798 = vmatpush1.bf16.msra.mxu0 0
      %1799 = vmatprep.subr.bf16.mxu0 0
      %1800 = vmatpush1.bf16.msra.mxu0 0
      %1801 = vmatprep.subr.bf16.mxu0 0
      %1802 = vmatpush1.bf16.msra.mxu0 0
      %1803 = vmatprep.subr.bf16.mxu0 0
      %1804 = vmatpush1.bf16.msra.mxu0 0
      %1805 = vmatprep.subr.bf16.mxu0 0
      %1806 = vmatpush1.bf16.msra.mxu0 0
      %1807 = vmatprep.subr.bf16.mxu0 0
      %1808 = vmatpush1.bf16.msra.mxu0 %v1791
      %1809 = vmatprep.subr.bf16.mxu0 0
      %1810 = vmatpush2.bf16.msra.mxu0 0
      %1811 = vmatprep.subr.bf16.mxu0 0
      %1812 = vmatpush2.bf16.msra.mxu0 0
      %1813 = vmatprep.subr.bf16.mxu0 0
      %1814 = vmatpush2.bf16.msra.mxu0 0
      %1815 = vmatprep.subr.bf16.mxu0 0
      %1816 = vmatpush2.bf16.msra.mxu0 0
      %1817 = vmatprep.subr.bf16.mxu0 0
      %1818 = vmatpush2.bf16.msra.mxu0 0
      %1819 = vmatprep.subr.bf16.mxu0 0
      %1820 = vmatpush2.bf16.msra.mxu0 0
      %1821 = vmatprep.subr.bf16.mxu0 0
      %1822 = vmatpush2.bf16.msra.mxu0 0
      %1823 = vmatprep.subr.bf16.mxu0 0
      %1824 = vmatpush2.bf16.msra.mxu0 0
      %1825 = vmatprep.mubr.bf16.mxu0 0
      %1826 = vmatmul.mubr.bf16.gmra.mxu0 %v1788
      %v1827 = vpop.f32.mrf.mxu0
      %v1828 = vadd.f32 %v1582, %v1827
      %v1829 = vpop.f32.mrf.mxu0
      %v1830 = vpop.f32.mrf.mxu0
      %v1831 = vpop.f32.mrf.mxu0
      %1832 = vdwg.mxu0
      %v1833 = vsel %vm1599, %v1642, -inf
      %v1834 = vrot.slane %v1833, 4
      %v1835 = vmax.f32 %v1833, %v1834
      %v1836 = vrot.slane %v1835, 2
      %v1837 = vmax.f32 %v1835, %v1836
      %v1838 = vrot.slane %v1837, 1
      %v1839 = vmax.f32 %v1837, %v1838
      %v1840 = vsel %vm1599, %v1704, -inf
      %v1841 = vrot.slane %v1840, 4
      %v1842 = vmax.f32 %v1840, %v1841
      %v1843 = vrot.slane %v1842, 2
      %v1844 = vmax.f32 %v1842, %v1843
      %v1845 = vrot.slane %v1844, 1
      %v1846 = vmax.f32 %v1844, %v1845
      %v1847 = vsel %vm1599, %v1766, -inf
      %v1848 = vrot.slane %v1847, 4
      %v1849 = vmax.f32 %v1847, %v1848
      %v1850 = vrot.slane %v1849, 2
      %v1851 = vmax.f32 %v1849, %v1850
      %v1852 = vrot.slane %v1851, 1
      %v1853 = vmax.f32 %v1851, %v1852
      %v1854 = vsel %vm1599, %v1828, -inf
      %v1855 = vrot.slane %v1854, 4
      %v1856 = vmax.f32 %v1854, %v1855
      %v1857 = vrot.slane %v1856, 2
      %v1858 = vmax.f32 %v1856, %v1857
      %v1859 = vrot.slane %v1858, 1
      %v1860 = vmax.f32 %v1858, %v1859
      %v1861 = vsub.f32 %v1642, %v1839
      %v1862 = vsub.f32 %v1704, %v1846
      %v1863 = vsub.f32 %v1766, %v1853
      %v1864 = vsub.f32 %v1828, %v1860
      %v1865 = vmul.f32 %v1861, 1.442695
      %v1866 = vpow.pop %v1865
      %v1867 = vmul.f32 %v1862, 1.442695
      %v1868 = vpow.pop %v1867
      %v1869 = vmul.f32 %v1863, 1.442695
      %v1870 = vpow.pop %v1869
      %v1871 = vmul.f32 %v1864, 1.442695
      %v1872 = vpow.pop %v1871
      %v1873 = vsel %vm1599, %v1866, 0.0
      %v1874 = vrot.slane %v1873, 4
      %v1875 = vadd.f32 %v1873, %v1874
      %v1876 = vrot.slane %v1875, 2
      %v1877 = vadd.f32 %v1875, %v1876
      %v1878 = vrot.slane %v1877, 1
      %v1879 = vadd.f32 %v1877, %v1878
      %v1880 = vsel %vm1599, %v1868, 0.0
      %v1881 = vrot.slane %v1880, 4
      %v1882 = vadd.f32 %v1880, %v1881
      %v1883 = vrot.slane %v1882, 2
      %v1884 = vadd.f32 %v1882, %v1883
      %v1885 = vrot.slane %v1884, 1
      %v1886 = vadd.f32 %v1884, %v1885
      %v1887 = vsel %vm1599, %v1870, 0.0
      %v1888 = vrot.slane %v1887, 4
      %v1889 = vadd.f32 %v1887, %v1888
      %v1890 = vrot.slane %v1889, 2
      %v1891 = vadd.f32 %v1889, %v1890
      %v1892 = vrot.slane %v1891, 1
      %v1893 = vadd.f32 %v1891, %v1892
      %v1894 = vsel %vm1599, %v1872, 0.0
      %v1895 = vrot.slane %v1894, 4
      %v1896 = vadd.f32 %v1894, %v1895
      %v1897 = vrot.slane %v1896, 2
      %v1898 = vadd.f32 %v1896, %v1897
      %v1899 = vrot.slane %v1898, 1
      %v1900 = vadd.f32 %v1898, %v1899
      %v1901 = vrcp.pop %v1879
      %v1902 = vrcp.pop %v1886
      %v1903 = vrcp.pop %v1893
      %v1904 = vrcp.pop %v1900
      %v1905 = vmul.f32 %v1866, %v1901
      %v1906 = vmul.f32 %v1868, %v1902
      %v1907 = vmul.f32 %v1870, %v1903
      %v1908 = vmul.f32 %v1872, %v1904
      %v1909 = vpack.c.bf16 %v1905, %v1905
      %v1910 = vpack.c.bf16 %v1906, %v1906
      %v1911 = vpack.c.bf16 %v1907, %v1907
      %v1912 = vpack.c.bf16 %v1908, %v1908
      %v1914 = vsel %vm1599, %v1550, 0
      %v1917 = vsel %vm1603, %v1909, 0
      %1919 = vmatprep.subr.bf16.mxu0 0
      %1920 = vmatpush1.bf16.msra.mxu0 0
      %1921 = vmatprep.subr.bf16.mxu0 0
      %1922 = vmatpush1.bf16.msra.mxu0 0
      %1923 = vmatprep.subr.bf16.mxu0 0
      %1924 = vmatpush1.bf16.msra.mxu0 0
      %1925 = vmatprep.subr.bf16.mxu0 0
      %1926 = vmatpush1.bf16.msra.mxu0 0
      %1927 = vmatprep.subr.bf16.mxu0 0
      %1928 = vmatpush1.bf16.msra.mxu0 0
      %1929 = vmatprep.subr.bf16.mxu0 0
      %1930 = vmatpush1.bf16.msra.mxu0 0
      %1931 = vmatprep.subr.bf16.mxu0 0
      %1932 = vmatpush1.bf16.msra.mxu0 0
      %1933 = vmatprep.subr.bf16.mxu0 0
      %1934 = vmatpush1.bf16.msra.mxu0 %v1917
      %1935 = vmatprep.subr.bf16.mxu0 0
      %1936 = vmatpush2.bf16.msra.mxu0 0
      %1937 = vmatprep.subr.bf16.mxu0 0
      %1938 = vmatpush2.bf16.msra.mxu0 0
      %1939 = vmatprep.subr.bf16.mxu0 0
      %1940 = vmatpush2.bf16.msra.mxu0 0
      %1941 = vmatprep.subr.bf16.mxu0 0
      %1942 = vmatpush2.bf16.msra.mxu0 0
      %1943 = vmatprep.subr.bf16.mxu0 0
      %1944 = vmatpush2.bf16.msra.mxu0 0
      %1945 = vmatprep.subr.bf16.mxu0 0
      %1946 = vmatpush2.bf16.msra.mxu0 0
      %1947 = vmatprep.subr.bf16.mxu0 0
      %1948 = vmatpush2.bf16.msra.mxu0 0
      %1949 = vmatprep.subr.bf16.mxu0 0
      %1950 = vmatpush2.bf16.msra.mxu0 0
      %1951 = vmatprep.mubr.bf16.mxu0 0
      %1952 = vmatmul.mubr.bf16.gmra.mxu0 %v1914
      %v1953 = vpop.f32.mrf.mxu0
      %v1954 = vadd.f32 0.0, %v1953
      %v1955 = vpop.f32.mrf.mxu0
      %v1956 = vpop.f32.mrf.mxu0
      %v1957 = vpop.f32.mrf.mxu0
      %1958 = vdwg.mxu0
      %v1960 = vsel %vm1599, %v1551, 0
      %v1963 = vsel %vm1603, %v1910, 0
      %1965 = vmatprep.subr.bf16.mxu0 0
      %1966 = vmatpush1.bf16.msra.mxu0 0
      %1967 = vmatprep.subr.bf16.mxu0 0
      %1968 = vmatpush1.bf16.msra.mxu0 0
      %1969 = vmatprep.subr.bf16.mxu0 0
      %1970 = vmatpush1.bf16.msra.mxu0 0
      %1971 = vmatprep.subr.bf16.mxu0 0
      %1972 = vmatpush1.bf16.msra.mxu0 0
      %1973 = vmatprep.subr.bf16.mxu0 0
      %1974 = vmatpush1.bf16.msra.mxu0 0
      %1975 = vmatprep.subr.bf16.mxu0 0
      %1976 = vmatpush1.bf16.msra.mxu0 0
      %1977 = vmatprep.subr.bf16.mxu0 0
      %1978 = vmatpush1.bf16.msra.mxu0 0
      %1979 = vmatprep.subr.bf16.mxu0 0
      %1980 = vmatpush1.bf16.msra.mxu0 %v1963
      %1981 = vmatprep.subr.bf16.mxu0 0
      %1982 = vmatpush2.bf16.msra.mxu0 0
      %1983 = vmatprep.subr.bf16.mxu0 0
      %1984 = vmatpush2.bf16.msra.mxu0 0
      %1985 = vmatprep.subr.bf16.mxu0 0
      %1986 = vmatpush2.bf16.msra.mxu0 0
      %1987 = vmatprep.subr.bf16.mxu0 0
      %1988 = vmatpush2.bf16.msra.mxu0 0
      %1989 = vmatprep.subr.bf16.mxu0 0
      %1990 = vmatpush2.bf16.msra.mxu0 0
      %1991 = vmatprep.subr.bf16.mxu0 0
      %1992 = vmatpush2.bf16.msra.mxu0 0
      %1993 = vmatprep.subr.bf16.mxu0 0
      %1994 = vmatpush2.bf16.msra.mxu0 0
      %1995 = vmatprep.subr.bf16.mxu0 0
      %1996 = vmatpush2.bf16.msra.mxu0 0
      %1997 = vmatprep.mubr.bf16.mxu0 0
      %1998 = vmatmul.mubr.bf16.gmra.mxu0 %v1960
      %v1999 = vpop.f32.mrf.mxu0
      %v2000 = vadd.f32 0.0, %v1999
      %v2001 = vpop.f32.mrf.mxu0
      %v2002 = vpop.f32.mrf.mxu0
      %v2003 = vpop.f32.mrf.mxu0
      %2004 = vdwg.mxu0
      %v2006 = vsel %vm1599, %v1552, 0
      %v2009 = vsel %vm1603, %v1911, 0
      %2011 = vmatprep.subr.bf16.mxu0 0
      %2012 = vmatpush1.bf16.msra.mxu0 0
      %2013 = vmatprep.subr.bf16.mxu0 0
      %2014 = vmatpush1.bf16.msra.mxu0 0
      %2015 = vmatprep.subr.bf16.mxu0 0
      %2016 = vmatpush1.bf16.msra.mxu0 0
      %2017 = vmatprep.subr.bf16.mxu0 0
      %2018 = vmatpush1.bf16.msra.mxu0 0
      %2019 = vmatprep.subr.bf16.mxu0 0
      %2020 = vmatpush1.bf16.msra.mxu0 0
      %2021 = vmatprep.subr.bf16.mxu0 0
      %2022 = vmatpush1.bf16.msra.mxu0 0
      %2023 = vmatprep.subr.bf16.mxu0 0
      %2024 = vmatpush1.bf16.msra.mxu0 0
      %2025 = vmatprep.subr.bf16.mxu0 0
      %2026 = vmatpush1.bf16.msra.mxu0 %v2009
      %2027 = vmatprep.subr.bf16.mxu0 0
      %2028 = vmatpush2.bf16.msra.mxu0 0
      %2029 = vmatprep.subr.bf16.mxu0 0
      %2030 = vmatpush2.bf16.msra.mxu0 0
      %2031 = vmatprep.subr.bf16.mxu0 0
      %2032 = vmatpush2.bf16.msra.mxu0 0
      %2033 = vmatprep.subr.bf16.mxu0 0
      %2034 = vmatpush2.bf16.msra.mxu0 0
      %2035 = vmatprep.subr.bf16.mxu0 0
      %2036 = vmatpush2.bf16.msra.mxu0 0
      %2037 = vmatprep.subr.bf16.mxu0 0
      %2038 = vmatpush2.bf16.msra.mxu0 0
      %2039 = vmatprep.subr.bf16.mxu0 0
      %2040 = vmatpush2.bf16.msra.mxu0 0
      %2041 = vmatprep.subr.bf16.mxu0 0
      %2042 = vmatpush2.bf16.msra.mxu0 0
      %2043 = vmatprep.mubr.bf16.mxu0 0
      %2044 = vmatmul.mubr.bf16.gmra.mxu0 %v2006
      %v2045 = vpop.f32.mrf.mxu0
      %v2046 = vadd.f32 0.0, %v2045
      %v2047 = vpop.f32.mrf.mxu0
      %v2048 = vpop.f32.mrf.mxu0
      %v2049 = vpop.f32.mrf.mxu0
      %2050 = vdwg.mxu0
      %v2052 = vsel %vm1599, %v1553, 0
      %v2055 = vsel %vm1603, %v1912, 0
      %2057 = vmatprep.subr.bf16.mxu0 0
      %2058 = vmatpush1.bf16.msra.mxu0 0
      %2059 = vmatprep.subr.bf16.mxu0 0
      %2060 = vmatpush1.bf16.msra.mxu0 0
      %2061 = vmatprep.subr.bf16.mxu0 0
      %2062 = vmatpush1.bf16.msra.mxu0 0
      %2063 = vmatprep.subr.bf16.mxu0 0
      %2064 = vmatpush1.bf16.msra.mxu0 0
      %2065 = vmatprep.subr.bf16.mxu0 0
      %2066 = vmatpush1.bf16.msra.mxu0 0
      %2067 = vmatprep.subr.bf16.mxu0 0
      %2068 = vmatpush1.bf16.msra.mxu0 0
      %2069 = vmatprep.subr.bf16.mxu0 0
      %2070 = vmatpush1.bf16.msra.mxu0 0
      %2071 = vmatprep.subr.bf16.mxu0 0
      %2072 = vmatpush1.bf16.msra.mxu0 %v2055
      %2073 = vmatprep.subr.bf16.mxu0 0
      %2074 = vmatpush2.bf16.msra.mxu0 0
      %2075 = vmatprep.subr.bf16.mxu0 0
      %2076 = vmatpush2.bf16.msra.mxu0 0
      %2077 = vmatprep.subr.bf16.mxu0 0
      %2078 = vmatpush2.bf16.msra.mxu0 0
      %2079 = vmatprep.subr.bf16.mxu0 0
      %2080 = vmatpush2.bf16.msra.mxu0 0
      %2081 = vmatprep.subr.bf16.mxu0 0
      %2082 = vmatpush2.bf16.msra.mxu0 0
      %2083 = vmatprep.subr.bf16.mxu0 0
      %2084 = vmatpush2.bf16.msra.mxu0 0
      %2085 = vmatprep.subr.bf16.mxu0 0
      %2086 = vmatpush2.bf16.msra.mxu0 0
      %2087 = vmatprep.subr.bf16.mxu0 0
      %2088 = vmatpush2.bf16.msra.mxu0 0
      %2089 = vmatprep.mubr.bf16.mxu0 0
      %2090 = vmatmul.mubr.bf16.gmra.mxu0 %v2052
      %v2091 = vpop.f32.mrf.mxu0
      %v2092 = vadd.f32 0.0, %v2091
      %v2093 = vpop.f32.mrf.mxu0
      %v2094 = vpop.f32.mrf.mxu0
      %v2095 = vpop.f32.mrf.mxu0
      %2096 = vdwg.mxu0
      %v2097 = vpack.c.bf16 %v2000, %v1954
      %v2098 = vpack.c.bf16 %v2092, %v2046
      %2100 = vset.pattern.permute.xlu0 0
      %2101 = vperm.xlu0 %2100, %v1558
      %v2102 = vpop.permute.xlu0 %2101
      %2105 = vset.pattern.permute.xlu0 0
      %2106 = vperm.xlu0 %2105, %v1559
      %v2107 = vpop.permute.xlu0 %2106
      %2110 = vset.pattern.permute.xlu0 0
      %2111 = vperm.xlu0 %2110, %v1560
      %v2112 = vpop.permute.xlu0 %2111
      %2115 = vset.pattern.permute.xlu0 0
      %2116 = vperm.xlu0 %2115, %v1561
      %v2117 = vpop.permute.xlu0 %2116
      %v2123 = vunpack.c.l.b16 %v1554
      %v2124 = vunpack.c.l.b16 %v1555
      %v2125 = vunpack.c.l.b16 %v1556
      %v2126 = vunpack.c.l.b16 %v1557
      %v2127 = vpack.c.b16 %v2124, %v2123
      %v2128 = vpack.c.b16 %v2126, %v2125
      %v2130 = vsel %vm1490, %v2127, 0
      %v2133 = vsel %vm1490, %v2128, 0
      %2135 = vmatprep.subr.bf16.mxu0 0
      %2136 = vmatpush1.bf16.msra.mxu0 0
      %2137 = vmatprep.subr.bf16.mxu0 0
      %2138 = vmatpush1.bf16.msra.mxu0 0
      %2139 = vmatprep.subr.bf16.mxu0 0
      %2140 = vmatpush1.bf16.msra.mxu0 0
      %2141 = vmatprep.subr.bf16.mxu0 0
      %2142 = vmatpush1.bf16.msra.mxu0 0
      %2143 = vmatprep.subr.bf16.mxu0 0
      %2144 = vmatpush1.bf16.msra.mxu0 0
      %2145 = vmatprep.subr.bf16.mxu0 0
      %2146 = vmatpush1.bf16.msra.mxu0 0
      %2147 = vmatprep.subr.bf16.mxu0 0
      %2148 = vmatpush1.bf16.msra.mxu0 %v2098
      %2149 = vmatprep.subr.bf16.mxu0 0
      %2150 = vmatpush1.bf16.msra.mxu0 %v2097
      %2151 = vmatprep.subr.bf16.mxu0 0
      %2152 = vmatpush2.bf16.msra.mxu0 0
      %2153 = vmatprep.subr.bf16.mxu0 0
      %2154 = vmatpush2.bf16.msra.mxu0 0
      %2155 = vmatprep.subr.bf16.mxu0 0
      %2156 = vmatpush2.bf16.msra.mxu0 0
      %2157 = vmatprep.subr.bf16.mxu0 0
      %2158 = vmatpush2.bf16.msra.mxu0 0
      %2159 = vmatprep.subr.bf16.mxu0 0
      %2160 = vmatpush2.bf16.msra.mxu0 0
      %2161 = vmatprep.subr.bf16.mxu0 0
      %2162 = vmatpush2.bf16.msra.mxu0 0
      %2163 = vmatprep.subr.bf16.mxu0 0
      %2164 = vmatpush2.bf16.msra.mxu0 0
      %2165 = vmatprep.subr.bf16.mxu0 0
      %2166 = vmatpush2.bf16.msra.mxu0 0
      %2167 = vmatprep.mubr.bf16.mxu0 0
      %2168 = vmatmul.mubr.bf16.gmra.mxu0 %v2130
      %v2169 = vpop.f32.mrf.mxu0
      %v2170 = vadd.f32 %v2102, %v2169
      %v2171 = vpop.f32.mrf.mxu0
      %v2172 = vpop.f32.mrf.mxu0
      %v2173 = vadd.f32 %v2107, %v2172
      %v2174 = vpop.f32.mrf.mxu0
      %2175 = vmatprep.mubr.bf16.mxu0 0
      %2176 = vmatmul.mubr.bf16.gmra.mxu0 %v2133
      %v2177 = vpop.f32.mrf.mxu0
      %v2178 = vadd.f32 %v2112, %v2177
      %v2179 = vpop.f32.mrf.mxu0
      %v2180 = vpop.f32.mrf.mxu0
      %v2181 = vadd.f32 %v2117, %v2180
      %v2182 = vpop.f32.mrf.mxu0
      %2183 = vdwg.mxu0
      %v2184 = vadd.f32 %v1446, %v2170
      %v2185 = vadd.f32 %v1447, %v2173
      %v2186 = vadd.f32 %v1448, %v2178
      %v2187 = vadd.f32 %v1449, %v2181
      %v2188 = vld [vmem:[%s23] sm:$0xff]
      %v2189 = vld [vmem:[%s23 + $0x8] sm:$0xff]
      %v2190 = vld [vmem:[%s23 + $0x10] sm:$0xff]
      %v2191 = vld [vmem:[%s23 + $0x18] sm:$0xff]
      %v2192 = vld [vmem:[%s25] sm:$0xff]
      %v2193 = vld [vmem:[%s25 + $0x8] sm:$0xff]
      %v2194 = vld [vmem:[%s25 + $0x10] sm:$0xff]
      %v2195 = vld [vmem:[%s25 + $0x18] sm:$0xff]
      %v2196 = vsel %vm1599, %v2184, 0.0
      %v2197 = vsel %vm1599, %v2185, 0.0
      %v2198 = vadd.f32 %v2196, %v2197
      %v2199 = vsel %vm1599, %v2186, 0.0
      %v2200 = vadd.f32 %v2198, %v2199
      %v2201 = vsel %vm1599, %v2187, 0.0
      %v2202 = vadd.f32 %v2200, %v2201
      %v2203 = vrot.slane %v2202, 4
      %v2204 = vadd.f32 %v2202, %v2203
      %v2205 = vrot.slane %v2204, 2
      %v2206 = vadd.f32 %v2204, %v2205
      %v2207 = vrot.slane %v2206, 1
      %v2208 = vadd.f32 %v2206, %v2207
      %v2209 = vmul.f32 %v2208, 0.03125
      %v2210 = vmul.f32 %v2184, %v2184
      %v2211 = vmul.f32 %v2185, %v2185
      %v2212 = vmul.f32 %v2186, %v2186
      %v2213 = vmul.f32 %v2187, %v2187
      %v2214 = vsel %vm1599, %v2210, 0.0
      %v2215 = vsel %vm1599, %v2211, 0.0
      %v2216 = vadd.f32 %v2214, %v2215
      %v2217 = vsel %vm1599, %v2212, 0.0
      %v2218 = vadd.f32 %v2216, %v2217
      %v2219 = vsel %vm1599, %v2213, 0.0
      %v2220 = vadd.f32 %v2218, %v2219
      %v2221 = vrot.slane %v2220, 4
      %v2222 = vadd.f32 %v2220, %v2221
      %v2223 = vrot.slane %v2222, 2
      %v2224 = vadd.f32 %v2222, %v2223
      %v2225 = vrot.slane %v2224, 1
      %v2226 = vadd.f32 %v2224, %v2225
      %v2227 = vmul.f32 %v2226, 0.03125
      %v2228 = vmul.f32 %v2209, %v2209
      %v2229 = vsub.f32 %v2227, %v2228
      %v2230 = vsub.f32 %v2184, %v2209
      %v2231 = vsub.f32 %v2185, %v2209
      %v2232 = vsub.f32 %v2186, %v2209
      %v2233 = vsub.f32 %v2187, %v2209
      %v2234 = vadd.f32 %v2229, 1e-05
      %v2235 = vrsqrt.pop %v2234
      %v2236 = vmul.f32 %v2230, %v2235
      %v2237 = vmul.f32 %v2231, %v2235
      %v2238 = vmul.f32 %v2232, %v2235
      %v2239 = vmul.f32 %v2233, %v2235
      %2241 = vset.pattern.permute.xlu0 0
      %2242 = vperm.xlu0 %2241, %v2188
      %v2243 = vpop.permute.xlu0 %2242
      %2246 = vset.pattern.permute.xlu0 0
      %2247 = vperm.xlu0 %2246, %v2189
      %v2248 = vpop.permute.xlu0 %2247
      %2251 = vset.pattern.permute.xlu0 0
      %2252 = vperm.xlu0 %2251, %v2190
      %v2253 = vpop.permute.xlu0 %2252
      %2256 = vset.pattern.permute.xlu0 0
      %2257 = vperm.xlu0 %2256, %v2191
      %v2258 = vpop.permute.xlu0 %2257
      %v2260 = vmul.f32 %v2236, %v2243
      %v2261 = vmul.f32 %v2237, %v2248
      %v2262 = vmul.f32 %v2238, %v2253
      %v2263 = vmul.f32 %v2239, %v2258
      %2265 = vset.pattern.permute.xlu0 0
      %2266 = vperm.xlu0 %2265, %v2192
      %v2267 = vpop.permute.xlu0 %2266
      %2270 = vset.pattern.permute.xlu0 0
      %2271 = vperm.xlu0 %2270, %v2193
      %v2272 = vpop.permute.xlu0 %2271
      %2275 = vset.pattern.permute.xlu0 0
      %2276 = vperm.xlu0 %2275, %v2194
      %v2277 = vpop.permute.xlu0 %2276
      %2280 = vset.pattern.permute.xlu0 0
      %2281 = vperm.xlu0 %2280, %v2195
      %v2282 = vpop.permute.xlu0 %2281
      %v2284 = vadd.f32 %v2260, %v2267
      %v2285 = vadd.f32 %v2261, %v2272
      %v2286 = vadd.f32 %v2262, %v2277
      %v2287 = vadd.f32 %v2263, %v2282
      %v2288 = vld [vmem:[%s27] sm:$0xf]
      %v2289 = vld [vmem:[%s27 + $0x4] sm:$0xf]
      %v2290 = vld [vmem:[%s27 + $0x8] sm:$0xf]
      %v2291 = vld [vmem:[%s27 + $0xc] sm:$0xf]
      %v2292 = vpack.c.bf16 %v2285, %v2284
      %v2293 = vpack.c.bf16 %v2287, %v2286
      %v2294 = vld [vmem:[%s29] sm:$0xff]
      %v2295 = vld [vmem:[%s29 + $0x8] sm:$0xff]
      %v2296 = vld [vmem:[%s29 + $0x10] sm:$0xff]
      %v2297 = vld [vmem:[%s29 + $0x18] sm:$0xff]
      %2299 = vset.pattern.permute.xlu0 0
      %2300 = vperm.xlu0 %2299, %v2294
      %v2301 = vpop.permute.xlu0 %2300
      %2304 = vset.pattern.permute.xlu0 0
      %2305 = vperm.xlu0 %2304, %v2295
      %v2306 = vpop.permute.xlu0 %2305
      %2309 = vset.pattern.permute.xlu0 0
      %2310 = vperm.xlu0 %2309, %v2296
      %v2311 = vpop.permute.xlu0 %2310
      %2314 = vset.pattern.permute.xlu0 0
      %2315 = vperm.xlu0 %2314, %v2297
      %v2316 = vpop.permute.xlu0 %2315
      %v2322 = vunpack.c.l.b16 %v2288
      %v2323 = vunpack.c.l.b16 %v2289
      %v2324 = vunpack.c.l.b16 %v2290
      %v2325 = vunpack.c.l.b16 %v2291
      %v2326 = vpack.c.b16 %v2323, %v2322
      %v2327 = vpack.c.b16 %v2325, %v2324
      %v2329 = vsel %vm1490, %v2326, 0
      %v2332 = vsel %vm1490, %v2327, 0
      %2334 = vmatprep.subr.bf16.mxu0 0
      %2335 = vmatpush1.bf16.msra.mxu0 0
      %2336 = vmatprep.subr.bf16.mxu0 0
      %2337 = vmatpush1.bf16.msra.mxu0 0
      %2338 = vmatprep.subr.bf16.mxu0 0
      %2339 = vmatpush1.bf16.msra.mxu0 0
      %2340 = vmatprep.subr.bf16.mxu0 0
      %2341 = vmatpush1.bf16.msra.mxu0 0
      %2342 = vmatprep.subr.bf16.mxu0 0
      %2343 = vmatpush1.bf16.msra.mxu0 0
      %2344 = vmatprep.subr.bf16.mxu0 0
      %2345 = vmatpush1.bf16.msra.mxu0 0
      %2346 = vmatprep.subr.bf16.mxu0 0
      %2347 = vmatpush1.bf16.msra.mxu0 %v2293
      %2348 = vmatprep.subr.bf16.mxu0 0
      %2349 = vmatpush1.bf16.msra.mxu0 %v2292
      %2350 = vmatprep.subr.bf16.mxu0 0
      %2351 = vmatpush2.bf16.msra.mxu0 0
      %2352 = vmatprep.subr.bf16.mxu0 0
      %2353 = vmatpush2.bf16.msra.mxu0 0
      %2354 = vmatprep.subr.bf16.mxu0 0
      %2355 = vmatpush2.bf16.msra.mxu0 0
      %2356 = vmatprep.subr.bf16.mxu0 0
      %2357 = vmatpush2.bf16.msra.mxu0 0
      %2358 = vmatprep.subr.bf16.mxu0 0
      %2359 = vmatpush2.bf16.msra.mxu0 0
      %2360 = vmatprep.subr.bf16.mxu0 0
      %2361 = vmatpush2.bf16.msra.mxu0 0
      %2362 = vmatprep.subr.bf16.mxu0 0
      %2363 = vmatpush2.bf16.msra.mxu0 0
      %2364 = vmatprep.subr.bf16.mxu0 0
      %2365 = vmatpush2.bf16.msra.mxu0 0
      %2366 = vmatprep.mubr.bf16.mxu0 0
      %2367 = vmatmul.mubr.bf16.gmra.mxu0 %v2329
      %v2368 = vpop.f32.mrf.mxu0
      %v2369 = vadd.f32 %v2301, %v2368
      %v2370 = vpop.f32.mrf.mxu0
      %v2371 = vpop.f32.mrf.mxu0
      %v2372 = vadd.f32 %v2306, %v2371
      %v2373 = vpop.f32.mrf.mxu0
      %2374 = vmatprep.mubr.bf16.mxu0 0
      %2375 = vmatmul.mubr.bf16.gmra.mxu0 %v2332
      %v2376 = vpop.f32.mrf.mxu0
      %v2377 = vadd.f32 %v2311, %v2376
      %v2378 = vpop.f32.mrf.mxu0
      %v2379 = vpop.f32.mrf.mxu0
      %v2380 = vadd.f32 %v2316, %v2379
      %v2381 = vpop.f32.mrf.mxu0
      %2382 = vdwg.mxu0
      %v2383 = vld [vmem:[#allocation4] sm:$0xf]
      %v2384 = vld [vmem:[#allocation4 + $0x4] sm:$0xf]
      %v2385 = vld [vmem:[#allocation4 + $0x8] sm:$0xf]
      %v2386 = vld [vmem:[#allocation4 + $0xc] sm:$0xf]
      %v2387 = vld [vmem:[#allocation5] sm:$0xf]
      %v2388 = vld [vmem:[#allocation5 + $0x4] sm:$0xf]
      %v2389 = vld [vmem:[#allocation5 + $0x8] sm:$0xf]
      %v2390 = vld [vmem:[#allocation5 + $0xc] sm:$0xf]
      %v2391 = vld [vmem:[%s39] sm:$0xf]
      %v2392 = vld [vmem:[%s39 + $0x4] sm:$0xf]
      %v2393 = vld [vmem:[%s39 + $0x8] sm:$0xf]
      %v2394 = vld [vmem:[%s39 + $0xc] sm:$0xf]
      %v2395 = vld [vmem:[%s41] sm:$0xff]
      %v2396 = vld [vmem:[%s41 + $0x8] sm:$0xff]
      %v2397 = vld [vmem:[%s41 + $0x10] sm:$0xff]
      %v2398 = vld [vmem:[%s41 + $0x18] sm:$0xff]
      %v2399 = vpack.c.bf16 %v2372, %v2369
      %v2400 = vpack.c.bf16 %v2380, %v2377
      %v2403 = vunpack.c.l.b16 %v2399
      %v2404 = vunpack.c.h.b16 %v2399
      %v2405 = vunpack.c.l.b16 %v2400
      %v2406 = vunpack.c.h.b16 %v2400
      %v2407 = vpack.c.b16 %v2403, %v2403
      %v2408 = vpack.c.b16 %v2404, %v2404
      %v2409 = vpack.c.b16 %v2405, %v2405
      %v2410 = vpack.c.b16 %v2406, %v2406
      %2411 = vxpose.xlu0.c.b16.start [1/8] %v2383, 128
      %2412 = vxpose.xlu0.c.b16.cont [2/8] 0, 128
      %2413 = vxpose.xlu0.c.b16.cont [3/8] 0, 128
      %2414 = vxpose.xlu0.c.b16.cont [4/8] 0, 128
      %2415 = vxpose.xlu0.c.b16.cont [5/8] 0, 128
      %2416 = vxpose.xlu0.c.b16.cont [6/8] 0, 128
      %2417 = vxpose.xlu0.c.b16.cont [7/8] 0, 128
      %2418 = vxpose.xlu0.c.b16.end [8/8] 0, 128
      %v2419 = vpop.trf.xlu0
      %v2420 = vpop.trf.xlu0
      %v2421 = vpop.trf.xlu0
      %v2422 = vpop.trf.xlu0
      %v2423 = vpop.trf.xlu0
      %v2424 = vpop.trf.xlu0
      %v2425 = vpop.trf.xlu0
      %v2426 = vpop.trf.xlu0
      %v2428 = vsel %vm1599, %v2419, 0
      %v2431 = vsel %vm1603, %v2407, 0
      %2433 = vmatprep.subr.bf16.mxu0 0
      %2434 = vmatpush1.bf16.msra.mxu0 0
      %2435 = vmatprep.subr.bf16.mxu0 0
      %2436 = vmatpush1.bf16.msra.mxu0 0
      %2437 = vmatprep.subr.bf16.mxu0 0
      %2438 = vmatpush1.bf16.msra.mxu0 0
      %2439 = vmatprep.subr.bf16.mxu0 0
      %2440 = vmatpush1.bf16.msra.mxu0 0
      %2441 = vmatprep.subr.bf16.mxu0 0
      %2442 = vmatpush1.bf16.msra.mxu0 0
      %2443 = vmatprep.subr.bf16.mxu0 0
      %2444 = vmatpush1.bf16.msra.mxu0 0
      %2445 = vmatprep.subr.bf16.mxu0 0
      %2446 = vmatpush1.bf16.msra.mxu0 0
      %2447 = vmatprep.subr.bf16.mxu0 0
      %2448 = vmatpush1.bf16.msra.mxu0 %v2431
      %2449 = vmatprep.subr.bf16.mxu0 0
      %2450 = vmatpush2.bf16.msra.mxu0 0
      %2451 = vmatprep.subr.bf16.mxu0 0
      %2452 = vmatpush2.bf16.msra.mxu0 0
      %2453 = vmatprep.subr.bf16.mxu0 0
      %2454 = vmatpush2.bf16.msra.mxu0 0
      %2455 = vmatprep.subr.bf16.mxu0 0
      %2456 = vmatpush2.bf16.msra.mxu0 0
      %2457 = vmatprep.subr.bf16.mxu0 0
      %2458 = vmatpush2.bf16.msra.mxu0 0
      %2459 = vmatprep.subr.bf16.mxu0 0
      %2460 = vmatpush2.bf16.msra.mxu0 0
      %2461 = vmatprep.subr.bf16.mxu0 0
      %2462 = vmatpush2.bf16.msra.mxu0 0
      %2463 = vmatprep.subr.bf16.mxu0 0
      %2464 = vmatpush2.bf16.msra.mxu0 0
      %2465 = vmatprep.mubr.bf16.mxu0 0
      %2466 = vmatmul.mubr.bf16.gmra.mxu0 %v2428
      %v2467 = vpop.f32.mrf.mxu0
      %v2468 = vadd.f32 0.0, %v2467
      %v2469 = vpop.f32.mrf.mxu0
      %v2470 = vpop.f32.mrf.mxu0
      %v2471 = vadd.f32 0.0, %v2470
      %v2472 = vpop.f32.mrf.mxu0
      %2473 = vdwg.mxu0
      %2474 = vxpose.xlu0.c.b16.start [1/8] %v2384, 128
      %2475 = vxpose.xlu0.c.b16.cont [2/8] 0, 128
      %2476 = vxpose.xlu0.c.b16.cont [3/8] 0, 128
      %2477 = vxpose.xlu0.c.b16.cont [4/8] 0, 128
      %2478 = vxpose.xlu0.c.b16.cont [5/8] 0, 128
      %2479 = vxpose.xlu0.c.b16.cont [6/8] 0, 128
      %2480 = vxpose.xlu0.c.b16.cont [7/8] 0, 128
      %2481 = vxpose.xlu0.c.b16.end [8/8] 0, 128
      %v2482 = vpop.trf.xlu0
      %v2483 = vpop.trf.xlu0
      %v2484 = vpop.trf.xlu0
      %v2485 = vpop.trf.xlu0
      %v2486 = vpop.trf.xlu0
      %v2487 = vpop.trf.xlu0
      %v2488 = vpop.trf.xlu0
      %v2489 = vpop.trf.xlu0
      %v2491 = vsel %vm1599, %v2482, 0
      %v2494 = vsel %vm1603, %v2408, 0
      %2496 = vmatprep.subr.bf16.mxu0 0
      %2497 = vmatpush1.bf16.msra.mxu0 0
      %2498 = vmatprep.subr.bf16.mxu0 0
      %2499 = vmatpush1.bf16.msra.mxu0 0
      %2500 = vmatprep.subr.bf16.mxu0 0
      %2501 = vmatpush1.bf16.msra.mxu0 0
      %2502 = vmatprep.subr.bf16.mxu0 0
      %2503 = vmatpush1.bf16.msra.mxu0 0
      %2504 = vmatprep.subr.bf16.mxu0 0
      %2505 = vmatpush1.bf16.msra.mxu0 0
      %2506 = vmatprep.subr.bf16.mxu0 0
      %2507 = vmatpush1.bf16.msra.mxu0 0
      %2508 = vmatprep.subr.bf16.mxu0 0
      %2509 = vmatpush1.bf16.msra.mxu0 0
      %2510 = vmatprep.subr.bf16.mxu0 0
      %2511 = vmatpush1.bf16.msra.mxu0 %v2494
      %2512 = vmatprep.subr.bf16.mxu0 0
      %2513 = vmatpush2.bf16.msra.mxu0 0
      %2514 = vmatprep.subr.bf16.mxu0 0
      %2515 = vmatpush2.bf16.msra.mxu0 0
      %2516 = vmatprep.subr.bf16.mxu0 0
      %2517 = vmatpush2.bf16.msra.mxu0 0
      %2518 = vmatprep.subr.bf16.mxu0 0
      %2519 = vmatpush2.bf16.msra.mxu0 0
      %2520 = vmatprep.subr.bf16.mxu0 0
      %2521 = vmatpush2.bf16.msra.mxu0 0
      %2522 = vmatprep.subr.bf16.mxu0 0
      %2523 = vmatpush2.bf16.msra.mxu0 0
      %2524 = vmatprep.subr.bf16.mxu0 0
      %2525 = vmatpush2.bf16.msra.mxu0 0
      %2526 = vmatprep.subr.bf16.mxu0 0
      %2527 = vmatpush2.bf16.msra.mxu0 0
      %2528 = vmatprep.mubr.bf16.mxu0 0
      %2529 = vmatmul.mubr.bf16.gmra.mxu0 %v2491
      %v2530 = vpop.f32.mrf.mxu0
      %v2531 = vadd.f32 0.0, %v2530
      %v2532 = vpop.f32.mrf.mxu0
      %v2533 = vpop.f32.mrf.mxu0
      %v2534 = vadd.f32 0.0, %v2533
      %v2535 = vpop.f32.mrf.mxu0
      %2536 = vdwg.mxu0
      %2537 = vxpose.xlu0.c.b16.start [1/8] %v2385, 128
      %2538 = vxpose.xlu0.c.b16.cont [2/8] 0, 128
      %2539 = vxpose.xlu0.c.b16.cont [3/8] 0, 128
      %2540 = vxpose.xlu0.c.b16.cont [4/8] 0, 128
      %2541 = vxpose.xlu0.c.b16.cont [5/8] 0, 128
      %2542 = vxpose.xlu0.c.b16.cont [6/8] 0, 128
      %2543 = vxpose.xlu0.c.b16.cont [7/8] 0, 128
      %2544 = vxpose.xlu0.c.b16.end [8/8] 0, 128
      %v2545 = vpop.trf.xlu0
      %v2546 = vpop.trf.xlu0
      %v2547 = vpop.trf.xlu0
      %v2548 = vpop.trf.xlu0
      %v2549 = vpop.trf.xlu0
      %v2550 = vpop.trf.xlu0
      %v2551 = vpop.trf.xlu0
      %v2552 = vpop.trf.xlu0
      %v2554 = vsel %vm1599, %v2545, 0
      %v2557 = vsel %vm1603, %v2409, 0
      %2559 = vmatprep.subr.bf16.mxu0 0
      %2560 = vmatpush1.bf16.msra.mxu0 0
      %2561 = vmatprep.subr.bf16.mxu0 0
      %2562 = vmatpush1.bf16.msra.mxu0 0
      %2563 = vmatprep.subr.bf16.mxu0 0
      %2564 = vmatpush1.bf16.msra.mxu0 0
      %2565 = vmatprep.subr.bf16.mxu0 0
      %2566 = vmatpush1.bf16.msra.mxu0 0
      %2567 = vmatprep.subr.bf16.mxu0 0
      %2568 = vmatpush1.bf16.msra.mxu0 0
      %2569 = vmatprep.subr.bf16.mxu0 0
      %2570 = vmatpush1.bf16.msra.mxu0 0
      %2571 = vmatprep.subr.bf16.mxu0 0
      %2572 = vmatpush1.bf16.msra.mxu0 0
      %2573 = vmatprep.subr.bf16.mxu0 0
      %2574 = vmatpush1.bf16.msra.mxu0 %v2557
      %2575 = vmatprep.subr.bf16.mxu0 0
      %2576 = vmatpush2.bf16.msra.mxu0 0
      %2577 = vmatprep.subr.bf16.mxu0 0
      %2578 = vmatpush2.bf16.msra.mxu0 0
      %2579 = vmatprep.subr.bf16.mxu0 0
      %2580 = vmatpush2.bf16.msra.mxu0 0
      %2581 = vmatprep.subr.bf16.mxu0 0
      %2582 = vmatpush2.bf16.msra.mxu0 0
      %2583 = vmatprep.subr.bf16.mxu0 0
      %2584 = vmatpush2.bf16.msra.mxu0 0
      %2585 = vmatprep.subr.bf16.mxu0 0
      %2586 = vmatpush2.bf16.msra.mxu0 0
      %2587 = vmatprep.subr.bf16.mxu0 0
      %2588 = vmatpush2.bf16.msra.mxu0 0
      %2589 = vmatprep.subr.bf16.mxu0 0
      %2590 = vmatpush2.bf16.msra.mxu0 0
      %2591 = vmatprep.mubr.bf16.mxu0 0
      %2592 = vmatmul.mubr.bf16.gmra.mxu0 %v2554
      %v2593 = vpop.f32.mrf.mxu0
      %v2594 = vadd.f32 0.0, %v2593
      %v2595 = vpop.f32.mrf.mxu0
      %v2596 = vpop.f32.mrf.mxu0
      %v2597 = vadd.f32 0.0, %v2596
      %v2598 = vpop.f32.mrf.mxu0
      %2599 = vdwg.mxu0
      %2600 = vxpose.xlu0.c.b16.start [1/8] %v2386, 128
      %2601 = vxpose.xlu0.c.b16.cont [2/8] 0, 128
      %2602 = vxpose.xlu0.c.b16.cont [3/8] 0, 128
      %2603 = vxpose.xlu0.c.b16.cont [4/8] 0, 128
      %2604 = vxpose.xlu0.c.b16.cont [5/8] 0, 128
      %2605 = vxpose.xlu0.c.b16.cont [6/8] 0, 128
      %2606 = vxpose.xlu0.c.b16.cont [7/8] 0, 128
      %2607 = vxpose.xlu0.c.b16.end [8/8] 0, 128
      %v2608 = vpop.trf.xlu0
      %v2609 = vpop.trf.xlu0
      %v2610 = vpop.trf.xlu0
      %v2611 = vpop.trf.xlu0
      %v2612 = vpop.trf.xlu0
      %v2613 = vpop.trf.xlu0
      %v2614 = vpop.trf.xlu0
      %v2615 = vpop.trf.xlu0
      %v2617 = vsel %vm1599, %v2608, 0
      %v2620 = vsel %vm1603, %v2410, 0
      %2622 = vmatprep.subr.bf16.mxu0 0
      %2623 = vmatpush1.bf16.msra.mxu0 0
      %2624 = vmatprep.subr.bf16.mxu0 0
      %2625 = vmatpush1.bf16.msra.mxu0 0
      %2626 = vmatprep.subr.bf16.mxu0 0
      %2627 = vmatpush1.bf16.msra.mxu0 0
      %2628 = vmatprep.subr.bf16.mxu0 0
      %2629 = vmatpush1.bf16.msra.mxu0 0
      %2630 = vmatprep.subr.bf16.mxu0 0
      %2631 = vmatpush1.bf16.msra.mxu0 0
      %2632 = vmatprep.subr.bf16.mxu0 0
      %2633 = vmatpush1.bf16.msra.mxu0 0
      %2634 = vmatprep.subr.bf16.mxu0 0
      %2635 = vmatpush1.bf16.msra.mxu0 0
      %2636 = vmatprep.subr.bf16.mxu0 0
      %2637 = vmatpush1.bf16.msra.mxu0 %v2620
      %2638 = vmatprep.subr.bf16.mxu0 0
      %2639 = vmatpush2.bf16.msra.mxu0 0
      %2640 = vmatprep.subr.bf16.mxu0 0
      %2641 = vmatpush2.bf16.msra.mxu0 0
      %2642 = vmatprep.subr.bf16.mxu0 0
      %2643 = vmatpush2.bf16.msra.mxu0 0
      %2644 = vmatprep.subr.bf16.mxu0 0
      %2645 = vmatpush2.bf16.msra.mxu0 0
      %2646 = vmatprep.subr.bf16.mxu0 0
      %2647 = vmatpush2.bf16.msra.mxu0 0
      %2648 = vmatprep.subr.bf16.mxu0 0
      %2649 = vmatpush2.bf16.msra.mxu0 0
      %2650 = vmatprep.subr.bf16.mxu0 0
      %2651 = vmatpush2.bf16.msra.mxu0 0
      %2652 = vmatprep.subr.bf16.mxu0 0
      %2653 = vmatpush2.bf16.msra.mxu0 0
      %2654 = vmatprep.mubr.bf16.mxu0 0
      %2655 = vmatmul.mubr.bf16.gmra.mxu0 %v2617
      %v2656 = vpop.f32.mrf.mxu0
      %v2657 = vadd.f32 0.0, %v2656
      %v2658 = vpop.f32.mrf.mxu0
      %v2659 = vpop.f32.mrf.mxu0
      %v2660 = vadd.f32 0.0, %v2659
      %v2661 = vpop.f32.mrf.mxu0
      %2662 = vdwg.mxu0
      %v2663 = vsel %vm1599, %v2468, -inf
      %v2664 = vsel %vm1599, %v2471, -inf
      %v2665 = vmax.f32 %v2663, %v2664
      %v2666 = vrot.slane %v2665, 4
      %v2667 = vmax.f32 %v2665, %v2666
      %v2668 = vrot.slane %v2667, 2
      %v2669 = vmax.f32 %v2667, %v2668
      %v2670 = vrot.slane %v2669, 1
      %v2671 = vmax.f32 %v2669, %v2670
      %v2672 = vsel %vm1599, %v2531, -inf
      %v2673 = vsel %vm1599, %v2534, -inf
      %v2674 = vmax.f32 %v2672, %v2673
      %v2675 = vrot.slane %v2674, 4
      %v2676 = vmax.f32 %v2674, %v2675
      %v2677 = vrot.slane %v2676, 2
      %v2678 = vmax.f32 %v2676, %v2677
      %v2679 = vrot.slane %v2678, 1
      %v2680 = vmax.f32 %v2678, %v2679
      %v2681 = vsel %vm1599, %v2594, -inf
      %v2682 = vsel %vm1599, %v2597, -inf
      %v2683 = vmax.f32 %v2681, %v2682
      %v2684 = vrot.slane %v2683, 4
      %v2685 = vmax.f32 %v2683, %v2684
      %v2686 = vrot.slane %v2685, 2
      %v2687 = vmax.f32 %v2685, %v2686
      %v2688 = vrot.slane %v2687, 1
      %v2689 = vmax.f32 %v2687, %v2688
      %v2690 = vsel %vm1599, %v2657, -inf
      %v2691 = vsel %vm1599, %v2660, -inf
      %v2692 = vmax.f32 %v2690, %v2691
      %v2693 = vrot.slane %v2692, 4
      %v2694 = vmax.f32 %v2692, %v2693
      %v2695 = vrot.slane %v2694, 2
      %v2696 = vmax.f32 %v2694, %v2695
      %v2697 = vrot.slane %v2696, 1
      %v2698 = vmax.f32 %v2696, %v2697
      %v2699 = vsub.f32 %v2468, %v2671
      %v2700 = vsub.f32 %v2471, %v2671
      %v2701 = vsub.f32 %v2531, %v2680
      %v2702 = vsub.f32 %v2534, %v2680
      %v2703 = vsub.f32 %v2594, %v2689
      %v2704 = vsub.f32 %v2597, %v2689
      %v2705 = vsub.f32 %v2657, %v2698
      %v2706 = vsub.f32 %v2660, %v2698
      %v2707 = vmul.f32 %v2699, 1.442695
      %v2708 = vpow.pop %v2707
      %v2709 = vmul.f32 %v2700, 1.442695
      %v2710 = vpow.pop %v2709
      %v2711 = vmul.f32 %v2701, 1.442695
      %v2712 = vpow.pop %v2711
      %v2713 = vmul.f32 %v2702, 1.442695
      %v2714 = vpow.pop %v2713
      %v2715 = vmul.f32 %v2703, 1.442695
      %v2716 = vpow.pop %v2715
      %v2717 = vmul.f32 %v2704, 1.442695
      %v2718 = vpow.pop %v2717
      %v2719 = vmul.f32 %v2705, 1.442695
      %v2720 = vpow.pop %v2719
      %v2721 = vmul.f32 %v2706, 1.442695
      %v2722 = vpow.pop %v2721
      %v2723 = vsel %vm1599, %v2708, 0.0
      %v2724 = vsel %vm1599, %v2710, 0.0
      %v2725 = vadd.f32 %v2723, %v2724
      %v2726 = vrot.slane %v2725, 4
      %v2727 = vadd.f32 %v2725, %v2726
      %v2728 = vrot.slane %v2727, 2
      %v2729 = vadd.f32 %v2727, %v2728
      %v2730 = vrot.slane %v2729, 1
      %v2731 = vadd.f32 %v2729, %v2730
      %v2732 = vsel %vm1599, %v2712, 0.0
      %v2733 = vsel %vm1599, %v2714, 0.0
      %v2734 = vadd.f32 %v2732, %v2733
      %v2735 = vrot.slane %v2734, 4
      %v2736 = vadd.f32 %v2734, %v2735
      %v2737 = vrot.slane %v2736, 2
      %v2738 = vadd.f32 %v2736, %v2737
      %v2739 = vrot.slane %v2738, 1
      %v2740 = vadd.f32 %v2738, %v2739
      %v2741 = vsel %vm1599, %v2716, 0.0
      %v2742 = vsel %vm1599, %v2718, 0.0
      %v2743 = vadd.f32 %v2741, %v2742
      %v2744 = vrot.slane %v2743, 4
      %v2745 = vadd.f32 %v2743, %v2744
      %v2746 = vrot.slane %v2745, 2
      %v2747 = vadd.f32 %v2745, %v2746
      %v2748 = vrot.slane %v2747, 1
      %v2749 = vadd.f32 %v2747, %v2748
      %v2750 = vsel %vm1599, %v2720, 0.0
      %v2751 = vsel %vm1599, %v2722, 0.0
      %v2752 = vadd.f32 %v2750, %v2751
      %v2753 = vrot.slane %v2752, 4
      %v2754 = vadd.f32 %v2752, %v2753
      %v2755 = vrot.slane %v2754, 2
      %v2756 = vadd.f32 %v2754, %v2755
      %v2757 = vrot.slane %v2756, 1
      %v2758 = vadd.f32 %v2756, %v2757
      %v2759 = vrcp.pop %v2731
      %v2760 = vrcp.pop %v2740
      %v2761 = vrcp.pop %v2749
      %v2762 = vrcp.pop %v2758
      %v2763 = vmul.f32 %v2708, %v2759
      %v2764 = vmul.f32 %v2710, %v2759
      %v2765 = vmul.f32 %v2712, %v2760
      %v2766 = vmul.f32 %v2714, %v2760
      %v2767 = vmul.f32 %v2716, %v2761
      %v2768 = vmul.f32 %v2718, %v2761
      %v2769 = vmul.f32 %v2720, %v2762
      %v2770 = vmul.f32 %v2722, %v2762
      %v2771 = vpack.c.bf16 %v2764, %v2763
      %v2772 = vpack.c.bf16 %v2766, %v2765
      %v2773 = vpack.c.bf16 %v2768, %v2767
      %v2774 = vpack.c.bf16 %v2770, %v2769
      %vm2775 = vcmask 130048
      %v2777 = vsel %vm2775, %v2387, 0
      %2779 = vmatprep.subr.bf16.mxu0 0
      %2780 = vmatpush1.bf16.msra.mxu0 0
      %2781 = vmatprep.subr.bf16.mxu0 0
      %2782 = vmatpush1.bf16.msra.mxu0 0
      %2783 = vmatprep.subr.bf16.mxu0 0
      %2784 = vmatpush1.bf16.msra.mxu0 0
      %2785 = vmatprep.subr.bf16.mxu0 0
      %2786 = vmatpush1.bf16.msra.mxu0 0
      %2787 = vmatprep.subr.bf16.mxu0 0
      %2788 = vmatpush1.bf16.msra.mxu0 0
      %2789 = vmatprep.subr.bf16.mxu0 0
      %2790 = vmatpush1.bf16.msra.mxu0 0
      %2791 = vmatprep.subr.bf16.mxu0 0
      %2792 = vmatpush1.bf16.msra.mxu0 0
      %2793 = vmatprep.subr.bf16.mxu0 0
      %2794 = vmatpush1.bf16.msra.mxu0 %v2771
      %2795 = vmatprep.subr.bf16.mxu0 0
      %2796 = vmatpush2.bf16.msra.mxu0 0
      %2797 = vmatprep.subr.bf16.mxu0 0
      %2798 = vmatpush2.bf16.msra.mxu0 0
      %2799 = vmatprep.subr.bf16.mxu0 0
      %2800 = vmatpush2.bf16.msra.mxu0 0
      %2801 = vmatprep.subr.bf16.mxu0 0
      %2802 = vmatpush2.bf16.msra.mxu0 0
      %2803 = vmatprep.subr.bf16.mxu0 0
      %2804 = vmatpush2.bf16.msra.mxu0 0
      %2805 = vmatprep.subr.bf16.mxu0 0
      %2806 = vmatpush2.bf16.msra.mxu0 0
      %2807 = vmatprep.subr.bf16.mxu0 0
      %2808 = vmatpush2.bf16.msra.mxu0 0
      %2809 = vmatprep.subr.bf16.mxu0 0
      %2810 = vmatpush2.bf16.msra.mxu0 0
      %2811 = vmatprep.mubr.bf16.mxu0 0
      %2812 = vmatmul.mubr.bf16.gmra.mxu0 %v2777
      %v2813 = vpop.f32.mrf.mxu0
      %v2814 = vadd.f32 0.0, %v2813
      %v2815 = vpop.f32.mrf.mxu0
      %v2816 = vpop.f32.mrf.mxu0
      %v2817 = vpop.f32.mrf.mxu0
      %2818 = vdwg.mxu0
      %v2820 = vsel %vm2775, %v2388, 0
      %2822 = vmatprep.subr.bf16.mxu0 0
      %2823 = vmatpush1.bf16.msra.mxu0 0
      %2824 = vmatprep.subr.bf16.mxu0 0
      %2825 = vmatpush1.bf16.msra.mxu0 0
      %2826 = vmatprep.subr.bf16.mxu0 0
      %2827 = vmatpush1.bf16.msra.mxu0 0
      %2828 = vmatprep.subr.bf16.mxu0 0
      %2829 = vmatpush1.bf16.msra.mxu0 0
      %2830 = vmatprep.subr.bf16.mxu0 0
      %2831 = vmatpush1.bf16.msra.mxu0 0
      %2832 = vmatprep.subr.bf16.mxu0 0
      %2833 = vmatpush1.bf16.msra.mxu0 0
      %2834 = vmatprep.subr.bf16.mxu0 0
      %2835 = vmatpush1.bf16.msra.mxu0 0
      %2836 = vmatprep.subr.bf16.mxu0 0
      %2837 = vmatpush1.bf16.msra.mxu0 %v2772
      %2838 = vmatprep.subr.bf16.mxu0 0
      %2839 = vmatpush2.bf16.msra.mxu0 0
      %2840 = vmatprep.subr.bf16.mxu0 0
      %2841 = vmatpush2.bf16.msra.mxu0 0
      %2842 = vmatprep.subr.bf16.mxu0 0
      %2843 = vmatpush2.bf16.msra.mxu0 0
      %2844 = vmatprep.subr.bf16.mxu0 0
      %2845 = vmatpush2.bf16.msra.mxu0 0
      %2846 = vmatprep.subr.bf16.mxu0 0
      %2847 = vmatpush2.bf16.msra.mxu0 0
      %2848 = vmatprep.subr.bf16.mxu0 0
      %2849 = vmatpush2.bf16.msra.mxu0 0
      %2850 = vmatprep.subr.bf16.mxu0 0
      %2851 = vmatpush2.bf16.msra.mxu0 0
      %2852 = vmatprep.subr.bf16.mxu0 0
      %2853 = vmatpush2.bf16.msra.mxu0 0
      %2854 = vmatprep.mubr.bf16.mxu0 0
      %2855 = vmatmul.mubr.bf16.gmra.mxu0 %v2820
      %v2856 = vpop.f32.mrf.mxu0
      %v2857 = vadd.f32 0.0, %v2856
      %v2858 = vpop.f32.mrf.mxu0
      %v2859 = vpop.f32.mrf.mxu0
      %v2860 = vpop.f32.mrf.mxu0
      %2861 = vdwg.mxu0
      %v2863 = vsel %vm2775, %v2389, 0
      %2865 = vmatprep.subr.bf16.mxu0 0
      %2866 = vmatpush1.bf16.msra.mxu0 0
      %2867 = vmatprep.subr.bf16.mxu0 0
      %2868 = vmatpush1.bf16.msra.mxu0 0
      %2869 = vmatprep.subr.bf16.mxu0 0
      %2870 = vmatpush1.bf16.msra.mxu0 0
      %2871 = vmatprep.subr.bf16.mxu0 0
      %2872 = vmatpush1.bf16.msra.mxu0 0
      %2873 = vmatprep.subr.bf16.mxu0 0
      %2874 = vmatpush1.bf16.msra.mxu0 0
      %2875 = vmatprep.subr.bf16.mxu0 0
      %2876 = vmatpush1.bf16.msra.mxu0 0
      %2877 = vmatprep.subr.bf16.mxu0 0
      %2878 = vmatpush1.bf16.msra.mxu0 0
      %2879 = vmatprep.subr.bf16.mxu0 0
      %2880 = vmatpush1.bf16.msra.mxu0 %v2773
      %2881 = vmatprep.subr.bf16.mxu0 0
      %2882 = vmatpush2.bf16.msra.mxu0 0
      %2883 = vmatprep.subr.bf16.mxu0 0
      %2884 = vmatpush2.bf16.msra.mxu0 0
      %2885 = vmatprep.subr.bf16.mxu0 0
      %2886 = vmatpush2.bf16.msra.mxu0 0
      %2887 = vmatprep.subr.bf16.mxu0 0
      %2888 = vmatpush2.bf16.msra.mxu0 0
      %2889 = vmatprep.subr.bf16.mxu0 0
      %2890 = vmatpush2.bf16.msra.mxu0 0
      %2891 = vmatprep.subr.bf16.mxu0 0
      %2892 = vmatpush2.bf16.msra.mxu0 0
      %2893 = vmatprep.subr.bf16.mxu0 0
      %2894 = vmatpush2.bf16.msra.mxu0 0
      %2895 = vmatprep.subr.bf16.mxu0 0
      %2896 = vmatpush2.bf16.msra.mxu0 0
      %2897 = vmatprep.mubr.bf16.mxu0 0
      %2898 = vmatmul.mubr.bf16.gmra.mxu0 %v2863
      %v2899 = vpop.f32.mrf.mxu0
      %v2900 = vadd.f32 0.0, %v2899
      %v2901 = vpop.f32.mrf.mxu0
      %v2902 = vpop.f32.mrf.mxu0
      %v2903 = vpop.f32.mrf.mxu0
      %2904 = vdwg.mxu0
      %v2906 = vsel %vm2775, %v2390, 0
      %2908 = vmatprep.subr.bf16.mxu0 0
      %2909 = vmatpush1.bf16.msra.mxu0 0
      %2910 = vmatprep.subr.bf16.mxu0 0
      %2911 = vmatpush1.bf16.msra.mxu0 0
      %2912 = vmatprep.subr.bf16.mxu0 0
      %2913 = vmatpush1.bf16.msra.mxu0 0
      %2914 = vmatprep.subr.bf16.mxu0 0
      %2915 = vmatpush1.bf16.msra.mxu0 0
      %2916 = vmatprep.subr.bf16.mxu0 0
      %2917 = vmatpush1.bf16.msra.mxu0 0
      %2918 = vmatprep.subr.bf16.mxu0 0
      %2919 = vmatpush1.bf16.msra.mxu0 0
      %2920 = vmatprep.subr.bf16.mxu0 0
      %2921 = vmatpush1.bf16.msra.mxu0 0
      %2922 = vmatprep.subr.bf16.mxu0 0
      %2923 = vmatpush1.bf16.msra.mxu0 %v2774
      %2924 = vmatprep.subr.bf16.mxu0 0
      %2925 = vmatpush2.bf16.msra.mxu0 0
      %2926 = vmatprep.subr.bf16.mxu0 0
      %2927 = vmatpush2.bf16.msra.mxu0 0
      %2928 = vmatprep.subr.bf16.mxu0 0
      %2929 = vmatpush2.bf16.msra.mxu0 0
      %2930 = vmatprep.subr.bf16.mxu0 0
      %2931 = vmatpush2.bf16.msra.mxu0 0
      %2932 = vmatprep.subr.bf16.mxu0 0
      %2933 = vmatpush2.bf16.msra.mxu0 0
      %2934 = vmatprep.subr.bf16.mxu0 0
      %2935 = vmatpush2.bf16.msra.mxu0 0
      %2936 = vmatprep.subr.bf16.mxu0 0
      %2937 = vmatpush2.bf16.msra.mxu0 0
      %2938 = vmatprep.subr.bf16.mxu0 0
      %2939 = vmatpush2.bf16.msra.mxu0 0
      %2940 = vmatprep.mubr.bf16.mxu0 0
      %2941 = vmatmul.mubr.bf16.gmra.mxu0 %v2906
      %v2942 = vpop.f32.mrf.mxu0
      %v2943 = vadd.f32 0.0, %v2942
      %v2944 = vpop.f32.mrf.mxu0
      %v2945 = vpop.f32.mrf.mxu0
      %v2946 = vpop.f32.mrf.mxu0
      %2947 = vdwg.mxu0
      %v2948 = vpack.c.bf16 %v2857, %v2814
      %v2949 = vpack.c.bf16 %v2943, %v2900
      %2951 = vset.pattern.permute.xlu0 0
      %2952 = vperm.xlu0 %2951, %v2395
      %v2953 = vpop.permute.xlu0 %2952
      %2956 = vset.pattern.permute.xlu0 0
      %2957 = vperm.xlu0 %2956, %v2396
      %v2958 = vpop.permute.xlu0 %2957
      %2961 = vset.pattern.permute.xlu0 0
      %2962 = vperm.xlu0 %2961, %v2397
      %v2963 = vpop.permute.xlu0 %2962
      %2966 = vset.pattern.permute.xlu0 0
      %2967 = vperm.xlu0 %2966, %v2398
      %v2968 = vpop.permute.xlu0 %2967
      %v2974 = vunpack.c.l.b16 %v2391
      %v2975 = vunpack.c.l.b16 %v2392
      %v2976 = vunpack.c.l.b16 %v2393
      %v2977 = vunpack.c.l.b16 %v2394
      %v2978 = vpack.c.b16 %v2975, %v2974
      %v2979 = vpack.c.b16 %v2977, %v2976
      %v2981 = vsel %vm1490, %v2978, 0
      %v2984 = vsel %vm1490, %v2979, 0
      %2986 = vmatprep.subr.bf16.mxu0 0
      %2987 = vmatpush1.bf16.msra.mxu0 0
      %2988 = vmatprep.subr.bf16.mxu0 0
      %2989 = vmatpush1.bf16.msra.mxu0 0
      %2990 = vmatprep.subr.bf16.mxu0 0
      %2991 = vmatpush1.bf16.msra.mxu0 0
      %2992 = vmatprep.subr.bf16.mxu0 0
      %2993 = vmatpush1.bf16.msra.mxu0 0
      %2994 = vmatprep.subr.bf16.mxu0 0
      %2995 = vmatpush1.bf16.msra.mxu0 0
      %2996 = vmatprep.subr.bf16.mxu0 0
      %2997 = vmatpush1.bf16.msra.mxu0 0
      %2998 = vmatprep.subr.bf16.mxu0 0
      %2999 = vmatpush1.bf16.msra.mxu0 %v2949
      %3000 = vmatprep.subr.bf16.mxu0 0
      %3001 = vmatpush1.bf16.msra.mxu0 %v2948
      %3002 = vmatprep.subr.bf16.mxu0 0
      %3003 = vmatpush2.bf16.msra.mxu0 0
      %3004 = vmatprep.subr.bf16.mxu0 0
      %3005 = vmatpush2.bf16.msra.mxu0 0
      %3006 = vmatprep.subr.bf16.mxu0 0
      %3007 = vmatpush2.bf16.msra.mxu0 0
      %3008 = vmatprep.subr.bf16.mxu0 0
      %3009 = vmatpush2.bf16.msra.mxu0 0
      %3010 = vmatprep.subr.bf16.mxu0 0
      %3011 = vmatpush2.bf16.msra.mxu0 0
      %3012 = vmatprep.subr.bf16.mxu0 0
      %3013 = vmatpush2.bf16.msra.mxu0 0
      %3014 = vmatprep.subr.bf16.mxu0 0
      %3015 = vmatpush2.bf16.msra.mxu0 0
      %3016 = vmatprep.subr.bf16.mxu0 0
      %3017 = vmatpush2.bf16.msra.mxu0 0
      %3018 = vmatprep.mubr.bf16.mxu0 0
      %3019 = vmatmul.mubr.bf16.gmra.mxu0 %v2981
      %v3020 = vpop.f32.mrf.mxu0
      %v3021 = vadd.f32 %v2953, %v3020
      %v3022 = vpop.f32.mrf.mxu0
      %v3023 = vpop.f32.mrf.mxu0
      %v3024 = vadd.f32 %v2958, %v3023
      %v3025 = vpop.f32.mrf.mxu0
      %3026 = vmatprep.mubr.bf16.mxu0 0
      %3027 = vmatmul.mubr.bf16.gmra.mxu0 %v2984
      %v3028 = vpop.f32.mrf.mxu0
      %v3029 = vadd.f32 %v2963, %v3028
      %v3030 = vpop.f32.mrf.mxu0
      %v3031 = vpop.f32.mrf.mxu0
      %v3032 = vadd.f32 %v2968, %v3031
      %v3033 = vpop.f32.mrf.mxu0
      %3034 = vdwg.mxu0
      %v3035 = vadd.f32 %v2284, %v3021
      %v3036 = vadd.f32 %v2285, %v3024
      %v3037 = vadd.f32 %v2286, %v3029
      %v3038 = vadd.f32 %v2287, %v3032
      %v3039 = vld [vmem:[%s43] sm:$0xff]
      %v3040 = vld [vmem:[%s43 + $0x8] sm:$0xff]
      %v3041 = vld [vmem:[%s43 + $0x10] sm:$0xff]
      %v3042 = vld [vmem:[%s43 + $0x18] sm:$0xff]
      %v3043 = vld [vmem:[%s45] sm:$0xff]
      %v3044 = vld [vmem:[%s45 + $0x8] sm:$0xff]
      %v3045 = vld [vmem:[%s45 + $0x10] sm:$0xff]
      %v3046 = vld [vmem:[%s45 + $0x18] sm:$0xff]
      %v3047 = vsel %vm1599, %v3035, 0.0
      %v3048 = vsel %vm1599, %v3036, 0.0
      %v3049 = vadd.f32 %v3047, %v3048
      %v3050 = vsel %vm1599, %v3037, 0.0
      %v3051 = vadd.f32 %v3049, %v3050
      %v3052 = vsel %vm1599, %v3038, 0.0
      %v3053 = vadd.f32 %v3051, %v3052
      %v3054 = vrot.slane %v3053, 4
      %v3055 = vadd.f32 %v3053, %v3054
      %v3056 = vrot.slane %v3055, 2
      %v3057 = vadd.f32 %v3055, %v3056
      %v3058 = vrot.slane %v3057, 1
      %v3059 = vadd.f32 %v3057, %v3058
      %v3060 = vmul.f32 %v3059, 0.03125
      %v3061 = vmul.f32 %v3035, %v3035
      %v3062 = vmul.f32 %v3036, %v3036
      %v3063 = vmul.f32 %v3037, %v3037
      %v3064 = vmul.f32 %v3038, %v3038
      %v3065 = vsel %vm1599, %v3061, 0.0
      %v3066 = vsel %vm1599, %v3062, 0.0
      %v3067 = vadd.f32 %v3065, %v3066
      %v3068 = vsel %vm1599, %v3063, 0.0
      %v3069 = vadd.f32 %v3067, %v3068
      %v3070 = vsel %vm1599, %v3064, 0.0
      %v3071 = vadd.f32 %v3069, %v3070
      %v3072 = vrot.slane %v3071, 4
      %v3073 = vadd.f32 %v3071, %v3072
      %v3074 = vrot.slane %v3073, 2
      %v3075 = vadd.f32 %v3073, %v3074
      %v3076 = vrot.slane %v3075, 1
      %v3077 = vadd.f32 %v3075, %v3076
      %v3078 = vmul.f32 %v3077, 0.03125
      %v3079 = vmul.f32 %v3060, %v3060
      %v3080 = vsub.f32 %v3078, %v3079
      %v3081 = vsub.f32 %v3035, %v3060
      %v3082 = vsub.f32 %v3036, %v3060
      %v3083 = vsub.f32 %v3037, %v3060
      %v3084 = vsub.f32 %v3038, %v3060
      %v3085 = vadd.f32 %v3080, 1e-05
      %v3086 = vrsqrt.pop %v3085
      %v3087 = vmul.f32 %v3081, %v3086
      %v3088 = vmul.f32 %v3082, %v3086
      %v3089 = vmul.f32 %v3083, %v3086
      %v3090 = vmul.f32 %v3084, %v3086
      %3092 = vset.pattern.permute.xlu0 0
      %3093 = vperm.xlu0 %3092, %v3039
      %v3094 = vpop.permute.xlu0 %3093
      %3097 = vset.pattern.permute.xlu0 0
      %3098 = vperm.xlu0 %3097, %v3040
      %v3099 = vpop.permute.xlu0 %3098
      %3102 = vset.pattern.permute.xlu0 0
      %3103 = vperm.xlu0 %3102, %v3041
      %v3104 = vpop.permute.xlu0 %3103
      %3107 = vset.pattern.permute.xlu0 0
      %3108 = vperm.xlu0 %3107, %v3042
      %v3109 = vpop.permute.xlu0 %3108
      %v3111 = vmul.f32 %v3087, %v3094
      %v3112 = vmul.f32 %v3088, %v3099
      %v3113 = vmul.f32 %v3089, %v3104
      %v3114 = vmul.f32 %v3090, %v3109
      %3116 = vset.pattern.permute.xlu0 0
      %3117 = vperm.xlu0 %3116, %v3043
      %v3118 = vpop.permute.xlu0 %3117
      %3121 = vset.pattern.permute.xlu0 0
      %3122 = vperm.xlu0 %3121, %v3044
      %v3123 = vpop.permute.xlu0 %3122
      %3126 = vset.pattern.permute.xlu0 0
      %3127 = vperm.xlu0 %3126, %v3045
      %v3128 = vpop.permute.xlu0 %3127
      %3131 = vset.pattern.permute.xlu0 0
      %3132 = vperm.xlu0 %3131, %v3046
      %v3133 = vpop.permute.xlu0 %3132
      %v3135 = vadd.f32 %v3111, %v3118
      %v3136 = vadd.f32 %v3112, %v3123
      %v3137 = vadd.f32 %v3113, %v3128
      %v3138 = vadd.f32 %v3114, %v3133
      %v3139 = vld [vmem:[%s47] sm:$0xf]
      %v3140 = vld [vmem:[%s47 + $0x4] sm:$0xf]
      %v3141 = vld [vmem:[%s47 + $0x8] sm:$0xf]
      %v3142 = vld [vmem:[%s47 + $0xc] sm:$0xf]
      %v3143 = vld [vmem:[%s47 + $0x10] sm:$0xf]
      %v3144 = vld [vmem:[%s47 + $0x14] sm:$0xf]
      %v3145 = vld [vmem:[%s47 + $0x18] sm:$0xf]
      %v3146 = vld [vmem:[%s47 + $0x1c] sm:$0xf]
      %v3147 = vpack.c.bf16 %v3136, %v3135
      %v3148 = vpack.c.bf16 %v3138, %v3137
      %v3149 = vld [vmem:[%s49] sm:$0xff]
      %v3150 = vld [vmem:[%s49 + $0x8] sm:$0xff]
      %v3151 = vld [vmem:[%s49 + $0x10] sm:$0xff]
      %v3152 = vld [vmem:[%s49 + $0x18] sm:$0xff]
      %v3153 = vld [vmem:[%s49 + $0x20] sm:$0xff]
      %v3154 = vld [vmem:[%s49 + $0x28] sm:$0xff]
      %v3155 = vld [vmem:[%s49 + $0x30] sm:$0xff]
      %v3156 = vld [vmem:[%s49 + $0x38] sm:$0xff]
      %3158 = vset.pattern.permute.xlu0 0
      %3159 = vperm.xlu0 %3158, %v3149
      %v3160 = vpop.permute.xlu0 %3159
      %3163 = vset.pattern.permute.xlu0 0
      %3164 = vperm.xlu0 %3163, %v3150
      %v3165 = vpop.permute.xlu0 %3164
      %3168 = vset.pattern.permute.xlu0 0
      %3169 = vperm.xlu0 %3168, %v3151
      %v3170 = vpop.permute.xlu0 %3169
      %3173 = vset.pattern.permute.xlu0 0
      %3174 = vperm.xlu0 %3173, %v3152
      %v3175 = vpop.permute.xlu0 %3174
      %3178 = vset.pattern.permute.xlu0 0
      %3179 = vperm.xlu0 %3178, %v3153
      %v3180 = vpop.permute.xlu0 %3179
      %3183 = vset.pattern.permute.xlu0 0
      %3184 = vperm.xlu0 %3183, %v3154
      %v3185 = vpop.permute.xlu0 %3184
      %3188 = vset.pattern.permute.xlu0 0
      %3189 = vperm.xlu0 %3188, %v3155
      %v3190 = vpop.permute.xlu0 %3189
      %3193 = vset.pattern.permute.xlu0 0
      %3194 = vperm.xlu0 %3193, %v3156
      %v3195 = vpop.permute.xlu0 %3194
      %v3205 = vunpack.c.l.b16 %v3139
      %v3206 = vunpack.c.l.b16 %v3140
      %v3207 = vunpack.c.l.b16 %v3141
      %v3208 = vunpack.c.l.b16 %v3142
      %v3209 = vunpack.c.l.b16 %v3143
      %v3210 = vunpack.c.l.b16 %v3144
      %v3211 = vunpack.c.l.b16 %v3145
      %v3212 = vunpack.c.l.b16 %v3146
      %v3213 = vpack.c.b16 %v3206, %v3205
      %v3214 = vpack.c.b16 %v3208, %v3207
      %v3215 = vpack.c.b16 %v3210, %v3209
      %v3216 = vpack.c.b16 %v3212, %v3211
      %v3218 = vsel %vm1490, %v3213, 0
      %v3221 = vsel %vm1490, %v3214, 0
      %v3224 = vsel %vm1490, %v3215, 0
      %v3227 = vsel %vm1490, %v3216, 0
      %3229 = vmatprep.subr.bf16.mxu0 0
      %3230 = vmatpush1.bf16.msra.mxu0 0
      %3231 = vmatprep.subr.bf16.mxu0 0
      %3232 = vmatpush1.bf16.msra.mxu0 0
      %3233 = vmatprep.subr.bf16.mxu0 0
      %3234 = vmatpush1.bf16.msra.mxu0 0
      %3235 = vmatprep.subr.bf16.mxu0 0
      %3236 = vmatpush1.bf16.msra.mxu0 0
      %3237 = vmatprep.subr.bf16.mxu0 0
      %3238 = vmatpush1.bf16.msra.mxu0 0
      %3239 = vmatprep.subr.bf16.mxu0 0
      %3240 = vmatpush1.bf16.msra.mxu0 0
      %3241 = vmatprep.subr.bf16.mxu0 0
      %3242 = vmatpush1.bf16.msra.mxu0 %v3148
      %3243 = vmatprep.subr.bf16.mxu0 0
      %3244 = vmatpush1.bf16.msra.mxu0 %v3147
      %3245 = vmatprep.subr.bf16.mxu0 0
      %3246 = vmatpush2.bf16.msra.mxu0 0
      %3247 = vmatprep.subr.bf16.mxu0 0
      %3248 = vmatpush2.bf16.msra.mxu0 0
      %3249 = vmatprep.subr.bf16.mxu0 0
      %3250 = vmatpush2.bf16.msra.mxu0 0
      %3251 = vmatprep.subr.bf16.mxu0 0
      %3252 = vmatpush2.bf16.msra.mxu0 0
      %3253 = vmatprep.subr.bf16.mxu0 0
      %3254 = vmatpush2.bf16.msra.mxu0 0
      %3255 = vmatprep.subr.bf16.mxu0 0
      %3256 = vmatpush2.bf16.msra.mxu0 0
      %3257 = vmatprep.subr.bf16.mxu0 0
      %3258 = vmatpush2.bf16.msra.mxu0 0
      %3259 = vmatprep.subr.bf16.mxu0 0
      %3260 = vmatpush2.bf16.msra.mxu0 0
      %3261 = vmatprep.mubr.bf16.mxu0 0
      %3262 = vmatmul.mubr.bf16.gmra.mxu0 %v3218
      %v3263 = vpop.f32.mrf.mxu0
      %v3264 = vadd.f32 %v3160, %v3263
      %v3265 = vpop.f32.mrf.mxu0
      %v3266 = vpop.f32.mrf.mxu0
      %v3267 = vadd.f32 %v3165, %v3266
      %v3268 = vpop.f32.mrf.mxu0
      %3269 = vmatprep.mubr.bf16.mxu0 0
      %3270 = vmatmul.mubr.bf16.gmra.mxu0 %v3221
      %v3271 = vpop.f32.mrf.mxu0
      %v3272 = vadd.f32 %v3170, %v3271
      %v3273 = vpop.f32.mrf.mxu0
      %v3274 = vpop.f32.mrf.mxu0
      %v3275 = vadd.f32 %v3175, %v3274
      %v3276 = vpop.f32.mrf.mxu0
      %3277 = vmatprep.mubr.bf16.mxu0 0
      %3278 = vmatmul.mubr.bf16.gmra.mxu0 %v3224
      %v3279 = vpop.f32.mrf.mxu0
      %v3280 = vadd.f32 %v3180, %v3279
      %v3281 = vpop.f32.mrf.mxu0
      %v3282 = vpop.f32.mrf.mxu0
      %v3283 = vadd.f32 %v3185, %v3282
      %v3284 = vpop.f32.mrf.mxu0
      %3285 = vmatprep.mubr.bf16.mxu0 0
      %3286 = vmatmul.mubr.bf16.gmra.mxu0 %v3227
      %v3287 = vpop.f32.mrf.mxu0
      %v3288 = vadd.f32 %v3190, %v3287
      %v3289 = vpop.f32.mrf.mxu0
      %v3290 = vpop.f32.mrf.mxu0
      %v3291 = vadd.f32 %v3195, %v3290
      %v3292 = vpop.f32.mrf.mxu0
      %3293 = vdwg.mxu0
      %v3294 = vmul.f32 %v3264, 0.5
      %v3295 = vmul.f32 %v3267, 0.5
      %v3296 = vmul.f32 %v3272, 0.5
      %v3297 = vmul.f32 %v3275, 0.5
      %v3298 = vmul.f32 %v3280, 0.5
      %v3299 = vmul.f32 %v3283, 0.5
      %v3300 = vmul.f32 %v3288, 0.5
      %v3301 = vmul.f32 %v3291, 0.5
      %v3302 = vmul.f32 %v3264, 0.044715
      %v3303 = vmul.f32 %v3267, 0.044715
      %v3304 = vmul.f32 %v3272, 0.044715
      %v3305 = vmul.f32 %v3275, 0.044715
      %v3306 = vmul.f32 %v3280, 0.044715
      %v3307 = vmul.f32 %v3283, 0.044715
      %v3308 = vmul.f32 %v3288, 0.044715
      %v3309 = vmul.f32 %v3291, 0.044715
      %v3310 = vmul.f32 %v3302, %v3264
      %v3311 = vmul.f32 %v3303, %v3267
      %v3312 = vmul.f32 %v3304, %v3272
      %v3313 = vmul.f32 %v3305, %v3275
      %v3314 = vmul.f32 %v3306, %v3280
      %v3315 = vmul.f32 %v3307, %v3283
      %v3316 = vmul.f32 %v3308, %v3288
      %v3317 = vmul.f32 %v3309, %v3291
      %v3318 = vmul.f32 %v3310, %v3264
      %v3319 = vmul.f32 %v3311, %v3267
      %v3320 = vmul.f32 %v3312, %v3272
      %v3321 = vmul.f32 %v3313, %v3275
      %v3322 = vmul.f32 %v3314, %v3280
      %v3323 = vmul.f32 %v3315, %v3283
      %v3324 = vmul.f32 %v3316, %v3288
      %v3325 = vmul.f32 %v3317, %v3291
      %v3326 = vadd.f32 %v3264, %v3318
      %v3327 = vadd.f32 %v3267, %v3319
      %v3328 = vadd.f32 %v3272, %v3320
      %v3329 = vadd.f32 %v3275, %v3321
      %v3330 = vadd.f32 %v3280, %v3322
      %v3331 = vadd.f32 %v3283, %v3323
      %v3332 = vadd.f32 %v3288, %v3324
      %v3333 = vadd.f32 %v3291, %v3325
      %v3334 = vmul.f32 %v3326, 0.7978846
      %v3335 = vmul.f32 %v3327, 0.7978846
      %v3336 = vmul.f32 %v3328, 0.7978846
      %v3337 = vmul.f32 %v3329, 0.7978846
      %v3338 = vmul.f32 %v3330, 0.7978846
      %v3339 = vmul.f32 %v3331, 0.7978846
      %v3340 = vmul.f32 %v3332, 0.7978846
      %v3341 = vmul.f32 %v3333, 0.7978846
      %v3342 = vtanh.pop %v3334
      %v3343 = vtanh.pop %v3335
      %v3344 = vtanh.pop %v3336
      %v3345 = vtanh.pop %v3337
      %v3346 = vtanh.pop %v3338
      %v3347 = vtanh.pop %v3339
      %v3348 = vtanh.pop %v3340
      %v3349 = vtanh.pop %v3341
      %v3350 = vadd.f32 %v3342, 1.0
      %v3351 = vadd.f32 %v3343, 1.0
      %v3352 = vadd.f32 %v3344, 1.0
      %v3353 = vadd.f32 %v3345, 1.0
      %v3354 = vadd.f32 %v3346, 1.0
      %v3355 = vadd.f32 %v3347, 1.0
      %v3356 = vadd.f32 %v3348, 1.0
      %v3357 = vadd.f32 %v3349, 1.0
      %v3358 = vmul.f32 %v3294, %v3350
      %v3359 = vmul.f32 %v3295, %v3351
      %v3360 = vmul.f32 %v3296, %v3352
      %v3361 = vmul.f32 %v3297, %v3353
      %v3362 = vmul.f32 %v3298, %v3354
      %v3363 = vmul.f32 %v3299, %v3355
      %v3364 = vmul.f32 %v3300, %v3356
      %v3365 = vmul.f32 %v3301, %v3357
      %v3366 = vld [vmem:[%s51] sm:$0xf]
      %v3367 = vld [vmem:[%s51 + $0x4] sm:$0xf]
      %v3368 = vld [vmem:[%s51 + $0x8] sm:$0xf]
      %v3369 = vld [vmem:[%s51 + $0xc] sm:$0xf]
      %v3370 = vpack.c.bf16 %v3359, %v3358
      %v3371 = vpack.c.bf16 %v3361, %v3360
      %v3372 = vpack.c.bf16 %v3363, %v3362
      %v3373 = vpack.c.bf16 %v3365, %v3364
      %v3374 = vld [vmem:[%s53] sm:$0xff]
      %v3375 = vld [vmem:[%s53 + $0x8] sm:$0xff]
      %v3376 = vld [vmem:[%s53 + $0x10] sm:$0xff]
      %v3377 = vld [vmem:[%s53 + $0x18] sm:$0xff]
      %3379 = vset.pattern.permute.xlu0 0
      %3380 = vperm.xlu0 %3379, %v3374
      %v3381 = vpop.permute.xlu0 %3380
      %3384 = vset.pattern.permute.xlu0 0
      %3385 = vperm.xlu0 %3384, %v3375
      %v3386 = vpop.permute.xlu0 %3385
      %3389 = vset.pattern.permute.xlu0 0
      %3390 = vperm.xlu0 %3389, %v3376
      %v3391 = vpop.permute.xlu0 %3390
      %3394 = vset.pattern.permute.xlu0 0
      %3395 = vperm.xlu0 %3394, %v3377
      %v3396 = vpop.permute.xlu0 %3395
      %v3402 = vunpack.c.l.b16 %v3366
      %v3403 = vunpack.c.l.b16 %v3367
      %v3404 = vunpack.c.l.b16 %v3368
      %v3405 = vunpack.c.l.b16 %v3369
      %v3406 = vpack.c.b16 %v3403, %v3402
      %v3407 = vpack.c.b16 %v3405, %v3404
      %vm3408 = vcmask 523264
      %v3410 = vsel %vm3408, %v3406, 0
      %v3413 = vsel %vm3408, %v3407, 0
      %3415 = vmatprep.subr.bf16.mxu0 0
      %3416 = vmatpush1.bf16.msra.mxu0 0
      %3417 = vmatprep.subr.bf16.mxu0 0
      %3418 = vmatpush1.bf16.msra.mxu0 0
      %3419 = vmatprep.subr.bf16.mxu0 0
      %3420 = vmatpush1.bf16.msra.mxu0 0
      %3421 = vmatprep.subr.bf16.mxu0 0
      %3422 = vmatpush1.bf16.msra.mxu0 0
      %3423 = vmatprep.subr.bf16.mxu0 0
      %3424 = vmatpush1.bf16.msra.mxu0 %v3373
      %3425 = vmatprep.subr.bf16.mxu0 0
      %3426 = vmatpush1.bf16.msra.mxu0 %v3372
      %3427 = vmatprep.subr.bf16.mxu0 0
      %3428 = vmatpush1.bf16.msra.mxu0 %v3371
      %3429 = vmatprep.subr.bf16.mxu0 0
      %3430 = vmatpush1.bf16.msra.mxu0 %v3370
      %3431 = vmatprep.subr.bf16.mxu0 0
      %3432 = vmatpush2.bf16.msra.mxu0 0
      %3433 = vmatprep.subr.bf16.mxu0 0
      %3434 = vmatpush2.bf16.msra.mxu0 0
      %3435 = vmatprep.subr.bf16.mxu0 0
      %3436 = vmatpush2.bf16.msra.mxu0 0
      %3437 = vmatprep.subr.bf16.mxu0 0
      %3438 = vmatpush2.bf16.msra.mxu0 0
      %3439 = vmatprep.subr.bf16.mxu0 0
      %3440 = vmatpush2.bf16.msra.mxu0 0
      %3441 = vmatprep.subr.bf16.mxu0 0
      %3442 = vmatpush2.bf16.msra.mxu0 0
      %3443 = vmatprep.subr.bf16.mxu0 0
      %3444 = vmatpush2.bf16.msra.mxu0 0
      %3445 = vmatprep.subr.bf16.mxu0 0
      %3446 = vmatpush2.bf16.msra.mxu0 0
      %3447 = vmatprep.mubr.bf16.mxu0 0
      %3448 = vmatmul.mubr.bf16.gmra.mxu0 %v3410
      %v3449 = vpop.f32.mrf.mxu0
      %v3450 = vadd.f32 %v3381, %v3449
      %v3451 = vpop.f32.mrf.mxu0
      %v3452 = vpop.f32.mrf.mxu0
      %v3453 = vadd.f32 %v3386, %v3452
      %v3454 = vpop.f32.mrf.mxu0
      %3455 = vmatprep.mubr.bf16.mxu0 0
      %3456 = vmatmul.mubr.bf16.gmra.mxu0 %v3413
      %v3457 = vpop.f32.mrf.mxu0
      %v3458 = vadd.f32 %v3391, %v3457
      %v3459 = vpop.f32.mrf.mxu0
      %v3460 = vpop.f32.mrf.mxu0
      %v3461 = vadd.f32 %v3396, %v3460
      %v3462 = vpop.f32.mrf.mxu0
      %3463 = vdwg.mxu0
      %v3464 = vadd.f32 %v3135, %v3450
      %v3465 = vadd.f32 %v3136, %v3453
      %v3466 = vadd.f32 %v3137, %v3458
      %v3467 = vadd.f32 %v3138, %v3461
      %v3468 = vld [vmem:[%s55] sm:$0xff]
      %v3469 = vld [vmem:[%s55 + $0x8] sm:$0xff]
      %v3470 = vld [vmem:[%s55 + $0x10] sm:$0xff]
      %v3471 = vld [vmem:[%s55 + $0x18] sm:$0xff]
      %v3472 = vld [vmem:[%s57] sm:$0xff]
      %v3473 = vld [vmem:[%s57 + $0x8] sm:$0xff]
      %v3474 = vld [vmem:[%s57 + $0x10] sm:$0xff]
      %v3475 = vld [vmem:[%s57 + $0x18] sm:$0xff]
      %v3476 = vsel %vm1599, %v3464, 0.0
      %v3477 = vsel %vm1599, %v3465, 0.0
      %v3478 = vadd.f32 %v3476, %v3477
      %v3479 = vsel %vm1599, %v3466, 0.0
      %v3480 = vadd.f32 %v3478, %v3479
      %v3481 = vsel %vm1599, %v3467, 0.0
      %v3482 = vadd.f32 %v3480, %v3481
      %v3483 = vrot.slane %v3482, 4
      %v3484 = vadd.f32 %v3482, %v3483
      %v3485 = vrot.slane %v3484, 2
      %v3486 = vadd.f32 %v3484, %v3485
      %v3487 = vrot.slane %v3486, 1
      %v3488 = vadd.f32 %v3486, %v3487
      %v3489 = vmul.f32 %v3488, 0.03125
      %v3490 = vmul.f32 %v3464, %v3464
      %v3491 = vmul.f32 %v3465, %v3465
      %v3492 = vmul.f32 %v3466, %v3466
      %v3493 = vmul.f32 %v3467, %v3467
      %v3494 = vsel %vm1599, %v3490, 0.0
      %v3495 = vsel %vm1599, %v3491, 0.0
      %v3496 = vadd.f32 %v3494, %v3495
      %v3497 = vsel %vm1599, %v3492, 0.0
      %v3498 = vadd.f32 %v3496, %v3497
      %v3499 = vsel %vm1599, %v3493, 0.0
      %v3500 = vadd.f32 %v3498, %v3499
      %v3501 = vrot.slane %v3500, 4
      %v3502 = vadd.f32 %v3500, %v3501
      %v3503 = vrot.slane %v3502, 2
      %v3504 = vadd.f32 %v3502, %v3503
      %v3505 = vrot.slane %v3504, 1
      %v3506 = vadd.f32 %v3504, %v3505
      %v3507 = vmul.f32 %v3506, 0.03125
      %v3508 = vmul.f32 %v3489, %v3489
      %v3509 = vsub.f32 %v3507, %v3508
      %v3510 = vsub.f32 %v3464, %v3489
      %v3511 = vsub.f32 %v3465, %v3489
      %v3512 = vsub.f32 %v3466, %v3489
      %v3513 = vsub.f32 %v3467, %v3489
      %v3514 = vadd.f32 %v3509, 1e-05
      %v3515 = vrsqrt.pop %v3514
      %v3516 = vmul.f32 %v3510, %v3515
      %v3517 = vmul.f32 %v3511, %v3515
      %v3518 = vmul.f32 %v3512, %v3515
      %v3519 = vmul.f32 %v3513, %v3515
      %3521 = vset.pattern.permute.xlu0 0
      %3522 = vperm.xlu0 %3521, %v3468
      %v3523 = vpop.permute.xlu0 %3522
      %3526 = vset.pattern.permute.xlu0 0
      %3527 = vperm.xlu0 %3526, %v3469
      %v3528 = vpop.permute.xlu0 %3527
      %3531 = vset.pattern.permute.xlu0 0
      %3532 = vperm.xlu0 %3531, %v3470
      %v3533 = vpop.permute.xlu0 %3532
      %3536 = vset.pattern.permute.xlu0 0
      %3537 = vperm.xlu0 %3536, %v3471
      %v3538 = vpop.permute.xlu0 %3537
      %v3540 = vmul.f32 %v3516, %v3523
      %v3541 = vmul.f32 %v3517, %v3528
      %v3542 = vmul.f32 %v3518, %v3533
      %v3543 = vmul.f32 %v3519, %v3538
      %3545 = vset.pattern.permute.xlu0 0
      %3546 = vperm.xlu0 %3545, %v3472
      %v3547 = vpop.permute.xlu0 %3546
      %3550 = vset.pattern.permute.xlu0 0
      %3551 = vperm.xlu0 %3550, %v3473
      %v3552 = vpop.permute.xlu0 %3551
      %3555 = vset.pattern.permute.xlu0 0
      %3556 = vperm.xlu0 %3555, %v3474
      %v3557 = vpop.permute.xlu0 %3556
      %3560 = vset.pattern.permute.xlu0 0
      %3561 = vperm.xlu0 %3560, %v3475
      %v3562 = vpop.permute.xlu0 %3561
      %v3564 = vadd.f32 %v3540, %v3547
      %v3565 = vadd.f32 %v3541, %v3552
      %v3566 = vadd.f32 %v3542, %v3557
      %v3567 = vadd.f32 %v3543, %v3562
      %3568 = vst.msk [vmem:[%s973] sm:$0xff] %vm1599, %v3564
      %3569 = vst.msk [vmem:[%s973 + $0x8] sm:$0xff] %vm1599, %v3565
      %3570 = vst.msk [vmem:[%s973 + $0x10] sm:$0xff] %vm1599, %v3566
      %3571 = vst.msk [vmem:[%s973 + $0x18] sm:$0xff] %vm1599, %v3567
      %p3572 = scmp.lt.s32.totalorder %s74, 1
      %s3573 = scalar_select %p3572, %s74, 1
      %p3574 = scmp.lt.s32.totalorder %s75, 0
      %s3575 = scalar_select %p3574, %s75, 0
      %s3576 = smul.addr %s3573, 4
      %s3577 = sadd.s32 %s3575, %s3576
      %s3578 = smul.addr %s3577, 8
      %s3579 = scalar_lea.vmem %s59, %s3578
      // Predicated region
      $region141: #{tpu_custom_call.1} parent=135 // pred_check
        %p3580 = pneg %p728
      $region142: #{tpu_custom_call.1} parent=135 // pred_check_branch
        %3582 = sbr.rel (%p3580) target = $region144
      $region143: #{tpu_custom_call.1} parent=135 // pred_region
        _
      $region144: #{tpu_custom_call.1} parent=135 // pred_fallthru
        _
    $region136: #{tpu_custom_call.1} parent=5 // pred_fallthru
      _
    %p3583 = scmp.le.s32.totalorder 2, %s65
    // Predicated region
    $region145: #{tpu_custom_call.1} parent=5 // pred_check
      %p3584 = pneg %p3583
    $region146: #{tpu_custom_call.1} parent=5 // pred_check_branch
      %3586 = sbr.rel (%p3584) target = $region148
    $region147: #{tpu_custom_call.1} parent=5 // pred_region
      %s3587 = ssub.s32 %s65, 2
      // Predicated region
      $region149: #{tpu_custom_call.1} parent=147 // pred_check
        %p3588 = pneg %p734
      $region150: #{tpu_custom_call.1} parent=147 // pred_check_branch
        %3590 = sbr.rel (%p3588) target = $region152
      $region151: #{tpu_custom_call.1} parent=147 // pred_region
        %p3591 = scmp.lt.s32.totalorder %s76, 1
        %s3592 = scalar_select %p3591, %s76, 1
        %p3593 = scmp.lt.s32.totalorder %s77, 0
        %s3594 = scalar_select %p3593, %s77, 0
        %s3595 = smul.addr %s3592, 4
        %s3596 = sadd.s32 %s3594, %s3595
        %s3597 = smul.addr %s3596, 8
        %s3598 = scalar_lea.vmem %s59, %s3597
      $region152: #{tpu_custom_call.1} parent=147 // pred_fallthru
        _
    $region148: #{tpu_custom_call.1} parent=5 // pred_fallthru
      _
  $region6: #{tpu_custom_call.1} parent=0 // loop_footer
    %s69 = sadd.s32 1, %s65
  $region7: #{tpu_custom_call.1} parent=0 // loop_footer_branch
    %64 = sbr.rel target = $region3
  $region8: #{tpu_custom_call.1} parent=0 // loop_exit
    _

// kernel: tpu_custom_call.1
$region0: #{tpu_custom_call.1}
  #allocation0 [shape = 'u32[]', space=smem, size = 0x4, offset = 0x4, fixed_abs, tag = 'smem constant byte address 0x4 - core index']
  #allocation1 [shape = 'u32[144,128]{1,0:T(1,128)}', space=vmem, size = 0x12000, scoped, tag = 'internal scratch']
  #allocation2 [shape = 'bf16[32,8]{1,0:T(8,128)(2,1)}', space=vmem, size = 0x2000, scoped, tag = 'scratch operand']
  #allocation3 [shape = 'bf16[32,8]{1,0:T(8,128)(2,1)}', space=vmem, size = 0x2000, scoped, tag = 'scratch operand']
  #allocation4 [shape = 'bf16[32,16]{1,0:T(8,128)(2,1)}', space=vmem, size = 0x2000, scoped, tag = 'scratch operand']
  #allocation5 [shape = 'bf16[32,16]{1,0:T(8,128)(2,1)}', space=vmem, size = 0x2000, scoped, tag = 'scratch operand']
  %s0 = inlined_call_operand.smem [shape: u32[30], index: -1, kind: input, shape index: {}]
  %s1 = sld [smem:[%s0]]
  %s2 = scalar_lea.smem %s0, 1
  %s3 = sld [smem:[%s2]]
  %s4 = scalar_lea.smem %s0, 2
  %s5 = sld [smem:[%s4]]
  %s6 = scalar_lea.smem %s0, 3
  %s7 = sld [smem:[%s6]]
  %s8 = scalar_lea.smem %s0, 4
  %s9 = sld [smem:[%s8]]
  %s10 = scalar_lea.smem %s0, 5
  %s11 = sld [smem:[%s10]]
  %s12 = scalar_lea.smem %s0, 6
  %s13 = sld [smem:[%s12]]
  %s14 = scalar_lea.smem %s0, 7
  %s15 = sld [smem:[%s14]]
  %s16 = scalar_lea.smem %s0, 8
  %s17 = sld [smem:[%s16]]
  %s18 = scalar_lea.smem %s0, 9
  %s19 = sld [smem:[%s18]]
  %s20 = scalar_lea.smem %s0, 10
  %s21 = sld [smem:[%s20]]
  %s22 = scalar_lea.smem %s0, 11
  %s23 = sld [smem:[%s22]]
  %s24 = scalar_lea.smem %s0, 12
  %s25 = sld [smem:[%s24]]
  %s26 = scalar_lea.smem %s0, 13
  %s27 = sld [smem:[%s26]]
  %s28 = scalar_lea.smem %s0, 14
  %s29 = sld [smem:[%s28]]
  %s30 = scalar_lea.smem %s0, 15
  %s31 = sld [smem:[%s30]]
  %s32 = scalar_lea.smem %s0, 16
  %s33 = sld [smem:[%s32]]
  %s34 = scalar_lea.smem %s0, 17
  %s35 = sld [smem:[%s34]]
  %s36 = scalar_lea.smem %s0, 18
  %s37 = sld [smem:[%s36]]
  %s38 = scalar_lea.smem %s0, 19
  %s39 = sld [smem:[%s38]]
  %s40 = scalar_lea.smem %s0, 20
  %s41 = sld [smem:[%s40]]
  %s42 = scalar_lea.smem %s0, 21
  %s43 = sld [smem:[%s42]]
  %s44 = scalar_lea.smem %s0, 22
  %s45 = sld [smem:[%s44]]
  %s46 = scalar_lea.smem %s0, 23
  %s47 = sld [smem:[%s46]]
  %s48 = scalar_lea.smem %s0, 24
  %s49 = sld [smem:[%s48]]
  %s50 = scalar_lea.smem %s0, 25
  %s51 = sld [smem:[%s50]]
  %s52 = scalar_lea.smem %s0, 26
  %s53 = sld [smem:[%s52]]
  %s54 = scalar_lea.smem %s0, 27
  %s55 = sld [smem:[%s54]]
  %s56 = scalar_lea.smem %s0, 28
  %s57 = sld [smem:[%s56]]
  %s58 = scalar_lea.smem %s0, 29
  %s59 = sld [smem:[%s58]]
  %s60 = sld [smem:[#allocation0]]
  $region153: #{tpu_custom_call.1} parent=0
    _
  %s62 = ssub.s32 1, %s60
  %s63 = scalar_select 0, %s62, %s60
  loop: start=0, step=1, limit=4
  $region2: #{tpu_custom_call.1} parent=0 // loop_pre_header
    _
  $region3: #{tpu_custom_call.1} parent=0 // loop_header
    %s65 = sphi 0, %s69
    %p66 = scmp.ge.s32.totalorder %s65, 4
    %s72 = sphi 0, %s84
    %s73 = sphi 0, %s80
    %s74 = sphi 0, %s72
    %s75 = sphi 0, %s73
    %s76 = sphi 0, %s74
    %s77 = sphi 0, %s75
    %s89 = sphi 0, %s91
    %s92 = sphi 0, %s89
    %s93 = sphi 0, %s92
    %s109 = sphi 0, %s93
    %s115 = sphi 0, %s117
    %s118 = sphi 0, %s115
    %s119 = sphi 0, %s118
    %s135 = sphi 0, %s119
    %s141 = sphi 0, %s143
    %s144 = sphi 0, %s141
    %s145 = sphi 0, %s144
    %s161 = sphi 0, %s145
    %s165 = sphi 0, %s165
    %s167 = sphi 0, %s165
    %s168 = sphi 0, %s167
    %s182 = sphi 0, %s168
    %s186 = sphi 0, %s186
    %s188 = sphi 0, %s186
    %s189 = sphi 0, %s188
    %s203 = sphi 0, %s189
    %s207 = sphi 0, %s207
    %s209 = sphi 0, %s207
    %s210 = sphi 0, %s209
    %s224 = sphi 0, %s210
    %s228 = sphi 0, %s228
    %s230 = sphi 0, %s228
    %s231 = sphi 0, %s230
    %s245 = sphi 0, %s231
    %s249 = sphi 0, %s249
    %s251 = sphi 0, %s249
    %s252 = sphi 0, %s251
    %s266 = sphi 0, %s252
    %s270 = sphi 0, %s270
    %s272 = sphi 0, %s270
    %s273 = sphi 0, %s272
    %s287 = sphi 0, %s273
    %s291 = sphi 0, %s291
    %s293 = sphi 0, %s291
    %s294 = sphi 0, %s293
    %s308 = sphi 0, %s294
    %s312 = sphi 0, %s312
    %s314 = sphi 0, %s312
    %s315 = sphi 0, %s314
    %s329 = sphi 0, %s315
    %s333 = sphi 0, %s333
    %s335 = sphi 0, %s333
    %s336 = sphi 0, %s335
    %s350 = sphi 0, %s336
    %s354 = sphi 0, %s354
    %s356 = sphi 0, %s354
    %s357 = sphi 0, %s356
    %s371 = sphi 0, %s357
    %s375 = sphi 0, %s375
    %s377 = sphi 0, %s375
    %s378 = sphi 0, %s377
    %s392 = sphi 0, %s378
    %s396 = sphi 0, %s396
    %s398 = sphi 0, %s396
    %s399 = sphi 0, %s398
    %s413 = sphi 0, %s399
    %s417 = sphi 0, %s417
    %s419 = sphi 0, %s417
    %s420 = sphi 0, %s419
    %s434 = sphi 0, %s420
    %s438 = sphi 0, %s438
    %s440 = sphi 0, %s438
    %s441 = sphi 0, %s440
    %s455 = sphi 0, %s441
    %s459 = sphi 0, %s459
    %s461 = sphi 0, %s459
    %s462 = sphi 0, %s461
    %s476 = sphi 0, %s462
    %s480 = sphi 0, %s480
    %s482 = sphi 0, %s480
    %s483 = sphi 0, %s482
    %s497 = sphi 0, %s483
    %s501 = sphi 0, %s501
    %s503 = sphi 0, %s501
    %s504 = sphi 0, %s503
    %s518 = sphi 0, %s504
    %s522 = sphi 0, %s522
    %s524 = sphi 0, %s522
    %s525 = sphi 0, %s524
    %s539 = sphi 0, %s525
    %s543 = sphi 0, %s543
    %s545 = sphi 0, %s543
    %s546 = sphi 0, %s545
    %s560 = sphi 0, %s546
    %s564 = sphi 0, %s564
    %s566 = sphi 0, %s564
    %s567 = sphi 0, %s566
    %s581 = sphi 0, %s567
    %s585 = sphi 0, %s585
    %s587 = sphi 0, %s585
    %s588 = sphi 0, %s587
    %s602 = sphi 0, %s588
    %s606 = sphi 0, %s606
    %s608 = sphi 0, %s606
    %s609 = sphi 0, %s608
    %s623 = sphi 0, %s609
    %s627 = sphi 0, %s627
    %s629 = sphi 0, %s627
    %s630 = sphi 0, %s629
    %s644 = sphi 0, %s630
    %s648 = sphi 0, %s648
    %s650 = sphi 0, %s648
    %s651 = sphi 0, %s650
    %s665 = sphi 0, %s651
    %s669 = sphi 0, %s669
    %s671 = sphi 0, %s669
    %s672 = sphi 0, %s671
    %s686 = sphi 0, %s672
    %s690 = sphi 0, %s690
    %s692 = sphi 0, %s690
    %s693 = sphi 0, %s692
    %s707 = sphi 0, %s693
    %s715 = sphi 0, %s717
    %s718 = sphi 0, %s715
    %s719 = sphi 0, %s718
    %s735 = sphi 0, %s719
  $region4: #{tpu_custom_call.1} parent=0 // loop_header_branch
    %68 = sbr.rel (%p66) target = $region8
  $region5: #{tpu_custom_call.1} parent=0 // loop_body
    %s70 = ssub.s32 %s65, 1
    %s71 = ssub.s32 %s65, 2
    %s78 = sadd.s32 1, %s73
    %p79 = scmp.ge.s32.totalorder %s78, 1
    %s80 = scalar_select %p79, 0, %s78
    %s81 = sadd.s32 1, %s72
    %s82 = scalar_select %p79, %s81, %s72
    %p83 = scmp.ge.s32.totalorder %s82, 2
    %s84 = scalar_select %p83, 0, %s82
    %s85 = ssub.s32 %s72, %s84
    %s86 = ssub.s32 %s73, %s80
    %s87 = sor.u32 %s85, %s86
    %p88 = scmp.eq.s32.totalorder %s87, 0
    %s90 = sadd.s32 %s89, 1
    %s91 = scalar_select %p88, %s89, %s90
    %p94 = pneg %p88
    %p95 = scmp.eq.s32.totalorder %s65, 1
    %p96 = por %p94, %p95
    %p97 = scmp.ne.s32.totalorder %s89, %s92
    %p98 = scmp.eq.s32.totalorder %s65, 0
    %p99 = por %p97, %p98
    %p100 = scmp.ne.s32.totalorder %s89, %s92
    %p101 = scmp.eq.s32.totalorder %s70, 1
    %p102 = por %p100, %p101
    %p103 = scmp.ne.s32.totalorder %s92, %s93
    %p104 = scmp.eq.s32.totalorder %s70, 0
    %p105 = por %p103, %p104
    %p106 = scmp.ne.s32.totalorder %s92, %s93
    %p107 = scmp.eq.s32.totalorder %s71, 1
    %p108 = por %p106, %p107
    %p110 = scmp.ne.s32.totalorder %s93, %s109
    %p111 = scmp.eq.s32.totalorder %s71, 0
    %p112 = por %p110, %p111
    %s113 = ssub.s32 %s72, %s84
    %p114 = scmp.eq.s32.totalorder %s113, 0
    %s116 = sadd.s32 %s115, 1
    %s117 = scalar_select %p114, %s115, %s116
    %p120 = pneg %p114
    %p121 = scmp.eq.s32.totalorder %s65, 1
    %p122 = por %p120, %p121
    %p123 = scmp.ne.s32.totalorder %s115, %s118
    %p124 = scmp.eq.s32.totalorder %s65, 0
    %p125 = por %p123, %p124
    %p126 = scmp.ne.s32.totalorder %s115, %s118
    %p127 = scmp.eq.s32.totalorder %s70, 1
    %p128 = por %p126, %p127
    %p129 = scmp.ne.s32.totalorder %s118, %s119
    %p130 = scmp.eq.s32.totalorder %s70, 0
    %p131 = por %p129, %p130
    %p132 = scmp.ne.s32.totalorder %s118, %s119
    %p133 = scmp.eq.s32.totalorder %s71, 1
    %p134 = por %p132, %p133
    %p136 = scmp.ne.s32.totalorder %s119, %s135
    %p137 = scmp.eq.s32.totalorder %s71, 0
    %p138 = por %p136, %p137
    %s139 = ssub.s32 %s72, %s84
    %p140 = scmp.eq.s32.totalorder %s139, 0
    %s142 = sadd.s32 %s141, 1
    %s143 = scalar_select %p140, %s141, %s142
    %p146 = pneg %p140
    %p147 = scmp.eq.s32.totalorder %s65, 1
    %p148 = por %p146, %p147
    %p149 = scmp.ne.s32.totalorder %s141, %s144
    %p150 = scmp.eq.s32.totalorder %s65, 0
    %p151 = por %p149, %p150
    %p152 = scmp.ne.s32.totalorder %s141, %s144
    %p153 = scmp.eq.s32.totalorder %s70, 1
    %p154 = por %p152, %p153
    %p155 = scmp.ne.s32.totalorder %s144, %s145
    %p156 = scmp.eq.s32.totalorder %s70, 0
    %p157 = por %p155, %p156
    %p158 = scmp.ne.s32.totalorder %s144, %s145
    %p159 = scmp.eq.s32.totalorder %s71, 1
    %p160 = por %p158, %p159
    %p162 = scmp.ne.s32.totalorder %s145, %s161
    %p163 = scmp.eq.s32.totalorder %s71, 0
    %p164 = por %p162, %p163
    %s166 = sadd.s32 %s165, 1
    %p169 = scmp.eq.s32.totalorder %s65, 1
    %p170 = scmp.ne.s32.totalorder %s165, %s167
    %p171 = scmp.eq.s32.totalorder %s65, 0
    %p172 = por %p170, %p171
    %p173 = scmp.ne.s32.totalorder %s165, %s167
    %p174 = scmp.eq.s32.totalorder %s70, 1
    %p175 = por %p173, %p174
    %p176 = scmp.ne.s32.totalorder %s167, %s168
    %p177 = scmp.eq.s32.totalorder %s70, 0
    %p178 = por %p176, %p177
    %p179 = scmp.ne.s32.totalorder %s167, %s168
    %p180 = scmp.eq.s32.totalorder %s71, 1
    %p181 = por %p179, %p180
    %p183 = scmp.ne.s32.totalorder %s168, %s182
    %p184 = scmp.eq.s32.totalorder %s71, 0
    %p185 = por %p183, %p184
    %s187 = sadd.s32 %s186, 1
    %p190 = scmp.eq.s32.totalorder %s65, 1
    %p191 = scmp.ne.s32.totalorder %s186, %s188
    %p192 = scmp.eq.s32.totalorder %s65, 0
    %p193 = por %p191, %p192
    %p194 = scmp.ne.s32.totalorder %s186, %s188
    %p195 = scmp.eq.s32.totalorder %s70, 1
    %p196 = por %p194, %p195
    %p197 = scmp.ne.s32.totalorder %s188, %s189
    %p198 = scmp.eq.s32.totalorder %s70, 0
    %p199 = por %p197, %p198
    %p200 = scmp.ne.s32.totalorder %s188, %s189
    %p201 = scmp.eq.s32.totalorder %s71, 1
    %p202 = por %p200, %p201
    %p204 = scmp.ne.s32.totalorder %s189, %s203
    %p205 = scmp.eq.s32.totalorder %s71, 0
    %p206 = por %p204, %p205
    %s208 = sadd.s32 %s207, 1
    %p211 = scmp.eq.s32.totalorder %s65, 1
    %p212 = scmp.ne.s32.totalorder %s207, %s209
    %p213 = scmp.eq.s32.totalorder %s65, 0
    %p214 = por %p212, %p213
    %p215 = scmp.ne.s32.totalorder %s207, %s209
    %p216 = scmp.eq.s32.totalorder %s70, 1
    %p217 = por %p215, %p216
    %p218 = scmp.ne.s32.totalorder %s209, %s210
    %p219 = scmp.eq.s32.totalorder %s70, 0
    %p220 = por %p218, %p219
    %p221 = scmp.ne.s32.totalorder %s209, %s210
    %p222 = scmp.eq.s32.totalorder %s71, 1
    %p223 = por %p221, %p222
    %p225 = scmp.ne.s32.totalorder %s210, %s224
    %p226 = scmp.eq.s32.totalorder %s71, 0
    %p227 = por %p225, %p226
    %s229 = sadd.s32 %s228, 1
    %p232 = scmp.eq.s32.totalorder %s65, 1
    %p233 = scmp.ne.s32.totalorder %s228, %s230
    %p234 = scmp.eq.s32.totalorder %s65, 0
    %p235 = por %p233, %p234
    %p236 = scmp.ne.s32.totalorder %s228, %s230
    %p237 = scmp.eq.s32.totalorder %s70, 1
    %p238 = por %p236, %p237
    %p239 = scmp.ne.s32.totalorder %s230, %s231
    %p240 = scmp.eq.s32.totalorder %s70, 0
    %p241 = por %p239, %p240
    %p242 = scmp.ne.s32.totalorder %s230, %s231
    %p243 = scmp.eq.s32.totalorder %s71, 1
    %p244 = por %p242, %p243
    %p246 = scmp.ne.s32.totalorder %s231, %s245
    %p247 = scmp.eq.s32.totalorder %s71, 0
    %p248 = por %p246, %p247
    %s250 = sadd.s32 %s249, 1
    %p253 = scmp.eq.s32.totalorder %s65, 1
    %p254 = scmp.ne.s32.totalorder %s249, %s251
    %p255 = scmp.eq.s32.totalorder %s65, 0
    %p256 = por %p254, %p255
    %p257 = scmp.ne.s32.totalorder %s249, %s251
    %p258 = scmp.eq.s32.totalorder %s70, 1
    %p259 = por %p257, %p258
    %p260 = scmp.ne.s32.totalorder %s251, %s252
    %p261 = scmp.eq.s32.totalorder %s70, 0
    %p262 = por %p260, %p261
    %p263 = scmp.ne.s32.totalorder %s251, %s252
    %p264 = scmp.eq.s32.totalorder %s71, 1
    %p265 = por %p263, %p264
    %p267 = scmp.ne.s32.totalorder %s252, %s266
    %p268 = scmp.eq.s32.totalorder %s71, 0
    %p269 = por %p267, %p268
    %s271 = sadd.s32 %s270, 1
    %p274 = scmp.eq.s32.totalorder %s65, 1
    %p275 = scmp.ne.s32.totalorder %s270, %s272
    %p276 = scmp.eq.s32.totalorder %s65, 0
    %p277 = por %p275, %p276
    %p278 = scmp.ne.s32.totalorder %s270, %s272
    %p279 = scmp.eq.s32.totalorder %s70, 1
    %p280 = por %p278, %p279
    %p281 = scmp.ne.s32.totalorder %s272, %s273
    %p282 = scmp.eq.s32.totalorder %s70, 0
    %p283 = por %p281, %p282
    %p284 = scmp.ne.s32.totalorder %s272, %s273
    %p285 = scmp.eq.s32.totalorder %s71, 1
    %p286 = por %p284, %p285
    %p288 = scmp.ne.s32.totalorder %s273, %s287
    %p289 = scmp.eq.s32.totalorder %s71, 0
    %p290 = por %p288, %p289
    %s292 = sadd.s32 %s291, 1
    %p295 = scmp.eq.s32.totalorder %s65, 1
    %p296 = scmp.ne.s32.totalorder %s291, %s293
    %p297 = scmp.eq.s32.totalorder %s65, 0
    %p298 = por %p296, %p297
    %p299 = scmp.ne.s32.totalorder %s291, %s293
    %p300 = scmp.eq.s32.totalorder %s70, 1
    %p301 = por %p299, %p300
    %p302 = scmp.ne.s32.totalorder %s293, %s294
    %p303 = scmp.eq.s32.totalorder %s70, 0
    %p304 = por %p302, %p303
    %p305 = scmp.ne.s32.totalorder %s293, %s294
    %p306 = scmp.eq.s32.totalorder %s71, 1
    %p307 = por %p305, %p306
    %p309 = scmp.ne.s32.totalorder %s294, %s308
    %p310 = scmp.eq.s32.totalorder %s71, 0
    %p311 = por %p309, %p310
    %s313 = sadd.s32 %s312, 1
    %p316 = scmp.eq.s32.totalorder %s65, 1
    %p317 = scmp.ne.s32.totalorder %s312, %s314
    %p318 = scmp.eq.s32.totalorder %s65, 0
    %p319 = por %p317, %p318
    %p320 = scmp.ne.s32.totalorder %s312, %s314
    %p321 = scmp.eq.s32.totalorder %s70, 1
    %p322 = por %p320, %p321
    %p323 = scmp.ne.s32.totalorder %s314, %s315
    %p324 = scmp.eq.s32.totalorder %s70, 0
    %p325 = por %p323, %p324
    %p326 = scmp.ne.s32.totalorder %s314, %s315
    %p327 = scmp.eq.s32.totalorder %s71, 1
    %p328 = por %p326, %p327
    %p330 = scmp.ne.s32.totalorder %s315, %s329
    %p331 = scmp.eq.s32.totalorder %s71, 0
    %p332 = por %p330, %p331
    %s334 = sadd.s32 %s333, 1
    %p337 = scmp.eq.s32.totalorder %s65, 1
    %p338 = scmp.ne.s32.totalorder %s333, %s335
    %p339 = scmp.eq.s32.totalorder %s65, 0
    %p340 = por %p338, %p339
    %p341 = scmp.ne.s32.totalorder %s333, %s335
    %p342 = scmp.eq.s32.totalorder %s70, 1
    %p343 = por %p341, %p342
    %p344 = scmp.ne.s32.totalorder %s335, %s336
    %p345 = scmp.eq.s32.totalorder %s70, 0
    %p346 = por %p344, %p345
    %p347 = scmp.ne.s32.totalorder %s335, %s336
    %p348 = scmp.eq.s32.totalorder %s71, 1
    %p349 = por %p347, %p348
    %p351 = scmp.ne.s32.totalorder %s336, %s350
    %p352 = scmp.eq.s32.totalorder %s71, 0
    %p353 = por %p351, %p352
    %s355 = sadd.s32 %s354, 1
    %p358 = scmp.eq.s32.totalorder %s65, 1
    %p359 = scmp.ne.s32.totalorder %s354, %s356
    %p360 = scmp.eq.s32.totalorder %s65, 0
    %p361 = por %p359, %p360
    %p362 = scmp.ne.s32.totalorder %s354, %s356
    %p363 = scmp.eq.s32.totalorder %s70, 1
    %p364 = por %p362, %p363
    %p365 = scmp.ne.s32.totalorder %s356, %s357
    %p366 = scmp.eq.s32.totalorder %s70, 0
    %p367 = por %p365, %p366
    %p368 = scmp.ne.s32.totalorder %s356, %s357
    %p369 = scmp.eq.s32.totalorder %s71, 1
    %p370 = por %p368, %p369
    %p372 = scmp.ne.s32.totalorder %s357, %s371
    %p373 = scmp.eq.s32.totalorder %s71, 0
    %p374 = por %p372, %p373
    %s376 = sadd.s32 %s375, 1
    %p379 = scmp.eq.s32.totalorder %s65, 1
    %p380 = scmp.ne.s32.totalorder %s375, %s377
    %p381 = scmp.eq.s32.totalorder %s65, 0
    %p382 = por %p380, %p381
    %p383 = scmp.ne.s32.totalorder %s375, %s377
    %p384 = scmp.eq.s32.totalorder %s70, 1
    %p385 = por %p383, %p384
    %p386 = scmp.ne.s32.totalorder %s377, %s378
    %p387 = scmp.eq.s32.totalorder %s70, 0
    %p388 = por %p386, %p387
    %p389 = scmp.ne.s32.totalorder %s377, %s378
    %p390 = scmp.eq.s32.totalorder %s71, 1
    %p391 = por %p389, %p390
    %p393 = scmp.ne.s32.totalorder %s378, %s392
    %p394 = scmp.eq.s32.totalorder %s71, 0
    %p395 = por %p393, %p394
    %s397 = sadd.s32 %s396, 1
    %p400 = scmp.eq.s32.totalorder %s65, 1
    %p401 = scmp.ne.s32.totalorder %s396, %s398
    %p402 = scmp.eq.s32.totalorder %s65, 0
    %p403 = por %p401, %p402
    %p404 = scmp.ne.s32.totalorder %s396, %s398
    %p405 = scmp.eq.s32.totalorder %s70, 1
    %p406 = por %p404, %p405
    %p407 = scmp.ne.s32.totalorder %s398, %s399
    %p408 = scmp.eq.s32.totalorder %s70, 0
    %p409 = por %p407, %p408
    %p410 = scmp.ne.s32.totalorder %s398, %s399
    %p411 = scmp.eq.s32.totalorder %s71, 1
    %p412 = por %p410, %p411
    %p414 = scmp.ne.s32.totalorder %s399, %s413
    %p415 = scmp.eq.s32.totalorder %s71, 0
    %p416 = por %p414, %p415
    %s418 = sadd.s32 %s417, 1
    %p421 = scmp.eq.s32.totalorder %s65, 1
    %p422 = scmp.ne.s32.totalorder %s417, %s419
    %p423 = scmp.eq.s32.totalorder %s65, 0
    %p424 = por %p422, %p423
    %p425 = scmp.ne.s32.totalorder %s417, %s419
    %p426 = scmp.eq.s32.totalorder %s70, 1
    %p427 = por %p425, %p426
    %p428 = scmp.ne.s32.totalorder %s419, %s420
    %p429 = scmp.eq.s32.totalorder %s70, 0
    %p430 = por %p428, %p429
    %p431 = scmp.ne.s32.totalorder %s419, %s420
    %p432 = scmp.eq.s32.totalorder %s71, 1
    %p433 = por %p431, %p432
    %p435 = scmp.ne.s32.totalorder %s420, %s434
    %p436 = scmp.eq.s32.totalorder %s71, 0
    %p437 = por %p435, %p436
    %s439 = sadd.s32 %s438, 1
    %p442 = scmp.eq.s32.totalorder %s65, 1
    %p443 = scmp.ne.s32.totalorder %s438, %s440
    %p444 = scmp.eq.s32.totalorder %s65, 0
    %p445 = por %p443, %p444
    %p446 = scmp.ne.s32.totalorder %s438, %s440
    %p447 = scmp.eq.s32.totalorder %s70, 1
    %p448 = por %p446, %p447
    %p449 = scmp.ne.s32.totalorder %s440, %s441
    %p450 = scmp.eq.s32.totalorder %s70, 0
    %p451 = por %p449, %p450
    %p452 = scmp.ne.s32.totalorder %s440, %s441
    %p453 = scmp.eq.s32.totalorder %s71, 1
    %p454 = por %p452, %p453
    %p456 = scmp.ne.s32.totalorder %s441, %s455
    %p457 = scmp.eq.s32.totalorder %s71, 0
    %p458 = por %p456, %p457
    %s460 = sadd.s32 %s459, 1
    %p463 = scmp.eq.s32.totalorder %s65, 1
    %p464 = scmp.ne.s32.totalorder %s459, %s461
    %p465 = scmp.eq.s32.totalorder %s65, 0
    %p466 = por %p464, %p465
    %p467 = scmp.ne.s32.totalorder %s459, %s461
    %p468 = scmp.eq.s32.totalorder %s70, 1
    %p469 = por %p467, %p468
    %p470 = scmp.ne.s32.totalorder %s461, %s462
    %p471 = scmp.eq.s32.totalorder %s70, 0
    %p472 = por %p470, %p471
    %p473 = scmp.ne.s32.totalorder %s461, %s462
    %p474 = scmp.eq.s32.totalorder %s71, 1
    %p475 = por %p473, %p474
    %p477 = scmp.ne.s32.totalorder %s462, %s476
    %p478 = scmp.eq.s32.totalorder %s71, 0
    %p479 = por %p477, %p478
    %s481 = sadd.s32 %s480, 1
    %p484 = scmp.eq.s32.totalorder %s65, 1
    %p485 = scmp.ne.s32.totalorder %s480, %s482
    %p486 = scmp.eq.s32.totalorder %s65, 0
    %p487 = por %p485, %p486
    %p488 = scmp.ne.s32.totalorder %s480, %s482
    %p489 = scmp.eq.s32.totalorder %s70, 1
    %p490 = por %p488, %p489
    %p491 = scmp.ne.s32.totalorder %s482, %s483
    %p492 = scmp.eq.s32.totalorder %s70, 0
    %p493 = por %p491, %p492
    %p494 = scmp.ne.s32.totalorder %s482, %s483
    %p495 = scmp.eq.s32.totalorder %s71, 1
    %p496 = por %p494, %p495
    %p498 = scmp.ne.s32.totalorder %s483, %s497
    %p499 = scmp.eq.s32.totalorder %s71, 0
    %p500 = por %p498, %p499
    %s502 = sadd.s32 %s501, 1
    %p505 = scmp.eq.s32.totalorder %s65, 1
    %p506 = scmp.ne.s32.totalorder %s501, %s503
    %p507 = scmp.eq.s32.totalorder %s65, 0
    %p508 = por %p506, %p507
    %p509 = scmp.ne.s32.totalorder %s501, %s503
    %p510 = scmp.eq.s32.totalorder %s70, 1
    %p511 = por %p509, %p510
    %p512 = scmp.ne.s32.totalorder %s503, %s504
    %p513 = scmp.eq.s32.totalorder %s70, 0
    %p514 = por %p512, %p513
    %p515 = scmp.ne.s32.totalorder %s503, %s504
    %p516 = scmp.eq.s32.totalorder %s71, 1
    %p517 = por %p515, %p516
    %p519 = scmp.ne.s32.totalorder %s504, %s518
    %p520 = scmp.eq.s32.totalorder %s71, 0
    %p521 = por %p519, %p520
    %s523 = sadd.s32 %s522, 1
    %p526 = scmp.eq.s32.totalorder %s65, 1
    %p527 = scmp.ne.s32.totalorder %s522, %s524
    %p528 = scmp.eq.s32.totalorder %s65, 0
    %p529 = por %p527, %p528
    %p530 = scmp.ne.s32.totalorder %s522, %s524
    %p531 = scmp.eq.s32.totalorder %s70, 1
    %p532 = por %p530, %p531
    %p533 = scmp.ne.s32.totalorder %s524, %s525
    %p534 = scmp.eq.s32.totalorder %s70, 0
    %p535 = por %p533, %p534
    %p536 = scmp.ne.s32.totalorder %s524, %s525
    %p537 = scmp.eq.s32.totalorder %s71, 1
    %p538 = por %p536, %p537
    %p540 = scmp.ne.s32.totalorder %s525, %s539
    %p541 = scmp.eq.s32.totalorder %s71, 0
    %p542 = por %p540, %p541
    %s544 = sadd.s32 %s543, 1
    %p547 = scmp.eq.s32.totalorder %s65, 1
    %p548 = scmp.ne.s32.totalorder %s543, %s545
    %p549 = scmp.eq.s32.totalorder %s65, 0
    %p550 = por %p548, %p549
    %p551 = scmp.ne.s32.totalorder %s543, %s545
    %p552 = scmp.eq.s32.totalorder %s70, 1
    %p553 = por %p551, %p552
    %p554 = scmp.ne.s32.totalorder %s545, %s546
    %p555 = scmp.eq.s32.totalorder %s70, 0
    %p556 = por %p554, %p555
    %p557 = scmp.ne.s32.totalorder %s545, %s546
    %p558 = scmp.eq.s32.totalorder %s71, 1
    %p559 = por %p557, %p558
    %p561 = scmp.ne.s32.totalorder %s546, %s560
    %p562 = scmp.eq.s32.totalorder %s71, 0
    %p563 = por %p561, %p562
    %s565 = sadd.s32 %s564, 1
    %p568 = scmp.eq.s32.totalorder %s65, 1
    %p569 = scmp.ne.s32.totalorder %s564, %s566
    %p570 = scmp.eq.s32.totalorder %s65, 0
    %p571 = por %p569, %p570
    %p572 = scmp.ne.s32.totalorder %s564, %s566
    %p573 = scmp.eq.s32.totalorder %s70, 1
    %p574 = por %p572, %p573
    %p575 = scmp.ne.s32.totalorder %s566, %s567
    %p576 = scmp.eq.s32.totalorder %s70, 0
    %p577 = por %p575, %p576
    %p578 = scmp.ne.s32.totalorder %s566, %s567
    %p579 = scmp.eq.s32.totalorder %s71, 1
    %p580 = por %p578, %p579
    %p582 = scmp.ne.s32.totalorder %s567, %s581
    %p583 = scmp.eq.s32.totalorder %s71, 0
    %p584 = por %p582, %p583
    %s586 = sadd.s32 %s585, 1
    %p589 = scmp.eq.s32.totalorder %s65, 1
    %p590 = scmp.ne.s32.totalorder %s585, %s587
    %p591 = scmp.eq.s32.totalorder %s65, 0
    %p592 = por %p590, %p591
    %p593 = scmp.ne.s32.totalorder %s585, %s587
    %p594 = scmp.eq.s32.totalorder %s70, 1
    %p595 = por %p593, %p594
    %p596 = scmp.ne.s32.totalorder %s587, %s588
    %p597 = scmp.eq.s32.totalorder %s70, 0
    %p598 = por %p596, %p597
    %p599 = scmp.ne.s32.totalorder %s587, %s588
    %p600 = scmp.eq.s32.totalorder %s71, 1
    %p601 = por %p599, %p600
    %p603 = scmp.ne.s32.totalorder %s588, %s602
    %p604 = scmp.eq.s32.totalorder %s71, 0
    %p605 = por %p603, %p604
    %s607 = sadd.s32 %s606, 1
    %p610 = scmp.eq.s32.totalorder %s65, 1
    %p611 = scmp.ne.s32.totalorder %s606, %s608
    %p612 = scmp.eq.s32.totalorder %s65, 0
    %p613 = por %p611, %p612
    %p614 = scmp.ne.s32.totalorder %s606, %s608
    %p615 = scmp.eq.s32.totalorder %s70, 1
    %p616 = por %p614, %p615
    %p617 = scmp.ne.s32.totalorder %s608, %s609
    %p618 = scmp.eq.s32.totalorder %s70, 0
    %p619 = por %p617, %p618
    %p620 = scmp.ne.s32.totalorder %s608, %s609
    %p621 = scmp.eq.s32.totalorder %s71, 1
    %p622 = por %p620, %p621
    %p624 = scmp.ne.s32.totalorder %s609, %s623
    %p625 = scmp.eq.s32.totalorder %s71, 0
    %p626 = por %p624, %p625
    %s628 = sadd.s32 %s627, 1
    %p631 = scmp.eq.s32.totalorder %s65, 1
    %p632 = scmp.ne.s32.totalorder %s627, %s629
    %p633 = scmp.eq.s32.totalorder %s65, 0
    %p634 = por %p632, %p633
    %p635 = scmp.ne.s32.totalorder %s627, %s629
    %p636 = scmp.eq.s32.totalorder %s70, 1
    %p637 = por %p635, %p636
    %p638 = scmp.ne.s32.totalorder %s629, %s630
    %p639 = scmp.eq.s32.totalorder %s70, 0
    %p640 = por %p638, %p639
    %p641 = scmp.ne.s32.totalorder %s629, %s630
    %p642 = scmp.eq.s32.totalorder %s71, 1
    %p643 = por %p641, %p642
    %p645 = scmp.ne.s32.totalorder %s630, %s644
    %p646 = scmp.eq.s32.totalorder %s71, 0
    %p647 = por %p645, %p646
    %s649 = sadd.s32 %s648, 1
    %p652 = scmp.eq.s32.totalorder %s65, 1
    %p653 = scmp.ne.s32.totalorder %s648, %s650
    %p654 = scmp.eq.s32.totalorder %s65, 0
    %p655 = por %p653, %p654
    %p656 = scmp.ne.s32.totalorder %s648, %s650
    %p657 = scmp.eq.s32.totalorder %s70, 1
    %p658 = por %p656, %p657
    %p659 = scmp.ne.s32.totalorder %s650, %s651
    %p660 = scmp.eq.s32.totalorder %s70, 0
    %p661 = por %p659, %p660
    %p662 = scmp.ne.s32.totalorder %s650, %s651
    %p663 = scmp.eq.s32.totalorder %s71, 1
    %p664 = por %p662, %p663
    %p666 = scmp.ne.s32.totalorder %s651, %s665
    %p667 = scmp.eq.s32.totalorder %s71, 0
    %p668 = por %p666, %p667
    %s670 = sadd.s32 %s669, 1
    %p673 = scmp.eq.s32.totalorder %s65, 1
    %p674 = scmp.ne.s32.totalorder %s669, %s671
    %p675 = scmp.eq.s32.totalorder %s65, 0
    %p676 = por %p674, %p675
    %p677 = scmp.ne.s32.totalorder %s669, %s671
    %p678 = scmp.eq.s32.totalorder %s70, 1
    %p679 = por %p677, %p678
    %p680 = scmp.ne.s32.totalorder %s671, %s672
    %p681 = scmp.eq.s32.totalorder %s70, 0
    %p682 = por %p680, %p681
    %p683 = scmp.ne.s32.totalorder %s671, %s672
    %p684 = scmp.eq.s32.totalorder %s71, 1
    %p685 = por %p683, %p684
    %p687 = scmp.ne.s32.totalorder %s672, %s686
    %p688 = scmp.eq.s32.totalorder %s71, 0
    %p689 = por %p687, %p688
    %s691 = sadd.s32 %s690, 1
    %p694 = scmp.eq.s32.totalorder %s65, 1
    %p695 = scmp.ne.s32.totalorder %s690, %s692
    %p696 = scmp.eq.s32.totalorder %s65, 0
    %p697 = por %p695, %p696
    %p698 = scmp.ne.s32.totalorder %s690, %s692
    %p699 = scmp.eq.s32.totalorder %s70, 1
    %p700 = por %p698, %p699
    %p701 = scmp.ne.s32.totalorder %s692, %s693
    %p702 = scmp.eq.s32.totalorder %s70, 0
    %p703 = por %p701, %p702
    %p704 = scmp.ne.s32.totalorder %s692, %s693
    %p705 = scmp.eq.s32.totalorder %s71, 1
    %p706 = por %p704, %p705
    %p708 = scmp.ne.s32.totalorder %s693, %s707
    %p709 = scmp.eq.s32.totalorder %s71, 0
    %p710 = por %p708, %p709
    %s711 = ssub.s32 %s72, %s84
    %s712 = ssub.s32 %s73, %s80
    %s713 = sor.u32 %s711, %s712
    %p714 = scmp.eq.s32.totalorder %s713, 0
    %s716 = sadd.s32 %s715, 1
    %s717 = scalar_select %p714, %s715, %s716
    %p720 = pneg %p714
    %p721 = scmp.eq.s32.totalorder %s65, 1
    %p722 = por %p720, %p721
    %p723 = scmp.ne.s32.totalorder %s715, %s718
    %p724 = scmp.eq.s32.totalorder %s65, 0
    %p725 = por %p723, %p724
    %p726 = scmp.ne.s32.totalorder %s715, %s718
    %p727 = scmp.eq.s32.totalorder %s70, 1
    %p728 = por %p726, %p727
    %p729 = scmp.ne.s32.totalorder %s718, %s719
    %p730 = scmp.eq.s32.totalorder %s70, 0
    %p731 = por %p729, %p730
    %p732 = scmp.ne.s32.totalorder %s718, %s719
    %p733 = scmp.eq.s32.totalorder %s71, 1
    %p734 = por %p732, %p733
    %p736 = scmp.ne.s32.totalorder %s719, %s735
    %p737 = scmp.eq.s32.totalorder %s71, 0
    %p738 = por %p736, %p737
    %p739 = scmp.le.s32.totalorder 1, %s65
    %p740 = scmp.lt.s32.totalorder %s65, 3
    %p741 = pnand %p739, %p740
    %p742 = pneg %p741
    // Predicated region
    $region9: #{tpu_custom_call.1} parent=5 // pred_check
      _
    $region10: #{tpu_custom_call.1} parent=5 // pred_check_branch
      %744 = sbr.rel (%p741) target = $region12
    $region11: #{tpu_custom_call.1} parent=5 // pred_region
      %s745 = ssub.s32 %s65, 1
      // Predicated region
      $region13: #{tpu_custom_call.1} parent=11 // pred_check
        %p746 = pneg %p178
      $region14: #{tpu_custom_call.1} parent=11 // pred_check_branch
        %748 = sbr.rel (%p746) target = $region16
      $region15: #{tpu_custom_call.1} parent=11 // pred_region
        _
      $region16: #{tpu_custom_call.1} parent=11 // pred_fallthru
        _
      // Predicated region
      $region17: #{tpu_custom_call.1} parent=11 // pred_check
        %p749 = pneg %p199
      $region18: #{tpu_custom_call.1} parent=11 // pred_check_branch
        %751 = sbr.rel (%p749) target = $region20
      $region19: #{tpu_custom_call.1} parent=11 // pred_region
        _
      $region20: #{tpu_custom_call.1} parent=11 // pred_fallthru
        _
      // Predicated region
      $region21: #{tpu_custom_call.1} parent=11 // pred_check
        %p752 = pneg %p220
      $region22: #{tpu_custom_call.1} parent=11 // pred_check_branch
        %754 = sbr.rel (%p752) target = $region24
      $region23: #{tpu_custom_call.1} parent=11 // pred_region
        _
      $region24: #{tpu_custom_call.1} parent=11 // pred_fallthru
        _
      // Predicated region
      $region25: #{tpu_custom_call.1} parent=11 // pred_check
        %p755 = pneg %p241
      $region26: #{tpu_custom_call.1} parent=11 // pred_check_branch
        %757 = sbr.rel (%p755) target = $region28
      $region27: #{tpu_custom_call.1} parent=11 // pred_region
        _
      $region28: #{tpu_custom_call.1} parent=11 // pred_fallthru
        _
      // Predicated region
      $region29: #{tpu_custom_call.1} parent=11 // pred_check
        %p758 = pneg %p262
      $region30: #{tpu_custom_call.1} parent=11 // pred_check_branch
        %760 = sbr.rel (%p758) target = $region32
      $region31: #{tpu_custom_call.1} parent=11 // pred_region
        _
      $region32: #{tpu_custom_call.1} parent=11 // pred_fallthru
        _
      // Predicated region
      $region33: #{tpu_custom_call.1} parent=11 // pred_check
        %p761 = pneg %p283
      $region34: #{tpu_custom_call.1} parent=11 // pred_check_branch
        %763 = sbr.rel (%p761) target = $region36
      $region35: #{tpu_custom_call.1} parent=11 // pred_region
        _
      $region36: #{tpu_custom_call.1} parent=11 // pred_fallthru
        _
      // Predicated region
      $region37: #{tpu_custom_call.1} parent=11 // pred_check
        %p764 = pneg %p304
      $region38: #{tpu_custom_call.1} parent=11 // pred_check_branch
        %766 = sbr.rel (%p764) target = $region40
      $region39: #{tpu_custom_call.1} parent=11 // pred_region
        _
      $region40: #{tpu_custom_call.1} parent=11 // pred_fallthru
        _
      // Predicated region
      $region41: #{tpu_custom_call.1} parent=11 // pred_check
        %p767 = pneg %p325
      $region42: #{tpu_custom_call.1} parent=11 // pred_check_branch
        %769 = sbr.rel (%p767) target = $region44
      $region43: #{tpu_custom_call.1} parent=11 // pred_region
        _
      $region44: #{tpu_custom_call.1} parent=11 // pred_fallthru
        _
      // Predicated region
      $region45: #{tpu_custom_call.1} parent=11 // pred_check
        %p770 = pneg %p346
      $region46: #{tpu_custom_call.1} parent=11 // pred_check_branch
        %772 = sbr.rel (%p770) target = $region48
      $region47: #{tpu_custom_call.1} parent=11 // pred_region
        _
      $region48: #{tpu_custom_call.1} parent=11 // pred_fallthru
        _
      // Predicated region
      $region49: #{tpu_custom_call.1} parent=11 // pred_check
        %p773 = pneg %p367
      $region50: #{tpu_custom_call.1} parent=11 // pred_check_branch
        %775 = sbr.rel (%p773) target = $region52
      $region51: #{tpu_custom_call.1} parent=11 // pred_region
        _
      $region52: #{tpu_custom_call.1} parent=11 // pred_fallthru
        _
      // Predicated region
      $region53: #{tpu_custom_call.1} parent=11 // pred_check
        %p776 = pneg %p388
      $region54: #{tpu_custom_call.1} parent=11 // pred_check_branch
        %778 = sbr.rel (%p776) target = $region56
      $region55: #{tpu_custom_call.1} parent=11 // pred_region
        _
      $region56: #{tpu_custom_call.1} parent=11 // pred_fallthru
        _
      // Predicated region
      $region57: #{tpu_custom_call.1} parent=11 // pred_check
        %p779 = pneg %p409
      $region58: #{tpu_custom_call.1} parent=11 // pred_check_branch
        %781 = sbr.rel (%p779) target = $region60
      $region59: #{tpu_custom_call.1} parent=11 // pred_region
        _
      $region60: #{tpu_custom_call.1} parent=11 // pred_fallthru
        _
      // Predicated region
      $region61: #{tpu_custom_call.1} parent=11 // pred_check
        %p782 = pneg %p430
      $region62: #{tpu_custom_call.1} parent=11 // pred_check_branch
        %784 = sbr.rel (%p782) target = $region64
      $region63: #{tpu_custom_call.1} parent=11 // pred_region
        _
      $region64: #{tpu_custom_call.1} parent=11 // pred_fallthru
        _
      // Predicated region
      $region65: #{tpu_custom_call.1} parent=11 // pred_check
        %p785 = pneg %p451
      $region66: #{tpu_custom_call.1} parent=11 // pred_check_branch
        %787 = sbr.rel (%p785) target = $region68
      $region67: #{tpu_custom_call.1} parent=11 // pred_region
        _
      $region68: #{tpu_custom_call.1} parent=11 // pred_fallthru
        _
      // Predicated region
      $region69: #{tpu_custom_call.1} parent=11 // pred_check
        %p788 = pneg %p472
      $region70: #{tpu_custom_call.1} parent=11 // pred_check_branch
        %790 = sbr.rel (%p788) target = $region72
      $region71: #{tpu_custom_call.1} parent=11 // pred_region
        _
      $region72: #{tpu_custom_call.1} parent=11 // pred_fallthru
        _
      // Predicated region
      $region73: #{tpu_custom_call.1} parent=11 // pred_check
        %p791 = pneg %p493
      $region74: #{tpu_custom_call.1} parent=11 // pred_check_branch
        %793 = sbr.rel (%p791) target = $region76
      $region75: #{tpu_custom_call.1} parent=11 // pred_region
        _
      $region76: #{tpu_custom_call.1} parent=11 // pred_fallthru
        _
      // Predicated region
      $region77: #{tpu_custom_call.1} parent=11 // pred_check
        %p794 = pneg %p514
      $region78: #{tpu_custom_call.1} parent=11 // pred_check_branch
        %796 = sbr.rel (%p794) target = $region80
      $region79: #{tpu_custom_call.1} parent=11 // pred_region
        _
      $region80: #{tpu_custom_call.1} parent=11 // pred_fallthru
        _
      // Predicated region
      $region81: #{tpu_custom_call.1} parent=11 // pred_check
        %p797 = pneg %p535
      $region82: #{tpu_custom_call.1} parent=11 // pred_check_branch
        %799 = sbr.rel (%p797) target = $region84
      $region83: #{tpu_custom_call.1} parent=11 // pred_region
        _
      $region84: #{tpu_custom_call.1} parent=11 // pred_fallthru
        _
      // Predicated region
      $region85: #{tpu_custom_call.1} parent=11 // pred_check
        %p800 = pneg %p556
      $region86: #{tpu_custom_call.1} parent=11 // pred_check_branch
        %802 = sbr.rel (%p800) target = $region88
      $region87: #{tpu_custom_call.1} parent=11 // pred_region
        _
      $region88: #{tpu_custom_call.1} parent=11 // pred_fallthru
        _
      // Predicated region
      $region89: #{tpu_custom_call.1} parent=11 // pred_check
        %p803 = pneg %p577
      $region90: #{tpu_custom_call.1} parent=11 // pred_check_branch
        %805 = sbr.rel (%p803) target = $region92
      $region91: #{tpu_custom_call.1} parent=11 // pred_region
        _
      $region92: #{tpu_custom_call.1} parent=11 // pred_fallthru
        _
      // Predicated region
      $region93: #{tpu_custom_call.1} parent=11 // pred_check
        %p806 = pneg %p598
      $region94: #{tpu_custom_call.1} parent=11 // pred_check_branch
        %808 = sbr.rel (%p806) target = $region96
      $region95: #{tpu_custom_call.1} parent=11 // pred_region
        _
      $region96: #{tpu_custom_call.1} parent=11 // pred_fallthru
        _
      // Predicated region
      $region97: #{tpu_custom_call.1} parent=11 // pred_check
        %p809 = pneg %p619
      $region98: #{tpu_custom_call.1} parent=11 // pred_check_branch
        %811 = sbr.rel (%p809) target = $region100
      $region99: #{tpu_custom_call.1} parent=11 // pred_region
        _
      $region100: #{tpu_custom_call.1} parent=11 // pred_fallthru
        _
      // Predicated region
      $region101: #{tpu_custom_call.1} parent=11 // pred_check
        %p812 = pneg %p640
      $region102: #{tpu_custom_call.1} parent=11 // pred_check_branch
        %814 = sbr.rel (%p812) target = $region104
      $region103: #{tpu_custom_call.1} parent=11 // pred_region
        _
      $region104: #{tpu_custom_call.1} parent=11 // pred_fallthru
        _
      // Predicated region
      $region105: #{tpu_custom_call.1} parent=11 // pred_check
        %p815 = pneg %p661
      $region106: #{tpu_custom_call.1} parent=11 // pred_check_branch
        %817 = sbr.rel (%p815) target = $region108
      $region107: #{tpu_custom_call.1} parent=11 // pred_region
        _
      $region108: #{tpu_custom_call.1} parent=11 // pred_fallthru
        _
      // Predicated region
      $region109: #{tpu_custom_call.1} parent=11 // pred_check
        %p818 = pneg %p682
      $region110: #{tpu_custom_call.1} parent=11 // pred_check_branch
        %820 = sbr.rel (%p818) target = $region112
      $region111: #{tpu_custom_call.1} parent=11 // pred_region
        _
      $region112: #{tpu_custom_call.1} parent=11 // pred_fallthru
        _
      // Predicated region
      $region113: #{tpu_custom_call.1} parent=11 // pred_check
        %p821 = pneg %p703
      $region114: #{tpu_custom_call.1} parent=11 // pred_check_branch
        %823 = sbr.rel (%p821) target = $region116
      $region115: #{tpu_custom_call.1} parent=11 // pred_region
        _
      $region116: #{tpu_custom_call.1} parent=11 // pred_fallthru
        _
    $region12: #{tpu_custom_call.1} parent=5 // pred_fallthru
      _
    %p824 = scmp.lt.s32.totalorder %s65, 2
    // Predicated region
    $region117: #{tpu_custom_call.1} parent=5 // pred_check
      %p825 = pneg %p824
    $region118: #{tpu_custom_call.1} parent=5 // pred_check_branch
      %827 = sbr.rel (%p825) target = $region120
    $region119: #{tpu_custom_call.1} parent=5 // pred_region
      // Predicated region
      $region121: #{tpu_custom_call.1} parent=119 // pred_check
        %p828 = pneg %p99
      $region122: #{tpu_custom_call.1} parent=119 // pred_check_branch
        %830 = sbr.rel (%p828) target = $region124
      $region123: #{tpu_custom_call.1} parent=119 // pred_region
        %p831 = scmp.lt.s32.totalorder %s72, 1
        %s832 = scalar_select %p831, %s72, 1
        %p833 = scmp.lt.s32.totalorder %s73, 0
        %s834 = scalar_select %p833, %s73, 0
        %s835 = smul.addr %s832, 4
        %s836 = sadd.s32 %s834, %s835
        %s837 = smul.addr %s836, 8
        %s838 = scalar_lea.vmem %s1, %s837
      $region124: #{tpu_custom_call.1} parent=119 // pred_fallthru
        _
      // Predicated region
      $region125: #{tpu_custom_call.1} parent=119 // pred_check
        %p839 = pneg %p125
      $region126: #{tpu_custom_call.1} parent=119 // pred_check_branch
        %841 = sbr.rel (%p839) target = $region128
      $region127: #{tpu_custom_call.1} parent=119 // pred_region
        %p842 = scmp.lt.s32.totalorder %s72, 1
        %s843 = scalar_select %p842, %s72, 1
        %s844 = smul.addr %s843, 4
        %s845 = smul.addr %s844, 8
        %s846 = scalar_lea.vmem %s3, %s845
      $region128: #{tpu_custom_call.1} parent=119 // pred_fallthru
        _
      // Predicated region
      $region129: #{tpu_custom_call.1} parent=119 // pred_check
        %p847 = pneg %p151
      $region130: #{tpu_custom_call.1} parent=119 // pred_check_branch
        %849 = sbr.rel (%p847) target = $region132
      $region131: #{tpu_custom_call.1} parent=119 // pred_region
        %p850 = scmp.lt.s32.totalorder %s72, 1
        %s851 = scalar_select %p850, %s72, 1
        %s852 = smul.addr %s851, 4
        %s853 = smul.addr %s852, 8
        %s854 = scalar_lea.vmem %s5, %s853
      $region132: #{tpu_custom_call.1} parent=119 // pred_fallthru
        _
    $region120: #{tpu_custom_call.1} parent=5 // pred_fallthru
      _
    %p855 = scmp.le.s32.totalorder 1, %s65
    %p856 = scmp.lt.s32.totalorder %s65, 3
    %p857 = pnand %p855, %p856
    %p858 = pneg %p857
    // Predicated region
    $region133: #{tpu_custom_call.1} parent=5 // pred_check
      _
    $region134: #{tpu_custom_call.1} parent=5 // pred_check_branch
      %860 = sbr.rel (%p857) target = $region136
    $region135: #{tpu_custom_call.1} parent=5 // pred_region
      %s861 = ssub.s32 %s65, 1
      %p862 = scmp.lt.s32.totalorder %s74, 1
      %s863 = scalar_select %p862, %s74, 1
      %p864 = scmp.lt.s32.totalorder %s75, 0
      %s865 = scalar_select %p864, %s75, 0
      %s866 = smul.addr %s863, 4
      %s867 = sadd.s32 %s865, %s866
      %s868 = smul.addr %s867, 8
      %s869 = scalar_lea.vmem %s1, %s868
      %p870 = pneg %p105
      %p871 = pneg %p102
      %p872 = scmp.lt.s32.totalorder %s74, 1
      %s873 = scalar_select %p872, %s74, 1
      %s874 = smul.addr %s873, 4
      %s875 = smul.addr %s874, 8
      %s876 = scalar_lea.vmem %s3, %s875
      %p877 = pneg %p131
      %p878 = pneg %p128
      %p879 = scmp.lt.s32.totalorder %s74, 1
      %s880 = scalar_select %p879, %s74, 1
      %s881 = smul.addr %s880, 4
      %s882 = smul.addr %s881, 8
      %s883 = scalar_lea.vmem %s5, %s882
      %p884 = pneg %p157
      %p885 = pneg %p154
      %p886 = pneg %p178
      %p887 = pneg %p175
      %p888 = pneg %p199
      %p889 = pneg %p196
      %p890 = pneg %p220
      %p891 = pneg %p217
      %p892 = pneg %p241
      %p893 = pneg %p238
      %p894 = pneg %p262
      %p895 = pneg %p259
      %p896 = pneg %p283
      %p897 = pneg %p280
      %p898 = pneg %p304
      %p899 = pneg %p301
      %p900 = pneg %p325
      %p901 = pneg %p322
      %p902 = pneg %p346
      %p903 = pneg %p343
      %p904 = pneg %p367
      %p905 = pneg %p364
      %p906 = pneg %p388
      %p907 = pneg %p385
      %p908 = pneg %p409
      %p909 = pneg %p406
      %p910 = pneg %p430
      %p911 = pneg %p427
      %p912 = pneg %p451
      %p913 = pneg %p448
      %p914 = pneg %p472
      %p915 = pneg %p469
      %p916 = pneg %p493
      %p917 = pneg %p490
      %p918 = pneg %p514
      %p919 = pneg %p511
      %p920 = pneg %p535
      %p921 = pneg %p532
      %p922 = pneg %p556
      %p923 = pneg %p553
      %p924 = pneg %p577
      %p925 = pneg %p574
      %p926 = pneg %p598
      %p927 = pneg %p595
      %p928 = pneg %p619
      %p929 = pneg %p616
      %p930 = pneg %p640
      %p931 = pneg %p637
      %p932 = pneg %p661
      %p933 = pneg %p658
      %p934 = pneg %p682
      %p935 = pneg %p679
      %p936 = pneg %p703
      %p937 = pneg %p700
      %p938 = pneg %p731
      %p939 = pneg %p728
      %p940 = scmp.lt.s32.totalorder %s74, 1
      %s941 = scalar_select %p940, %s74, 1
      %p942 = scmp.lt.s32.totalorder %s75, 0
      %s943 = scalar_select %p942, %s75, 0
      %s944 = smul.addr %s941, 4
      %s945 = sadd.s32 %s943, %s944
      %s946 = smul.addr %s945, 8
      %s947 = scalar_lea.vmem %s59, %s946
      %p948 = scmp.lt.s32.totalorder %s74, 1
      %s949 = scalar_select %p948, %s74, 1
      %p950 = scmp.lt.s32.totalorder %s75, 0
      %s951 = scalar_select %p950, %s75, 0
      %s952 = smul.addr %s949, 4
      %s953 = sadd.s32 %s951, %s952
      %s954 = smul.addr %s953, 8
      %s955 = scalar_lea.vmem %s1, %s954
      %p956 = scmp.lt.s32.totalorder %s74, 1
      %s957 = scalar_select %p956, %s74, 1
      %s958 = smul.addr %s957, 4
      %s959 = smul.addr %s958, 8
      %s960 = scalar_lea.vmem %s3, %s959
      %p961 = scmp.lt.s32.totalorder %s74, 1
      %s962 = scalar_select %p961, %s74, 1
      %s963 = smul.addr %s962, 4
      %s964 = smul.addr %s963, 8
      %s965 = scalar_lea.vmem %s5, %s964
      %p966 = scmp.lt.s32.totalorder %s74, 1
      %s967 = scalar_select %p966, %s74, 1
      %p968 = scmp.lt.s32.totalorder %s75, 0
      %s969 = scalar_select %p968, %s75, 0
      %s970 = smul.addr %s967, 4
      %s971 = sadd.s32 %s969, %s970
      %s972 = smul.addr %s971, 8
      %s973 = scalar_lea.vmem %s59, %s972
      %p975 = scmp.eq.s32.totalorder %s75, 0
      // Predicated region
      $region137: #{tpu_custom_call.1} parent=135 // pred_check
        %p976 = pneg %p975
      $region138: #{tpu_custom_call.1} parent=135 // pred_check_branch
        %978 = sbr.rel (%p976) target = $region140
      $region139: #{tpu_custom_call.1} parent=135 // pred_region
        %v979 = vld [vmem:[%s960] sm:$0xff]
        %v980 = vld [vmem:[%s960 + $0x8] sm:$0xff]
        %v981 = vld [vmem:[%s960 + $0x10] sm:$0xff]
        %v982 = vld [vmem:[%s960 + $0x18] sm:$0xff]
        %v983 = vpack.c.bf16 %v980, %v979
        %v984 = vpack.c.bf16 %v982, %v981
        %v985 = vld [vmem:[%s11] sm:$0xf]
        %v986 = vld [vmem:[%s11 + $0x4] sm:$0xf]
        %v987 = vld [vmem:[%s11 + $0x8] sm:$0xf]
        %v988 = vld [vmem:[%s11 + $0xc] sm:$0xf]
        %v989 = vld [vmem:[%s13] sm:$0xff]
        %v990 = vld [vmem:[%s13 + $0x8] sm:$0xff]
        %v991 = vld [vmem:[%s13 + $0x10] sm:$0xff]
        %v992 = vld [vmem:[%s13 + $0x18] sm:$0xff]
        %994 = vset.pattern.permute.xlu0 0
        %995 = vperm.xlu0 %994, %v989
        %v996 = vpop.permute.xlu0 %995
        %999 = vset.pattern.permute.xlu0 0
        %1000 = vperm.xlu0 %999, %v990
        %v1001 = vpop.permute.xlu0 %1000
        %1004 = vset.pattern.permute.xlu0 0
        %1005 = vperm.xlu0 %1004, %v991
        %v1006 = vpop.permute.xlu0 %1005
        %1009 = vset.pattern.permute.xlu0 0
        %1010 = vperm.xlu0 %1009, %v992
        %v1011 = vpop.permute.xlu0 %1010
        %v1017 = vunpack.c.l.b16 %v985
        %v1018 = vunpack.c.l.b16 %v986
        %v1019 = vunpack.c.l.b16 %v987
        %v1020 = vunpack.c.l.b16 %v988
        %v1021 = vpack.c.b16 %v1018, %v1017
        %v1022 = vpack.c.b16 %v1020, %v1019
        %vm1023 = vcmask 261120
        %v1025 = vsel %vm1023, %v1021, 0
        %v1028 = vsel %vm1023, %v1022, 0
        %1030 = vmatprep.subr.bf16.mxu0 0
        %1031 = vmatpush1.bf16.msra.mxu0 0
        %1032 = vmatprep.subr.bf16.mxu0 0
        %1033 = vmatpush1.bf16.msra.mxu0 0
        %1034 = vmatprep.subr.bf16.mxu0 0
        %1035 = vmatpush1.bf16.msra.mxu0 0
        %1036 = vmatprep.subr.bf16.mxu0 0
        %1037 = vmatpush1.bf16.msra.mxu0 0
        %1038 = vmatprep.subr.bf16.mxu0 0
        %1039 = vmatpush1.bf16.msra.mxu0 0
        %1040 = vmatprep.subr.bf16.mxu0 0
        %1041 = vmatpush1.bf16.msra.mxu0 0
        %1042 = vmatprep.subr.bf16.mxu0 0
        %1043 = vmatpush1.bf16.msra.mxu0 %v984
        %1044 = vmatprep.subr.bf16.mxu0 0
        %1045 = vmatpush1.bf16.msra.mxu0 %v983
        %1046 = vmatprep.subr.bf16.mxu0 0
        %1047 = vmatpush2.bf16.msra.mxu0 0
        %1048 = vmatprep.subr.bf16.mxu0 0
        %1049 = vmatpush2.bf16.msra.mxu0 0
        %1050 = vmatprep.subr.bf16.mxu0 0
        %1051 = vmatpush2.bf16.msra.mxu0 0
        %1052 = vmatprep.subr.bf16.mxu0 0
        %1053 = vmatpush2.bf16.msra.mxu0 0
        %1054 = vmatprep.subr.bf16.mxu0 0
        %1055 = vmatpush2.bf16.msra.mxu0 0
        %1056 = vmatprep.subr.bf16.mxu0 0
        %1057 = vmatpush2.bf16.msra.mxu0 0
        %1058 = vmatprep.subr.bf16.mxu0 0
        %1059 = vmatpush2.bf16.msra.mxu0 0
        %1060 = vmatprep.subr.bf16.mxu0 0
        %1061 = vmatpush2.bf16.msra.mxu0 0
        %1062 = vmatprep.mubr.bf16.mxu0 0
        %1063 = vmatmul.mubr.bf16.gmra.mxu0 %v1025
        %v1064 = vpop.f32.mrf.mxu0
        %v1065 = vadd.f32 %v996, %v1064
        %v1066 = vpop.f32.mrf.mxu0
        %v1067 = vpop.f32.mrf.mxu0
        %v1068 = vadd.f32 %v1001, %v1067
        %v1069 = vpop.f32.mrf.mxu0
        %1070 = vmatprep.mubr.bf16.mxu0 0
        %1071 = vmatmul.mubr.bf16.gmra.mxu0 %v1028
        %v1072 = vpop.f32.mrf.mxu0
        %v1073 = vadd.f32 %v1006, %v1072
        %v1074 = vpop.f32.mrf.mxu0
        %v1075 = vpop.f32.mrf.mxu0
        %v1076 = vadd.f32 %v1011, %v1075
        %v1077 = vpop.f32.mrf.mxu0
        %1078 = vdwg.mxu0
        %v1079 = vpack.c.bf16 %v1068, %v1065
        %v1080 = vpack.c.bf16 %v1076, %v1073
        %v1083 = vunpack.c.l.b16 %v1079
        %v1084 = vunpack.c.h.b16 %v1079
        %v1085 = vunpack.c.l.b16 %v1080
        %v1086 = vunpack.c.h.b16 %v1080
        %v1087 = vpack.c.b16 %v1083, %v1083
        %v1088 = vpack.c.b16 %v1084, %v1084
        %v1089 = vpack.c.b16 %v1085, %v1085
        %v1090 = vpack.c.b16 %v1086, %v1086
        %vm1095 = vcmask 60416
        %1096 = vst.msk [vmem:[#allocation2] sm:$0xf] %vm1095, %v1087
        %1097 = vst.msk [vmem:[#allocation2 + $0x4] sm:$0xf] %vm1095, %v1088
        %1098 = vst.msk [vmem:[#allocation2 + $0x8] sm:$0xf] %vm1095, %v1089
        %1099 = vst.msk [vmem:[#allocation2 + $0xc] sm:$0xf] %vm1095, %v1090
        %v1100 = vld [vmem:[%s15] sm:$0xf]
        %v1101 = vld [vmem:[%s15 + $0x4] sm:$0xf]
        %v1102 = vld [vmem:[%s15 + $0x8] sm:$0xf]
        %v1103 = vld [vmem:[%s15 + $0xc] sm:$0xf]
        %v1104 = vld [vmem:[%s17] sm:$0xff]
        %v1105 = vld [vmem:[%s17 + $0x8] sm:$0xff]
        %v1106 = vld [vmem:[%s17 + $0x10] sm:$0xff]
        %v1107 = vld [vmem:[%s17 + $0x18] sm:$0xff]
        %1109 = vset.pattern.permute.xlu0 0
        %1110 = vperm.xlu0 %1109, %v1104
        %v1111 = vpop.permute.xlu0 %1110
        %1114 = vset.pattern.permute.xlu0 0
        %1115 = vperm.xlu0 %1114, %v1105
        %v1116 = vpop.permute.xlu0 %1115
        %1119 = vset.pattern.permute.xlu0 0
        %1120 = vperm.xlu0 %1119, %v1106
        %v1121 = vpop.permute.xlu0 %1120
        %1124 = vset.pattern.permute.xlu0 0
        %1125 = vperm.xlu0 %1124, %v1107
        %v1126 = vpop.permute.xlu0 %1125
        %v1132 = vunpack.c.l.b16 %v1100
        %v1133 = vunpack.c.l.b16 %v1101
        %v1134 = vunpack.c.l.b16 %v1102
        %v1135 = vunpack.c.l.b16 %v1103
        %v1136 = vpack.c.b16 %v1133, %v1132
        %v1137 = vpack.c.b16 %v1135, %v1134
        %v1139 = vsel %vm1023, %v1136, 0
        %v1142 = vsel %vm1023, %v1137, 0
        %1144 = vmatprep.subr.bf16.mxu0 0
        %1145 = vmatpush1.bf16.msra.mxu0 0
        %1146 = vmatprep.subr.bf16.mxu0 0
        %1147 = vmatpush1.bf16.msra.mxu0 0
        %1148 = vmatprep.subr.bf16.mxu0 0
        %1149 = vmatpush1.bf16.msra.mxu0 0
        %1150 = vmatprep.subr.bf16.mxu0 0
        %1151 = vmatpush1.bf16.msra.mxu0 0
        %1152 = vmatprep.subr.bf16.mxu0 0
        %1153 = vmatpush1.bf16.msra.mxu0 0
        %1154 = vmatprep.subr.bf16.mxu0 0
        %1155 = vmatpush1.bf16.msra.mxu0 0
        %1156 = vmatprep.subr.bf16.mxu0 0
        %1157 = vmatpush1.bf16.msra.mxu0 %v984
        %1158 = vmatprep.subr.bf16.mxu0 0
        %1159 = vmatpush1.bf16.msra.mxu0 %v983
        %1160 = vmatprep.subr.bf16.mxu0 0
        %1161 = vmatpush2.bf16.msra.mxu0 0
        %1162 = vmatprep.subr.bf16.mxu0 0
        %1163 = vmatpush2.bf16.msra.mxu0 0
        %1164 = vmatprep.subr.bf16.mxu0 0
        %1165 = vmatpush2.bf16.msra.mxu0 0
        %1166 = vmatprep.subr.bf16.mxu0 0
        %1167 = vmatpush2.bf16.msra.mxu0 0
        %1168 = vmatprep.subr.bf16.mxu0 0
        %1169 = vmatpush2.bf16.msra.mxu0 0
        %1170 = vmatprep.subr.bf16.mxu0 0
        %1171 = vmatpush2.bf16.msra.mxu0 0
        %1172 = vmatprep.subr.bf16.mxu0 0
        %1173 = vmatpush2.bf16.msra.mxu0 0
        %1174 = vmatprep.subr.bf16.mxu0 0
        %1175 = vmatpush2.bf16.msra.mxu0 0
        %1176 = vmatprep.mubr.bf16.mxu0 0
        %1177 = vmatmul.mubr.bf16.gmra.mxu0 %v1139
        %v1178 = vpop.f32.mrf.mxu0
        %v1179 = vadd.f32 %v1111, %v1178
        %v1180 = vpop.f32.mrf.mxu0
        %v1181 = vpop.f32.mrf.mxu0
        %v1182 = vadd.f32 %v1116, %v1181
        %v1183 = vpop.f32.mrf.mxu0
        %1184 = vmatprep.mubr.bf16.mxu0 0
        %1185 = vmatmul.mubr.bf16.gmra.mxu0 %v1142
        %v1186 = vpop.f32.mrf.mxu0
        %v1187 = vadd.f32 %v1121, %v1186
        %v1188 = vpop.f32.mrf.mxu0
        %v1189 = vpop.f32.mrf.mxu0
        %v1190 = vadd.f32 %v1126, %v1189
        %v1191 = vpop.f32.mrf.mxu0
        %1192 = vdwg.mxu0
        %v1193 = vpack.c.bf16 %v1182, %v1179
        %v1194 = vpack.c.bf16 %v1190, %v1187
        %v1197 = vunpack.c.l.b16 %v1193
        %v1198 = vunpack.c.h.b16 %v1193
        %v1199 = vunpack.c.l.b16 %v1194
        %v1200 = vunpack.c.h.b16 %v1194
        %v1201 = vpack.c.b16 %v1197, %v1197
        %v1202 = vpack.c.b16 %v1198, %v1198
        %v1203 = vpack.c.b16 %v1199, %v1199
        %v1204 = vpack.c.b16 %v1200, %v1200
        %1209 = vst.msk [vmem:[#allocation3] sm:$0xf] %vm1095, %v1201
        %1210 = vst.msk [vmem:[#allocation3 + $0x4] sm:$0xf] %vm1095, %v1202
        %1211 = vst.msk [vmem:[#allocation3 + $0x8] sm:$0xf] %vm1095, %v1203
        %1212 = vst.msk [vmem:[#allocation3 + $0xc] sm:$0xf] %vm1095, %v1204
        %v1213 = vld [vmem:[%s965] sm:$0xff]
        %v1214 = vld [vmem:[%s965 + $0x8] sm:$0xff]
        %v1215 = vld [vmem:[%s965 + $0x10] sm:$0xff]
        %v1216 = vld [vmem:[%s965 + $0x18] sm:$0xff]
        %v1217 = vpack.c.bf16 %v1214, %v1213
        %v1218 = vpack.c.bf16 %v1216, %v1215
        %v1219 = vld [vmem:[%s31] sm:$0xf]
        %v1220 = vld [vmem:[%s31 + $0x4] sm:$0xf]
        %v1221 = vld [vmem:[%s31 + $0x8] sm:$0xf]
        %v1222 = vld [vmem:[%s31 + $0xc] sm:$0xf]
        %v1223 = vld [vmem:[%s33] sm:$0xff]
        %v1224 = vld [vmem:[%s33 + $0x8] sm:$0xff]
        %v1225 = vld [vmem:[%s33 + $0x10] sm:$0xff]
        %v1226 = vld [vmem:[%s33 + $0x18] sm:$0xff]
        %1228 = vset.pattern.permute.xlu0 0
        %1229 = vperm.xlu0 %1228, %v1223
        %v1230 = vpop.permute.xlu0 %1229
        %1233 = vset.pattern.permute.xlu0 0
        %1234 = vperm.xlu0 %1233, %v1224
        %v1235 = vpop.permute.xlu0 %1234
        %1238 = vset.pattern.permute.xlu0 0
        %1239 = vperm.xlu0 %1238, %v1225
        %v1240 = vpop.permute.xlu0 %1239
        %1243 = vset.pattern.permute.xlu0 0
        %1244 = vperm.xlu0 %1243, %v1226
        %v1245 = vpop.permute.xlu0 %1244
        %v1251 = vunpack.c.l.b16 %v1219
        %v1252 = vunpack.c.l.b16 %v1220
        %v1253 = vunpack.c.l.b16 %v1221
        %v1254 = vunpack.c.l.b16 %v1222
        %v1255 = vpack.c.b16 %v1252, %v1251
        %v1256 = vpack.c.b16 %v1254, %v1253
        %v1258 = vsel %vm1023, %v1255, 0
        %v1261 = vsel %vm1023, %v1256, 0
        %1263 = vmatprep.subr.bf16.mxu0 0
        %1264 = vmatpush1.bf16.msra.mxu0 0
        %1265 = vmatprep.subr.bf16.mxu0 0
        %1266 = vmatpush1.bf16.msra.mxu0 0
        %1267 = vmatprep.subr.bf16.mxu0 0
        %1268 = vmatpush1.bf16.msra.mxu0 0
        %1269 = vmatprep.subr.bf16.mxu0 0
        %1270 = vmatpush1.bf16.msra.mxu0 0
        %1271 = vmatprep.subr.bf16.mxu0 0
        %1272 = vmatpush1.bf16.msra.mxu0 0
        %1273 = vmatprep.subr.bf16.mxu0 0
        %1274 = vmatpush1.bf16.msra.mxu0 0
        %1275 = vmatprep.subr.bf16.mxu0 0
        %1276 = vmatpush1.bf16.msra.mxu0 %v1218
        %1277 = vmatprep.subr.bf16.mxu0 0
        %1278 = vmatpush1.bf16.msra.mxu0 %v1217
        %1279 = vmatprep.subr.bf16.mxu0 0
        %1280 = vmatpush2.bf16.msra.mxu0 0
        %1281 = vmatprep.subr.bf16.mxu0 0
        %1282 = vmatpush2.bf16.msra.mxu0 0
        %1283 = vmatprep.subr.bf16.mxu0 0
        %1284 = vmatpush2.bf16.msra.mxu0 0
        %1285 = vmatprep.subr.bf16.mxu0 0
        %1286 = vmatpush2.bf16.msra.mxu0 0
        %1287 = vmatprep.subr.bf16.mxu0 0
        %1288 = vmatpush2.bf16.msra.mxu0 0
        %1289 = vmatprep.subr.bf16.mxu0 0
        %1290 = vmatpush2.bf16.msra.mxu0 0
        %1291 = vmatprep.subr.bf16.mxu0 0
        %1292 = vmatpush2.bf16.msra.mxu0 0
        %1293 = vmatprep.subr.bf16.mxu0 0
        %1294 = vmatpush2.bf16.msra.mxu0 0
        %1295 = vmatprep.mubr.bf16.mxu0 0
        %1296 = vmatmul.mubr.bf16.gmra.mxu0 %v1258
        %v1297 = vpop.f32.mrf.mxu0
        %v1298 = vadd.f32 %v1230, %v1297
        %v1299 = vpop.f32.mrf.mxu0
        %v1300 = vpop.f32.mrf.mxu0
        %v1301 = vadd.f32 %v1235, %v1300
        %v1302 = vpop.f32.mrf.mxu0
        %1303 = vmatprep.mubr.bf16.mxu0 0
        %1304 = vmatmul.mubr.bf16.gmra.mxu0 %v1261
        %v1305 = vpop.f32.mrf.mxu0
        %v1306 = vadd.f32 %v1240, %v1305
        %v1307 = vpop.f32.mrf.mxu0
        %v1308 = vpop.f32.mrf.mxu0
        %v1309 = vadd.f32 %v1245, %v1308
        %v1310 = vpop.f32.mrf.mxu0
        %1311 = vdwg.mxu0
        %v1312 = vpack.c.bf16 %v1301, %v1298
        %v1313 = vpack.c.bf16 %v1309, %v1306
        %v1316 = vunpack.c.l.b16 %v1312
        %v1317 = vunpack.c.h.b16 %v1312
        %v1318 = vunpack.c.l.b16 %v1313
        %v1319 = vunpack.c.h.b16 %v1313
        %v1320 = vpack.c.b16 %v1316, %v1316
        %v1321 = vpack.c.b16 %v1317, %v1317
        %v1322 = vpack.c.b16 %v1318, %v1318
        %v1323 = vpack.c.b16 %v1319, %v1319
        %vm1328 = vcmask 125952
        %1329 = vst.msk [vmem:[#allocation4] sm:$0xf] %vm1328, %v1320
        %1330 = vst.msk [vmem:[#allocation4 + $0x4] sm:$0xf] %vm1328, %v1321
        %1331 = vst.msk [vmem:[#allocation4 + $0x8] sm:$0xf] %vm1328, %v1322
        %1332 = vst.msk [vmem:[#allocation4 + $0xc] sm:$0xf] %vm1328, %v1323
        %v1333 = vld [vmem:[%s35] sm:$0xf]
        %v1334 = vld [vmem:[%s35 + $0x4] sm:$0xf]
        %v1335 = vld [vmem:[%s35 + $0x8] sm:$0xf]
        %v1336 = vld [vmem:[%s35 + $0xc] sm:$0xf]
        %v1337 = vld [vmem:[%s37] sm:$0xff]
        %v1338 = vld [vmem:[%s37 + $0x8] sm:$0xff]
        %v1339 = vld [vmem:[%s37 + $0x10] sm:$0xff]
        %v1340 = vld [vmem:[%s37 + $0x18] sm:$0xff]
        %1342 = vset.pattern.permute.xlu0 0
        %1343 = vperm.xlu0 %1342, %v1337
        %v1344 = vpop.permute.xlu0 %1343
        %1347 = vset.pattern.permute.xlu0 0
        %1348 = vperm.xlu0 %1347, %v1338
        %v1349 = vpop.permute.xlu0 %1348
        %1352 = vset.pattern.permute.xlu0 0
        %1353 = vperm.xlu0 %1352, %v1339
        %v1354 = vpop.permute.xlu0 %1353
        %1357 = vset.pattern.permute.xlu0 0
        %1358 = vperm.xlu0 %1357, %v1340
        %v1359 = vpop.permute.xlu0 %1358
        %v1365 = vunpack.c.l.b16 %v1333
        %v1366 = vunpack.c.l.b16 %v1334
        %v1367 = vunpack.c.l.b16 %v1335
        %v1368 = vunpack.c.l.b16 %v1336
        %v1369 = vpack.c.b16 %v1366, %v1365
        %v1370 = vpack.c.b16 %v1368, %v1367
        %v1372 = vsel %vm1023, %v1369, 0
        %v1375 = vsel %vm1023, %v1370, 0
        %1377 = vmatprep.subr.bf16.mxu0 0
        %1378 = vmatpush1.bf16.msra.mxu0 0
        %1379 = vmatprep.subr.bf16.mxu0 0
        %1380 = vmatpush1.bf16.msra.mxu0 0
        %1381 = vmatprep.subr.bf16.mxu0 0
        %1382 = vmatpush1.bf16.msra.mxu0 0
        %1383 = vmatprep.subr.bf16.mxu0 0
        %1384 = vmatpush1.bf16.msra.mxu0 0
        %1385 = vmatprep.subr.bf16.mxu0 0
        %1386 = vmatpush1.bf16.msra.mxu0 0
        %1387 = vmatprep.subr.bf16.mxu0 0
        %1388 = vmatpush1.bf16.msra.mxu0 0
        %1389 = vmatprep.subr.bf16.mxu0 0
        %1390 = vmatpush1.bf16.msra.mxu0 %v1218
        %1391 = vmatprep.subr.bf16.mxu0 0
        %1392 = vmatpush1.bf16.msra.mxu0 %v1217
        %1393 = vmatprep.subr.bf16.mxu0 0
        %1394 = vmatpush2.bf16.msra.mxu0 0
        %1395 = vmatprep.subr.bf16.mxu0 0
        %1396 = vmatpush2.bf16.msra.mxu0 0
        %1397 = vmatprep.subr.bf16.mxu0 0
        %1398 = vmatpush2.bf16.msra.mxu0 0
        %1399 = vmatprep.subr.bf16.mxu0 0
        %1400 = vmatpush2.bf16.msra.mxu0 0
        %1401 = vmatprep.subr.bf16.mxu0 0
        %1402 = vmatpush2.bf16.msra.mxu0 0
        %1403 = vmatprep.subr.bf16.mxu0 0
        %1404 = vmatpush2.bf16.msra.mxu0 0
        %1405 = vmatprep.subr.bf16.mxu0 0
        %1406 = vmatpush2.bf16.msra.mxu0 0
        %1407 = vmatprep.subr.bf16.mxu0 0
        %1408 = vmatpush2.bf16.msra.mxu0 0
        %1409 = vmatprep.mubr.bf16.mxu0 0
        %1410 = vmatmul.mubr.bf16.gmra.mxu0 %v1372
        %v1411 = vpop.f32.mrf.mxu0
        %v1412 = vadd.f32 %v1344, %v1411
        %v1413 = vpop.f32.mrf.mxu0
        %v1414 = vpop.f32.mrf.mxu0
        %v1415 = vadd.f32 %v1349, %v1414
        %v1416 = vpop.f32.mrf.mxu0
        %1417 = vmatprep.mubr.bf16.mxu0 0
        %1418 = vmatmul.mubr.bf16.gmra.mxu0 %v1375
        %v1419 = vpop.f32.mrf.mxu0
        %v1420 = vadd.f32 %v1354, %v1419
        %v1421 = vpop.f32.mrf.mxu0
        %v1422 = vpop.f32.mrf.mxu0
        %v1423 = vadd.f32 %v1359, %v1422
        %v1424 = vpop.f32.mrf.mxu0
        %1425 = vdwg.mxu0
        %v1426 = vpack.c.bf16 %v1415, %v1412
        %v1427 = vpack.c.bf16 %v1423, %v1420
        %v1430 = vunpack.c.l.b16 %v1426
        %v1431 = vunpack.c.h.b16 %v1426
        %v1432 = vunpack.c.l.b16 %v1427
        %v1433 = vunpack.c.h.b16 %v1427
        %v1434 = vpack.c.b16 %v1430, %v1430
        %v1435 = vpack.c.b16 %v1431, %v1431
        %v1436 = vpack.c.b16 %v1432, %v1432
        %v1437 = vpack.c.b16 %v1433, %v1433
        %1442 = vst.msk [vmem:[#allocation5] sm:$0xf] %vm1328, %v1434
        %1443 = vst.msk [vmem:[#allocation5 + $0x4] sm:$0xf] %vm1328, %v1435
        %1444 = vst.msk [vmem:[#allocation5 + $0x8] sm:$0xf] %vm1328, %v1436
        %1445 = vst.msk [vmem:[#allocation5 + $0xc] sm:$0xf] %vm1328, %v1437
      $region140: #{tpu_custom_call.1} parent=135 // pred_fallthru
        _
      %v1446 = vld [vmem:[%s955] sm:$0xff]
      %v1447 = vld [vmem:[%s955 + $0x8] sm:$0xff]
      %v1448 = vld [vmem:[%s955 + $0x10] sm:$0xff]
      %v1449 = vld [vmem:[%s955 + $0x18] sm:$0xff]
      %v1450 = vld [vmem:[%s7] sm:$0xf]
      %v1451 = vld [vmem:[%s7 + $0x4] sm:$0xf]
      %v1452 = vld [vmem:[%s7 + $0x8] sm:$0xf]
      %v1453 = vld [vmem:[%s7 + $0xc] sm:$0xf]
      %v1454 = vpack.c.bf16 %v1447, %v1446
      %v1455 = vpack.c.bf16 %v1449, %v1448
      %v1456 = vld [vmem:[%s9] sm:$0xff]
      %v1457 = vld [vmem:[%s9 + $0x8] sm:$0xff]
      %v1458 = vld [vmem:[%s9 + $0x10] sm:$0xff]
      %v1459 = vld [vmem:[%s9 + $0x18] sm:$0xff]
      %1461 = vset.pattern.permute.xlu0 0
      %1462 = vperm.xlu0 %1461, %v1456
      %v1463 = vpop.permute.xlu0 %1462
      %1466 = vset.pattern.permute.xlu0 0
      %1467 = vperm.xlu0 %1466, %v1457
      %v1468 = vpop.permute.xlu0 %1467
      %1471 = vset.pattern.permute.xlu0 0
      %1472 = vperm.xlu0 %1471, %v1458
      %v1473 = vpop.permute.xlu0 %1472
      %1476 = vset.pattern.permute.xlu0 0
      %1477 = vperm.xlu0 %1476, %v1459
      %v1478 = vpop.permute.xlu0 %1477
      %v1484 = vunpack.c.l.b16 %v1450
      %v1485 = vunpack.c.l.b16 %v1451
      %v1486 = vunpack.c.l.b16 %v1452
      %v1487 = vunpack.c.l.b16 %v1453
      %v1488 = vpack.c.b16 %v1485, %v1484
      %v1489 = vpack.c.b16 %v1487, %v1486
      %vm1490 = vcmask 261120
      %v1492 = vsel %vm1490, %v1488, 0
      %v1495 = vsel %vm1490, %v1489, 0
      %1497 = vmatprep.subr.bf16.mxu0 0
      %1498 = vmatpush1.bf16.msra.mxu0 0
      %1499 = vmatprep.subr.bf16.mxu0 0
      %1500 = vmatpush1.bf16.msra.mxu0 0
      %1501 = vmatprep.subr.bf16.mxu0 0
      %1502 = vmatpush1.bf16.msra.mxu0 0
      %1503 = vmatprep.subr.bf16.mxu0 0
      %1504 = vmatpush1.bf16.msra.mxu0 0
      %1505 = vmatprep.subr.bf16.mxu0 0
      %1506 = vmatpush1.bf16.msra.mxu0 0
      %1507 = vmatprep.subr.bf16.mxu0 0
      %1508 = vmatpush1.bf16.msra.mxu0 0
      %1509 = vmatprep.subr.bf16.mxu0 0
      %1510 = vmatpush1.bf16.msra.mxu0 %v1455
      %1511 = vmatprep.subr.bf16.mxu0 0
      %1512 = vmatpush1.bf16.msra.mxu0 %v1454
      %1513 = vmatprep.subr.bf16.mxu0 0
      %1514 = vmatpush2.bf16.msra.mxu0 0
      %1515 = vmatprep.subr.bf16.mxu0 0
      %1516 = vmatpush2.bf16.msra.mxu0 0
      %1517 = vmatprep.subr.bf16.mxu0 0
      %1518 = vmatpush2.bf16.msra.mxu0 0
      %1519 = vmatprep.subr.bf16.mxu0 0
      %1520 = vmatpush2.bf16.msra.mxu0 0
      %1521 = vmatprep.subr.bf16.mxu0 0
      %1522 = vmatpush2.bf16.msra.mxu0 0
      %1523 = vmatprep.subr.bf16.mxu0 0
      %1524 = vmatpush2.bf16.msra.mxu0 0
      %1525 = vmatprep.subr.bf16.mxu0 0
      %1526 = vmatpush2.bf16.msra.mxu0 0
      %1527 = vmatprep.subr.bf16.mxu0 0
      %1528 = vmatpush2.bf16.msra.mxu0 0
      %1529 = vmatprep.mubr.bf16.mxu0 0
      %1530 = vmatmul.mubr.bf16.gmra.mxu0 %v1492
      %v1531 = vpop.f32.mrf.mxu0
      %v1532 = vadd.f32 %v1463, %v1531
      %v1533 = vpop.f32.mrf.mxu0
      %v1534 = vpop.f32.mrf.mxu0
      %v1535 = vadd.f32 %v1468, %v1534
      %v1536 = vpop.f32.mrf.mxu0
      %1537 = vmatprep.mubr.bf16.mxu0 0
      %1538 = vmatmul.mubr.bf16.gmra.mxu0 %v1495
      %v1539 = vpop.f32.mrf.mxu0
      %v1540 = vadd.f32 %v1473, %v1539
      %v1541 = vpop.f32.mrf.mxu0
      %v1542 = vpop.f32.mrf.mxu0
      %v1543 = vadd.f32 %v1478, %v1542
      %v1544 = vpop.f32.mrf.mxu0
      %1545 = vdwg.mxu0
      %v1546 = vld [vmem:[#allocation2] sm:$0xf]
      %v1547 = vld [vmem:[#allocation2 + $0x4] sm:$0xf]
      %v1548 = vld [vmem:[#allocation2 + $0x8] sm:$0xf]
      %v1549 = vld [vmem:[#allocation2 + $0xc] sm:$0xf]
      %v1550 = vld [vmem:[#allocation3] sm:$0xf]
      %v1551 = vld [vmem:[#allocation3 + $0x4] sm:$0xf]
      %v1552 = vld [vmem:[#allocation3 + $0x8] sm:$0xf]
      %v1553 = vld [vmem:[#allocation3 + $0xc] sm:$0xf]
      %v1554 = vld [vmem:[%s19] sm:$0xf]
      %v1555 = vld [vmem:[%s19 + $0x4] sm:$0xf]
      %v1556 = vld [vmem:[%s19 + $0x8] sm:$0xf]
      %v1557 = vld [vmem:[%s19 + $0xc] sm:$0xf]
      %v1558 = vld [vmem:[%s21] sm:$0xff]
      %v1559 = vld [vmem:[%s21 + $0x8] sm:$0xff]
      %v1560 = vld [vmem:[%s21 + $0x10] sm:$0xff]
      %v1561 = vld [vmem:[%s21 + $0x18] sm:$0xff]
      %s1562 = smul.u32 %s75, 8
      %v1563 = vpack.c.bf16 %v1535, %v1532
      %v1564 = vpack.c.bf16 %v1543, %v1540
      %v1567 = vunpack.c.l.b16 %v1563
      %v1568 = vunpack.c.h.b16 %v1563
      %v1569 = vunpack.c.l.b16 %v1564
      %v1570 = vunpack.c.h.b16 %v1564
      %v1571 = vpack.c.b16 %v1567, %v1567
      %v1572 = vpack.c.b16 %v1568, %v1568
      %v1573 = vpack.c.b16 %v1569, %v1569
      %v1574 = vpack.c.b16 %v1570, %v1570
      %1579 = vxpose.xlu0.c.b16.start [1/8] %v1571, 128
      %1580 = vxpose.xlu0.c.b16.cont [2/8] 0, 128
      %1581 = vxpose.xlu0.c.b16.cont [3/8] 0, 128
      %1582 = vxpose.xlu0.c.b16.cont [4/8] 0, 128
      %1583 = vxpose.xlu0.c.b16.cont [5/8] 0, 128
      %1584 = vxpose.xlu0.c.b16.cont [6/8] 0, 128
      %1585 = vxpose.xlu0.c.b16.cont [7/8] 0, 128
      %1586 = vxpose.xlu0.c.b16.end [8/8] 0, 128
      %v1587 = vpop.trf.xlu0
      %v1588 = vpop.trf.xlu0
      %v1589 = vpop.trf.xlu0
      %v1590 = vpop.trf.xlu0
      %v1591 = vpop.trf.xlu0
      %v1592 = vpop.trf.xlu0
      %v1593 = vpop.trf.xlu0
      %v1594 = vpop.trf.xlu0
      %1595 = vxpose.xlu0.c.b16.start [1/8] %v1572, 128
      %1596 = vxpose.xlu0.c.b16.cont [2/8] 0, 128
      %1597 = vxpose.xlu0.c.b16.cont [3/8] 0, 128
      %1598 = vxpose.xlu0.c.b16.cont [4/8] 0, 128
      %1599 = vxpose.xlu0.c.b16.cont [5/8] 0, 128
      %1600 = vxpose.xlu0.c.b16.cont [6/8] 0, 128
      %1601 = vxpose.xlu0.c.b16.cont [7/8] 0, 128
      %1602 = vxpose.xlu0.c.b16.end [8/8] 0, 128
      %v1603 = vpop.trf.xlu0
      %v1604 = vpop.trf.xlu0
      %v1605 = vpop.trf.xlu0
      %v1606 = vpop.trf.xlu0
      %v1607 = vpop.trf.xlu0
      %v1608 = vpop.trf.xlu0
      %v1609 = vpop.trf.xlu0
      %v1610 = vpop.trf.xlu0
      %1611 = vxpose.xlu0.c.b16.start [1/8] %v1573, 128
      %1612 = vxpose.xlu0.c.b16.cont [2/8] 0, 128
      %1613 = vxpose.xlu0.c.b16.cont [3/8] 0, 128
      %1614 = vxpose.xlu0.c.b16.cont [4/8] 0, 128
      %1615 = vxpose.xlu0.c.b16.cont [5/8] 0, 128
      %1616 = vxpose.xlu0.c.b16.cont [6/8] 0, 128
      %1617 = vxpose.xlu0.c.b16.cont [7/8] 0, 128
      %1618 = vxpose.xlu0.c.b16.end [8/8] 0, 128
      %v1619 = vpop.trf.xlu0
      %v1620 = vpop.trf.xlu0
      %v1621 = vpop.trf.xlu0
      %v1622 = vpop.trf.xlu0
      %v1623 = vpop.trf.xlu0
      %v1624 = vpop.trf.xlu0
      %v1625 = vpop.trf.xlu0
      %v1626 = vpop.trf.xlu0
      %1627 = vxpose.xlu0.c.b16.start [1/8] %v1574, 128
      %1628 = vxpose.xlu0.c.b16.cont [2/8] 0, 128
      %1629 = vxpose.xlu0.c.b16.cont [3/8] 0, 128
      %1630 = vxpose.xlu0.c.b16.cont [4/8] 0, 128
      %1631 = vxpose.xlu0.c.b16.cont [5/8] 0, 128
      %1632 = vxpose.xlu0.c.b16.cont [6/8] 0, 128
      %1633 = vxpose.xlu0.c.b16.cont [7/8] 0, 128
      %1634 = vxpose.xlu0.c.b16.end [8/8] 0, 128
      %v1635 = vpop.trf.xlu0
      %v1636 = vpop.trf.xlu0
      %v1637 = vpop.trf.xlu0
      %v1638 = vpop.trf.xlu0
      %v1639 = vpop.trf.xlu0
      %v1640 = vpop.trf.xlu0
      %v1641 = vpop.trf.xlu0
      %v1642 = vpop.trf.xlu0
      %v1643 = vlaneseq
      %v1644 = vshrl.u32 %v1643, 7
      %v1645 = vstv %s1562
      %v1646 = vadd.s32 %v1644, %v1645
      %v1647 = vlaneseq
      %v1648 = vand.u32 %v1647, 127
      %vm1649 = vcmp.le.s32.totalorder %v1648, %v1646
      %v1650 = vsel %vm1649, 0.0, -3.4028235e+38
      %vm1651 = vcmask 64512
      %v1653 = vsel %vm1651, %v1587, 0
      %vm1655 = vcmask 1043456
      %v1657 = vsel %vm1655, %v1546, 0
      %1659 = vmatprep.subr.bf16.mxu0 0
      %1660 = vmatpush1.bf16.msra.mxu0 0
      %1661 = vmatprep.subr.bf16.mxu0 0
      %1662 = vmatpush1.bf16.msra.mxu0 0
      %1663 = vmatprep.subr.bf16.mxu0 0
      %1664 = vmatpush1.bf16.msra.mxu0 0
      %1665 = vmatprep.subr.bf16.mxu0 0
      %1666 = vmatpush1.bf16.msra.mxu0 0
      %1667 = vmatprep.subr.bf16.mxu0 0
      %1668 = vmatpush1.bf16.msra.mxu0 0
      %1669 = vmatprep.subr.bf16.mxu0 0
      %1670 = vmatpush1.bf16.msra.mxu0 0
      %1671 = vmatprep.subr.bf16.mxu0 0
      %1672 = vmatpush1.bf16.msra.mxu0 0
      %1673 = vmatprep.subr.bf16.mxu0 0
      %1674 = vmatpush1.bf16.msra.mxu0 %v1657
      %1675 = vmatprep.subr.bf16.mxu0 0
      %1676 = vmatpush2.bf16.msra.mxu0 0
      %1677 = vmatprep.subr.bf16.mxu0 0
      %1678 = vmatpush2.bf16.msra.mxu0 0
      %1679 = vmatprep.subr.bf16.mxu0 0
      %1680 = vmatpush2.bf16.msra.mxu0 0
      %1681 = vmatprep.subr.bf16.mxu0 0
      %1682 = vmatpush2.bf16.msra.mxu0 0
      %1683 = vmatprep.subr.bf16.mxu0 0
      %1684 = vmatpush2.bf16.msra.mxu0 0
      %1685 = vmatprep.subr.bf16.mxu0 0
      %1686 = vmatpush2.bf16.msra.mxu0 0
      %1687 = vmatprep.subr.bf16.mxu0 0
      %1688 = vmatpush2.bf16.msra.mxu0 0
      %1689 = vmatprep.subr.bf16.mxu0 0
      %1690 = vmatpush2.bf16.msra.mxu0 0
      %1691 = vmatprep.mubr.bf16.mxu0 0
      %1692 = vmatmul.mubr.bf16.gmra.mxu0 %v1653
      %v1693 = vpop.f32.mrf.mxu0
      %v1694 = vadd.f32 %v1650, %v1693
      %v1695 = vpop.f32.mrf.mxu0
      %v1696 = vpop.f32.mrf.mxu0
      %v1697 = vpop.f32.mrf.mxu0
      %1698 = vdwg.mxu0
      %v1700 = vsel %vm1651, %v1603, 0
      %v1703 = vsel %vm1655, %v1547, 0
      %1705 = vmatprep.subr.bf16.mxu0 0
      %1706 = vmatpush1.bf16.msra.mxu0 0
      %1707 = vmatprep.subr.bf16.mxu0 0
      %1708 = vmatpush1.bf16.msra.mxu0 0
      %1709 = vmatprep.subr.bf16.mxu0 0
      %1710 = vmatpush1.bf16.msra.mxu0 0
      %1711 = vmatprep.subr.bf16.mxu0 0
      %1712 = vmatpush1.bf16.msra.mxu0 0
      %1713 = vmatprep.subr.bf16.mxu0 0
      %1714 = vmatpush1.bf16.msra.mxu0 0
      %1715 = vmatprep.subr.bf16.mxu0 0
      %1716 = vmatpush1.bf16.msra.mxu0 0
      %1717 = vmatprep.subr.bf16.mxu0 0
      %1718 = vmatpush1.bf16.msra.mxu0 0
      %1719 = vmatprep.subr.bf16.mxu0 0
      %1720 = vmatpush1.bf16.msra.mxu0 %v1703
      %1721 = vmatprep.subr.bf16.mxu0 0
      %1722 = vmatpush2.bf16.msra.mxu0 0
      %1723 = vmatprep.subr.bf16.mxu0 0
      %1724 = vmatpush2.bf16.msra.mxu0 0
      %1725 = vmatprep.subr.bf16.mxu0 0
      %1726 = vmatpush2.bf16.msra.mxu0 0
      %1727 = vmatprep.subr.bf16.mxu0 0
      %1728 = vmatpush2.bf16.msra.mxu0 0
      %1729 = vmatprep.subr.bf16.mxu0 0
      %1730 = vmatpush2.bf16.msra.mxu0 0
      %1731 = vmatprep.subr.bf16.mxu0 0
      %1732 = vmatpush2.bf16.msra.mxu0 0
      %1733 = vmatprep.subr.bf16.mxu0 0
      %1734 = vmatpush2.bf16.msra.mxu0 0
      %1735 = vmatprep.subr.bf16.mxu0 0
      %1736 = vmatpush2.bf16.msra.mxu0 0
      %1737 = vmatprep.mubr.bf16.mxu0 0
      %1738 = vmatmul.mubr.bf16.gmra.mxu0 %v1700
      %v1739 = vpop.f32.mrf.mxu0
      %v1740 = vadd.f32 %v1650, %v1739
      %v1741 = vpop.f32.mrf.mxu0
      %v1742 = vpop.f32.mrf.mxu0
      %v1743 = vpop.f32.mrf.mxu0
      %1744 = vdwg.mxu0
      %v1746 = vsel %vm1651, %v1619, 0
      %v1749 = vsel %vm1655, %v1548, 0
      %1751 = vmatprep.subr.bf16.mxu0 0
      %1752 = vmatpush1.bf16.msra.mxu0 0
      %1753 = vmatprep.subr.bf16.mxu0 0
      %1754 = vmatpush1.bf16.msra.mxu0 0
      %1755 = vmatprep.subr.bf16.mxu0 0
      %1756 = vmatpush1.bf16.msra.mxu0 0
      %1757 = vmatprep.subr.bf16.mxu0 0
      %1758 = vmatpush1.bf16.msra.mxu0 0
      %1759 = vmatprep.subr.bf16.mxu0 0
      %1760 = vmatpush1.bf16.msra.mxu0 0
      %1761 = vmatprep.subr.bf16.mxu0 0
      %1762 = vmatpush1.bf16.msra.mxu0 0
      %1763 = vmatprep.subr.bf16.mxu0 0
      %1764 = vmatpush1.bf16.msra.mxu0 0
      %1765 = vmatprep.subr.bf16.mxu0 0
      %1766 = vmatpush1.bf16.msra.mxu0 %v1749
      %1767 = vmatprep.subr.bf16.mxu0 0
      %1768 = vmatpush2.bf16.msra.mxu0 0
      %1769 = vmatprep.subr.bf16.mxu0 0
      %1770 = vmatpush2.bf16.msra.mxu0 0
      %1771 = vmatprep.subr.bf16.mxu0 0
      %1772 = vmatpush2.bf16.msra.mxu0 0
      %1773 = vmatprep.subr.bf16.mxu0 0
      %1774 = vmatpush2.bf16.msra.mxu0 0
      %1775 = vmatprep.subr.bf16.mxu0 0
      %1776 = vmatpush2.bf16.msra.mxu0 0
      %1777 = vmatprep.subr.bf16.mxu0 0
      %1778 = vmatpush2.bf16.msra.mxu0 0
      %1779 = vmatprep.subr.bf16.mxu0 0
      %1780 = vmatpush2.bf16.msra.mxu0 0
      %1781 = vmatprep.subr.bf16.mxu0 0
      %1782 = vmatpush2.bf16.msra.mxu0 0
      %1783 = vmatprep.mubr.bf16.mxu0 0
      %1784 = vmatmul.mubr.bf16.gmra.mxu0 %v1746
      %v1785 = vpop.f32.mrf.mxu0
      %v1786 = vadd.f32 %v1650, %v1785
      %v1787 = vpop.f32.mrf.mxu0
      %v1788 = vpop.f32.mrf.mxu0
      %v1789 = vpop.f32.mrf.mxu0
      %1790 = vdwg.mxu0
      %v1792 = vsel %vm1651, %v1635, 0
      %v1795 = vsel %vm1655, %v1549, 0
      %1797 = vmatprep.subr.bf16.mxu0 0
      %1798 = vmatpush1.bf16.msra.mxu0 0
      %1799 = vmatprep.subr.bf16.mxu0 0
      %1800 = vmatpush1.bf16.msra.mxu0 0
      %1801 = vmatprep.subr.bf16.mxu0 0
      %1802 = vmatpush1.bf16.msra.mxu0 0
      %1803 = vmatprep.subr.bf16.mxu0 0
      %1804 = vmatpush1.bf16.msra.mxu0 0
      %1805 = vmatprep.subr.bf16.mxu0 0
      %1806 = vmatpush1.bf16.msra.mxu0 0
      %1807 = vmatprep.subr.bf16.mxu0 0
      %1808 = vmatpush1.bf16.msra.mxu0 0
      %1809 = vmatprep.subr.bf16.mxu0 0
      %1810 = vmatpush1.bf16.msra.mxu0 0
      %1811 = vmatprep.subr.bf16.mxu0 0
      %1812 = vmatpush1.bf16.msra.mxu0 %v1795
      %1813 = vmatprep.subr.bf16.mxu0 0
      %1814 = vmatpush2.bf16.msra.mxu0 0
      %1815 = vmatprep.subr.bf16.mxu0 0
      %1816 = vmatpush2.bf16.msra.mxu0 0
      %1817 = vmatprep.subr.bf16.mxu0 0
      %1818 = vmatpush2.bf16.msra.mxu0 0
      %1819 = vmatprep.subr.bf16.mxu0 0
      %1820 = vmatpush2.bf16.msra.mxu0 0
      %1821 = vmatprep.subr.bf16.mxu0 0
      %1822 = vmatpush2.bf16.msra.mxu0 0
      %1823 = vmatprep.subr.bf16.mxu0 0
      %1824 = vmatpush2.bf16.msra.mxu0 0
      %1825 = vmatprep.subr.bf16.mxu0 0
      %1826 = vmatpush2.bf16.msra.mxu0 0
      %1827 = vmatprep.subr.bf16.mxu0 0
      %1828 = vmatpush2.bf16.msra.mxu0 0
      %1829 = vmatprep.mubr.bf16.mxu0 0
      %1830 = vmatmul.mubr.bf16.gmra.mxu0 %v1792
      %v1831 = vpop.f32.mrf.mxu0
      %v1832 = vadd.f32 %v1650, %v1831
      %v1833 = vpop.f32.mrf.mxu0
      %v1834 = vpop.f32.mrf.mxu0
      %v1835 = vpop.f32.mrf.mxu0
      %1836 = vdwg.mxu0
      %v1837 = vsel %vm1651, %v1694, -inf
      %1838 = vmax.xlane.f32.xlu0 %v1837
      %v1839 = vpop.xlane.xlu0 %1838
      %v1840 = vsel %vm1651, %v1740, -inf
      %1841 = vmax.xlane.f32.xlu0 %v1840
      %v1842 = vpop.xlane.xlu0 %1841
      %v1843 = vsel %vm1651, %v1786, -inf
      %1844 = vmax.xlane.f32.xlu0 %v1843
      %v1845 = vpop.xlane.xlu0 %1844
      %v1846 = vsel %vm1651, %v1832, -inf
      %1847 = vmax.xlane.f32.xlu0 %v1846
      %v1848 = vpop.xlane.xlu0 %1847
      %v1849 = vsub.f32 %v1694, %v1839
      %v1850 = vsub.f32 %v1740, %v1842
      %v1851 = vsub.f32 %v1786, %v1845
      %v1852 = vsub.f32 %v1832, %v1848
      %v1853 = vmul.f32 %v1849, 1.442695
      %v1854 = vpow.pop %v1853
      %v1855 = vmul.f32 %v1850, 1.442695
      %v1856 = vpow.pop %v1855
      %v1857 = vmul.f32 %v1851, 1.442695
      %v1858 = vpow.pop %v1857
      %v1859 = vmul.f32 %v1852, 1.442695
      %v1860 = vpow.pop %v1859
      %v1861 = vsel %vm1651, %v1854, 0.0
      %1862 = vadd.xlane.f32.xlu0 %v1861
      %v1863 = vpop.xlane.xlu0 %1862
      %v1864 = vsel %vm1651, %v1856, 0.0
      %1865 = vadd.xlane.f32.xlu0 %v1864
      %v1866 = vpop.xlane.xlu0 %1865
      %v1867 = vsel %vm1651, %v1858, 0.0
      %1868 = vadd.xlane.f32.xlu0 %v1867
      %v1869 = vpop.xlane.xlu0 %1868
      %v1870 = vsel %vm1651, %v1860, 0.0
      %1871 = vadd.xlane.f32.xlu0 %v1870
      %v1872 = vpop.xlane.xlu0 %1871
      %v1873 = vrcp.pop %v1863
      %v1874 = vrcp.pop %v1866
      %v1875 = vrcp.pop %v1869
      %v1876 = vrcp.pop %v1872
      %v1877 = vmul.f32 %v1854, %v1873
      %v1878 = vmul.f32 %v1856, %v1874
      %v1879 = vmul.f32 %v1858, %v1875
      %v1880 = vmul.f32 %v1860, %v1876
      %v1881 = vpack.c.bf16 %v1877, %v1877
      %v1882 = vpack.c.bf16 %v1878, %v1878
      %v1883 = vpack.c.bf16 %v1879, %v1879
      %v1884 = vpack.c.bf16 %v1880, %v1880
      %v1886 = vsel %vm1651, %v1550, 0
      %v1889 = vsel %vm1651, %v1881, 0
      %1891 = vmatprep.subr.bf16.mxu0 0
      %1892 = vmatpush1.bf16.xpose.msra.mxu0 0
      %1893 = vmatprep.subr.bf16.mxu0 0
      %1894 = vmatpush1.bf16.xpose.msra.mxu0 0
      %1895 = vmatprep.subr.bf16.mxu0 0
      %1896 = vmatpush1.bf16.xpose.msra.mxu0 0
      %1897 = vmatprep.subr.bf16.mxu0 0
      %1898 = vmatpush1.bf16.xpose.msra.mxu0 0
      %1899 = vmatprep.subr.bf16.mxu0 0
      %1900 = vmatpush1.bf16.xpose.msra.mxu0 0
      %1901 = vmatprep.subr.bf16.mxu0 0
      %1902 = vmatpush1.bf16.xpose.msra.mxu0 0
      %1903 = vmatprep.subr.bf16.mxu0 0
      %1904 = vmatpush1.bf16.xpose.msra.mxu0 0
      %1905 = vmatprep.subr.bf16.mxu0 0
      %1906 = vmatpush1.bf16.xpose.msra.mxu0 %v1889
      %1907 = vmatprep.subr.bf16.mxu0 0
      %1908 = vmatpush2.bf16.xpose.msra.mxu0 0
      %1909 = vmatprep.subr.bf16.mxu0 0
      %1910 = vmatpush2.bf16.xpose.msra.mxu0 0
      %1911 = vmatprep.subr.bf16.mxu0 0
      %1912 = vmatpush2.bf16.xpose.msra.mxu0 0
      %1913 = vmatprep.subr.bf16.mxu0 0
      %1914 = vmatpush2.bf16.xpose.msra.mxu0 0
      %1915 = vmatprep.subr.bf16.mxu0 0
      %1916 = vmatpush2.bf16.xpose.msra.mxu0 0
      %1917 = vmatprep.subr.bf16.mxu0 0
      %1918 = vmatpush2.bf16.xpose.msra.mxu0 0
      %1919 = vmatprep.subr.bf16.mxu0 0
      %1920 = vmatpush2.bf16.xpose.msra.mxu0 0
      %1921 = vmatprep.subr.bf16.mxu0 0
      %1922 = vmatpush2.bf16.xpose.msra.mxu0 0
      %1923 = vmatprep.mubr.bf16.mxu0 0
      %1924 = vmatmul.mubr.bf16.gmra.mxu0 %v1886
      %v1925 = vpop.f32.mrf.mxu0
      %v1926 = vadd.f32 0.0, %v1925
      %v1927 = vpop.f32.mrf.mxu0
      %v1928 = vpop.f32.mrf.mxu0
      %v1929 = vpop.f32.mrf.mxu0
      %1930 = vdwg.mxu0
      %v1932 = vsel %vm1651, %v1551, 0
      %v1935 = vsel %vm1651, %v1882, 0
      %1937 = vmatprep.subr.bf16.mxu0 0
      %1938 = vmatpush1.bf16.xpose.msra.mxu0 0
      %1939 = vmatprep.subr.bf16.mxu0 0
      %1940 = vmatpush1.bf16.xpose.msra.mxu0 0
      %1941 = vmatprep.subr.bf16.mxu0 0
      %1942 = vmatpush1.bf16.xpose.msra.mxu0 0
      %1943 = vmatprep.subr.bf16.mxu0 0
      %1944 = vmatpush1.bf16.xpose.msra.mxu0 0
      %1945 = vmatprep.subr.bf16.mxu0 0
      %1946 = vmatpush1.bf16.xpose.msra.mxu0 0
      %1947 = vmatprep.subr.bf16.mxu0 0
      %1948 = vmatpush1.bf16.xpose.msra.mxu0 0
      %1949 = vmatprep.subr.bf16.mxu0 0
      %1950 = vmatpush1.bf16.xpose.msra.mxu0 0
      %1951 = vmatprep.subr.bf16.mxu0 0
      %1952 = vmatpush1.bf16.xpose.msra.mxu0 %v1935
      %1953 = vmatprep.subr.bf16.mxu0 0
      %1954 = vmatpush2.bf16.xpose.msra.mxu0 0
      %1955 = vmatprep.subr.bf16.mxu0 0
      %1956 = vmatpush2.bf16.xpose.msra.mxu0 0
      %1957 = vmatprep.subr.bf16.mxu0 0
      %1958 = vmatpush2.bf16.xpose.msra.mxu0 0
      %1959 = vmatprep.subr.bf16.mxu0 0
      %1960 = vmatpush2.bf16.xpose.msra.mxu0 0
      %1961 = vmatprep.subr.bf16.mxu0 0
      %1962 = vmatpush2.bf16.xpose.msra.mxu0 0
      %1963 = vmatprep.subr.bf16.mxu0 0
      %1964 = vmatpush2.bf16.xpose.msra.mxu0 0
      %1965 = vmatprep.subr.bf16.mxu0 0
      %1966 = vmatpush2.bf16.xpose.msra.mxu0 0
      %1967 = vmatprep.subr.bf16.mxu0 0
      %1968 = vmatpush2.bf16.xpose.msra.mxu0 0
      %1969 = vmatprep.mubr.bf16.mxu0 0
      %1970 = vmatmul.mubr.bf16.gmra.mxu0 %v1932
      %v1971 = vpop.f32.mrf.mxu0
      %v1972 = vadd.f32 0.0, %v1971
      %v1973 = vpop.f32.mrf.mxu0
      %v1974 = vpop.f32.mrf.mxu0
      %v1975 = vpop.f32.mrf.mxu0
      %1976 = vdwg.mxu0
      %v1978 = vsel %vm1651, %v1552, 0
      %v1981 = vsel %vm1651, %v1883, 0
      %1983 = vmatprep.subr.bf16.mxu0 0
      %1984 = vmatpush1.bf16.xpose.msra.mxu0 0
      %1985 = vmatprep.subr.bf16.mxu0 0
      %1986 = vmatpush1.bf16.xpose.msra.mxu0 0
      %1987 = vmatprep.subr.bf16.mxu0 0
      %1988 = vmatpush1.bf16.xpose.msra.mxu0 0
      %1989 = vmatprep.subr.bf16.mxu0 0
      %1990 = vmatpush1.bf16.xpose.msra.mxu0 0
      %1991 = vmatprep.subr.bf16.mxu0 0
      %1992 = vmatpush1.bf16.xpose.msra.mxu0 0
      %1993 = vmatprep.subr.bf16.mxu0 0
      %1994 = vmatpush1.bf16.xpose.msra.mxu0 0
      %1995 = vmatprep.subr.bf16.mxu0 0
      %1996 = vmatpush1.bf16.xpose.msra.mxu0 0
      %1997 = vmatprep.subr.bf16.mxu0 0
      %1998 = vmatpush1.bf16.xpose.msra.mxu0 %v1981
      %1999 = vmatprep.subr.bf16.mxu0 0
      %2000 = vmatpush2.bf16.xpose.msra.mxu0 0
      %2001 = vmatprep.subr.bf16.mxu0 0
      %2002 = vmatpush2.bf16.xpose.msra.mxu0 0
      %2003 = vmatprep.subr.bf16.mxu0 0
      %2004 = vmatpush2.bf16.xpose.msra.mxu0 0
      %2005 = vmatprep.subr.bf16.mxu0 0
      %2006 = vmatpush2.bf16.xpose.msra.mxu0 0
      %2007 = vmatprep.subr.bf16.mxu0 0
      %2008 = vmatpush2.bf16.xpose.msra.mxu0 0
      %2009 = vmatprep.subr.bf16.mxu0 0
      %2010 = vmatpush2.bf16.xpose.msra.mxu0 0
      %2011 = vmatprep.subr.bf16.mxu0 0
      %2012 = vmatpush2.bf16.xpose.msra.mxu0 0
      %2013 = vmatprep.subr.bf16.mxu0 0
      %2014 = vmatpush2.bf16.xpose.msra.mxu0 0
      %2015 = vmatprep.mubr.bf16.mxu0 0
      %2016 = vmatmul.mubr.bf16.gmra.mxu0 %v1978
      %v2017 = vpop.f32.mrf.mxu0
      %v2018 = vadd.f32 0.0, %v2017
      %v2019 = vpop.f32.mrf.mxu0
      %v2020 = vpop.f32.mrf.mxu0
      %v2021 = vpop.f32.mrf.mxu0
      %2022 = vdwg.mxu0
      %v2024 = vsel %vm1651, %v1553, 0
      %v2027 = vsel %vm1651, %v1884, 0
      %2029 = vmatprep.subr.bf16.mxu0 0
      %2030 = vmatpush1.bf16.xpose.msra.mxu0 0
      %2031 = vmatprep.subr.bf16.mxu0 0
      %2032 = vmatpush1.bf16.xpose.msra.mxu0 0
      %2033 = vmatprep.subr.bf16.mxu0 0
      %2034 = vmatpush1.bf16.xpose.msra.mxu0 0
      %2035 = vmatprep.subr.bf16.mxu0 0
      %2036 = vmatpush1.bf16.xpose.msra.mxu0 0
      %2037 = vmatprep.subr.bf16.mxu0 0
      %2038 = vmatpush1.bf16.xpose.msra.mxu0 0
      %2039 = vmatprep.subr.bf16.mxu0 0
      %2040 = vmatpush1.bf16.xpose.msra.mxu0 0
      %2041 = vmatprep.subr.bf16.mxu0 0
      %2042 = vmatpush1.bf16.xpose.msra.mxu0 0
      %2043 = vmatprep.subr.bf16.mxu0 0
      %2044 = vmatpush1.bf16.xpose.msra.mxu0 %v2027
      %2045 = vmatprep.subr.bf16.mxu0 0
      %2046 = vmatpush2.bf16.xpose.msra.mxu0 0
      %2047 = vmatprep.subr.bf16.mxu0 0
      %2048 = vmatpush2.bf16.xpose.msra.mxu0 0
      %2049 = vmatprep.subr.bf16.mxu0 0
      %2050 = vmatpush2.bf16.xpose.msra.mxu0 0
      %2051 = vmatprep.subr.bf16.mxu0 0
      %2052 = vmatpush2.bf16.xpose.msra.mxu0 0
      %2053 = vmatprep.subr.bf16.mxu0 0
      %2054 = vmatpush2.bf16.xpose.msra.mxu0 0
      %2055 = vmatprep.subr.bf16.mxu0 0
      %2056 = vmatpush2.bf16.xpose.msra.mxu0 0
      %2057 = vmatprep.subr.bf16.mxu0 0
      %2058 = vmatpush2.bf16.xpose.msra.mxu0 0
      %2059 = vmatprep.subr.bf16.mxu0 0
      %2060 = vmatpush2.bf16.xpose.msra.mxu0 0
      %2061 = vmatprep.mubr.bf16.mxu0 0
      %2062 = vmatmul.mubr.bf16.gmra.mxu0 %v2024
      %v2063 = vpop.f32.mrf.mxu0
      %v2064 = vadd.f32 0.0, %v2063
      %v2065 = vpop.f32.mrf.mxu0
      %v2066 = vpop.f32.mrf.mxu0
      %v2067 = vpop.f32.mrf.mxu0
      %2068 = vdwg.mxu0
      %v2069 = vpack.c.bf16 %v1972, %v1926
      %v2070 = vpack.c.bf16 %v2064, %v2018
      %2072 = vset.pattern.permute.xlu0 0
      %2073 = vperm.xlu0 %2072, %v1558
      %v2074 = vpop.permute.xlu0 %2073
      %2077 = vset.pattern.permute.xlu0 0
      %2078 = vperm.xlu0 %2077, %v1559
      %v2079 = vpop.permute.xlu0 %2078
      %2082 = vset.pattern.permute.xlu0 0
      %2083 = vperm.xlu0 %2082, %v1560
      %v2084 = vpop.permute.xlu0 %2083
      %2087 = vset.pattern.permute.xlu0 0
      %2088 = vperm.xlu0 %2087, %v1561
      %v2089 = vpop.permute.xlu0 %2088
      %v2095 = vunpack.c.l.b16 %v1554
      %v2096 = vunpack.c.l.b16 %v1555
      %v2097 = vunpack.c.l.b16 %v1556
      %v2098 = vunpack.c.l.b16 %v1557
      %v2099 = vpack.c.b16 %v2096, %v2095
      %v2100 = vpack.c.b16 %v2098, %v2097
      %v2102 = vsel %vm1490, %v2099, 0
      %v2105 = vsel %vm1490, %v2100, 0
      %2107 = vmatprep.subr.bf16.mxu0 0
      %2108 = vmatpush1.bf16.msra.mxu0 0
      %2109 = vmatprep.subr.bf16.mxu0 0
      %2110 = vmatpush1.bf16.msra.mxu0 0
      %2111 = vmatprep.subr.bf16.mxu0 0
      %2112 = vmatpush1.bf16.msra.mxu0 0
      %2113 = vmatprep.subr.bf16.mxu0 0
      %2114 = vmatpush1.bf16.msra.mxu0 0
      %2115 = vmatprep.subr.bf16.mxu0 0
      %2116 = vmatpush1.bf16.msra.mxu0 0
      %2117 = vmatprep.subr.bf16.mxu0 0
      %2118 = vmatpush1.bf16.msra.mxu0 0
      %2119 = vmatprep.subr.bf16.mxu0 0
      %2120 = vmatpush1.bf16.msra.mxu0 %v2070
      %2121 = vmatprep.subr.bf16.mxu0 0
      %2122 = vmatpush1.bf16.msra.mxu0 %v2069
      %2123 = vmatprep.subr.bf16.mxu0 0
      %2124 = vmatpush2.bf16.msra.mxu0 0
      %2125 = vmatprep.subr.bf16.mxu0 0
      %2126 = vmatpush2.bf16.msra.mxu0 0
      %2127 = vmatprep.subr.bf16.mxu0 0
      %2128 = vmatpush2.bf16.msra.mxu0 0
      %2129 = vmatprep.subr.bf16.mxu0 0
      %2130 = vmatpush2.bf16.msra.mxu0 0
      %2131 = vmatprep.subr.bf16.mxu0 0
      %2132 = vmatpush2.bf16.msra.mxu0 0
      %2133 = vmatprep.subr.bf16.mxu0 0
      %2134 = vmatpush2.bf16.msra.mxu0 0
      %2135 = vmatprep.subr.bf16.mxu0 0
      %2136 = vmatpush2.bf16.msra.mxu0 0
      %2137 = vmatprep.subr.bf16.mxu0 0
      %2138 = vmatpush2.bf16.msra.mxu0 0
      %2139 = vmatprep.mubr.bf16.mxu0 0
      %2140 = vmatmul.mubr.bf16.gmra.mxu0 %v2102
      %v2141 = vpop.f32.mrf.mxu0
      %v2142 = vadd.f32 %v2074, %v2141
      %v2143 = vpop.f32.mrf.mxu0
      %v2144 = vpop.f32.mrf.mxu0
      %v2145 = vadd.f32 %v2079, %v2144
      %v2146 = vpop.f32.mrf.mxu0
      %2147 = vmatprep.mubr.bf16.mxu0 0
      %2148 = vmatmul.mubr.bf16.gmra.mxu0 %v2105
      %v2149 = vpop.f32.mrf.mxu0
      %v2150 = vadd.f32 %v2084, %v2149
      %v2151 = vpop.f32.mrf.mxu0
      %v2152 = vpop.f32.mrf.mxu0
      %v2153 = vadd.f32 %v2089, %v2152
      %v2154 = vpop.f32.mrf.mxu0
      %2155 = vdwg.mxu0
      %v2156 = vadd.f32 %v1446, %v2142
      %v2157 = vadd.f32 %v1447, %v2145
      %v2158 = vadd.f32 %v1448, %v2150
      %v2159 = vadd.f32 %v1449, %v2153
      %v2160 = vld [vmem:[%s23] sm:$0xff]
      %v2161 = vld [vmem:[%s23 + $0x8] sm:$0xff]
      %v2162 = vld [vmem:[%s23 + $0x10] sm:$0xff]
      %v2163 = vld [vmem:[%s23 + $0x18] sm:$0xff]
      %v2164 = vld [vmem:[%s25] sm:$0xff]
      %v2165 = vld [vmem:[%s25 + $0x8] sm:$0xff]
      %v2166 = vld [vmem:[%s25 + $0x10] sm:$0xff]
      %v2167 = vld [vmem:[%s25 + $0x18] sm:$0xff]
      %v2168 = vsel %vm1651, %v2156, 0.0
      %v2169 = vsel %vm1651, %v2157, 0.0
      %v2170 = vadd.f32 %v2168, %v2169
      %v2171 = vsel %vm1651, %v2158, 0.0
      %v2172 = vadd.f32 %v2170, %v2171
      %v2173 = vsel %vm1651, %v2159, 0.0
      %v2174 = vadd.f32 %v2172, %v2173
      %v2175 = vrot.slane %v2174, 4
      %v2176 = vadd.f32 %v2174, %v2175
      %v2177 = vrot.slane %v2176, 2
      %v2178 = vadd.f32 %v2176, %v2177
      %v2179 = vrot.slane %v2178, 1
      %v2180 = vadd.f32 %v2178, %v2179
      %v2181 = vmul.f32 %v2180, 0.03125
      %v2182 = vmul.f32 %v2156, %v2156
      %v2183 = vmul.f32 %v2157, %v2157
      %v2184 = vmul.f32 %v2158, %v2158
      %v2185 = vmul.f32 %v2159, %v2159
      %v2186 = vsel %vm1651, %v2182, 0.0
      %v2187 = vsel %vm1651, %v2183, 0.0
      %v2188 = vadd.f32 %v2186, %v2187
      %v2189 = vsel %vm1651, %v2184, 0.0
      %v2190 = vadd.f32 %v2188, %v2189
      %v2191 = vsel %vm1651, %v2185, 0.0
      %v2192 = vadd.f32 %v2190, %v2191
      %v2193 = vrot.slane %v2192, 4
      %v2194 = vadd.f32 %v2192, %v2193
      %v2195 = vrot.slane %v2194, 2
      %v2196 = vadd.f32 %v2194, %v2195
      %v2197 = vrot.slane %v2196, 1
      %v2198 = vadd.f32 %v2196, %v2197
      %v2199 = vmul.f32 %v2198, 0.03125
      %v2200 = vmul.f32 %v2181, %v2181
      %v2201 = vsub.f32 %v2199, %v2200
      %v2202 = vsub.f32 %v2156, %v2181
      %v2203 = vsub.f32 %v2157, %v2181
      %v2204 = vsub.f32 %v2158, %v2181
      %v2205 = vsub.f32 %v2159, %v2181
      %v2206 = vadd.f32 %v2201, 1e-05
      %v2207 = vrsqrt.pop %v2206
      %v2208 = vmul.f32 %v2202, %v2207
      %v2209 = vmul.f32 %v2203, %v2207
      %v2210 = vmul.f32 %v2204, %v2207
      %v2211 = vmul.f32 %v2205, %v2207
      %2213 = vset.pattern.permute.xlu0 0
      %2214 = vperm.xlu0 %2213, %v2160
      %v2215 = vpop.permute.xlu0 %2214
      %2218 = vset.pattern.permute.xlu0 0
      %2219 = vperm.xlu0 %2218, %v2161
      %v2220 = vpop.permute.xlu0 %2219
      %2223 = vset.pattern.permute.xlu0 0
      %2224 = vperm.xlu0 %2223, %v2162
      %v2225 = vpop.permute.xlu0 %2224
      %2228 = vset.pattern.permute.xlu0 0
      %2229 = vperm.xlu0 %2228, %v2163
      %v2230 = vpop.permute.xlu0 %2229
      %v2232 = vmul.f32 %v2208, %v2215
      %v2233 = vmul.f32 %v2209, %v2220
      %v2234 = vmul.f32 %v2210, %v2225
      %v2235 = vmul.f32 %v2211, %v2230
      %2237 = vset.pattern.permute.xlu0 0
      %2238 = vperm.xlu0 %2237, %v2164
      %v2239 = vpop.permute.xlu0 %2238
      %2242 = vset.pattern.permute.xlu0 0
      %2243 = vperm.xlu0 %2242, %v2165
      %v2244 = vpop.permute.xlu0 %2243
      %2247 = vset.pattern.permute.xlu0 0
      %2248 = vperm.xlu0 %2247, %v2166
      %v2249 = vpop.permute.xlu0 %2248
      %2252 = vset.pattern.permute.xlu0 0
      %2253 = vperm.xlu0 %2252, %v2167
      %v2254 = vpop.permute.xlu0 %2253
      %v2256 = vadd.f32 %v2232, %v2239
      %v2257 = vadd.f32 %v2233, %v2244
      %v2258 = vadd.f32 %v2234, %v2249
      %v2259 = vadd.f32 %v2235, %v2254
      %v2260 = vld [vmem:[%s27] sm:$0xf]
      %v2261 = vld [vmem:[%s27 + $0x4] sm:$0xf]
      %v2262 = vld [vmem:[%s27 + $0x8] sm:$0xf]
      %v2263 = vld [vmem:[%s27 + $0xc] sm:$0xf]
      %v2264 = vpack.c.bf16 %v2257, %v2256
      %v2265 = vpack.c.bf16 %v2259, %v2258
      %v2266 = vld [vmem:[%s29] sm:$0xff]
      %v2267 = vld [vmem:[%s29 + $0x8] sm:$0xff]
      %v2268 = vld [vmem:[%s29 + $0x10] sm:$0xff]
      %v2269 = vld [vmem:[%s29 + $0x18] sm:$0xff]
      %2271 = vset.pattern.permute.xlu0 0
      %2272 = vperm.xlu0 %2271, %v2266
      %v2273 = vpop.permute.xlu0 %2272
      %2276 = vset.pattern.permute.xlu0 0
      %2277 = vperm.xlu0 %2276, %v2267
      %v2278 = vpop.permute.xlu0 %2277
      %2281 = vset.pattern.permute.xlu0 0
      %2282 = vperm.xlu0 %2281, %v2268
      %v2283 = vpop.permute.xlu0 %2282
      %2286 = vset.pattern.permute.xlu0 0
      %2287 = vperm.xlu0 %2286, %v2269
      %v2288 = vpop.permute.xlu0 %2287
      %v2294 = vunpack.c.l.b16 %v2260
      %v2295 = vunpack.c.l.b16 %v2261
      %v2296 = vunpack.c.l.b16 %v2262
      %v2297 = vunpack.c.l.b16 %v2263
      %v2298 = vpack.c.b16 %v2295, %v2294
      %v2299 = vpack.c.b16 %v2297, %v2296
      %v2301 = vsel %vm1490, %v2298, 0
      %v2304 = vsel %vm1490, %v2299, 0
      %2306 = vmatprep.subr.bf16.mxu0 0
      %2307 = vmatpush1.bf16.msra.mxu0 0
      %2308 = vmatprep.subr.bf16.mxu0 0
      %2309 = vmatpush1.bf16.msra.mxu0 0
      %2310 = vmatprep.subr.bf16.mxu0 0
      %2311 = vmatpush1.bf16.msra.mxu0 0
      %2312 = vmatprep.subr.bf16.mxu0 0
      %2313 = vmatpush1.bf16.msra.mxu0 0
      %2314 = vmatprep.subr.bf16.mxu0 0
      %2315 = vmatpush1.bf16.msra.mxu0 0
      %2316 = vmatprep.subr.bf16.mxu0 0
      %2317 = vmatpush1.bf16.msra.mxu0 0
      %2318 = vmatprep.subr.bf16.mxu0 0
      %2319 = vmatpush1.bf16.msra.mxu0 %v2265
      %2320 = vmatprep.subr.bf16.mxu0 0
      %2321 = vmatpush1.bf16.msra.mxu0 %v2264
      %2322 = vmatprep.subr.bf16.mxu0 0
      %2323 = vmatpush2.bf16.msra.mxu0 0
      %2324 = vmatprep.subr.bf16.mxu0 0
      %2325 = vmatpush2.bf16.msra.mxu0 0
      %2326 = vmatprep.subr.bf16.mxu0 0
      %2327 = vmatpush2.bf16.msra.mxu0 0
      %2328 = vmatprep.subr.bf16.mxu0 0
      %2329 = vmatpush2.bf16.msra.mxu0 0
      %2330 = vmatprep.subr.bf16.mxu0 0
      %2331 = vmatpush2.bf16.msra.mxu0 0
      %2332 = vmatprep.subr.bf16.mxu0 0
      %2333 = vmatpush2.bf16.msra.mxu0 0
      %2334 = vmatprep.subr.bf16.mxu0 0
      %2335 = vmatpush2.bf16.msra.mxu0 0
      %2336 = vmatprep.subr.bf16.mxu0 0
      %2337 = vmatpush2.bf16.msra.mxu0 0
      %2338 = vmatprep.mubr.bf16.mxu0 0
      %2339 = vmatmul.mubr.bf16.gmra.mxu0 %v2301
      %v2340 = vpop.f32.mrf.mxu0
      %v2341 = vadd.f32 %v2273, %v2340
      %v2342 = vpop.f32.mrf.mxu0
      %v2343 = vpop.f32.mrf.mxu0
      %v2344 = vadd.f32 %v2278, %v2343
      %v2345 = vpop.f32.mrf.mxu0
      %2346 = vmatprep.mubr.bf16.mxu0 0
      %2347 = vmatmul.mubr.bf16.gmra.mxu0 %v2304
      %v2348 = vpop.f32.mrf.mxu0
      %v2349 = vadd.f32 %v2283, %v2348
      %v2350 = vpop.f32.mrf.mxu0
      %v2351 = vpop.f32.mrf.mxu0
      %v2352 = vadd.f32 %v2288, %v2351
      %v2353 = vpop.f32.mrf.mxu0
      %2354 = vdwg.mxu0
      %v2355 = vld [vmem:[#allocation4] sm:$0xf]
      %v2356 = vld [vmem:[#allocation4 + $0x4] sm:$0xf]
      %v2357 = vld [vmem:[#allocation4 + $0x8] sm:$0xf]
      %v2358 = vld [vmem:[#allocation4 + $0xc] sm:$0xf]
      %v2359 = vld [vmem:[#allocation5] sm:$0xf]
      %v2360 = vld [vmem:[#allocation5 + $0x4] sm:$0xf]
      %v2361 = vld [vmem:[#allocation5 + $0x8] sm:$0xf]
      %v2362 = vld [vmem:[#allocation5 + $0xc] sm:$0xf]
      %v2363 = vld [vmem:[%s39] sm:$0xf]
      %v2364 = vld [vmem:[%s39 + $0x4] sm:$0xf]
      %v2365 = vld [vmem:[%s39 + $0x8] sm:$0xf]
      %v2366 = vld [vmem:[%s39 + $0xc] sm:$0xf]
      %v2367 = vld [vmem:[%s41] sm:$0xff]
      %v2368 = vld [vmem:[%s41 + $0x8] sm:$0xff]
      %v2369 = vld [vmem:[%s41 + $0x10] sm:$0xff]
      %v2370 = vld [vmem:[%s41 + $0x18] sm:$0xff]
      %v2371 = vpack.c.bf16 %v2344, %v2341
      %v2372 = vpack.c.bf16 %v2352, %v2349
      %v2375 = vunpack.c.l.b16 %v2371
      %v2376 = vunpack.c.h.b16 %v2371
      %v2377 = vunpack.c.l.b16 %v2372
      %v2378 = vunpack.c.h.b16 %v2372
      %v2379 = vpack.c.b16 %v2375, %v2375
      %v2380 = vpack.c.b16 %v2376, %v2376
      %v2381 = vpack.c.b16 %v2377, %v2377
      %v2382 = vpack.c.b16 %v2378, %v2378
      %2387 = vxpose.xlu0.c.b16.start [1/8] %v2379, 128
      %2388 = vxpose.xlu0.c.b16.cont [2/8] 0, 128
      %2389 = vxpose.xlu0.c.b16.cont [3/8] 0, 128
      %2390 = vxpose.xlu0.c.b16.cont [4/8] 0, 128
      %2391 = vxpose.xlu0.c.b16.cont [5/8] 0, 128
      %2392 = vxpose.xlu0.c.b16.cont [6/8] 0, 128
      %2393 = vxpose.xlu0.c.b16.cont [7/8] 0, 128
      %2394 = vxpose.xlu0.c.b16.end [8/8] 0, 128
      %v2395 = vpop.trf.xlu0
      %v2396 = vpop.trf.xlu0
      %v2397 = vpop.trf.xlu0
      %v2398 = vpop.trf.xlu0
      %v2399 = vpop.trf.xlu0
      %v2400 = vpop.trf.xlu0
      %v2401 = vpop.trf.xlu0
      %v2402 = vpop.trf.xlu0
      %2403 = vxpose.xlu0.c.b16.start [1/8] %v2380, 128
      %2404 = vxpose.xlu0.c.b16.cont [2/8] 0, 128
      %2405 = vxpose.xlu0.c.b16.cont [3/8] 0, 128
      %2406 = vxpose.xlu0.c.b16.cont [4/8] 0, 128
      %2407 = vxpose.xlu0.c.b16.cont [5/8] 0, 128
      %2408 = vxpose.xlu0.c.b16.cont [6/8] 0, 128
      %2409 = vxpose.xlu0.c.b16.cont [7/8] 0, 128
      %2410 = vxpose.xlu0.c.b16.end [8/8] 0, 128
      %v2411 = vpop.trf.xlu0
      %v2412 = vpop.trf.xlu0
      %v2413 = vpop.trf.xlu0
      %v2414 = vpop.trf.xlu0
      %v2415 = vpop.trf.xlu0
      %v2416 = vpop.trf.xlu0
      %v2417 = vpop.trf.xlu0
      %v2418 = vpop.trf.xlu0
      %2419 = vxpose.xlu0.c.b16.start [1/8] %v2381, 128
      %2420 = vxpose.xlu0.c.b16.cont [2/8] 0, 128
      %2421 = vxpose.xlu0.c.b16.cont [3/8] 0, 128
      %2422 = vxpose.xlu0.c.b16.cont [4/8] 0, 128
      %2423 = vxpose.xlu0.c.b16.cont [5/8] 0, 128
      %2424 = vxpose.xlu0.c.b16.cont [6/8] 0, 128
      %2425 = vxpose.xlu0.c.b16.cont [7/8] 0, 128
      %2426 = vxpose.xlu0.c.b16.end [8/8] 0, 128
      %v2427 = vpop.trf.xlu0
      %v2428 = vpop.trf.xlu0
      %v2429 = vpop.trf.xlu0
      %v2430 = vpop.trf.xlu0
      %v2431 = vpop.trf.xlu0
      %v2432 = vpop.trf.xlu0
      %v2433 = vpop.trf.xlu0
      %v2434 = vpop.trf.xlu0
      %2435 = vxpose.xlu0.c.b16.start [1/8] %v2382, 128
      %2436 = vxpose.xlu0.c.b16.cont [2/8] 0, 128
      %2437 = vxpose.xlu0.c.b16.cont [3/8] 0, 128
      %2438 = vxpose.xlu0.c.b16.cont [4/8] 0, 128
      %2439 = vxpose.xlu0.c.b16.cont [5/8] 0, 128
      %2440 = vxpose.xlu0.c.b16.cont [6/8] 0, 128
      %2441 = vxpose.xlu0.c.b16.cont [7/8] 0, 128
      %2442 = vxpose.xlu0.c.b16.end [8/8] 0, 128
      %v2443 = vpop.trf.xlu0
      %v2444 = vpop.trf.xlu0
      %v2445 = vpop.trf.xlu0
      %v2446 = vpop.trf.xlu0
      %v2447 = vpop.trf.xlu0
      %v2448 = vpop.trf.xlu0
      %v2449 = vpop.trf.xlu0
      %v2450 = vpop.trf.xlu0
      %v2452 = vsel %vm1651, %v2395, 0
      %v2455 = vsel %vm1655, %v2355, 0
      %2457 = vmatprep.subr.bf16.mxu0 0
      %2458 = vmatpush1.bf16.msra.mxu0 0
      %2459 = vmatprep.subr.bf16.mxu0 0
      %2460 = vmatpush1.bf16.msra.mxu0 0
      %2461 = vmatprep.subr.bf16.mxu0 0
      %2462 = vmatpush1.bf16.msra.mxu0 0
      %2463 = vmatprep.subr.bf16.mxu0 0
      %2464 = vmatpush1.bf16.msra.mxu0 0
      %2465 = vmatprep.subr.bf16.mxu0 0
      %2466 = vmatpush1.bf16.msra.mxu0 0
      %2467 = vmatprep.subr.bf16.mxu0 0
      %2468 = vmatpush1.bf16.msra.mxu0 0
      %2469 = vmatprep.subr.bf16.mxu0 0
      %2470 = vmatpush1.bf16.msra.mxu0 0
      %2471 = vmatprep.subr.bf16.mxu0 0
      %2472 = vmatpush1.bf16.msra.mxu0 %v2455
      %2473 = vmatprep.subr.bf16.mxu0 0
      %2474 = vmatpush2.bf16.msra.mxu0 0
      %2475 = vmatprep.subr.bf16.mxu0 0
      %2476 = vmatpush2.bf16.msra.mxu0 0
      %2477 = vmatprep.subr.bf16.mxu0 0
      %2478 = vmatpush2.bf16.msra.mxu0 0
      %2479 = vmatprep.subr.bf16.mxu0 0
      %2480 = vmatpush2.bf16.msra.mxu0 0
      %2481 = vmatprep.subr.bf16.mxu0 0
      %2482 = vmatpush2.bf16.msra.mxu0 0
      %2483 = vmatprep.subr.bf16.mxu0 0
      %2484 = vmatpush2.bf16.msra.mxu0 0
      %2485 = vmatprep.subr.bf16.mxu0 0
      %2486 = vmatpush2.bf16.msra.mxu0 0
      %2487 = vmatprep.subr.bf16.mxu0 0
      %2488 = vmatpush2.bf16.msra.mxu0 0
      %2489 = vmatprep.mubr.bf16.mxu0 0
      %2490 = vmatmul.mubr.bf16.gmra.mxu0 %v2452
      %v2491 = vpop.f32.mrf.mxu0
      %v2492 = vadd.f32 0.0, %v2491
      %v2493 = vpop.f32.mrf.mxu0
      %v2494 = vpop.f32.mrf.mxu0
      %v2495 = vpop.f32.mrf.mxu0
      %2496 = vdwg.mxu0
      %v2498 = vsel %vm1651, %v2411, 0
      %v2501 = vsel %vm1655, %v2356, 0
      %2503 = vmatprep.subr.bf16.mxu0 0
      %2504 = vmatpush1.bf16.msra.mxu0 0
      %2505 = vmatprep.subr.bf16.mxu0 0
      %2506 = vmatpush1.bf16.msra.mxu0 0
      %2507 = vmatprep.subr.bf16.mxu0 0
      %2508 = vmatpush1.bf16.msra.mxu0 0
      %2509 = vmatprep.subr.bf16.mxu0 0
      %2510 = vmatpush1.bf16.msra.mxu0 0
      %2511 = vmatprep.subr.bf16.mxu0 0
      %2512 = vmatpush1.bf16.msra.mxu0 0
      %2513 = vmatprep.subr.bf16.mxu0 0
      %2514 = vmatpush1.bf16.msra.mxu0 0
      %2515 = vmatprep.subr.bf16.mxu0 0
      %2516 = vmatpush1.bf16.msra.mxu0 0
      %2517 = vmatprep.subr.bf16.mxu0 0
      %2518 = vmatpush1.bf16.msra.mxu0 %v2501
      %2519 = vmatprep.subr.bf16.mxu0 0
      %2520 = vmatpush2.bf16.msra.mxu0 0
      %2521 = vmatprep.subr.bf16.mxu0 0
      %2522 = vmatpush2.bf16.msra.mxu0 0
      %2523 = vmatprep.subr.bf16.mxu0 0
      %2524 = vmatpush2.bf16.msra.mxu0 0
      %2525 = vmatprep.subr.bf16.mxu0 0
      %2526 = vmatpush2.bf16.msra.mxu0 0
      %2527 = vmatprep.subr.bf16.mxu0 0
      %2528 = vmatpush2.bf16.msra.mxu0 0
      %2529 = vmatprep.subr.bf16.mxu0 0
      %2530 = vmatpush2.bf16.msra.mxu0 0
      %2531 = vmatprep.subr.bf16.mxu0 0
      %2532 = vmatpush2.bf16.msra.mxu0 0
      %2533 = vmatprep.subr.bf16.mxu0 0
      %2534 = vmatpush2.bf16.msra.mxu0 0
      %2535 = vmatprep.mubr.bf16.mxu0 0
      %2536 = vmatmul.mubr.bf16.gmra.mxu0 %v2498
      %v2537 = vpop.f32.mrf.mxu0
      %v2538 = vadd.f32 0.0, %v2537
      %v2539 = vpop.f32.mrf.mxu0
      %v2540 = vpop.f32.mrf.mxu0
      %v2541 = vpop.f32.mrf.mxu0
      %2542 = vdwg.mxu0
      %v2544 = vsel %vm1651, %v2427, 0
      %v2547 = vsel %vm1655, %v2357, 0
      %2549 = vmatprep.subr.bf16.mxu0 0
      %2550 = vmatpush1.bf16.msra.mxu0 0
      %2551 = vmatprep.subr.bf16.mxu0 0
      %2552 = vmatpush1.bf16.msra.mxu0 0
      %2553 = vmatprep.subr.bf16.mxu0 0
      %2554 = vmatpush1.bf16.msra.mxu0 0
      %2555 = vmatprep.subr.bf16.mxu0 0
      %2556 = vmatpush1.bf16.msra.mxu0 0
      %2557 = vmatprep.subr.bf16.mxu0 0
      %2558 = vmatpush1.bf16.msra.mxu0 0
      %2559 = vmatprep.subr.bf16.mxu0 0
      %2560 = vmatpush1.bf16.msra.mxu0 0
      %2561 = vmatprep.subr.bf16.mxu0 0
      %2562 = vmatpush1.bf16.msra.mxu0 0
      %2563 = vmatprep.subr.bf16.mxu0 0
      %2564 = vmatpush1.bf16.msra.mxu0 %v2547
      %2565 = vmatprep.subr.bf16.mxu0 0
      %2566 = vmatpush2.bf16.msra.mxu0 0
      %2567 = vmatprep.subr.bf16.mxu0 0
      %2568 = vmatpush2.bf16.msra.mxu0 0
      %2569 = vmatprep.subr.bf16.mxu0 0
      %2570 = vmatpush2.bf16.msra.mxu0 0
      %2571 = vmatprep.subr.bf16.mxu0 0
      %2572 = vmatpush2.bf16.msra.mxu0 0
      %2573 = vmatprep.subr.bf16.mxu0 0
      %2574 = vmatpush2.bf16.msra.mxu0 0
      %2575 = vmatprep.subr.bf16.mxu0 0
      %2576 = vmatpush2.bf16.msra.mxu0 0
      %2577 = vmatprep.subr.bf16.mxu0 0
      %2578 = vmatpush2.bf16.msra.mxu0 0
      %2579 = vmatprep.subr.bf16.mxu0 0
      %2580 = vmatpush2.bf16.msra.mxu0 0
      %2581 = vmatprep.mubr.bf16.mxu0 0
      %2582 = vmatmul.mubr.bf16.gmra.mxu0 %v2544
      %v2583 = vpop.f32.mrf.mxu0
      %v2584 = vadd.f32 0.0, %v2583
      %v2585 = vpop.f32.mrf.mxu0
      %v2586 = vpop.f32.mrf.mxu0
      %v2587 = vpop.f32.mrf.mxu0
      %2588 = vdwg.mxu0
      %v2590 = vsel %vm1651, %v2443, 0
      %v2593 = vsel %vm1655, %v2358, 0
      %2595 = vmatprep.subr.bf16.mxu0 0
      %2596 = vmatpush1.bf16.msra.mxu0 0
      %2597 = vmatprep.subr.bf16.mxu0 0
      %2598 = vmatpush1.bf16.msra.mxu0 0
      %2599 = vmatprep.subr.bf16.mxu0 0
      %2600 = vmatpush1.bf16.msra.mxu0 0
      %2601 = vmatprep.subr.bf16.mxu0 0
      %2602 = vmatpush1.bf16.msra.mxu0 0
      %2603 = vmatprep.subr.bf16.mxu0 0
      %2604 = vmatpush1.bf16.msra.mxu0 0
      %2605 = vmatprep.subr.bf16.mxu0 0
      %2606 = vmatpush1.bf16.msra.mxu0 0
      %2607 = vmatprep.subr.bf16.mxu0 0
      %2608 = vmatpush1.bf16.msra.mxu0 0
      %2609 = vmatprep.subr.bf16.mxu0 0
      %2610 = vmatpush1.bf16.msra.mxu0 %v2593
      %2611 = vmatprep.subr.bf16.mxu0 0
      %2612 = vmatpush2.bf16.msra.mxu0 0
      %2613 = vmatprep.subr.bf16.mxu0 0
      %2614 = vmatpush2.bf16.msra.mxu0 0
      %2615 = vmatprep.subr.bf16.mxu0 0
      %2616 = vmatpush2.bf16.msra.mxu0 0
      %2617 = vmatprep.subr.bf16.mxu0 0
      %2618 = vmatpush2.bf16.msra.mxu0 0
      %2619 = vmatprep.subr.bf16.mxu0 0
      %2620 = vmatpush2.bf16.msra.mxu0 0
      %2621 = vmatprep.subr.bf16.mxu0 0
      %2622 = vmatpush2.bf16.msra.mxu0 0
      %2623 = vmatprep.subr.bf16.mxu0 0
      %2624 = vmatpush2.bf16.msra.mxu0 0
      %2625 = vmatprep.subr.bf16.mxu0 0
      %2626 = vmatpush2.bf16.msra.mxu0 0
      %2627 = vmatprep.mubr.bf16.mxu0 0
      %2628 = vmatmul.mubr.bf16.gmra.mxu0 %v2590
      %v2629 = vpop.f32.mrf.mxu0
      %v2630 = vadd.f32 0.0, %v2629
      %v2631 = vpop.f32.mrf.mxu0
      %v2632 = vpop.f32.mrf.mxu0
      %v2633 = vpop.f32.mrf.mxu0
      %2634 = vdwg.mxu0
      %vm2635 = vcmask 130048
      %v2636 = vsel %vm2635, %v2492, -inf
      %2637 = vmax.xlane.f32.xlu0 %v2636
      %v2638 = vpop.xlane.xlu0 %2637
      %v2639 = vsel %vm2635, %v2538, -inf
      %2640 = vmax.xlane.f32.xlu0 %v2639
      %v2641 = vpop.xlane.xlu0 %2640
      %v2642 = vsel %vm2635, %v2584, -inf
      %2643 = vmax.xlane.f32.xlu0 %v2642
      %v2644 = vpop.xlane.xlu0 %2643
      %v2645 = vsel %vm2635, %v2630, -inf
      %2646 = vmax.xlane.f32.xlu0 %v2645
      %v2647 = vpop.xlane.xlu0 %2646
      %v2648 = vsub.f32 %v2492, %v2638
      %v2649 = vsub.f32 %v2538, %v2641
      %v2650 = vsub.f32 %v2584, %v2644
      %v2651 = vsub.f32 %v2630, %v2647
      %v2652 = vmul.f32 %v2648, 1.442695
      %v2653 = vpow.pop %v2652
      %v2654 = vmul.f32 %v2649, 1.442695
      %v2655 = vpow.pop %v2654
      %v2656 = vmul.f32 %v2650, 1.442695
      %v2657 = vpow.pop %v2656
      %v2658 = vmul.f32 %v2651, 1.442695
      %v2659 = vpow.pop %v2658
      %v2660 = vsel %vm2635, %v2653, 0.0
      %2661 = vadd.xlane.f32.xlu0 %v2660
      %v2662 = vpop.xlane.xlu0 %2661
      %v2663 = vsel %vm2635, %v2655, 0.0
      %2664 = vadd.xlane.f32.xlu0 %v2663
      %v2665 = vpop.xlane.xlu0 %2664
      %v2666 = vsel %vm2635, %v2657, 0.0
      %2667 = vadd.xlane.f32.xlu0 %v2666
      %v2668 = vpop.xlane.xlu0 %2667
      %v2669 = vsel %vm2635, %v2659, 0.0
      %2670 = vadd.xlane.f32.xlu0 %v2669
      %v2671 = vpop.xlane.xlu0 %2670
      %v2672 = vrcp.pop %v2662
      %v2673 = vrcp.pop %v2665
      %v2674 = vrcp.pop %v2668
      %v2675 = vrcp.pop %v2671
      %v2676 = vmul.f32 %v2653, %v2672
      %v2677 = vmul.f32 %v2655, %v2673
      %v2678 = vmul.f32 %v2657, %v2674
      %v2679 = vmul.f32 %v2659, %v2675
      %v2680 = vpack.c.bf16 %v2676, %v2676
      %v2681 = vpack.c.bf16 %v2677, %v2677
      %v2682 = vpack.c.bf16 %v2678, %v2678
      %v2683 = vpack.c.bf16 %v2679, %v2679
      %v2685 = vsel %vm2635, %v2359, 0
      %v2688 = vsel %vm2635, %v2680, 0
      %2690 = vmatprep.subr.bf16.mxu0 0
      %2691 = vmatpush1.bf16.xpose.msra.mxu0 0
      %2692 = vmatprep.subr.bf16.mxu0 0
      %2693 = vmatpush1.bf16.xpose.msra.mxu0 0
      %2694 = vmatprep.subr.bf16.mxu0 0
      %2695 = vmatpush1.bf16.xpose.msra.mxu0 0
      %2696 = vmatprep.subr.bf16.mxu0 0
      %2697 = vmatpush1.bf16.xpose.msra.mxu0 0
      %2698 = vmatprep.subr.bf16.mxu0 0
      %2699 = vmatpush1.bf16.xpose.msra.mxu0 0
      %2700 = vmatprep.subr.bf16.mxu0 0
      %2701 = vmatpush1.bf16.xpose.msra.mxu0 0
      %2702 = vmatprep.subr.bf16.mxu0 0
      %2703 = vmatpush1.bf16.xpose.msra.mxu0 0
      %2704 = vmatprep.subr.bf16.mxu0 0
      %2705 = vmatpush1.bf16.xpose.msra.mxu0 %v2688
      %2706 = vmatprep.subr.bf16.mxu0 0
      %2707 = vmatpush2.bf16.xpose.msra.mxu0 0
      %2708 = vmatprep.subr.bf16.mxu0 0
      %2709 = vmatpush2.bf16.xpose.msra.mxu0 0
      %2710 = vmatprep.subr.bf16.mxu0 0
      %2711 = vmatpush2.bf16.xpose.msra.mxu0 0
      %2712 = vmatprep.subr.bf16.mxu0 0
      %2713 = vmatpush2.bf16.xpose.msra.mxu0 0
      %2714 = vmatprep.subr.bf16.mxu0 0
      %2715 = vmatpush2.bf16.xpose.msra.mxu0 0
      %2716 = vmatprep.subr.bf16.mxu0 0
      %2717 = vmatpush2.bf16.xpose.msra.mxu0 0
      %2718 = vmatprep.subr.bf16.mxu0 0
      %2719 = vmatpush2.bf16.xpose.msra.mxu0 0
      %2720 = vmatprep.subr.bf16.mxu0 0
      %2721 = vmatpush2.bf16.xpose.msra.mxu0 0
      %2722 = vmatprep.mubr.bf16.mxu0 0
      %2723 = vmatmul.mubr.bf16.gmra.mxu0 %v2685
      %v2724 = vpop.f32.mrf.mxu0
      %v2725 = vadd.f32 0.0, %v2724
      %v2726 = vpop.f32.mrf.mxu0
      %v2727 = vpop.f32.mrf.mxu0
      %v2728 = vpop.f32.mrf.mxu0
      %2729 = vdwg.mxu0
      %v2731 = vsel %vm2635, %v2360, 0
      %v2734 = vsel %vm2635, %v2681, 0
      %2736 = vmatprep.subr.bf16.mxu0 0
      %2737 = vmatpush1.bf16.xpose.msra.mxu0 0
      %2738 = vmatprep.subr.bf16.mxu0 0
      %2739 = vmatpush1.bf16.xpose.msra.mxu0 0
      %2740 = vmatprep.subr.bf16.mxu0 0
      %2741 = vmatpush1.bf16.xpose.msra.mxu0 0
      %2742 = vmatprep.subr.bf16.mxu0 0
      %2743 = vmatpush1.bf16.xpose.msra.mxu0 0
      %2744 = vmatprep.subr.bf16.mxu0 0
      %2745 = vmatpush1.bf16.xpose.msra.mxu0 0
      %2746 = vmatprep.subr.bf16.mxu0 0
      %2747 = vmatpush1.bf16.xpose.msra.mxu0 0
      %2748 = vmatprep.subr.bf16.mxu0 0
      %2749 = vmatpush1.bf16.xpose.msra.mxu0 0
      %2750 = vmatprep.subr.bf16.mxu0 0
      %2751 = vmatpush1.bf16.xpose.msra.mxu0 %v2734
      %2752 = vmatprep.subr.bf16.mxu0 0
      %2753 = vmatpush2.bf16.xpose.msra.mxu0 0
      %2754 = vmatprep.subr.bf16.mxu0 0
      %2755 = vmatpush2.bf16.xpose.msra.mxu0 0
      %2756 = vmatprep.subr.bf16.mxu0 0
      %2757 = vmatpush2.bf16.xpose.msra.mxu0 0
      %2758 = vmatprep.subr.bf16.mxu0 0
      %2759 = vmatpush2.bf16.xpose.msra.mxu0 0
      %2760 = vmatprep.subr.bf16.mxu0 0
      %2761 = vmatpush2.bf16.xpose.msra.mxu0 0
      %2762 = vmatprep.subr.bf16.mxu0 0
      %2763 = vmatpush2.bf16.xpose.msra.mxu0 0
      %2764 = vmatprep.subr.bf16.mxu0 0
      %2765 = vmatpush2.bf16.xpose.msra.mxu0 0
      %2766 = vmatprep.subr.bf16.mxu0 0
      %2767 = vmatpush2.bf16.xpose.msra.mxu0 0
      %2768 = vmatprep.mubr.bf16.mxu0 0
      %2769 = vmatmul.mubr.bf16.gmra.mxu0 %v2731
      %v2770 = vpop.f32.mrf.mxu0
      %v2771 = vadd.f32 0.0, %v2770
      %v2772 = vpop.f32.mrf.mxu0
      %v2773 = vpop.f32.mrf.mxu0
      %v2774 = vpop.f32.mrf.mxu0
      %2775 = vdwg.mxu0
      %v2777 = vsel %vm2635, %v2361, 0
      %v2780 = vsel %vm2635, %v2682, 0
      %2782 = vmatprep.subr.bf16.mxu0 0
      %2783 = vmatpush1.bf16.xpose.msra.mxu0 0
      %2784 = vmatprep.subr.bf16.mxu0 0
      %2785 = vmatpush1.bf16.xpose.msra.mxu0 0
      %2786 = vmatprep.subr.bf16.mxu0 0
      %2787 = vmatpush1.bf16.xpose.msra.mxu0 0
      %2788 = vmatprep.subr.bf16.mxu0 0
      %2789 = vmatpush1.bf16.xpose.msra.mxu0 0
      %2790 = vmatprep.subr.bf16.mxu0 0
      %2791 = vmatpush1.bf16.xpose.msra.mxu0 0
      %2792 = vmatprep.subr.bf16.mxu0 0
      %2793 = vmatpush1.bf16.xpose.msra.mxu0 0
      %2794 = vmatprep.subr.bf16.mxu0 0
      %2795 = vmatpush1.bf16.xpose.msra.mxu0 0
      %2796 = vmatprep.subr.bf16.mxu0 0
      %2797 = vmatpush1.bf16.xpose.msra.mxu0 %v2780
      %2798 = vmatprep.subr.bf16.mxu0 0
      %2799 = vmatpush2.bf16.xpose.msra.mxu0 0
      %2800 = vmatprep.subr.bf16.mxu0 0
      %2801 = vmatpush2.bf16.xpose.msra.mxu0 0
      %2802 = vmatprep.subr.bf16.mxu0 0
      %2803 = vmatpush2.bf16.xpose.msra.mxu0 0
      %2804 = vmatprep.subr.bf16.mxu0 0
      %2805 = vmatpush2.bf16.xpose.msra.mxu0 0
      %2806 = vmatprep.subr.bf16.mxu0 0
      %2807 = vmatpush2.bf16.xpose.msra.mxu0 0
      %2808 = vmatprep.subr.bf16.mxu0 0
      %2809 = vmatpush2.bf16.xpose.msra.mxu0 0
      %2810 = vmatprep.subr.bf16.mxu0 0
      %2811 = vmatpush2.bf16.xpose.msra.mxu0 0
      %2812 = vmatprep.subr.bf16.mxu0 0
      %2813 = vmatpush2.bf16.xpose.msra.mxu0 0
      %2814 = vmatprep.mubr.bf16.mxu0 0
      %2815 = vmatmul.mubr.bf16.gmra.mxu0 %v2777
      %v2816 = vpop.f32.mrf.mxu0
      %v2817 = vadd.f32 0.0, %v2816
      %v2818 = vpop.f32.mrf.mxu0
      %v2819 = vpop.f32.mrf.mxu0
      %v2820 = vpop.f32.mrf.mxu0
      %2821 = vdwg.mxu0
      %v2823 = vsel %vm2635, %v2362, 0
      %v2826 = vsel %vm2635, %v2683, 0
      %2828 = vmatprep.subr.bf16.mxu0 0
      %2829 = vmatpush1.bf16.xpose.msra.mxu0 0
      %2830 = vmatprep.subr.bf16.mxu0 0
      %2831 = vmatpush1.bf16.xpose.msra.mxu0 0
      %2832 = vmatprep.subr.bf16.mxu0 0
      %2833 = vmatpush1.bf16.xpose.msra.mxu0 0
      %2834 = vmatprep.subr.bf16.mxu0 0
      %2835 = vmatpush1.bf16.xpose.msra.mxu0 0
      %2836 = vmatprep.subr.bf16.mxu0 0
      %2837 = vmatpush1.bf16.xpose.msra.mxu0 0
      %2838 = vmatprep.subr.bf16.mxu0 0
      %2839 = vmatpush1.bf16.xpose.msra.mxu0 0
      %2840 = vmatprep.subr.bf16.mxu0 0
      %2841 = vmatpush1.bf16.xpose.msra.mxu0 0
      %2842 = vmatprep.subr.bf16.mxu0 0
      %2843 = vmatpush1.bf16.xpose.msra.mxu0 %v2826
      %2844 = vmatprep.subr.bf16.mxu0 0
      %2845 = vmatpush2.bf16.xpose.msra.mxu0 0
      %2846 = vmatprep.subr.bf16.mxu0 0
      %2847 = vmatpush2.bf16.xpose.msra.mxu0 0
      %2848 = vmatprep.subr.bf16.mxu0 0
      %2849 = vmatpush2.bf16.xpose.msra.mxu0 0
      %2850 = vmatprep.subr.bf16.mxu0 0
      %2851 = vmatpush2.bf16.xpose.msra.mxu0 0
      %2852 = vmatprep.subr.bf16.mxu0 0
      %2853 = vmatpush2.bf16.xpose.msra.mxu0 0
      %2854 = vmatprep.subr.bf16.mxu0 0
      %2855 = vmatpush2.bf16.xpose.msra.mxu0 0
      %2856 = vmatprep.subr.bf16.mxu0 0
      %2857 = vmatpush2.bf16.xpose.msra.mxu0 0
      %2858 = vmatprep.subr.bf16.mxu0 0
      %2859 = vmatpush2.bf16.xpose.msra.mxu0 0
      %2860 = vmatprep.mubr.bf16.mxu0 0
      %2861 = vmatmul.mubr.bf16.gmra.mxu0 %v2823
      %v2862 = vpop.f32.mrf.mxu0
      %v2863 = vadd.f32 0.0, %v2862
      %v2864 = vpop.f32.mrf.mxu0
      %v2865 = vpop.f32.mrf.mxu0
      %v2866 = vpop.f32.mrf.mxu0
      %2867 = vdwg.mxu0
      %v2868 = vpack.c.bf16 %v2771, %v2725
      %v2869 = vpack.c.bf16 %v2863, %v2817
      %2871 = vset.pattern.permute.xlu0 0
      %2872 = vperm.xlu0 %2871, %v2367
      %v2873 = vpop.permute.xlu0 %2872
      %2876 = vset.pattern.permute.xlu0 0
      %2877 = vperm.xlu0 %2876, %v2368
      %v2878 = vpop.permute.xlu0 %2877
      %2881 = vset.pattern.permute.xlu0 0
      %2882 = vperm.xlu0 %2881, %v2369
      %v2883 = vpop.permute.xlu0 %2882
      %2886 = vset.pattern.permute.xlu0 0
      %2887 = vperm.xlu0 %2886, %v2370
      %v2888 = vpop.permute.xlu0 %2887
      %v2894 = vunpack.c.l.b16 %v2363
      %v2895 = vunpack.c.l.b16 %v2364
      %v2896 = vunpack.c.l.b16 %v2365
      %v2897 = vunpack.c.l.b16 %v2366
      %v2898 = vpack.c.b16 %v2895, %v2894
      %v2899 = vpack.c.b16 %v2897, %v2896
      %v2901 = vsel %vm1490, %v2898, 0
      %v2904 = vsel %vm1490, %v2899, 0
      %2906 = vmatprep.subr.bf16.mxu0 0
      %2907 = vmatpush1.bf16.msra.mxu0 0
      %2908 = vmatprep.subr.bf16.mxu0 0
      %2909 = vmatpush1.bf16.msra.mxu0 0
      %2910 = vmatprep.subr.bf16.mxu0 0
      %2911 = vmatpush1.bf16.msra.mxu0 0
      %2912 = vmatprep.subr.bf16.mxu0 0
      %2913 = vmatpush1.bf16.msra.mxu0 0
      %2914 = vmatprep.subr.bf16.mxu0 0
      %2915 = vmatpush1.bf16.msra.mxu0 0
      %2916 = vmatprep.subr.bf16.mxu0 0
      %2917 = vmatpush1.bf16.msra.mxu0 0
      %2918 = vmatprep.subr.bf16.mxu0 0
      %2919 = vmatpush1.bf16.msra.mxu0 %v2869
      %2920 = vmatprep.subr.bf16.mxu0 0
      %2921 = vmatpush1.bf16.msra.mxu0 %v2868
      %2922 = vmatprep.subr.bf16.mxu0 0
      %2923 = vmatpush2.bf16.msra.mxu0 0
      %2924 = vmatprep.subr.bf16.mxu0 0
      %2925 = vmatpush2.bf16.msra.mxu0 0
      %2926 = vmatprep.subr.bf16.mxu0 0
      %2927 = vmatpush2.bf16.msra.mxu0 0
      %2928 = vmatprep.subr.bf16.mxu0 0
      %2929 = vmatpush2.bf16.msra.mxu0 0
      %2930 = vmatprep.subr.bf16.mxu0 0
      %2931 = vmatpush2.bf16.msra.mxu0 0
      %2932 = vmatprep.subr.bf16.mxu0 0
      %2933 = vmatpush2.bf16.msra.mxu0 0
      %2934 = vmatprep.subr.bf16.mxu0 0
      %2935 = vmatpush2.bf16.msra.mxu0 0
      %2936 = vmatprep.subr.bf16.mxu0 0
      %2937 = vmatpush2.bf16.msra.mxu0 0
      %2938 = vmatprep.mubr.bf16.mxu0 0
      %2939 = vmatmul.mubr.bf16.gmra.mxu0 %v2901
      %v2940 = vpop.f32.mrf.mxu0
      %v2941 = vadd.f32 %v2873, %v2940
      %v2942 = vpop.f32.mrf.mxu0
      %v2943 = vpop.f32.mrf.mxu0
      %v2944 = vadd.f32 %v2878, %v2943
      %v2945 = vpop.f32.mrf.mxu0
      %2946 = vmatprep.mubr.bf16.mxu0 0
      %2947 = vmatmul.mubr.bf16.gmra.mxu0 %v2904
      %v2948 = vpop.f32.mrf.mxu0
      %v2949 = vadd.f32 %v2883, %v2948
      %v2950 = vpop.f32.mrf.mxu0
      %v2951 = vpop.f32.mrf.mxu0
      %v2952 = vadd.f32 %v2888, %v2951
      %v2953 = vpop.f32.mrf.mxu0
      %2954 = vdwg.mxu0
      %v2955 = vadd.f32 %v2256, %v2941
      %v2956 = vadd.f32 %v2257, %v2944
      %v2957 = vadd.f32 %v2258, %v2949
      %v2958 = vadd.f32 %v2259, %v2952
      %v2959 = vld [vmem:[%s43] sm:$0xff]
      %v2960 = vld [vmem:[%s43 + $0x8] sm:$0xff]
      %v2961 = vld [vmem:[%s43 + $0x10] sm:$0xff]
      %v2962 = vld [vmem:[%s43 + $0x18] sm:$0xff]
      %v2963 = vld [vmem:[%s45] sm:$0xff]
      %v2964 = vld [vmem:[%s45 + $0x8] sm:$0xff]
      %v2965 = vld [vmem:[%s45 + $0x10] sm:$0xff]
      %v2966 = vld [vmem:[%s45 + $0x18] sm:$0xff]
      %v2967 = vsel %vm1651, %v2955, 0.0
      %v2968 = vsel %vm1651, %v2956, 0.0
      %v2969 = vadd.f32 %v2967, %v2968
      %v2970 = vsel %vm1651, %v2957, 0.0
      %v2971 = vadd.f32 %v2969, %v2970
      %v2972 = vsel %vm1651, %v2958, 0.0
      %v2973 = vadd.f32 %v2971, %v2972
      %v2974 = vrot.slane %v2973, 4
      %v2975 = vadd.f32 %v2973, %v2974
      %v2976 = vrot.slane %v2975, 2
      %v2977 = vadd.f32 %v2975, %v2976
      %v2978 = vrot.slane %v2977, 1
      %v2979 = vadd.f32 %v2977, %v2978
      %v2980 = vmul.f32 %v2979, 0.03125
      %v2981 = vmul.f32 %v2955, %v2955
      %v2982 = vmul.f32 %v2956, %v2956
      %v2983 = vmul.f32 %v2957, %v2957
      %v2984 = vmul.f32 %v2958, %v2958
      %v2985 = vsel %vm1651, %v2981, 0.0
      %v2986 = vsel %vm1651, %v2982, 0.0
      %v2987 = vadd.f32 %v2985, %v2986
      %v2988 = vsel %vm1651, %v2983, 0.0
      %v2989 = vadd.f32 %v2987, %v2988
      %v2990 = vsel %vm1651, %v2984, 0.0
      %v2991 = vadd.f32 %v2989, %v2990
      %v2992 = vrot.slane %v2991, 4
      %v2993 = vadd.f32 %v2991, %v2992
      %v2994 = vrot.slane %v2993, 2
      %v2995 = vadd.f32 %v2993, %v2994
      %v2996 = vrot.slane %v2995, 1
      %v2997 = vadd.f32 %v2995, %v2996
      %v2998 = vmul.f32 %v2997, 0.03125
      %v2999 = vmul.f32 %v2980, %v2980
      %v3000 = vsub.f32 %v2998, %v2999
      %v3001 = vsub.f32 %v2955, %v2980
      %v3002 = vsub.f32 %v2956, %v2980
      %v3003 = vsub.f32 %v2957, %v2980
      %v3004 = vsub.f32 %v2958, %v2980
      %v3005 = vadd.f32 %v3000, 1e-05
      %v3006 = vrsqrt.pop %v3005
      %v3007 = vmul.f32 %v3001, %v3006
      %v3008 = vmul.f32 %v3002, %v3006
      %v3009 = vmul.f32 %v3003, %v3006
      %v3010 = vmul.f32 %v3004, %v3006
      %3012 = vset.pattern.permute.xlu0 0
      %3013 = vperm.xlu0 %3012, %v2959
      %v3014 = vpop.permute.xlu0 %3013
      %3017 = vset.pattern.permute.xlu0 0
      %3018 = vperm.xlu0 %3017, %v2960
      %v3019 = vpop.permute.xlu0 %3018
      %3022 = vset.pattern.permute.xlu0 0
      %3023 = vperm.xlu0 %3022, %v2961
      %v3024 = vpop.permute.xlu0 %3023
      %3027 = vset.pattern.permute.xlu0 0
      %3028 = vperm.xlu0 %3027, %v2962
      %v3029 = vpop.permute.xlu0 %3028
      %v3031 = vmul.f32 %v3007, %v3014
      %v3032 = vmul.f32 %v3008, %v3019
      %v3033 = vmul.f32 %v3009, %v3024
      %v3034 = vmul.f32 %v3010, %v3029
      %3036 = vset.pattern.permute.xlu0 0
      %3037 = vperm.xlu0 %3036, %v2963
      %v3038 = vpop.permute.xlu0 %3037
      %3041 = vset.pattern.permute.xlu0 0
      %3042 = vperm.xlu0 %3041, %v2964
      %v3043 = vpop.permute.xlu0 %3042
      %3046 = vset.pattern.permute.xlu0 0
      %3047 = vperm.xlu0 %3046, %v2965
      %v3048 = vpop.permute.xlu0 %3047
      %3051 = vset.pattern.permute.xlu0 0
      %3052 = vperm.xlu0 %3051, %v2966
      %v3053 = vpop.permute.xlu0 %3052
      %v3055 = vadd.f32 %v3031, %v3038
      %v3056 = vadd.f32 %v3032, %v3043
      %v3057 = vadd.f32 %v3033, %v3048
      %v3058 = vadd.f32 %v3034, %v3053
      %v3059 = vld [vmem:[%s47] sm:$0xf]
      %v3060 = vld [vmem:[%s47 + $0x4] sm:$0xf]
      %v3061 = vld [vmem:[%s47 + $0x8] sm:$0xf]
      %v3062 = vld [vmem:[%s47 + $0xc] sm:$0xf]
      %v3063 = vld [vmem:[%s47 + $0x10] sm:$0xf]
      %v3064 = vld [vmem:[%s47 + $0x14] sm:$0xf]
      %v3065 = vld [vmem:[%s47 + $0x18] sm:$0xf]
      %v3066 = vld [vmem:[%s47 + $0x1c] sm:$0xf]
      %v3067 = vpack.c.bf16 %v3056, %v3055
      %v3068 = vpack.c.bf16 %v3058, %v3057
      %v3069 = vld [vmem:[%s49] sm:$0xff]
      %v3070 = vld [vmem:[%s49 + $0x8] sm:$0xff]
      %v3071 = vld [vmem:[%s49 + $0x10] sm:$0xff]
      %v3072 = vld [vmem:[%s49 + $0x18] sm:$0xff]
      %v3073 = vld [vmem:[%s49 + $0x20] sm:$0xff]
      %v3074 = vld [vmem:[%s49 + $0x28] sm:$0xff]
      %v3075 = vld [vmem:[%s49 + $0x30] sm:$0xff]
      %v3076 = vld [vmem:[%s49 + $0x38] sm:$0xff]
      %3078 = vset.pattern.permute.xlu0 0
      %3079 = vperm.xlu0 %3078, %v3069
      %v3080 = vpop.permute.xlu0 %3079
      %3083 = vset.pattern.permute.xlu0 0
      %3084 = vperm.xlu0 %3083, %v3070
      %v3085 = vpop.permute.xlu0 %3084
      %3088 = vset.pattern.permute.xlu0 0
      %3089 = vperm.xlu0 %3088, %v3071
      %v3090 = vpop.permute.xlu0 %3089
      %3093 = vset.pattern.permute.xlu0 0
      %3094 = vperm.xlu0 %3093, %v3072
      %v3095 = vpop.permute.xlu0 %3094
      %3098 = vset.pattern.permute.xlu0 0
      %3099 = vperm.xlu0 %3098, %v3073
      %v3100 = vpop.permute.xlu0 %3099
      %3103 = vset.pattern.permute.xlu0 0
      %3104 = vperm.xlu0 %3103, %v3074
      %v3105 = vpop.permute.xlu0 %3104
      %3108 = vset.pattern.permute.xlu0 0
      %3109 = vperm.xlu0 %3108, %v3075
      %v3110 = vpop.permute.xlu0 %3109
      %3113 = vset.pattern.permute.xlu0 0
      %3114 = vperm.xlu0 %3113, %v3076
      %v3115 = vpop.permute.xlu0 %3114
      %v3125 = vunpack.c.l.b16 %v3059
      %v3126 = vunpack.c.l.b16 %v3060
      %v3127 = vunpack.c.l.b16 %v3061
      %v3128 = vunpack.c.l.b16 %v3062
      %v3129 = vunpack.c.l.b16 %v3063
      %v3130 = vunpack.c.l.b16 %v3064
      %v3131 = vunpack.c.l.b16 %v3065
      %v3132 = vunpack.c.l.b16 %v3066
      %v3133 = vpack.c.b16 %v3126, %v3125
      %v3134 = vpack.c.b16 %v3128, %v3127
      %v3135 = vpack.c.b16 %v3130, %v3129
      %v3136 = vpack.c.b16 %v3132, %v3131
      %v3138 = vsel %vm1490, %v3133, 0
      %v3141 = vsel %vm1490, %v3134, 0
      %v3144 = vsel %vm1490, %v3135, 0
      %v3147 = vsel %vm1490, %v3136, 0
      %3149 = vmatprep.subr.bf16.mxu0 0
      %3150 = vmatpush1.bf16.msra.mxu0 0
      %3151 = vmatprep.subr.bf16.mxu0 0
      %3152 = vmatpush1.bf16.msra.mxu0 0
      %3153 = vmatprep.subr.bf16.mxu0 0
      %3154 = vmatpush1.bf16.msra.mxu0 0
      %3155 = vmatprep.subr.bf16.mxu0 0
      %3156 = vmatpush1.bf16.msra.mxu0 0
      %3157 = vmatprep.subr.bf16.mxu0 0
      %3158 = vmatpush1.bf16.msra.mxu0 0
      %3159 = vmatprep.subr.bf16.mxu0 0
      %3160 = vmatpush1.bf16.msra.mxu0 0
      %3161 = vmatprep.subr.bf16.mxu0 0
      %3162 = vmatpush1.bf16.msra.mxu0 %v3068
      %3163 = vmatprep.subr.bf16.mxu0 0
      %3164 = vmatpush1.bf16.msra.mxu0 %v3067
      %3165 = vmatprep.subr.bf16.mxu0 0
      %3166 = vmatpush2.bf16.msra.mxu0 0
      %3167 = vmatprep.subr.bf16.mxu0 0
      %3168 = vmatpush2.bf16.msra.mxu0 0
      %3169 = vmatprep.subr.bf16.mxu0 0
      %3170 = vmatpush2.bf16.msra.mxu0 0
      %3171 = vmatprep.subr.bf16.mxu0 0
      %3172 = vmatpush2.bf16.msra.mxu0 0
      %3173 = vmatprep.subr.bf16.mxu0 0
      %3174 = vmatpush2.bf16.msra.mxu0 0
      %3175 = vmatprep.subr.bf16.mxu0 0
      %3176 = vmatpush2.bf16.msra.mxu0 0
      %3177 = vmatprep.subr.bf16.mxu0 0
      %3178 = vmatpush2.bf16.msra.mxu0 0
      %3179 = vmatprep.subr.bf16.mxu0 0
      %3180 = vmatpush2.bf16.msra.mxu0 0
      %3181 = vmatprep.mubr.bf16.mxu0 0
      %3182 = vmatmul.mubr.bf16.gmra.mxu0 %v3138
      %v3183 = vpop.f32.mrf.mxu0
      %v3184 = vadd.f32 %v3080, %v3183
      %v3185 = vpop.f32.mrf.mxu0
      %v3186 = vpop.f32.mrf.mxu0
      %v3187 = vadd.f32 %v3085, %v3186
      %v3188 = vpop.f32.mrf.mxu0
      %3189 = vmatprep.mubr.bf16.mxu0 0
      %3190 = vmatmul.mubr.bf16.gmra.mxu0 %v3141
      %v3191 = vpop.f32.mrf.mxu0
      %v3192 = vadd.f32 %v3090, %v3191
      %v3193 = vpop.f32.mrf.mxu0
      %v3194 = vpop.f32.mrf.mxu0
      %v3195 = vadd.f32 %v3095, %v3194
      %v3196 = vpop.f32.mrf.mxu0
      %3197 = vmatprep.mubr.bf16.mxu0 0
      %3198 = vmatmul.mubr.bf16.gmra.mxu0 %v3144
      %v3199 = vpop.f32.mrf.mxu0
      %v3200 = vadd.f32 %v3100, %v3199
      %v3201 = vpop.f32.mrf.mxu0
      %v3202 = vpop.f32.mrf.mxu0
      %v3203 = vadd.f32 %v3105, %v3202
      %v3204 = vpop.f32.mrf.mxu0
      %3205 = vmatprep.mubr.bf16.mxu0 0
      %3206 = vmatmul.mubr.bf16.gmra.mxu0 %v3147
      %v3207 = vpop.f32.mrf.mxu0
      %v3208 = vadd.f32 %v3110, %v3207
      %v3209 = vpop.f32.mrf.mxu0
      %v3210 = vpop.f32.mrf.mxu0
      %v3211 = vadd.f32 %v3115, %v3210
      %v3212 = vpop.f32.mrf.mxu0
      %3213 = vdwg.mxu0
      %v3214 = vmul.f32 %v3184, 0.5
      %v3215 = vmul.f32 %v3187, 0.5
      %v3216 = vmul.f32 %v3192, 0.5
      %v3217 = vmul.f32 %v3195, 0.5
      %v3218 = vmul.f32 %v3200, 0.5
      %v3219 = vmul.f32 %v3203, 0.5
      %v3220 = vmul.f32 %v3208, 0.5
      %v3221 = vmul.f32 %v3211, 0.5
      %v3222 = vmul.f32 %v3184, 0.044715
      %v3223 = vmul.f32 %v3187, 0.044715
      %v3224 = vmul.f32 %v3192, 0.044715
      %v3225 = vmul.f32 %v3195, 0.044715
      %v3226 = vmul.f32 %v3200, 0.044715
      %v3227 = vmul.f32 %v3203, 0.044715
      %v3228 = vmul.f32 %v3208, 0.044715
      %v3229 = vmul.f32 %v3211, 0.044715
      %v3230 = vmul.f32 %v3222, %v3184
      %v3231 = vmul.f32 %v3223, %v3187
      %v3232 = vmul.f32 %v3224, %v3192
      %v3233 = vmul.f32 %v3225, %v3195
      %v3234 = vmul.f32 %v3226, %v3200
      %v3235 = vmul.f32 %v3227, %v3203
      %v3236 = vmul.f32 %v3228, %v3208
      %v3237 = vmul.f32 %v3229, %v3211
      %v3238 = vmul.f32 %v3230, %v3184
      %v3239 = vmul.f32 %v3231, %v3187
      %v3240 = vmul.f32 %v3232, %v3192
      %v3241 = vmul.f32 %v3233, %v3195
      %v3242 = vmul.f32 %v3234, %v3200
      %v3243 = vmul.f32 %v3235, %v3203
      %v3244 = vmul.f32 %v3236, %v3208
      %v3245 = vmul.f32 %v3237, %v3211
      %v3246 = vadd.f32 %v3184, %v3238
      %v3247 = vadd.f32 %v3187, %v3239
      %v3248 = vadd.f32 %v3192, %v3240
      %v3249 = vadd.f32 %v3195, %v3241
      %v3250 = vadd.f32 %v3200, %v3242
      %v3251 = vadd.f32 %v3203, %v3243
      %v3252 = vadd.f32 %v3208, %v3244
      %v3253 = vadd.f32 %v3211, %v3245
      %v3254 = vmul.f32 %v3246, 0.7978846
      %v3255 = vmul.f32 %v3247, 0.7978846
      %v3256 = vmul.f32 %v3248, 0.7978846
      %v3257 = vmul.f32 %v3249, 0.7978846
      %v3258 = vmul.f32 %v3250, 0.7978846
      %v3259 = vmul.f32 %v3251, 0.7978846
      %v3260 = vmul.f32 %v3252, 0.7978846
      %v3261 = vmul.f32 %v3253, 0.7978846
      %v3262 = vtanh.pop %v3254
      %v3263 = vtanh.pop %v3255
      %v3264 = vtanh.pop %v3256
      %v3265 = vtanh.pop %v3257
      %v3266 = vtanh.pop %v3258
      %v3267 = vtanh.pop %v3259
      %v3268 = vtanh.pop %v3260
      %v3269 = vtanh.pop %v3261
      %v3270 = vadd.f32 %v3262, 1.0
      %v3271 = vadd.f32 %v3263, 1.0
      %v3272 = vadd.f32 %v3264, 1.0
      %v3273 = vadd.f32 %v3265, 1.0
      %v3274 = vadd.f32 %v3266, 1.0
      %v3275 = vadd.f32 %v3267, 1.0
      %v3276 = vadd.f32 %v3268, 1.0
      %v3277 = vadd.f32 %v3269, 1.0
      %v3278 = vmul.f32 %v3214, %v3270
      %v3279 = vmul.f32 %v3215, %v3271
      %v3280 = vmul.f32 %v3216, %v3272
      %v3281 = vmul.f32 %v3217, %v3273
      %v3282 = vmul.f32 %v3218, %v3274
      %v3283 = vmul.f32 %v3219, %v3275
      %v3284 = vmul.f32 %v3220, %v3276
      %v3285 = vmul.f32 %v3221, %v3277
      %v3286 = vld [vmem:[%s51] sm:$0xf]
      %v3287 = vld [vmem:[%s51 + $0x4] sm:$0xf]
      %v3288 = vld [vmem:[%s51 + $0x8] sm:$0xf]
      %v3289 = vld [vmem:[%s51 + $0xc] sm:$0xf]
      %v3290 = vpack.c.bf16 %v3279, %v3278
      %v3291 = vpack.c.bf16 %v3281, %v3280
      %v3292 = vpack.c.bf16 %v3283, %v3282
      %v3293 = vpack.c.bf16 %v3285, %v3284
      %v3294 = vld [vmem:[%s53] sm:$0xff]
      %v3295 = vld [vmem:[%s53 + $0x8] sm:$0xff]
      %v3296 = vld [vmem:[%s53 + $0x10] sm:$0xff]
      %v3297 = vld [vmem:[%s53 + $0x18] sm:$0xff]
      %3299 = vset.pattern.permute.xlu0 0
      %3300 = vperm.xlu0 %3299, %v3294
      %v3301 = vpop.permute.xlu0 %3300
      %3304 = vset.pattern.permute.xlu0 0
      %3305 = vperm.xlu0 %3304, %v3295
      %v3306 = vpop.permute.xlu0 %3305
      %3309 = vset.pattern.permute.xlu0 0
      %3310 = vperm.xlu0 %3309, %v3296
      %v3311 = vpop.permute.xlu0 %3310
      %3314 = vset.pattern.permute.xlu0 0
      %3315 = vperm.xlu0 %3314, %v3297
      %v3316 = vpop.permute.xlu0 %3315
      %v3322 = vunpack.c.l.b16 %v3286
      %v3323 = vunpack.c.l.b16 %v3287
      %v3324 = vunpack.c.l.b16 %v3288
      %v3325 = vunpack.c.l.b16 %v3289
      %v3326 = vpack.c.b16 %v3323, %v3322
      %v3327 = vpack.c.b16 %v3325, %v3324
      %vm3328 = vcmask 523264
      %v3330 = vsel %vm3328, %v3326, 0
      %v3333 = vsel %vm3328, %v3327, 0
      %3335 = vmatprep.subr.bf16.mxu0 0
      %3336 = vmatpush1.bf16.msra.mxu0 0
      %3337 = vmatprep.subr.bf16.mxu0 0
      %3338 = vmatpush1.bf16.msra.mxu0 0
      %3339 = vmatprep.subr.bf16.mxu0 0
      %3340 = vmatpush1.bf16.msra.mxu0 0
      %3341 = vmatprep.subr.bf16.mxu0 0
      %3342 = vmatpush1.bf16.msra.mxu0 0
      %3343 = vmatprep.subr.bf16.mxu0 0
      %3344 = vmatpush1.bf16.msra.mxu0 %v3293
      %3345 = vmatprep.subr.bf16.mxu0 0
      %3346 = vmatpush1.bf16.msra.mxu0 %v3292
      %3347 = vmatprep.subr.bf16.mxu0 0
      %3348 = vmatpush1.bf16.msra.mxu0 %v3291
      %3349 = vmatprep.subr.bf16.mxu0 0
      %3350 = vmatpush1.bf16.msra.mxu0 %v3290
      %3351 = vmatprep.subr.bf16.mxu0 0
      %3352 = vmatpush2.bf16.msra.mxu0 0
      %3353 = vmatprep.subr.bf16.mxu0 0
      %3354 = vmatpush2.bf16.msra.mxu0 0
      %3355 = vmatprep.subr.bf16.mxu0 0
      %3356 = vmatpush2.bf16.msra.mxu0 0
      %3357 = vmatprep.subr.bf16.mxu0 0
      %3358 = vmatpush2.bf16.msra.mxu0 0
      %3359 = vmatprep.subr.bf16.mxu0 0
      %3360 = vmatpush2.bf16.msra.mxu0 0
      %3361 = vmatprep.subr.bf16.mxu0 0
      %3362 = vmatpush2.bf16.msra.mxu0 0
      %3363 = vmatprep.subr.bf16.mxu0 0
      %3364 = vmatpush2.bf16.msra.mxu0 0
      %3365 = vmatprep.subr.bf16.mxu0 0
      %3366 = vmatpush2.bf16.msra.mxu0 0
      %3367 = vmatprep.mubr.bf16.mxu0 0
      %3368 = vmatmul.mubr.bf16.gmra.mxu0 %v3330
      %v3369 = vpop.f32.mrf.mxu0
      %v3370 = vadd.f32 %v3301, %v3369
      %v3371 = vpop.f32.mrf.mxu0
      %v3372 = vpop.f32.mrf.mxu0
      %v3373 = vadd.f32 %v3306, %v3372
      %v3374 = vpop.f32.mrf.mxu0
      %3375 = vmatprep.mubr.bf16.mxu0 0
      %3376 = vmatmul.mubr.bf16.gmra.mxu0 %v3333
      %v3377 = vpop.f32.mrf.mxu0
      %v3378 = vadd.f32 %v3311, %v3377
      %v3379 = vpop.f32.mrf.mxu0
      %v3380 = vpop.f32.mrf.mxu0
      %v3381 = vadd.f32 %v3316, %v3380
      %v3382 = vpop.f32.mrf.mxu0
      %3383 = vdwg.mxu0
      %v3384 = vadd.f32 %v3055, %v3370
      %v3385 = vadd.f32 %v3056, %v3373
      %v3386 = vadd.f32 %v3057, %v3378
      %v3387 = vadd.f32 %v3058, %v3381
      %v3388 = vld [vmem:[%s55] sm:$0xff]
      %v3389 = vld [vmem:[%s55 + $0x8] sm:$0xff]
      %v3390 = vld [vmem:[%s55 + $0x10] sm:$0xff]
      %v3391 = vld [vmem:[%s55 + $0x18] sm:$0xff]
      %v3392 = vld [vmem:[%s57] sm:$0xff]
      %v3393 = vld [vmem:[%s57 + $0x8] sm:$0xff]
      %v3394 = vld [vmem:[%s57 + $0x10] sm:$0xff]
      %v3395 = vld [vmem:[%s57 + $0x18] sm:$0xff]
      %v3396 = vsel %vm1651, %v3384, 0.0
      %v3397 = vsel %vm1651, %v3385, 0.0
      %v3398 = vadd.f32 %v3396, %v3397
      %v3399 = vsel %vm1651, %v3386, 0.0
      %v3400 = vadd.f32 %v3398, %v3399
      %v3401 = vsel %vm1651, %v3387, 0.0
      %v3402 = vadd.f32 %v3400, %v3401
      %v3403 = vrot.slane %v3402, 4
      %v3404 = vadd.f32 %v3402, %v3403
      %v3405 = vrot.slane %v3404, 2
      %v3406 = vadd.f32 %v3404, %v3405
      %v3407 = vrot.slane %v3406, 1
      %v3408 = vadd.f32 %v3406, %v3407
      %v3409 = vmul.f32 %v3408, 0.03125
      %v3410 = vmul.f32 %v3384, %v3384
      %v3411 = vmul.f32 %v3385, %v3385
      %v3412 = vmul.f32 %v3386, %v3386
      %v3413 = vmul.f32 %v3387, %v3387
      %v3414 = vsel %vm1651, %v3410, 0.0
      %v3415 = vsel %vm1651, %v3411, 0.0
      %v3416 = vadd.f32 %v3414, %v3415
      %v3417 = vsel %vm1651, %v3412, 0.0
      %v3418 = vadd.f32 %v3416, %v3417
      %v3419 = vsel %vm1651, %v3413, 0.0
      %v3420 = vadd.f32 %v3418, %v3419
      %v3421 = vrot.slane %v3420, 4
      %v3422 = vadd.f32 %v3420, %v3421
      %v3423 = vrot.slane %v3422, 2
      %v3424 = vadd.f32 %v3422, %v3423
      %v3425 = vrot.slane %v3424, 1
      %v3426 = vadd.f32 %v3424, %v3425
      %v3427 = vmul.f32 %v3426, 0.03125
      %v3428 = vmul.f32 %v3409, %v3409
      %v3429 = vsub.f32 %v3427, %v3428
      %v3430 = vsub.f32 %v3384, %v3409
      %v3431 = vsub.f32 %v3385, %v3409
      %v3432 = vsub.f32 %v3386, %v3409
      %v3433 = vsub.f32 %v3387, %v3409
      %v3434 = vadd.f32 %v3429, 1e-05
      %v3435 = vrsqrt.pop %v3434
      %v3436 = vmul.f32 %v3430, %v3435
      %v3437 = vmul.f32 %v3431, %v3435
      %v3438 = vmul.f32 %v3432, %v3435
      %v3439 = vmul.f32 %v3433, %v3435
      %3441 = vset.pattern.permute.xlu0 0
      %3442 = vperm.xlu0 %3441, %v3388
      %v3443 = vpop.permute.xlu0 %3442
      %3446 = vset.pattern.permute.xlu0 0
      %3447 = vperm.xlu0 %3446, %v3389
      %v3448 = vpop.permute.xlu0 %3447
      %3451 = vset.pattern.permute.xlu0 0
      %3452 = vperm.xlu0 %3451, %v3390
      %v3453 = vpop.permute.xlu0 %3452
      %3456 = vset.pattern.permute.xlu0 0
      %3457 = vperm.xlu0 %3456, %v3391
      %v3458 = vpop.permute.xlu0 %3457
      %v3460 = vmul.f32 %v3436, %v3443
      %v3461 = vmul.f32 %v3437, %v3448
      %v3462 = vmul.f32 %v3438, %v3453
      %v3463 = vmul.f32 %v3439, %v3458
      %3465 = vset.pattern.permute.xlu0 0
      %3466 = vperm.xlu0 %3465, %v3392
      %v3467 = vpop.permute.xlu0 %3466
      %3470 = vset.pattern.permute.xlu0 0
      %3471 = vperm.xlu0 %3470, %v3393
      %v3472 = vpop.permute.xlu0 %3471
      %3475 = vset.pattern.permute.xlu0 0
      %3476 = vperm.xlu0 %3475, %v3394
      %v3477 = vpop.permute.xlu0 %3476
      %3480 = vset.pattern.permute.xlu0 0
      %3481 = vperm.xlu0 %3480, %v3395
      %v3482 = vpop.permute.xlu0 %3481
      %v3484 = vadd.f32 %v3460, %v3467
      %v3485 = vadd.f32 %v3461, %v3472
      %v3486 = vadd.f32 %v3462, %v3477
      %v3487 = vadd.f32 %v3463, %v3482
      %3488 = vst.msk [vmem:[%s973] sm:$0xff] %vm1651, %v3484
      %3489 = vst.msk [vmem:[%s973 + $0x8] sm:$0xff] %vm1651, %v3485
      %3490 = vst.msk [vmem:[%s973 + $0x10] sm:$0xff] %vm1651, %v3486
      %3491 = vst.msk [vmem:[%s973 + $0x18] sm:$0xff] %vm1651, %v3487
      %p3492 = scmp.lt.s32.totalorder %s74, 1
      %s3493 = scalar_select %p3492, %s74, 1
      %p3494 = scmp.lt.s32.totalorder %s75, 0
      %s3495 = scalar_select %p3494, %s75, 0
      %s3496 = smul.addr %s3493, 4
      %s3497 = sadd.s32 %s3495, %s3496
      %s3498 = smul.addr %s3497, 8
      %s3499 = scalar_lea.vmem %s59, %s3498
      // Predicated region
      $region141: #{tpu_custom_call.1} parent=135 // pred_check
        %p3500 = pneg %p728
      $region142: #{tpu_custom_call.1} parent=135 // pred_check_branch
        %3502 = sbr.rel (%p3500) target = $region144
      $region143: #{tpu_custom_call.1} parent=135 // pred_region
        _
      $region144: #{tpu_custom_call.1} parent=135 // pred_fallthru
        _
    $region136: #{tpu_custom_call.1} parent=5 // pred_fallthru
      _
    %p3503 = scmp.le.s32.totalorder 2, %s65
    // Predicated region
    $region145: #{tpu_custom_call.1} parent=5 // pred_check
      %p3504 = pneg %p3503
    $region146: #{tpu_custom_call.1} parent=5 // pred_check_branch
      %3506 = sbr.rel (%p3504) target = $region148
    $region147: #{tpu_custom_call.1} parent=5 // pred_region
      %s3507 = ssub.s32 %s65, 2
      // Predicated region
      $region149: #{tpu_custom_call.1} parent=147 // pred_check
        %p3508 = pneg %p734
      $region150: #{tpu_custom_call.1} parent=147 // pred_check_branch
        %3510 = sbr.rel (%p3508) target = $region152
      $region151: #{tpu_custom_call.1} parent=147 // pred_region
        %p3511 = scmp.lt.s32.totalorder %s76, 1
        %s3512 = scalar_select %p3511, %s76, 1
        %p3513 = scmp.lt.s32.totalorder %s77, 0
        %s3514 = scalar_select %p3513, %s77, 0
        %s3515 = smul.addr %s3512, 4
        %s3516 = sadd.s32 %s3514, %s3515
        %s3517 = smul.addr %s3516, 8
        %s3518 = scalar_lea.vmem %s59, %s3517
      $region152: #{tpu_custom_call.1} parent=147 // pred_fallthru
        _
    $region148: #{tpu_custom_call.1} parent=5 // pred_fallthru
      _
  $region6: #{tpu_custom_call.1} parent=0 // loop_footer
    %s69 = sadd.s32 1, %s65
  $region7: #{tpu_custom_call.1} parent=0 // loop_footer_branch
    %64 = sbr.rel target = $region3
  $region8: #{tpu_custom_call.1} parent=0 // loop_exit
    _

</llo_original>
